<compile_context>
chip_gen: v7x
topology: tpu7x:2x2x1
jax: 0.10.0
libtpu: 0.0.40
codegen_flags: <defaults>
</compile_context>

<pallas_src>
import jax
import jax.numpy as jnp
from jax import lax
from jax.experimental import pallas as pl
from jax.experimental.pallas import tpu as pltpu

H = 16
W = 16
HP = H + 2            # 18 : zero-padded (pad=1) grid height
WP = W + 2            # 18 : zero-padded grid width / flat row stride
P_IMG = 328           # HP*WP = 324 rounded up to a multiple of 8 (rows/image)
GUARD = 24            # >= WP + 1 guard rows on each side of the column scratch
C1, C2, C3 = 8, 16, 32
DX_ORDER = (1, 0, 2)  # lane order of the dx taps inside each column scratch


def _conv3x3_layer(h, col_ref, w_ref, b_ref, keep3, bimg):
    """One Conv2d(3x3, pad=1) + ReLU layer on the flat-padded layout.

    h:       (m, cin) activations (non-interior rows are exact zeros).
    col_ref: (2*GUARD + m, 3*cin) scratch holding the dx-im2col row block.
    w_ref:   (3, 3*cin, cout) folded weights, K ordered as DX_ORDER.
    b_ref:   (1, cout) bias.
    keep3:   (1, P_IMG, 1) interior-pixel mask.
    Returns (m, cout) with non-interior rows forced to exact zero.
    """
    m, cin = h.shape
    cout = w_ref.shape[-1]

    # Park the un-shifted tap so the +/-1-row taps can be re-read as sublane
    # offset loads, then write the 3*cin-wide im2col block with one aligned
    # full-width store.  Lane blocks follow DX_ORDER = (dx=1, dx=0, dx=2).
    col_ref[GUARD:GUARD + m, 0:cin] = h
    up = col_ref[GUARD - 1:GUARD - 1 + m, 0:cin]      # h[q-1]  (dx = 0 tap)
    dn = col_ref[GUARD + 1:GUARD + 1 + m, 0:cin]      # h[q+1]  (dx = 2 tap)
    col_ref[GUARD:GUARD + m, :] = jnp.concatenate([h, up, dn], axis=1)

    # Three K = 3*cin matmuls, one per dy row of the 3x3 stencil.
    acc = None
    for dy in range(3):
        start = GUARD + (dy - 1) * WP                 # static sublane offset
        part = jnp.dot(col_ref[start:start + m, :], w_ref[dy],
                       preferred_element_type=jnp.float32)
        acc = part if acc is None else acc + part

    v = jnp.maximum(acc + b_ref[...], 0.0)
    v = jnp.where(keep3, v.reshape(bimg, P_IMG, cout), 0.0)
    return v.reshape(m, cout)


def perceptual_kernel(x_ref, w1_ref, b1_ref, w2_ref, b2_ref, w3_ref, b3_ref,
                      out_ref, col1, col2, col3):
    m = x_ref.shape[0]             # B * P_IMG flat rows in this block
    bimg = out_ref.shape[0]        # B images in this block

    # One-time zeroing of the column scratches (insurance: every guard row a
    # shifted read can touch is then deterministically zero; correctness does
    # not depend on it because jnp.where forces non-interior rows to zero).
    @pl.when(pl.program_id(0) == 0)
    def _init():
        col1[...] = jnp.zeros_like(col1)
        col2[...] = jnp.zeros_like(col2)
        col3[...] = jnp.zeros_like(col3)

    # Interior-pixel mask of one flat-padded image, rebuilt from a tiny iota
    # (replaces the old (m_rows, 1) mask input).  Float math avoids vector
    # integer div/mod; values are integers so the 0.5 margins are exact.
    pos = lax.broadcasted_iota(jnp.int32, (P_IMG, 1), 0).astype(jnp.float32)
    yy = jnp.floor((pos + 0.5) * (1.0 / WP))
    xx = pos - yy * WP
    keep = ((yy >= 0.5) & (yy <= H + 0.5) & (xx >= 0.5) & (xx <= W + 0.5))
    keep3 = keep.reshape(1, P_IMG, 1)

    h1 = _conv3x3_layer(x_ref[...], col1, w1_ref, b1_ref, keep3, bimg)
    h2 = _conv3x3_layer(h1, col2, w2_ref, b2_ref, keep3, bimg)
    h3 = _conv3x3_layer(h2, col3, w3_ref, b3_ref, keep3, bimg)

    # AdaptiveAvgPool2d(1): mean over the 256 interior pixels of each image
    # (non-interior rows of h3 are exact zeros).
    sums = jnp.sum(h3.reshape(bimg, P_IMG, C3), axis=1)        # (B, 32)
    out_ref[...] = sums * (1.0 / (H * W))


def _fold_weight(wk):
    """(3, 3, cin, cout) HWIO -> (3, 3*cin, cout) with dx taps in DX_ORDER."""
    return jnp.stack([wk[:, d] for d in DX_ORDER], axis=1).reshape(
        3, 3 * wk.shape[2], wk.shape[3])


def simple2d_perceptual_net(x_nchw, params, block_images=16):
    """x_nchw: (N, Cin, 16, 16) f32 -> (N, 32, 1, 1) f32 (matches PyTorch)."""
    w1, b1, w2, b2, w3, b3 = params
    n, cin, h, w = x_nchw.shape
    assert (h, w) == (H, W)

    # --- pick the per-step image block --------------------------------------
    bimg = int(max(1, min(block_images, n, 32)))
    if bimg < n and bimg % 8 != 0:
        # multi-step grids need a sublane-aligned output block
        bimg = min(n, ((bimg + 7) // 8) * 8)
    if n >= 16 and -(-n // bimg) < 2:
        # keep >= 2 "parallel" grid steps so both v7x TensorCores get work
        bimg = max(8, ((n // 2) // 8) * 8)
    npad = -(-n // bimg) * bimg
    m_rows = bimg * P_IMG
    col_rows = m_rows + 2 * GUARD

    # --- raw flat-padded input: (npad*328, cin) -------------------------------
    x = jnp.transpose(x_nchw, (0, 2, 3, 1)).astype(jnp.float32)   # NHWC
    x = jnp.pad(x, ((0, npad - n), (1, 1), (1, 1), (0, 0)))       # (npad,18,18,cin)
    x = x.reshape(npad, HP * WP, cin)
    x = jnp.pad(x, ((0, 0), (0, P_IMG - HP * WP), (0, 0)))        # (npad,328,cin)
    x_flat = x.reshape(npad * P_IMG, cin)

    w1r, w2r, w3r = _fold_weight(w1), _fold_weight(w2), _fold_weight(w3)

    # VMEM budget (worst-case 128-lane padding of the narrow blocks): x double
    # buffer + 3 column scratches + compiler temporaries.  40 MiB sits safely
    # under every generation's physical VMEM (64 MiB/TC on v7x) and well above
    # v5e's 16 MiB default scoped limit.
    vmem_limit = 40 * 1024 * 1024

    out = pl.pallas_call(
        perceptual_kernel,
        out_shape=jax.ShapeDtypeStruct((npad, C3), jnp.float32),
        grid_spec=pltpu.PrefetchScalarGridSpec(
            num_scalar_prefetch=0,
            grid=(npad // bimg,),
            in_specs=[
                pl.BlockSpec((m_rows, cin), lambda i: (i, 0)),
                pl.BlockSpec((3, 3 * cin, C1), lambda i: (0, 0, 0)),
                pl.BlockSpec((1, C1), lambda i: (0, 0)),
                pl.BlockSpec((3, 3 * C1, C2), lambda i: (0, 0, 0)),
                pl.BlockSpec((1, C2), lambda i: (0, 0)),
                pl.BlockSpec((3, 3 * C2, C3), lambda i: (0, 0, 0)),
                pl.BlockSpec((1, C3), lambda i: (0, 0)),
            ],
            out_specs=pl.BlockSpec((bimg, C3), lambda i: (i, 0)),
            scratch_shapes=[
                pltpu.VMEM((col_rows, 3 * cin), jnp.float32),
                pltpu.VMEM((col_rows, 3 * C1), jnp.float32),
                pltpu.VMEM((col_rows, 3 * C2), jnp.float32),
            ],
        ),
        compiler_params=pltpu.CompilerParams(
            dimension_semantics=("parallel",),
            vmem_limit_bytes=vmem_limit),
    )(x_flat, w1r, b1, w2r, b2, w3r, b3)

    return out[:n].reshape(n, C3, 1, 1)


def reference(x_nchw, params):
    """Pure-JAX reference (NHWC convs), returns (N, 32, 1, 1)."""
    w1, b1, w2, b2, w3, b3 = params
    x = jnp.transpose(x_nchw, (0, 2, 3, 1))
    dn = ('NHWC', 'HWIO', 'NHWC')

    def conv_relu(h_, w_, b_):
        y = lax.conv_general_dilated(h_, w_, (1, 1), 'SAME',
                                     dimension_numbers=dn)
        return jnp.maximum(y + b_.reshape(1, 1, 1, -1), 0.0)

    h = conv_relu(x, w1, b1)
    h = conv_relu(h, w2, b2)
    h = conv_relu(h, w3, b3)
    pooled = jnp.mean(h, axis=(1, 2))                  # (N, 32)
    return pooled.reshape(x.shape[0], C3, 1, 1)


def init_params(key, in_channels):
    ks = jax.random.split(key, 6)

    def init_w(k, cin, cout):
        bound = 1.0 / jnp.sqrt(cin * 9.0)
        return jax.random.uniform(k, (3, 3, cin, cout), jnp.float32,
                                  -bound, bound)

    def init_b(k, cin, cout):
        bound = 1.0 / jnp.sqrt(cin * 9.0)
        return jax.random.uniform(k, (1, cout), jnp.float32, -bound, bound)

    w1 = init_w(ks[0], in_channels, C1)
    b1 = init_b(ks[1], in_channels, C1)
    w2 = init_w(ks[2], C1, C2)
    b2 = init_b(ks[3], C1, C2)
    w3 = init_w(ks[4], C2, C3)
    b3 = init_b(ks[5], C2, C3)
    return (w1, b1, w2, b2, w3, b3)


if __name__ == "__main__":
    key = jax.random.PRNGKey(0)
    k_x, k_p = jax.random.split(key)

    in_channels = 4
    params = init_params(k_p, in_channels)

    # Small shapes consistent with the module: batch=2, channels=4, 16x16.
    x = jax.random.normal(k_x, (2, in_channels, H, W), jnp.float32)
    out = simple2d_perceptual_net(x, params)
    out = jax.block_until_ready(out)

    ref = reference(x, params)
    assert out.shape == (2, C3, 1, 1), out.shape
    assert jnp.allclose(out, ref, atol=2e-4, rtol=2e-4), \
        float(jnp.max(jnp.abs(out - ref)))

    # Also exercise a multi-step grid with batch padding (grid=3, 4 pad images).
    k_x2 = jax.random.fold_in(k_x, 1)
    x2 = jax.random.normal(k_x2, (20, in_channels, H, W), jnp.float32)
    out2 = jax.block_until_ready(
        simple2d_perceptual_net(x2, params, block_images=8))
    ref2 = reference(x2, params)
    assert out2.shape == (20, C3, 1, 1), out2.shape
    assert jnp.allclose(out2, ref2, atol=2e-4, rtol=2e-4), \
        float(jnp.max(jnp.abs(out2 - ref2)))

    print("KERNEL_OK")
</pallas_src>

<mosaic_0001>
module attributes {stable_mosaic.version = 11 : i64} {
  func.func @perceptual_kernel(%arg0: i32, %arg1: memref<656x4xf32, #tpu.memory_space<vmem>>, %arg2: memref<3x12x8xf32, #tpu.memory_space<vmem>>, %arg3: memref<1x8xf32, #tpu.memory_space<vmem>>, %arg4: memref<3x24x16xf32, #tpu.memory_space<vmem>>, %arg5: memref<1x16xf32, #tpu.memory_space<vmem>>, %arg6: memref<3x48x32xf32, #tpu.memory_space<vmem>>, %arg7: memref<1x32xf32, #tpu.memory_space<vmem>>, %arg8: memref<2x32xf32, #tpu.memory_space<vmem>>, %arg9: memref<704x12xf32, #tpu.memory_space<vmem>>, %arg10: memref<704x24xf32, #tpu.memory_space<vmem>>, %arg11: memref<704x48xf32, #tpu.memory_space<vmem>>) attributes {dimension_semantics = [#tpu.dimension_semantics<parallel>], iteration_bounds = array<i64: 1>, scalar_prefetch = 0 : i64, scratch_operands = 3 : i64, tpu.core_type = #tpu.core_type<tc>, window_params = [{transform_indices = @transform_0, window_bounds = array<i64: 656, 4>}, {pipeline_mode = #tpu.pipeline_mode<synchronous>, transform_indices = @transform_1, window_bounds = array<i64: 3, 12, 8>}, {pipeline_mode = #tpu.pipeline_mode<synchronous>, transform_indices = @transform_2, window_bounds = array<i64: 1, 8>}, {pipeline_mode = #tpu.pipeline_mode<synchronous>, transform_indices = @transform_3, window_bounds = array<i64: 3, 24, 16>}, {pipeline_mode = #tpu.pipeline_mode<synchronous>, transform_indices = @transform_4, window_bounds = array<i64: 1, 16>}, {pipeline_mode = #tpu.pipeline_mode<synchronous>, transform_indices = @transform_5, window_bounds = array<i64: 3, 48, 32>}, {pipeline_mode = #tpu.pipeline_mode<synchronous>, transform_indices = @transform_6, window_bounds = array<i64: 1, 32>}, {transform_indices = @transform_7, window_bounds = array<i64: 2, 32>}]} {
    %c0_i32 = arith.constant 0 : i32
    %0 = arith.cmpi eq, %arg0, %c0_i32 : i32
    %1 = arith.extui %0 : i1 to i32
    %c0_i32_0 = arith.constant 0 : i32
    %2 = arith.cmpi ne, %1, %c0_i32_0 : i32
    scf.if %2 {
      %cst_95 = arith.constant 0.000000e+00 : f32
      %121 = vector.broadcast %cst_95 : f32 to vector<704x12xf32>
      %c0_96 = arith.constant 0 : index
      %c0_97 = arith.constant 0 : index
      %122 = vector.load %arg9[%c0_96, %c0_97] : memref<704x12xf32, #tpu.memory_space<vmem>>, vector<704x12xf32>
      tpu.vector_store %arg9[%c0_96, %c0_97], %121 {strides = array<i32>} : memref<704x12xf32, #tpu.memory_space<vmem>>, vector<704x12xf32>,
      %cst_98 = arith.constant 0.000000e+00 : f32
      %123 = vector.broadcast %cst_98 : f32 to vector<704x24xf32>
      %c0_99 = arith.constant 0 : index
      %c0_100 = arith.constant 0 : index
      %124 = vector.load %arg10[%c0_99, %c0_100] : memref<704x24xf32, #tpu.memory_space<vmem>>, vector<704x24xf32>
      tpu.vector_store %arg10[%c0_99, %c0_100], %123 {strides = array<i32>} : memref<704x24xf32, #tpu.memory_space<vmem>>, vector<704x24xf32>,
      %cst_101 = arith.constant 0.000000e+00 : f32
      %125 = vector.broadcast %cst_101 : f32 to vector<704x48xf32>
      %c0_102 = arith.constant 0 : index
      %c0_103 = arith.constant 0 : index
      %126 = vector.load %arg11[%c0_102, %c0_103] : memref<704x48xf32, #tpu.memory_space<vmem>>, vector<704x48xf32>
      tpu.vector_store %arg11[%c0_102, %c0_103], %125 {strides = array<i32>} : memref<704x48xf32, #tpu.memory_space<vmem>>, vector<704x48xf32>,
    } else {
    }
    %3 = tpu.iota {dimensions = array<i32: 0>} : vector<328x1xi32>
    %4 = arith.sitofp %3 : vector<328x1xi32> to vector<328x1xf32>
    %cst = arith.constant 5.000000e-01 : f32
    %5 = vector.broadcast %cst : f32 to vector<328x1xf32>
    %6 = arith.addf %4, %5 : vector<328x1xf32>
    %cst_1 = arith.constant 0.055555556 : f32
    %7 = vector.broadcast %cst_1 : f32 to vector<328x1xf32>
    %8 = arith.mulf %6, %7 : vector<328x1xf32>
    %9 = math.floor %8 : vector<328x1xf32>
    %cst_2 = arith.constant 1.800000e+01 : f32
    %10 = vector.broadcast %cst_2 : f32 to vector<328x1xf32>
    %11 = arith.mulf %9, %10 : vector<328x1xf32>
    %12 = arith.subf %4, %11 : vector<328x1xf32>
    %cst_3 = arith.constant 5.000000e-01 : f32
    %13 = vector.broadcast %cst_3 : f32 to vector<328x1xf32>
    %14 = arith.cmpf oge, %9, %13 : vector<328x1xf32>
    %cst_4 = arith.constant 1.650000e+01 : f32
    %15 = vector.broadcast %cst_4 : f32 to vector<328x1xf32>
    %16 = arith.cmpf ole, %9, %15 : vector<328x1xf32>
    %17 = arith.andi %14, %16 : vector<328x1xi1>
    %cst_5 = arith.constant 5.000000e-01 : f32
    %18 = vector.broadcast %cst_5 : f32 to vector<328x1xf32>
    %19 = arith.cmpf oge, %12, %18 : vector<328x1xf32>
    %20 = arith.andi %17, %19 : vector<328x1xi1>
    %cst_6 = arith.constant 1.650000e+01 : f32
    %21 = vector.broadcast %cst_6 : f32 to vector<328x1xf32>
    %22 = arith.cmpf ole, %12, %21 : vector<328x1xf32>
    %23 = arith.andi %20, %22 : vector<328x1xi1>
    %24 = vector.shape_cast %23 : vector<328x1xi1> to vector<1x328x1xi1>
    %c0 = arith.constant 0 : index
    %c0_7 = arith.constant 0 : index
    %25 = vector.load %arg1[%c0, %c0_7] : memref<656x4xf32, #tpu.memory_space<vmem>>, vector<656x4xf32>
    %c24 = arith.constant 24 : index
    %c0_8 = arith.constant 0 : index
    %26 = vector.load %arg9[%c24, %c0_8] : memref<704x12xf32, #tpu.memory_space<vmem>>, vector<656x4xf32>
    tpu.vector_store %arg9[%c24, %c0_8], %25 {strides = array<i32>} : memref<704x12xf32, #tpu.memory_space<vmem>>, vector<656x4xf32>,
    %c23 = arith.constant 23 : index
    %c0_9 = arith.constant 0 : index
    %27 = vector.load %arg9[%c23, %c0_9] : memref<704x12xf32, #tpu.memory_space<vmem>>, vector<656x4xf32>
    %c25 = arith.constant 25 : index
    %c0_10 = arith.constant 0 : index
    %28 = vector.load %arg9[%c25, %c0_10] : memref<704x12xf32, #tpu.memory_space<vmem>>, vector<656x4xf32>
    %29 = tpu.concatenate %25, %27, %28 in 1 : vector<656x4xf32>, vector<656x4xf32>, vector<656x4xf32> -> vector<656x12xf32>
    %c24_11 = arith.constant 24 : index
    %c0_12 = arith.constant 0 : index
    %30 = vector.load %arg9[%c24_11, %c0_12] : memref<704x12xf32, #tpu.memory_space<vmem>>, vector<656x12xf32>
    tpu.vector_store %arg9[%c24_11, %c0_12], %29 {strides = array<i32>} : memref<704x12xf32, #tpu.memory_space<vmem>>, vector<656x12xf32>,
    %c6 = arith.constant 6 : index
    %c0_13 = arith.constant 0 : index
    %31 = vector.load %arg9[%c6, %c0_13] : memref<704x12xf32, #tpu.memory_space<vmem>>, vector<656x12xf32>
    %c0_14 = arith.constant 0 : index
    %c0_15 = arith.constant 0 : index
    %c0_16 = arith.constant 0 : index
    %32 = vector.load %arg2[%c0_14, %c0_15, %c0_16] : memref<3x12x8xf32, #tpu.memory_space<vmem>>, vector<1x12x8xf32>
    %33 = vector.shape_cast %32 : vector<1x12x8xf32> to vector<12x8xf32>
    %cst_17 = arith.constant dense<0.000000e+00> : vector<656x8xf32>
    %34 = tpu.matmul %31, %33, %cst_17 {dimension_numbers = #tpu.dot_dimension_numbers<[1], [0], [0], [1], [0, 0, 1, 1], [], []>} : vector<656x12xf32>, vector<12x8xf32>, vector<656x8xf32> -> vector<656x8xf32>
    %c24_18 = arith.constant 24 : index
    %c0_19 = arith.constant 0 : index
    %35 = vector.load %arg9[%c24_18, %c0_19] : memref<704x12xf32, #tpu.memory_space<vmem>>, vector<656x12xf32>
    %c1 = arith.constant 1 : index
    %c0_20 = arith.constant 0 : index
    %c0_21 = arith.constant 0 : index
    %36 = vector.load %arg2[%c1, %c0_20, %c0_21] : memref<3x12x8xf32, #tpu.memory_space<vmem>>, vector<1x12x8xf32>
    %37 = vector.shape_cast %36 : vector<1x12x8xf32> to vector<12x8xf32>
    %cst_22 = arith.constant dense<0.000000e+00> : vector<656x8xf32>
    %38 = tpu.matmul %35, %37, %cst_22 {dimension_numbers = #tpu.dot_dimension_numbers<[1], [0], [0], [1], [0, 0, 1, 1], [], []>} : vector<656x12xf32>, vector<12x8xf32>, vector<656x8xf32> -> vector<656x8xf32>
    %39 = arith.addf %34, %38 : vector<656x8xf32>
    %c42 = arith.constant 42 : index
    %c0_23 = arith.constant 0 : index
    %40 = vector.load %arg9[%c42, %c0_23] : memref<704x12xf32, #tpu.memory_space<vmem>>, vector<656x12xf32>
    %c2 = arith.constant 2 : index
    %c0_24 = arith.constant 0 : index
    %c0_25 = arith.constant 0 : index
    %41 = vector.load %arg2[%c2, %c0_24, %c0_25] : memref<3x12x8xf32, #tpu.memory_space<vmem>>, vector<1x12x8xf32>
    %42 = vector.shape_cast %41 : vector<1x12x8xf32> to vector<12x8xf32>
    %cst_26 = arith.constant dense<0.000000e+00> : vector<656x8xf32>
    %43 = tpu.matmul %40, %42, %cst_26 {dimension_numbers = #tpu.dot_dimension_numbers<[1], [0], [0], [1], [0, 0, 1, 1], [], []>} : vector<656x12xf32>, vector<12x8xf32>, vector<656x8xf32> -> vector<656x8xf32>
    %44 = arith.addf %39, %43 : vector<656x8xf32>
    %c0_27 = arith.constant 0 : index
    %c0_28 = arith.constant 0 : index
    %45 = vector.load %arg3[%c0_27, %c0_28] : memref<1x8xf32, #tpu.memory_space<vmem>>, vector<1x8xf32>
    %46 = vector.broadcast %45 : vector<1x8xf32> to vector<656x8xf32>
    %47 = arith.addf %44, %46 : vector<656x8xf32>
    %cst_29 = arith.constant 0.000000e+00 : f32
    %48 = vector.broadcast %cst_29 : f32 to vector<656x8xf32>
    %49 = arith.maximumf %47, %48 : vector<656x8xf32>
    %50 = vector.shape_cast %49 : vector<656x8xf32> to vector<2x328x8xf32>
    %cst_30 = arith.constant 0.000000e+00 : f32
    %51 = vector.shape_cast %24 : vector<1x328x1xi1> to vector<1x328x1xi1>
    %52 = vector.broadcast %51 : vector<1x328x1xi1> to vector<2x328x8xi1>
    %53 = vector.broadcast %cst_30 : f32 to vector<2x328x8xf32>
    %54 = arith.select %52, %50, %53 : vector<2x328x8xi1>, vector<2x328x8xf32>
    %55 = vector.shape_cast %54 : vector<2x328x8xf32> to vector<656x8xf32>
    %c24_31 = arith.constant 24 : index
    %c0_32 = arith.constant 0 : index
    %56 = vector.load %arg10[%c24_31, %c0_32] : memref<704x24xf32, #tpu.memory_space<vmem>>, vector<656x8xf32>
    tpu.vector_store %arg10[%c24_31, %c0_32], %55 {strides = array<i32>} : memref<704x24xf32, #tpu.memory_space<vmem>>, vector<656x8xf32>,
    %c23_33 = arith.constant 23 : index
    %c0_34 = arith.constant 0 : index
    %57 = vector.load %arg10[%c23_33, %c0_34] : memref<704x24xf32, #tpu.memory_space<vmem>>, vector<656x8xf32>
    %c25_35 = arith.constant 25 : index
    %c0_36 = arith.constant 0 : index
    %58 = vector.load %arg10[%c25_35, %c0_36] : memref<704x24xf32, #tpu.memory_space<vmem>>, vector<656x8xf32>
    %59 = tpu.concatenate %55, %57, %58 in 1 : vector<656x8xf32>, vector<656x8xf32>, vector<656x8xf32> -> vector<656x24xf32>
    %c24_37 = arith.constant 24 : index
    %c0_38 = arith.constant 0 : index
    %60 = vector.load %arg10[%c24_37, %c0_38] : memref<704x24xf32, #tpu.memory_space<vmem>>, vector<656x24xf32>
    tpu.vector_store %arg10[%c24_37, %c0_38], %59 {strides = array<i32>} : memref<704x24xf32, #tpu.memory_space<vmem>>, vector<656x24xf32>,
    %c6_39 = arith.constant 6 : index
    %c0_40 = arith.constant 0 : index
    %61 = vector.load %arg10[%c6_39, %c0_40] : memref<704x24xf32, #tpu.memory_space<vmem>>, vector<656x24xf32>
    %c0_41 = arith.constant 0 : index
    %c0_42 = arith.constant 0 : index
    %c0_43 = arith.constant 0 : index
    %62 = vector.load %arg4[%c0_41, %c0_42, %c0_43] : memref<3x24x16xf32, #tpu.memory_space<vmem>>, vector<1x24x16xf32>
    %63 = vector.shape_cast %62 : vector<1x24x16xf32> to vector<24x16xf32>
    %cst_44 = arith.constant dense<0.000000e+00> : vector<656x16xf32>
    %64 = tpu.matmul %61, %63, %cst_44 {dimension_numbers = #tpu.dot_dimension_numbers<[1], [0], [0], [1], [0, 0, 1, 1], [], []>} : vector<656x24xf32>, vector<24x16xf32>, vector<656x16xf32> -> vector<656x16xf32>
    %c24_45 = arith.constant 24 : index
    %c0_46 = arith.constant 0 : index
    %65 = vector.load %arg10[%c24_45, %c0_46] : memref<704x24xf32, #tpu.memory_space<vmem>>, vector<656x24xf32>
    %c1_47 = arith.constant 1 : index
    %c0_48 = arith.constant 0 : index
    %c0_49 = arith.constant 0 : index
    %66 = vector.load %arg4[%c1_47, %c0_48, %c0_49] : memref<3x24x16xf32, #tpu.memory_space<vmem>>, vector<1x24x16xf32>
    %67 = vector.shape_cast %66 : vector<1x24x16xf32> to vector<24x16xf32>
    %cst_50 = arith.constant dense<0.000000e+00> : vector<656x16xf32>
    %68 = tpu.matmul %65, %67, %cst_50 {dimension_numbers = #tpu.dot_dimension_numbers<[1], [0], [0], [1], [0, 0, 1, 1], [], []>} : vector<656x24xf32>, vector<24x16xf32>, vector<656x16xf32> -> vector<656x16xf32>
    %69 = arith.addf %64, %68 : vector<656x16xf32>
    %c42_51 = arith.constant 42 : index
    %c0_52 = arith.constant 0 : index
    %70 = vector.load %arg10[%c42_51, %c0_52] : memref<704x24xf32, #tpu.memory_space<vmem>>, vector<656x24xf32>
    %c2_53 = arith.constant 2 : index
    %c0_54 = arith.constant 0 : index
    %c0_55 = arith.constant 0 : index
    %71 = vector.load %arg4[%c2_53, %c0_54, %c0_55] : memref<3x24x16xf32, #tpu.memory_space<vmem>>, vector<1x24x16xf32>
    %72 = vector.shape_cast %71 : vector<1x24x16xf32> to vector<24x16xf32>
    %cst_56 = arith.constant dense<0.000000e+00> : vector<656x16xf32>
    %73 = tpu.matmul %70, %72, %cst_56 {dimension_numbers = #tpu.dot_dimension_numbers<[1], [0], [0], [1], [0, 0, 1, 1], [], []>} : vector<656x24xf32>, vector<24x16xf32>, vector<656x16xf32> -> vector<656x16xf32>
    %74 = arith.addf %69, %73 : vector<656x16xf32>
    %c0_57 = arith.constant 0 : index
    %c0_58 = arith.constant 0 : index
    %75 = vector.load %arg5[%c0_57, %c0_58] : memref<1x16xf32, #tpu.memory_space<vmem>>, vector<1x16xf32>
    %76 = vector.broadcast %75 : vector<1x16xf32> to vector<656x16xf32>
    %77 = arith.addf %74, %76 : vector<656x16xf32>
    %cst_59 = arith.constant 0.000000e+00 : f32
    %78 = vector.broadcast %cst_59 : f32 to vector<656x16xf32>
    %79 = arith.maximumf %77, %78 : vector<656x16xf32>
    %80 = vector.shape_cast %79 : vector<656x16xf32> to vector<2x328x16xf32>
    %cst_60 = arith.constant 0.000000e+00 : f32
    %81 = vector.shape_cast %24 : vector<1x328x1xi1> to vector<1x328x1xi1>
    %82 = vector.broadcast %81 : vector<1x328x1xi1> to vector<2x328x16xi1>
    %83 = vector.broadcast %cst_60 : f32 to vector<2x328x16xf32>
    %84 = arith.select %82, %80, %83 : vector<2x328x16xi1>, vector<2x328x16xf32>
    %85 = vector.shape_cast %84 : vector<2x328x16xf32> to vector<656x16xf32>
    %c24_61 = arith.constant 24 : index
    %c0_62 = arith.constant 0 : index
    %86 = vector.load %arg11[%c24_61, %c0_62] : memref<704x48xf32, #tpu.memory_space<vmem>>, vector<656x16xf32>
    tpu.vector_store %arg11[%c24_61, %c0_62], %85 {strides = array<i32>} : memref<704x48xf32, #tpu.memory_space<vmem>>, vector<656x16xf32>,
    %c23_63 = arith.constant 23 : index
    %c0_64 = arith.constant 0 : index
    %87 = vector.load %arg11[%c23_63, %c0_64] : memref<704x48xf32, #tpu.memory_space<vmem>>, vector<656x16xf32>
    %c25_65 = arith.constant 25 : index
    %c0_66 = arith.constant 0 : index
    %88 = vector.load %arg11[%c25_65, %c0_66] : memref<704x48xf32, #tpu.memory_space<vmem>>, vector<656x16xf32>
    %89 = tpu.concatenate %85, %87, %88 in 1 : vector<656x16xf32>, vector<656x16xf32>, vector<656x16xf32> -> vector<656x48xf32>
    %c24_67 = arith.constant 24 : index
    %c0_68 = arith.constant 0 : index
    %90 = vector.load %arg11[%c24_67, %c0_68] : memref<704x48xf32, #tpu.memory_space<vmem>>, vector<656x48xf32>
    tpu.vector_store %arg11[%c24_67, %c0_68], %89 {strides = array<i32>} : memref<704x48xf32, #tpu.memory_space<vmem>>, vector<656x48xf32>,
    %c6_69 = arith.constant 6 : index
    %c0_70 = arith.constant 0 : index
    %91 = vector.load %arg11[%c6_69, %c0_70] : memref<704x48xf32, #tpu.memory_space<vmem>>, vector<656x48xf32>
    %c0_71 = arith.constant 0 : index
    %c0_72 = arith.constant 0 : index
    %c0_73 = arith.constant 0 : index
    %92 = vector.load %arg6[%c0_71, %c0_72, %c0_73] : memref<3x48x32xf32, #tpu.memory_space<vmem>>, vector<1x48x32xf32>
    %93 = vector.shape_cast %92 : vector<1x48x32xf32> to vector<48x32xf32>
    %cst_74 = arith.constant dense<0.000000e+00> : vector<656x32xf32>
    %94 = tpu.matmul %91, %93, %cst_74 {dimension_numbers = #tpu.dot_dimension_numbers<[1], [0], [0], [1], [0, 0, 1, 1], [], []>} : vector<656x48xf32>, vector<48x32xf32>, vector<656x32xf32> -> vector<656x32xf32>
    %c24_75 = arith.constant 24 : index
    %c0_76 = arith.constant 0 : index
    %95 = vector.load %arg11[%c24_75, %c0_76] : memref<704x48xf32, #tpu.memory_space<vmem>>, vector<656x48xf32>
    %c1_77 = arith.constant 1 : index
    %c0_78 = arith.constant 0 : index
    %c0_79 = arith.constant 0 : index
    %96 = vector.load %arg6[%c1_77, %c0_78, %c0_79] : memref<3x48x32xf32, #tpu.memory_space<vmem>>, vector<1x48x32xf32>
    %97 = vector.shape_cast %96 : vector<1x48x32xf32> to vector<48x32xf32>
    %cst_80 = arith.constant dense<0.000000e+00> : vector<656x32xf32>
    %98 = tpu.matmul %95, %97, %cst_80 {dimension_numbers = #tpu.dot_dimension_numbers<[1], [0], [0], [1], [0, 0, 1, 1], [], []>} : vector<656x48xf32>, vector<48x32xf32>, vector<656x32xf32> -> vector<656x32xf32>
    %99 = arith.addf %94, %98 : vector<656x32xf32>
    %c42_81 = arith.constant 42 : index
    %c0_82 = arith.constant 0 : index
    %100 = vector.load %arg11[%c42_81, %c0_82] : memref<704x48xf32, #tpu.memory_space<vmem>>, vector<656x48xf32>
    %c2_83 = arith.constant 2 : index
    %c0_84 = arith.constant 0 : index
    %c0_85 = arith.constant 0 : index
    %101 = vector.load %arg6[%c2_83, %c0_84, %c0_85] : memref<3x48x32xf32, #tpu.memory_space<vmem>>, vector<1x48x32xf32>
    %102 = vector.shape_cast %101 : vector<1x48x32xf32> to vector<48x32xf32>
    %cst_86 = arith.constant dense<0.000000e+00> : vector<656x32xf32>
    %103 = tpu.matmul %100, %102, %cst_86 {dimension_numbers = #tpu.dot_dimension_numbers<[1], [0], [0], [1], [0, 0, 1, 1], [], []>} : vector<656x48xf32>, vector<48x32xf32>, vector<656x32xf32> -> vector<656x32xf32>
    %104 = arith.addf %99, %103 : vector<656x32xf32>
    %c0_87 = arith.constant 0 : index
    %c0_88 = arith.constant 0 : index
    %105 = vector.load %arg7[%c0_87, %c0_88] : memref<1x32xf32, #tpu.memory_space<vmem>>, vector<1x32xf32>
    %106 = vector.broadcast %105 : vector<1x32xf32> to vector<656x32xf32>
    %107 = arith.addf %104, %106 : vector<656x32xf32>
    %cst_89 = arith.constant 0.000000e+00 : f32
    %108 = vector.broadcast %cst_89 : f32 to vector<656x32xf32>
    %109 = arith.maximumf %107, %108 : vector<656x32xf32>
    %110 = vector.shape_cast %109 : vector<656x32xf32> to vector<2x328x32xf32>
    %cst_90 = arith.constant 0.000000e+00 : f32
    %111 = vector.shape_cast %24 : vector<1x328x1xi1> to vector<1x328x1xi1>
    %112 = vector.broadcast %111 : vector<1x328x1xi1> to vector<2x328x32xi1>
    %113 = vector.broadcast %cst_90 : f32 to vector<2x328x32xf32>
    %114 = arith.select %112, %110, %113 : vector<2x328x32xi1>, vector<2x328x32xf32>
    %115 = vector.shape_cast %114 : vector<2x328x32xf32> to vector<656x32xf32>
    %116 = vector.shape_cast %115 : vector<656x32xf32> to vector<2x328x32xf32>
    %cst_91 = arith.constant dense<0.000000e+00> : vector<2x32xf32>
    %117 = vector.multi_reduction <add>, %116, %cst_91 [1] : vector<2x328x32xf32> to vector<2x32xf32>
    %cst_92 = arith.constant 3.906250e-03 : f32
    %118 = vector.broadcast %cst_92 : f32 to vector<2x32xf32>
    %119 = arith.mulf %117, %118 : vector<2x32xf32>
    %c0_93 = arith.constant 0 : index
    %c0_94 = arith.constant 0 : index
    %120 = vector.load %arg8[%c0_93, %c0_94] : memref<2x32xf32, #tpu.memory_space<vmem>>, vector<2x32xf32>
    tpu.vector_store %arg8[%c0_93, %c0_94], %119 {strides = array<i32>} : memref<2x32xf32, #tpu.memory_space<vmem>>, vector<2x32xf32>,
    return
  }
  func.func @transform_0(%arg0: i32) -> (i32, i32) {
    %c0_i32 = arith.constant 0 : i32
    %c0_i32_0 = arith.constant 0 : i32
    return %arg0, %c0_i32 : i32, i32
  }
  func.func @transform_1(%arg0: i32) -> (i32, i32, i32) {
    %c0_i32 = arith.constant 0 : i32
    %c0_i32_0 = arith.constant 0 : i32
    %c0_i32_1 = arith.constant 0 : i32
    %c0_i32_2 = arith.constant 0 : i32
    return %c0_i32, %c0_i32_0, %c0_i32_1 : i32, i32, i32
  }
  func.func @transform_2(%arg0: i32) -> (i32, i32) {
    %c0_i32 = arith.constant 0 : i32
    %c0_i32_0 = arith.constant 0 : i32
    %c0_i32_1 = arith.constant 0 : i32
    return %c0_i32, %c0_i32_0 : i32, i32
  }
  func.func @transform_3(%arg0: i32) -> (i32, i32, i32) {
    %c0_i32 = arith.constant 0 : i32
    %c0_i32_0 = arith.constant 0 : i32
    %c0_i32_1 = arith.constant 0 : i32
    %c0_i32_2 = arith.constant 0 : i32
    return %c0_i32, %c0_i32_0, %c0_i32_1 : i32, i32, i32
  }
  func.func @transform_4(%arg0: i32) -> (i32, i32) {
    %c0_i32 = arith.constant 0 : i32
    %c0_i32_0 = arith.constant 0 : i32
    %c0_i32_1 = arith.constant 0 : i32
    return %c0_i32, %c0_i32_0 : i32, i32
  }
  func.func @transform_5(%arg0: i32) -> (i32, i32, i32) {
    %c0_i32 = arith.constant 0 : i32
    %c0_i32_0 = arith.constant 0 : i32
    %c0_i32_1 = arith.constant 0 : i32
    %c0_i32_2 = arith.constant 0 : i32
    return %c0_i32, %c0_i32_0, %c0_i32_1 : i32, i32, i32
  }
  func.func @transform_6(%arg0: i32) -> (i32, i32) {
    %c0_i32 = arith.constant 0 : i32
    %c0_i32_0 = arith.constant 0 : i32
    %c0_i32_1 = arith.constant 0 : i32
    return %c0_i32, %c0_i32_0 : i32, i32
  }
  func.func @transform_7(%arg0: i32) -> (i32, i32) {
    %c0_i32 = arith.constant 0 : i32
    %c0_i32_0 = arith.constant 0 : i32
    return %arg0, %c0_i32 : i32, i32
  }
}

</mosaic_0001>

<llo_original>
// kernel: tpu_custom_call.1
$region0: #{tpu_custom_call.1}
  #allocation0 [shape = 'u32[]', space=smem, size = 0x4, offset = 0x4, fixed_abs, tag = 'smem constant byte address 0x4 - core index']
  #allocation1 [shape = 'u32[144,128]{1,0:T(1,128)}', space=vmem, size = 0x12000, scoped, tag = 'internal scratch']
  #allocation2 [shape = 'f32[704,12]{1,0:T(8,128)}', space=vmem, size = 0x58000, scoped, tag = 'scratch operand']
  #allocation3 [shape = 'f32[704,24]{1,0:T(8,128)}', space=vmem, size = 0x58000, scoped, tag = 'scratch operand']
  #allocation4 [shape = 'f32[704,48]{1,0:T(8,128)}', space=vmem, size = 0x58000, scoped, tag = 'scratch operand']
  %s0 = inlined_call_operand.vmem [shape: f32[656,4], index: 0, kind: input, shape index: {}]
  %s1 = inlined_call_operand.vmem [shape: f32[3,12,8], index: 1, kind: input, shape index: {}]
  %s2 = inlined_call_operand.vmem [shape: f32[1,8], index: 2, kind: input, shape index: {}]
  %s3 = inlined_call_operand.vmem [shape: f32[3,24,16], index: 3, kind: input, shape index: {}]
  %s4 = inlined_call_operand.vmem [shape: f32[1,16], index: 4, kind: input, shape index: {}]
  %s5 = inlined_call_operand.vmem [shape: f32[3,48,32], index: 5, kind: input, shape index: {}]
  %s6 = inlined_call_operand.vmem [shape: f32[1,32], index: 6, kind: input, shape index: {}]
  %s7 = inlined_call_operand.hbm [shape: f32[2,32], index: 7, kind: output, shape index: {}]
  %s8 = sld [smem:[#allocation0]]
  $region42: #{tpu_custom_call.1} parent=0
    _
  %s10 = ssub.s32 1, %s8
  %s11 = scalar_select 0, %s10, %s8
  $region1: #{tpu_custom_call.1} parent=0
    #allocation5 [shape = 'u8[1024]{0}', space=vmem, size = 0x400, scoped, tag = 'output window, operand 0, single buffered']
    #allocation6 [shape = 's32[1]{0}', space=sflag, size = 0x4, scoped, tag = 'scoped memory for tpu_custom_call.1']
    %12 = vsyncpa [#allocation6], 0
    // Predicated region
    $region2: #{tpu_custom_call.1} parent=1 // pred_check
      _
    $region3: #{tpu_custom_call.1} parent=1 // pred_check_branch
      %14 = sbr.rel (0) target = $region5
    $region4: #{tpu_custom_call.1} parent=1 // pred_region
      _
    $region5: #{tpu_custom_call.1} parent=1 // pred_fallthru
      _
    // Predicated region
    $region6: #{tpu_custom_call.1} parent=1 // pred_check
      _
    $region7: #{tpu_custom_call.1} parent=1 // pred_check_branch
      %16 = sbr.rel (0) target = $region9
    $region8: #{tpu_custom_call.1} parent=1 // pred_region
      _
    $region9: #{tpu_custom_call.1} parent=1 // pred_fallthru
      _
    // Predicated region
    $region10: #{tpu_custom_call.1} parent=1 // pred_check
      _
    $region11: #{tpu_custom_call.1} parent=1 // pred_check_branch
      %18 = sbr.rel (0) target = $region13
    $region12: #{tpu_custom_call.1} parent=1 // pred_region
      _
    $region13: #{tpu_custom_call.1} parent=1 // pred_fallthru
      _
    // Predicated region
    $region14: #{tpu_custom_call.1} parent=1 // pred_check
      _
    $region15: #{tpu_custom_call.1} parent=1 // pred_check_branch
      %20 = sbr.rel (0) target = $region17
    $region16: #{tpu_custom_call.1} parent=1 // pred_region
      _
    $region17: #{tpu_custom_call.1} parent=1 // pred_fallthru
      _
    // Predicated region
    $region18: #{tpu_custom_call.1} parent=1 // pred_check
      _
    $region19: #{tpu_custom_call.1} parent=1 // pred_check_branch
      %22 = sbr.rel (0) target = $region21
    $region20: #{tpu_custom_call.1} parent=1 // pred_region
      _
    $region21: #{tpu_custom_call.1} parent=1 // pred_fallthru
      _
    // Predicated region
    $region22: #{tpu_custom_call.1} parent=1 // pred_check
      _
    $region23: #{tpu_custom_call.1} parent=1 // pred_check_branch
      %24 = sbr.rel (0) target = $region25
    $region24: #{tpu_custom_call.1} parent=1 // pred_region
      _
    $region25: #{tpu_custom_call.1} parent=1 // pred_fallthru
      _
    // Predicated region
    $region26: #{tpu_custom_call.1} parent=1 // pred_check
      _
    $region27: #{tpu_custom_call.1} parent=1 // pred_check_branch
      %26 = sbr.rel (0) target = $region29
    $region28: #{tpu_custom_call.1} parent=1 // pred_region
      _
    $region29: #{tpu_custom_call.1} parent=1 // pred_fallthru
      _
    %p27 = scmp.eq.s32.totalorder 0, 0
    // Predicated region
    $region30: #{tpu_custom_call.1} parent=1 // pred_check
      %p28 = pneg %p27
    $region31: #{tpu_custom_call.1} parent=1 // pred_check_branch
      %30 = sbr.rel (%p28) target = $region33
    $region32: #{tpu_custom_call.1} parent=1 // pred_region
      %vm31 = vcmask 97280
      %32 = vst.msk [vmem:[#allocation2] sm:$0xff] %vm31, 0.0
      %33 = vst.msk [vmem:[#allocation2 + $0x8] sm:$0xff] %vm31, 0.0
      %34 = vst.msk [vmem:[#allocation2 + $0x10] sm:$0xff] %vm31, 0.0
      %35 = vst.msk [vmem:[#allocation2 + $0x18] sm:$0xff] %vm31, 0.0
      %36 = vst.msk [vmem:[#allocation2 + $0x20] sm:$0xff] %vm31, 0.0
      %37 = vst.msk [vmem:[#allocation2 + $0x28] sm:$0xff] %vm31, 0.0
      %38 = vst.msk [vmem:[#allocation2 + $0x30] sm:$0xff] %vm31, 0.0
      %39 = vst.msk [vmem:[#allocation2 + $0x38] sm:$0xff] %vm31, 0.0
      %40 = vst.msk [vmem:[#allocation2 + $0x40] sm:$0xff] %vm31, 0.0
      %41 = vst.msk [vmem:[#allocation2 + $0x48] sm:$0xff] %vm31, 0.0
      %42 = vst.msk [vmem:[#allocation2 + $0x50] sm:$0xff] %vm31, 0.0
      %43 = vst.msk [vmem:[#allocation2 + $0x58] sm:$0xff] %vm31, 0.0
      %44 = vst.msk [vmem:[#allocation2 + $0x60] sm:$0xff] %vm31, 0.0
      %45 = vst.msk [vmem:[#allocation2 + $0x68] sm:$0xff] %vm31, 0.0
      %46 = vst.msk [vmem:[#allocation2 + $0x70] sm:$0xff] %vm31, 0.0
      %47 = vst.msk [vmem:[#allocation2 + $0x78] sm:$0xff] %vm31, 0.0
      %48 = vst.msk [vmem:[#allocation2 + $0x80] sm:$0xff] %vm31, 0.0
      %49 = vst.msk [vmem:[#allocation2 + $0x88] sm:$0xff] %vm31, 0.0
      %50 = vst.msk [vmem:[#allocation2 + $0x90] sm:$0xff] %vm31, 0.0
      %51 = vst.msk [vmem:[#allocation2 + $0x98] sm:$0xff] %vm31, 0.0
      %52 = vst.msk [vmem:[#allocation2 + $0xa0] sm:$0xff] %vm31, 0.0
      %53 = vst.msk [vmem:[#allocation2 + $0xa8] sm:$0xff] %vm31, 0.0
      %54 = vst.msk [vmem:[#allocation2 + $0xb0] sm:$0xff] %vm31, 0.0
      %55 = vst.msk [vmem:[#allocation2 + $0xb8] sm:$0xff] %vm31, 0.0
      %56 = vst.msk [vmem:[#allocation2 + $0xc0] sm:$0xff] %vm31, 0.0
      %57 = vst.msk [vmem:[#allocation2 + $0xc8] sm:$0xff] %vm31, 0.0
      %58 = vst.msk [vmem:[#allocation2 + $0xd0] sm:$0xff] %vm31, 0.0
      %59 = vst.msk [vmem:[#allocation2 + $0xd8] sm:$0xff] %vm31, 0.0
      %60 = vst.msk [vmem:[#allocation2 + $0xe0] sm:$0xff] %vm31, 0.0
      %61 = vst.msk [vmem:[#allocation2 + $0xe8] sm:$0xff] %vm31, 0.0
      %62 = vst.msk [vmem:[#allocation2 + $0xf0] sm:$0xff] %vm31, 0.0
      %63 = vst.msk [vmem:[#allocation2 + $0xf8] sm:$0xff] %vm31, 0.0
      %64 = vst.msk [vmem:[#allocation2 + $0x100] sm:$0xff] %vm31, 0.0
      %65 = vst.msk [vmem:[#allocation2 + $0x108] sm:$0xff] %vm31, 0.0
      %66 = vst.msk [vmem:[#allocation2 + $0x110] sm:$0xff] %vm31, 0.0
      %67 = vst.msk [vmem:[#allocation2 + $0x118] sm:$0xff] %vm31, 0.0
      %68 = vst.msk [vmem:[#allocation2 + $0x120] sm:$0xff] %vm31, 0.0
      %69 = vst.msk [vmem:[#allocation2 + $0x128] sm:$0xff] %vm31, 0.0
      %70 = vst.msk [vmem:[#allocation2 + $0x130] sm:$0xff] %vm31, 0.0
      %71 = vst.msk [vmem:[#allocation2 + $0x138] sm:$0xff] %vm31, 0.0
      %72 = vst.msk [vmem:[#allocation2 + $0x140] sm:$0xff] %vm31, 0.0
      %73 = vst.msk [vmem:[#allocation2 + $0x148] sm:$0xff] %vm31, 0.0
      %74 = vst.msk [vmem:[#allocation2 + $0x150] sm:$0xff] %vm31, 0.0
      %75 = vst.msk [vmem:[#allocation2 + $0x158] sm:$0xff] %vm31, 0.0
      %76 = vst.msk [vmem:[#allocation2 + $0x160] sm:$0xff] %vm31, 0.0
      %77 = vst.msk [vmem:[#allocation2 + $0x168] sm:$0xff] %vm31, 0.0
      %78 = vst.msk [vmem:[#allocation2 + $0x170] sm:$0xff] %vm31, 0.0
      %79 = vst.msk [vmem:[#allocation2 + $0x178] sm:$0xff] %vm31, 0.0
      %80 = vst.msk [vmem:[#allocation2 + $0x180] sm:$0xff] %vm31, 0.0
      %81 = vst.msk [vmem:[#allocation2 + $0x188] sm:$0xff] %vm31, 0.0
      %82 = vst.msk [vmem:[#allocation2 + $0x190] sm:$0xff] %vm31, 0.0
      %83 = vst.msk [vmem:[#allocation2 + $0x198] sm:$0xff] %vm31, 0.0
      %84 = vst.msk [vmem:[#allocation2 + $0x1a0] sm:$0xff] %vm31, 0.0
      %85 = vst.msk [vmem:[#allocation2 + $0x1a8] sm:$0xff] %vm31, 0.0
      %86 = vst.msk [vmem:[#allocation2 + $0x1b0] sm:$0xff] %vm31, 0.0
      %87 = vst.msk [vmem:[#allocation2 + $0x1b8] sm:$0xff] %vm31, 0.0
      %88 = vst.msk [vmem:[#allocation2 + $0x1c0] sm:$0xff] %vm31, 0.0
      %89 = vst.msk [vmem:[#allocation2 + $0x1c8] sm:$0xff] %vm31, 0.0
      %90 = vst.msk [vmem:[#allocation2 + $0x1d0] sm:$0xff] %vm31, 0.0
      %91 = vst.msk [vmem:[#allocation2 + $0x1d8] sm:$0xff] %vm31, 0.0
      %92 = vst.msk [vmem:[#allocation2 + $0x1e0] sm:$0xff] %vm31, 0.0
      %93 = vst.msk [vmem:[#allocation2 + $0x1e8] sm:$0xff] %vm31, 0.0
      %94 = vst.msk [vmem:[#allocation2 + $0x1f0] sm:$0xff] %vm31, 0.0
      %95 = vst.msk [vmem:[#allocation2 + $0x1f8] sm:$0xff] %vm31, 0.0
      %96 = vst.msk [vmem:[#allocation2 + $0x200] sm:$0xff] %vm31, 0.0
      %97 = vst.msk [vmem:[#allocation2 + $0x208] sm:$0xff] %vm31, 0.0
      %98 = vst.msk [vmem:[#allocation2 + $0x210] sm:$0xff] %vm31, 0.0
      %99 = vst.msk [vmem:[#allocation2 + $0x218] sm:$0xff] %vm31, 0.0
      %100 = vst.msk [vmem:[#allocation2 + $0x220] sm:$0xff] %vm31, 0.0
      %101 = vst.msk [vmem:[#allocation2 + $0x228] sm:$0xff] %vm31, 0.0
      %102 = vst.msk [vmem:[#allocation2 + $0x230] sm:$0xff] %vm31, 0.0
      %103 = vst.msk [vmem:[#allocation2 + $0x238] sm:$0xff] %vm31, 0.0
      %104 = vst.msk [vmem:[#allocation2 + $0x240] sm:$0xff] %vm31, 0.0
      %105 = vst.msk [vmem:[#allocation2 + $0x248] sm:$0xff] %vm31, 0.0
      %106 = vst.msk [vmem:[#allocation2 + $0x250] sm:$0xff] %vm31, 0.0
      %107 = vst.msk [vmem:[#allocation2 + $0x258] sm:$0xff] %vm31, 0.0
      %108 = vst.msk [vmem:[#allocation2 + $0x260] sm:$0xff] %vm31, 0.0
      %109 = vst.msk [vmem:[#allocation2 + $0x268] sm:$0xff] %vm31, 0.0
      %110 = vst.msk [vmem:[#allocation2 + $0x270] sm:$0xff] %vm31, 0.0
      %111 = vst.msk [vmem:[#allocation2 + $0x278] sm:$0xff] %vm31, 0.0
      %112 = vst.msk [vmem:[#allocation2 + $0x280] sm:$0xff] %vm31, 0.0
      %113 = vst.msk [vmem:[#allocation2 + $0x288] sm:$0xff] %vm31, 0.0
      %114 = vst.msk [vmem:[#allocation2 + $0x290] sm:$0xff] %vm31, 0.0
      %115 = vst.msk [vmem:[#allocation2 + $0x298] sm:$0xff] %vm31, 0.0
      %116 = vst.msk [vmem:[#allocation2 + $0x2a0] sm:$0xff] %vm31, 0.0
      %117 = vst.msk [vmem:[#allocation2 + $0x2a8] sm:$0xff] %vm31, 0.0
      %118 = vst.msk [vmem:[#allocation2 + $0x2b0] sm:$0xff] %vm31, 0.0
      %119 = vst.msk [vmem:[#allocation2 + $0x2b8] sm:$0xff] %vm31, 0.0
      %vm120 = vcmask 195584
      %121 = vst.msk [vmem:[#allocation3] sm:$0xff] %vm120, 0.0
      %122 = vst.msk [vmem:[#allocation3 + $0x8] sm:$0xff] %vm120, 0.0
      %123 = vst.msk [vmem:[#allocation3 + $0x10] sm:$0xff] %vm120, 0.0
      %124 = vst.msk [vmem:[#allocation3 + $0x18] sm:$0xff] %vm120, 0.0
      %125 = vst.msk [vmem:[#allocation3 + $0x20] sm:$0xff] %vm120, 0.0
      %126 = vst.msk [vmem:[#allocation3 + $0x28] sm:$0xff] %vm120, 0.0
      %127 = vst.msk [vmem:[#allocation3 + $0x30] sm:$0xff] %vm120, 0.0
      %128 = vst.msk [vmem:[#allocation3 + $0x38] sm:$0xff] %vm120, 0.0
      %129 = vst.msk [vmem:[#allocation3 + $0x40] sm:$0xff] %vm120, 0.0
      %130 = vst.msk [vmem:[#allocation3 + $0x48] sm:$0xff] %vm120, 0.0
      %131 = vst.msk [vmem:[#allocation3 + $0x50] sm:$0xff] %vm120, 0.0
      %132 = vst.msk [vmem:[#allocation3 + $0x58] sm:$0xff] %vm120, 0.0
      %133 = vst.msk [vmem:[#allocation3 + $0x60] sm:$0xff] %vm120, 0.0
      %134 = vst.msk [vmem:[#allocation3 + $0x68] sm:$0xff] %vm120, 0.0
      %135 = vst.msk [vmem:[#allocation3 + $0x70] sm:$0xff] %vm120, 0.0
      %136 = vst.msk [vmem:[#allocation3 + $0x78] sm:$0xff] %vm120, 0.0
      %137 = vst.msk [vmem:[#allocation3 + $0x80] sm:$0xff] %vm120, 0.0
      %138 = vst.msk [vmem:[#allocation3 + $0x88] sm:$0xff] %vm120, 0.0
      %139 = vst.msk [vmem:[#allocation3 + $0x90] sm:$0xff] %vm120, 0.0
      %140 = vst.msk [vmem:[#allocation3 + $0x98] sm:$0xff] %vm120, 0.0
      %141 = vst.msk [vmem:[#allocation3 + $0xa0] sm:$0xff] %vm120, 0.0
      %142 = vst.msk [vmem:[#allocation3 + $0xa8] sm:$0xff] %vm120, 0.0
      %143 = vst.msk [vmem:[#allocation3 + $0xb0] sm:$0xff] %vm120, 0.0
      %144 = vst.msk [vmem:[#allocation3 + $0xb8] sm:$0xff] %vm120, 0.0
      %145 = vst.msk [vmem:[#allocation3 + $0xc0] sm:$0xff] %vm120, 0.0
      %146 = vst.msk [vmem:[#allocation3 + $0xc8] sm:$0xff] %vm120, 0.0
      %147 = vst.msk [vmem:[#allocation3 + $0xd0] sm:$0xff] %vm120, 0.0
      %148 = vst.msk [vmem:[#allocation3 + $0xd8] sm:$0xff] %vm120, 0.0
      %149 = vst.msk [vmem:[#allocation3 + $0xe0] sm:$0xff] %vm120, 0.0
      %150 = vst.msk [vmem:[#allocation3 + $0xe8] sm:$0xff] %vm120, 0.0
      %151 = vst.msk [vmem:[#allocation3 + $0xf0] sm:$0xff] %vm120, 0.0
      %152 = vst.msk [vmem:[#allocation3 + $0xf8] sm:$0xff] %vm120, 0.0
      %153 = vst.msk [vmem:[#allocation3 + $0x100] sm:$0xff] %vm120, 0.0
      %154 = vst.msk [vmem:[#allocation3 + $0x108] sm:$0xff] %vm120, 0.0
      %155 = vst.msk [vmem:[#allocation3 + $0x110] sm:$0xff] %vm120, 0.0
      %156 = vst.msk [vmem:[#allocation3 + $0x118] sm:$0xff] %vm120, 0.0
      %157 = vst.msk [vmem:[#allocation3 + $0x120] sm:$0xff] %vm120, 0.0
      %158 = vst.msk [vmem:[#allocation3 + $0x128] sm:$0xff] %vm120, 0.0
      %159 = vst.msk [vmem:[#allocation3 + $0x130] sm:$0xff] %vm120, 0.0
      %160 = vst.msk [vmem:[#allocation3 + $0x138] sm:$0xff] %vm120, 0.0
      %161 = vst.msk [vmem:[#allocation3 + $0x140] sm:$0xff] %vm120, 0.0
      %162 = vst.msk [vmem:[#allocation3 + $0x148] sm:$0xff] %vm120, 0.0
      %163 = vst.msk [vmem:[#allocation3 + $0x150] sm:$0xff] %vm120, 0.0
      %164 = vst.msk [vmem:[#allocation3 + $0x158] sm:$0xff] %vm120, 0.0
      %165 = vst.msk [vmem:[#allocation3 + $0x160] sm:$0xff] %vm120, 0.0
      %166 = vst.msk [vmem:[#allocation3 + $0x168] sm:$0xff] %vm120, 0.0
      %167 = vst.msk [vmem:[#allocation3 + $0x170] sm:$0xff] %vm120, 0.0
      %168 = vst.msk [vmem:[#allocation3 + $0x178] sm:$0xff] %vm120, 0.0
      %169 = vst.msk [vmem:[#allocation3 + $0x180] sm:$0xff] %vm120, 0.0
      %170 = vst.msk [vmem:[#allocation3 + $0x188] sm:$0xff] %vm120, 0.0
      %171 = vst.msk [vmem:[#allocation3 + $0x190] sm:$0xff] %vm120, 0.0
      %172 = vst.msk [vmem:[#allocation3 + $0x198] sm:$0xff] %vm120, 0.0
      %173 = vst.msk [vmem:[#allocation3 + $0x1a0] sm:$0xff] %vm120, 0.0
      %174 = vst.msk [vmem:[#allocation3 + $0x1a8] sm:$0xff] %vm120, 0.0
      %175 = vst.msk [vmem:[#allocation3 + $0x1b0] sm:$0xff] %vm120, 0.0
      %176 = vst.msk [vmem:[#allocation3 + $0x1b8] sm:$0xff] %vm120, 0.0
      %177 = vst.msk [vmem:[#allocation3 + $0x1c0] sm:$0xff] %vm120, 0.0
      %178 = vst.msk [vmem:[#allocation3 + $0x1c8] sm:$0xff] %vm120, 0.0
      %179 = vst.msk [vmem:[#allocation3 + $0x1d0] sm:$0xff] %vm120, 0.0
      %180 = vst.msk [vmem:[#allocation3 + $0x1d8] sm:$0xff] %vm120, 0.0
      %181 = vst.msk [vmem:[#allocation3 + $0x1e0] sm:$0xff] %vm120, 0.0
      %182 = vst.msk [vmem:[#allocation3 + $0x1e8] sm:$0xff] %vm120, 0.0
      %183 = vst.msk [vmem:[#allocation3 + $0x1f0] sm:$0xff] %vm120, 0.0
      %184 = vst.msk [vmem:[#allocation3 + $0x1f8] sm:$0xff] %vm120, 0.0
      %185 = vst.msk [vmem:[#allocation3 + $0x200] sm:$0xff] %vm120, 0.0
      %186 = vst.msk [vmem:[#allocation3 + $0x208] sm:$0xff] %vm120, 0.0
      %187 = vst.msk [vmem:[#allocation3 + $0x210] sm:$0xff] %vm120, 0.0
      %188 = vst.msk [vmem:[#allocation3 + $0x218] sm:$0xff] %vm120, 0.0
      %189 = vst.msk [vmem:[#allocation3 + $0x220] sm:$0xff] %vm120, 0.0
      %190 = vst.msk [vmem:[#allocation3 + $0x228] sm:$0xff] %vm120, 0.0
      %191 = vst.msk [vmem:[#allocation3 + $0x230] sm:$0xff] %vm120, 0.0
      %192 = vst.msk [vmem:[#allocation3 + $0x238] sm:$0xff] %vm120, 0.0
      %193 = vst.msk [vmem:[#allocation3 + $0x240] sm:$0xff] %vm120, 0.0
      %194 = vst.msk [vmem:[#allocation3 + $0x248] sm:$0xff] %vm120, 0.0
      %195 = vst.msk [vmem:[#allocation3 + $0x250] sm:$0xff] %vm120, 0.0
      %196 = vst.msk [vmem:[#allocation3 + $0x258] sm:$0xff] %vm120, 0.0
      %197 = vst.msk [vmem:[#allocation3 + $0x260] sm:$0xff] %vm120, 0.0
      %198 = vst.msk [vmem:[#allocation3 + $0x268] sm:$0xff] %vm120, 0.0
      %199 = vst.msk [vmem:[#allocation3 + $0x270] sm:$0xff] %vm120, 0.0
      %200 = vst.msk [vmem:[#allocation3 + $0x278] sm:$0xff] %vm120, 0.0
      %201 = vst.msk [vmem:[#allocation3 + $0x280] sm:$0xff] %vm120, 0.0
      %202 = vst.msk [vmem:[#allocation3 + $0x288] sm:$0xff] %vm120, 0.0
      %203 = vst.msk [vmem:[#allocation3 + $0x290] sm:$0xff] %vm120, 0.0
      %204 = vst.msk [vmem:[#allocation3 + $0x298] sm:$0xff] %vm120, 0.0
      %205 = vst.msk [vmem:[#allocation3 + $0x2a0] sm:$0xff] %vm120, 0.0
      %206 = vst.msk [vmem:[#allocation3 + $0x2a8] sm:$0xff] %vm120, 0.0
      %207 = vst.msk [vmem:[#allocation3 + $0x2b0] sm:$0xff] %vm120, 0.0
      %208 = vst.msk [vmem:[#allocation3 + $0x2b8] sm:$0xff] %vm120, 0.0
      %vm209 = vcmask 392192
      %210 = vst.msk [vmem:[#allocation4] sm:$0xff] %vm209, 0.0
      %211 = vst.msk [vmem:[#allocation4 + $0x8] sm:$0xff] %vm209, 0.0
      %212 = vst.msk [vmem:[#allocation4 + $0x10] sm:$0xff] %vm209, 0.0
      %213 = vst.msk [vmem:[#allocation4 + $0x18] sm:$0xff] %vm209, 0.0
      %214 = vst.msk [vmem:[#allocation4 + $0x20] sm:$0xff] %vm209, 0.0
      %215 = vst.msk [vmem:[#allocation4 + $0x28] sm:$0xff] %vm209, 0.0
      %216 = vst.msk [vmem:[#allocation4 + $0x30] sm:$0xff] %vm209, 0.0
      %217 = vst.msk [vmem:[#allocation4 + $0x38] sm:$0xff] %vm209, 0.0
      %218 = vst.msk [vmem:[#allocation4 + $0x40] sm:$0xff] %vm209, 0.0
      %219 = vst.msk [vmem:[#allocation4 + $0x48] sm:$0xff] %vm209, 0.0
      %220 = vst.msk [vmem:[#allocation4 + $0x50] sm:$0xff] %vm209, 0.0
      %221 = vst.msk [vmem:[#allocation4 + $0x58] sm:$0xff] %vm209, 0.0
      %222 = vst.msk [vmem:[#allocation4 + $0x60] sm:$0xff] %vm209, 0.0
      %223 = vst.msk [vmem:[#allocation4 + $0x68] sm:$0xff] %vm209, 0.0
      %224 = vst.msk [vmem:[#allocation4 + $0x70] sm:$0xff] %vm209, 0.0
      %225 = vst.msk [vmem:[#allocation4 + $0x78] sm:$0xff] %vm209, 0.0
      %226 = vst.msk [vmem:[#allocation4 + $0x80] sm:$0xff] %vm209, 0.0
      %227 = vst.msk [vmem:[#allocation4 + $0x88] sm:$0xff] %vm209, 0.0
      %228 = vst.msk [vmem:[#allocation4 + $0x90] sm:$0xff] %vm209, 0.0
      %229 = vst.msk [vmem:[#allocation4 + $0x98] sm:$0xff] %vm209, 0.0
      %230 = vst.msk [vmem:[#allocation4 + $0xa0] sm:$0xff] %vm209, 0.0
      %231 = vst.msk [vmem:[#allocation4 + $0xa8] sm:$0xff] %vm209, 0.0
      %232 = vst.msk [vmem:[#allocation4 + $0xb0] sm:$0xff] %vm209, 0.0
      %233 = vst.msk [vmem:[#allocation4 + $0xb8] sm:$0xff] %vm209, 0.0
      %234 = vst.msk [vmem:[#allocation4 + $0xc0] sm:$0xff] %vm209, 0.0
      %235 = vst.msk [vmem:[#allocation4 + $0xc8] sm:$0xff] %vm209, 0.0
      %236 = vst.msk [vmem:[#allocation4 + $0xd0] sm:$0xff] %vm209, 0.0
      %237 = vst.msk [vmem:[#allocation4 + $0xd8] sm:$0xff] %vm209, 0.0
      %238 = vst.msk [vmem:[#allocation4 + $0xe0] sm:$0xff] %vm209, 0.0
      %239 = vst.msk [vmem:[#allocation4 + $0xe8] sm:$0xff] %vm209, 0.0
      %240 = vst.msk [vmem:[#allocation4 + $0xf0] sm:$0xff] %vm209, 0.0
      %241 = vst.msk [vmem:[#allocation4 + $0xf8] sm:$0xff] %vm209, 0.0
      %242 = vst.msk [vmem:[#allocation4 + $0x100] sm:$0xff] %vm209, 0.0
      %243 = vst.msk [vmem:[#allocation4 + $0x108] sm:$0xff] %vm209, 0.0
      %244 = vst.msk [vmem:[#allocation4 + $0x110] sm:$0xff] %vm209, 0.0
      %245 = vst.msk [vmem:[#allocation4 + $0x118] sm:$0xff] %vm209, 0.0
      %246 = vst.msk [vmem:[#allocation4 + $0x120] sm:$0xff] %vm209, 0.0
      %247 = vst.msk [vmem:[#allocation4 + $0x128] sm:$0xff] %vm209, 0.0
      %248 = vst.msk [vmem:[#allocation4 + $0x130] sm:$0xff] %vm209, 0.0
      %249 = vst.msk [vmem:[#allocation4 + $0x138] sm:$0xff] %vm209, 0.0
      %250 = vst.msk [vmem:[#allocation4 + $0x140] sm:$0xff] %vm209, 0.0
      %251 = vst.msk [vmem:[#allocation4 + $0x148] sm:$0xff] %vm209, 0.0
      %252 = vst.msk [vmem:[#allocation4 + $0x150] sm:$0xff] %vm209, 0.0
      %253 = vst.msk [vmem:[#allocation4 + $0x158] sm:$0xff] %vm209, 0.0
      %254 = vst.msk [vmem:[#allocation4 + $0x160] sm:$0xff] %vm209, 0.0
      %255 = vst.msk [vmem:[#allocation4 + $0x168] sm:$0xff] %vm209, 0.0
      %256 = vst.msk [vmem:[#allocation4 + $0x170] sm:$0xff] %vm209, 0.0
      %257 = vst.msk [vmem:[#allocation4 + $0x178] sm:$0xff] %vm209, 0.0
      %258 = vst.msk [vmem:[#allocation4 + $0x180] sm:$0xff] %vm209, 0.0
      %259 = vst.msk [vmem:[#allocation4 + $0x188] sm:$0xff] %vm209, 0.0
      %260 = vst.msk [vmem:[#allocation4 + $0x190] sm:$0xff] %vm209, 0.0
      %261 = vst.msk [vmem:[#allocation4 + $0x198] sm:$0xff] %vm209, 0.0
      %262 = vst.msk [vmem:[#allocation4 + $0x1a0] sm:$0xff] %vm209, 0.0
      %263 = vst.msk [vmem:[#allocation4 + $0x1a8] sm:$0xff] %vm209, 0.0
      %264 = vst.msk [vmem:[#allocation4 + $0x1b0] sm:$0xff] %vm209, 0.0
      %265 = vst.msk [vmem:[#allocation4 + $0x1b8] sm:$0xff] %vm209, 0.0
      %266 = vst.msk [vmem:[#allocation4 + $0x1c0] sm:$0xff] %vm209, 0.0
      %267 = vst.msk [vmem:[#allocation4 + $0x1c8] sm:$0xff] %vm209, 0.0
      %268 = vst.msk [vmem:[#allocation4 + $0x1d0] sm:$0xff] %vm209, 0.0
      %269 = vst.msk [vmem:[#allocation4 + $0x1d8] sm:$0xff] %vm209, 0.0
      %270 = vst.msk [vmem:[#allocation4 + $0x1e0] sm:$0xff] %vm209, 0.0
      %271 = vst.msk [vmem:[#allocation4 + $0x1e8] sm:$0xff] %vm209, 0.0
      %272 = vst.msk [vmem:[#allocation4 + $0x1f0] sm:$0xff] %vm209, 0.0
      %273 = vst.msk [vmem:[#allocation4 + $0x1f8] sm:$0xff] %vm209, 0.0
      %274 = vst.msk [vmem:[#allocation4 + $0x200] sm:$0xff] %vm209, 0.0
      %275 = vst.msk [vmem:[#allocation4 + $0x208] sm:$0xff] %vm209, 0.0
      %276 = vst.msk [vmem:[#allocation4 + $0x210] sm:$0xff] %vm209, 0.0
      %277 = vst.msk [vmem:[#allocation4 + $0x218] sm:$0xff] %vm209, 0.0
      %278 = vst.msk [vmem:[#allocation4 + $0x220] sm:$0xff] %vm209, 0.0
      %279 = vst.msk [vmem:[#allocation4 + $0x228] sm:$0xff] %vm209, 0.0
      %280 = vst.msk [vmem:[#allocation4 + $0x230] sm:$0xff] %vm209, 0.0
      %281 = vst.msk [vmem:[#allocation4 + $0x238] sm:$0xff] %vm209, 0.0
      %282 = vst.msk [vmem:[#allocation4 + $0x240] sm:$0xff] %vm209, 0.0
      %283 = vst.msk [vmem:[#allocation4 + $0x248] sm:$0xff] %vm209, 0.0
      %284 = vst.msk [vmem:[#allocation4 + $0x250] sm:$0xff] %vm209, 0.0
      %285 = vst.msk [vmem:[#allocation4 + $0x258] sm:$0xff] %vm209, 0.0
      %286 = vst.msk [vmem:[#allocation4 + $0x260] sm:$0xff] %vm209, 0.0
      %287 = vst.msk [vmem:[#allocation4 + $0x268] sm:$0xff] %vm209, 0.0
      %288 = vst.msk [vmem:[#allocation4 + $0x270] sm:$0xff] %vm209, 0.0
      %289 = vst.msk [vmem:[#allocation4 + $0x278] sm:$0xff] %vm209, 0.0
      %290 = vst.msk [vmem:[#allocation4 + $0x280] sm:$0xff] %vm209, 0.0
      %291 = vst.msk [vmem:[#allocation4 + $0x288] sm:$0xff] %vm209, 0.0
      %292 = vst.msk [vmem:[#allocation4 + $0x290] sm:$0xff] %vm209, 0.0
      %293 = vst.msk [vmem:[#allocation4 + $0x298] sm:$0xff] %vm209, 0.0
      %294 = vst.msk [vmem:[#allocation4 + $0x2a0] sm:$0xff] %vm209, 0.0
      %295 = vst.msk [vmem:[#allocation4 + $0x2a8] sm:$0xff] %vm209, 0.0
      %296 = vst.msk [vmem:[#allocation4 + $0x2b0] sm:$0xff] %vm209, 0.0
      %297 = vst.msk [vmem:[#allocation4 + $0x2b8] sm:$0xff] %vm209, 0.0
    $region33: #{tpu_custom_call.1} parent=1 // pred_fallthru
      _
    %v298 = vlaneseq
    %v299 = vshrl.u32 %v298, 7
    %v300 = vadd.s32 %v299, 8
    %v301 = vadd.s32 %v299, 16
    %v302 = vadd.s32 %v299, 24
    %v303 = vadd.s32 %v299, 32
    %v304 = vadd.s32 %v299, 40
    %v305 = vadd.s32 %v299, 48
    %v306 = vadd.s32 %v299, 56
    %v307 = vadd.s32 %v299, 64
    %v308 = vadd.s32 %v299, 72
    %v309 = vadd.s32 %v299, 80
    %v310 = vadd.s32 %v299, 88
    %v311 = vadd.s32 %v299, 96
    %v312 = vadd.s32 %v299, 104
    %v313 = vadd.s32 %v299, 112
    %v314 = vadd.s32 %v299, 120
    %v315 = vadd.s32 %v299, 128
    %v316 = vadd.s32 %v299, 136
    %v317 = vadd.s32 %v299, 144
    %v318 = vadd.s32 %v299, 152
    %v319 = vadd.s32 %v299, 160
    %v320 = vadd.s32 %v299, 168
    %v321 = vadd.s32 %v299, 176
    %v322 = vadd.s32 %v299, 184
    %v323 = vadd.s32 %v299, 192
    %v324 = vadd.s32 %v299, 200
    %v325 = vadd.s32 %v299, 208
    %v326 = vadd.s32 %v299, 216
    %v327 = vadd.s32 %v299, 224
    %v328 = vadd.s32 %v299, 232
    %v329 = vadd.s32 %v299, 240
    %v330 = vadd.s32 %v299, 248
    %v331 = vadd.s32 %v299, 256
    %v332 = vadd.s32 %v299, 264
    %v333 = vadd.s32 %v299, 272
    %v334 = vadd.s32 %v299, 280
    %v335 = vadd.s32 %v299, 288
    %v336 = vadd.s32 %v299, 296
    %v337 = vadd.s32 %v299, 304
    %v338 = vadd.s32 %v299, 312
    %v339 = vadd.s32 %v299, 320
    %v340 = vcvt.s32.f32 %v299
    %v341 = vcvt.s32.f32 %v300
    %v342 = vcvt.s32.f32 %v301
    %v343 = vcvt.s32.f32 %v302
    %v344 = vcvt.s32.f32 %v303
    %v345 = vcvt.s32.f32 %v304
    %v346 = vcvt.s32.f32 %v305
    %v347 = vcvt.s32.f32 %v306
    %v348 = vcvt.s32.f32 %v307
    %v349 = vcvt.s32.f32 %v308
    %v350 = vcvt.s32.f32 %v309
    %v351 = vcvt.s32.f32 %v310
    %v352 = vcvt.s32.f32 %v311
    %v353 = vcvt.s32.f32 %v312
    %v354 = vcvt.s32.f32 %v313
    %v355 = vcvt.s32.f32 %v314
    %v356 = vcvt.s32.f32 %v315
    %v357 = vcvt.s32.f32 %v316
    %v358 = vcvt.s32.f32 %v317
    %v359 = vcvt.s32.f32 %v318
    %v360 = vcvt.s32.f32 %v319
    %v361 = vcvt.s32.f32 %v320
    %v362 = vcvt.s32.f32 %v321
    %v363 = vcvt.s32.f32 %v322
    %v364 = vcvt.s32.f32 %v323
    %v365 = vcvt.s32.f32 %v324
    %v366 = vcvt.s32.f32 %v325
    %v367 = vcvt.s32.f32 %v326
    %v368 = vcvt.s32.f32 %v327
    %v369 = vcvt.s32.f32 %v328
    %v370 = vcvt.s32.f32 %v329
    %v371 = vcvt.s32.f32 %v330
    %v372 = vcvt.s32.f32 %v331
    %v373 = vcvt.s32.f32 %v332
    %v374 = vcvt.s32.f32 %v333
    %v375 = vcvt.s32.f32 %v334
    %v376 = vcvt.s32.f32 %v335
    %v377 = vcvt.s32.f32 %v336
    %v378 = vcvt.s32.f32 %v337
    %v379 = vcvt.s32.f32 %v338
    %v380 = vcvt.s32.f32 %v339
    %v381 = vadd.f32 %v340, 0.5
    %v382 = vadd.f32 %v341, 0.5
    %v383 = vadd.f32 %v342, 0.5
    %v384 = vadd.f32 %v343, 0.5
    %v385 = vadd.f32 %v344, 0.5
    %v386 = vadd.f32 %v345, 0.5
    %v387 = vadd.f32 %v346, 0.5
    %v388 = vadd.f32 %v347, 0.5
    %v389 = vadd.f32 %v348, 0.5
    %v390 = vadd.f32 %v349, 0.5
    %v391 = vadd.f32 %v350, 0.5
    %v392 = vadd.f32 %v351, 0.5
    %v393 = vadd.f32 %v352, 0.5
    %v394 = vadd.f32 %v353, 0.5
    %v395 = vadd.f32 %v354, 0.5
    %v396 = vadd.f32 %v355, 0.5
    %v397 = vadd.f32 %v356, 0.5
    %v398 = vadd.f32 %v357, 0.5
    %v399 = vadd.f32 %v358, 0.5
    %v400 = vadd.f32 %v359, 0.5
    %v401 = vadd.f32 %v360, 0.5
    %v402 = vadd.f32 %v361, 0.5
    %v403 = vadd.f32 %v362, 0.5
    %v404 = vadd.f32 %v363, 0.5
    %v405 = vadd.f32 %v364, 0.5
    %v406 = vadd.f32 %v365, 0.5
    %v407 = vadd.f32 %v366, 0.5
    %v408 = vadd.f32 %v367, 0.5
    %v409 = vadd.f32 %v368, 0.5
    %v410 = vadd.f32 %v369, 0.5
    %v411 = vadd.f32 %v370, 0.5
    %v412 = vadd.f32 %v371, 0.5
    %v413 = vadd.f32 %v372, 0.5
    %v414 = vadd.f32 %v373, 0.5
    %v415 = vadd.f32 %v374, 0.5
    %v416 = vadd.f32 %v375, 0.5
    %v417 = vadd.f32 %v376, 0.5
    %v418 = vadd.f32 %v377, 0.5
    %v419 = vadd.f32 %v378, 0.5
    %v420 = vadd.f32 %v379, 0.5
    %v421 = vadd.f32 %v380, 0.5
    %v422 = vmul.f32 %v381, 0.055555556
    %v423 = vmul.f32 %v382, 0.055555556
    %v424 = vmul.f32 %v383, 0.055555556
    %v425 = vmul.f32 %v384, 0.055555556
    %v426 = vmul.f32 %v385, 0.055555556
    %v427 = vmul.f32 %v386, 0.055555556
    %v428 = vmul.f32 %v387, 0.055555556
    %v429 = vmul.f32 %v388, 0.055555556
    %v430 = vmul.f32 %v389, 0.055555556
    %v431 = vmul.f32 %v390, 0.055555556
    %v432 = vmul.f32 %v391, 0.055555556
    %v433 = vmul.f32 %v392, 0.055555556
    %v434 = vmul.f32 %v393, 0.055555556
    %v435 = vmul.f32 %v394, 0.055555556
    %v436 = vmul.f32 %v395, 0.055555556
    %v437 = vmul.f32 %v396, 0.055555556
    %v438 = vmul.f32 %v397, 0.055555556
    %v439 = vmul.f32 %v398, 0.055555556
    %v440 = vmul.f32 %v399, 0.055555556
    %v441 = vmul.f32 %v400, 0.055555556
    %v442 = vmul.f32 %v401, 0.055555556
    %v443 = vmul.f32 %v402, 0.055555556
    %v444 = vmul.f32 %v403, 0.055555556
    %v445 = vmul.f32 %v404, 0.055555556
    %v446 = vmul.f32 %v405, 0.055555556
    %v447 = vmul.f32 %v406, 0.055555556
    %v448 = vmul.f32 %v407, 0.055555556
    %v449 = vmul.f32 %v408, 0.055555556
    %v450 = vmul.f32 %v409, 0.055555556
    %v451 = vmul.f32 %v410, 0.055555556
    %v452 = vmul.f32 %v411, 0.055555556
    %v453 = vmul.f32 %v412, 0.055555556
    %v454 = vmul.f32 %v413, 0.055555556
    %v455 = vmul.f32 %v414, 0.055555556
    %v456 = vmul.f32 %v415, 0.055555556
    %v457 = vmul.f32 %v416, 0.055555556
    %v458 = vmul.f32 %v417, 0.055555556
    %v459 = vmul.f32 %v418, 0.055555556
    %v460 = vmul.f32 %v419, 0.055555556
    %v461 = vmul.f32 %v420, 0.055555556
    %v462 = vmul.f32 %v421, 0.055555556
    %v463 = vfloor.f32 %v422
    %v464 = vfloor.f32 %v423
    %v465 = vfloor.f32 %v424
    %v466 = vfloor.f32 %v425
    %v467 = vfloor.f32 %v426
    %v468 = vfloor.f32 %v427
    %v469 = vfloor.f32 %v428
    %v470 = vfloor.f32 %v429
    %v471 = vfloor.f32 %v430
    %v472 = vfloor.f32 %v431
    %v473 = vfloor.f32 %v432
    %v474 = vfloor.f32 %v433
    %v475 = vfloor.f32 %v434
    %v476 = vfloor.f32 %v435
    %v477 = vfloor.f32 %v436
    %v478 = vfloor.f32 %v437
    %v479 = vfloor.f32 %v438
    %v480 = vfloor.f32 %v439
    %v481 = vfloor.f32 %v440
    %v482 = vfloor.f32 %v441
    %v483 = vfloor.f32 %v442
    %v484 = vfloor.f32 %v443
    %v485 = vfloor.f32 %v444
    %v486 = vfloor.f32 %v445
    %v487 = vfloor.f32 %v446
    %v488 = vfloor.f32 %v447
    %v489 = vfloor.f32 %v448
    %v490 = vfloor.f32 %v449
    %v491 = vfloor.f32 %v450
    %v492 = vfloor.f32 %v451
    %v493 = vfloor.f32 %v452
    %v494 = vfloor.f32 %v453
    %v495 = vfloor.f32 %v454
    %v496 = vfloor.f32 %v455
    %v497 = vfloor.f32 %v456
    %v498 = vfloor.f32 %v457
    %v499 = vfloor.f32 %v458
    %v500 = vfloor.f32 %v459
    %v501 = vfloor.f32 %v460
    %v502 = vfloor.f32 %v461
    %v503 = vfloor.f32 %v462
    %v504 = vmul.f32 %v463, 18.0
    %v505 = vmul.f32 %v464, 18.0
    %v506 = vmul.f32 %v465, 18.0
    %v507 = vmul.f32 %v466, 18.0
    %v508 = vmul.f32 %v467, 18.0
    %v509 = vmul.f32 %v468, 18.0
    %v510 = vmul.f32 %v469, 18.0
    %v511 = vmul.f32 %v470, 18.0
    %v512 = vmul.f32 %v471, 18.0
    %v513 = vmul.f32 %v472, 18.0
    %v514 = vmul.f32 %v473, 18.0
    %v515 = vmul.f32 %v474, 18.0
    %v516 = vmul.f32 %v475, 18.0
    %v517 = vmul.f32 %v476, 18.0
    %v518 = vmul.f32 %v477, 18.0
    %v519 = vmul.f32 %v478, 18.0
    %v520 = vmul.f32 %v479, 18.0
    %v521 = vmul.f32 %v480, 18.0
    %v522 = vmul.f32 %v481, 18.0
    %v523 = vmul.f32 %v482, 18.0
    %v524 = vmul.f32 %v483, 18.0
    %v525 = vmul.f32 %v484, 18.0
    %v526 = vmul.f32 %v485, 18.0
    %v527 = vmul.f32 %v486, 18.0
    %v528 = vmul.f32 %v487, 18.0
    %v529 = vmul.f32 %v488, 18.0
    %v530 = vmul.f32 %v489, 18.0
    %v531 = vmul.f32 %v490, 18.0
    %v532 = vmul.f32 %v491, 18.0
    %v533 = vmul.f32 %v492, 18.0
    %v534 = vmul.f32 %v493, 18.0
    %v535 = vmul.f32 %v494, 18.0
    %v536 = vmul.f32 %v495, 18.0
    %v537 = vmul.f32 %v496, 18.0
    %v538 = vmul.f32 %v497, 18.0
    %v539 = vmul.f32 %v498, 18.0
    %v540 = vmul.f32 %v499, 18.0
    %v541 = vmul.f32 %v500, 18.0
    %v542 = vmul.f32 %v501, 18.0
    %v543 = vmul.f32 %v502, 18.0
    %v544 = vmul.f32 %v503, 18.0
    %v545 = vsub.f32 %v340, %v504
    %v546 = vsub.f32 %v341, %v505
    %v547 = vsub.f32 %v342, %v506
    %v548 = vsub.f32 %v343, %v507
    %v549 = vsub.f32 %v344, %v508
    %v550 = vsub.f32 %v345, %v509
    %v551 = vsub.f32 %v346, %v510
    %v552 = vsub.f32 %v347, %v511
    %v553 = vsub.f32 %v348, %v512
    %v554 = vsub.f32 %v349, %v513
    %v555 = vsub.f32 %v350, %v514
    %v556 = vsub.f32 %v351, %v515
    %v557 = vsub.f32 %v352, %v516
    %v558 = vsub.f32 %v353, %v517
    %v559 = vsub.f32 %v354, %v518
    %v560 = vsub.f32 %v355, %v519
    %v561 = vsub.f32 %v356, %v520
    %v562 = vsub.f32 %v357, %v521
    %v563 = vsub.f32 %v358, %v522
    %v564 = vsub.f32 %v359, %v523
    %v565 = vsub.f32 %v360, %v524
    %v566 = vsub.f32 %v361, %v525
    %v567 = vsub.f32 %v362, %v526
    %v568 = vsub.f32 %v363, %v527
    %v569 = vsub.f32 %v364, %v528
    %v570 = vsub.f32 %v365, %v529
    %v571 = vsub.f32 %v366, %v530
    %v572 = vsub.f32 %v367, %v531
    %v573 = vsub.f32 %v368, %v532
    %v574 = vsub.f32 %v369, %v533
    %v575 = vsub.f32 %v370, %v534
    %v576 = vsub.f32 %v371, %v535
    %v577 = vsub.f32 %v372, %v536
    %v578 = vsub.f32 %v373, %v537
    %v579 = vsub.f32 %v374, %v538
    %v580 = vsub.f32 %v375, %v539
    %v581 = vsub.f32 %v376, %v540
    %v582 = vsub.f32 %v377, %v541
    %v583 = vsub.f32 %v378, %v542
    %v584 = vsub.f32 %v379, %v543
    %v585 = vsub.f32 %v380, %v544
    %vm586 = vcmp.ge.f32.partialorder %v463, 0.5
    %vm587 = vcmp.ge.f32.partialorder %v464, 0.5
    %vm588 = vcmp.ge.f32.partialorder %v465, 0.5
    %vm589 = vcmp.ge.f32.partialorder %v466, 0.5
    %vm590 = vcmp.ge.f32.partialorder %v467, 0.5
    %vm591 = vcmp.ge.f32.partialorder %v468, 0.5
    %vm592 = vcmp.ge.f32.partialorder %v469, 0.5
    %vm593 = vcmp.ge.f32.partialorder %v470, 0.5
    %vm594 = vcmp.ge.f32.partialorder %v471, 0.5
    %vm595 = vcmp.ge.f32.partialorder %v472, 0.5
    %vm596 = vcmp.ge.f32.partialorder %v473, 0.5
    %vm597 = vcmp.ge.f32.partialorder %v474, 0.5
    %vm598 = vcmp.ge.f32.partialorder %v475, 0.5
    %vm599 = vcmp.ge.f32.partialorder %v476, 0.5
    %vm600 = vcmp.ge.f32.partialorder %v477, 0.5
    %vm601 = vcmp.ge.f32.partialorder %v478, 0.5
    %vm602 = vcmp.ge.f32.partialorder %v479, 0.5
    %vm603 = vcmp.ge.f32.partialorder %v480, 0.5
    %vm604 = vcmp.ge.f32.partialorder %v481, 0.5
    %vm605 = vcmp.ge.f32.partialorder %v482, 0.5
    %vm606 = vcmp.ge.f32.partialorder %v483, 0.5
    %vm607 = vcmp.ge.f32.partialorder %v484, 0.5
    %vm608 = vcmp.ge.f32.partialorder %v485, 0.5
    %vm609 = vcmp.ge.f32.partialorder %v486, 0.5
    %vm610 = vcmp.ge.f32.partialorder %v487, 0.5
    %vm611 = vcmp.ge.f32.partialorder %v488, 0.5
    %vm612 = vcmp.ge.f32.partialorder %v489, 0.5
    %vm613 = vcmp.ge.f32.partialorder %v490, 0.5
    %vm614 = vcmp.ge.f32.partialorder %v491, 0.5
    %vm615 = vcmp.ge.f32.partialorder %v492, 0.5
    %vm616 = vcmp.ge.f32.partialorder %v493, 0.5
    %vm617 = vcmp.ge.f32.partialorder %v494, 0.5
    %vm618 = vcmp.ge.f32.partialorder %v495, 0.5
    %vm619 = vcmp.ge.f32.partialorder %v496, 0.5
    %vm620 = vcmp.ge.f32.partialorder %v497, 0.5
    %vm621 = vcmp.ge.f32.partialorder %v498, 0.5
    %vm622 = vcmp.ge.f32.partialorder %v499, 0.5
    %vm623 = vcmp.ge.f32.partialorder %v500, 0.5
    %vm624 = vcmp.ge.f32.partialorder %v501, 0.5
    %vm625 = vcmp.ge.f32.partialorder %v502, 0.5
    %vm626 = vcmp.ge.f32.partialorder %v503, 0.5
    %vm627 = vcmp.le.f32.partialorder %v463, 16.5
    %vm628 = vcmp.le.f32.partialorder %v464, 16.5
    %vm629 = vcmp.le.f32.partialorder %v465, 16.5
    %vm630 = vcmp.le.f32.partialorder %v466, 16.5
    %vm631 = vcmp.le.f32.partialorder %v467, 16.5
    %vm632 = vcmp.le.f32.partialorder %v468, 16.5
    %vm633 = vcmp.le.f32.partialorder %v469, 16.5
    %vm634 = vcmp.le.f32.partialorder %v470, 16.5
    %vm635 = vcmp.le.f32.partialorder %v471, 16.5
    %vm636 = vcmp.le.f32.partialorder %v472, 16.5
    %vm637 = vcmp.le.f32.partialorder %v473, 16.5
    %vm638 = vcmp.le.f32.partialorder %v474, 16.5
    %vm639 = vcmp.le.f32.partialorder %v475, 16.5
    %vm640 = vcmp.le.f32.partialorder %v476, 16.5
    %vm641 = vcmp.le.f32.partialorder %v477, 16.5
    %vm642 = vcmp.le.f32.partialorder %v478, 16.5
    %vm643 = vcmp.le.f32.partialorder %v479, 16.5
    %vm644 = vcmp.le.f32.partialorder %v480, 16.5
    %vm645 = vcmp.le.f32.partialorder %v481, 16.5
    %vm646 = vcmp.le.f32.partialorder %v482, 16.5
    %vm647 = vcmp.le.f32.partialorder %v483, 16.5
    %vm648 = vcmp.le.f32.partialorder %v484, 16.5
    %vm649 = vcmp.le.f32.partialorder %v485, 16.5
    %vm650 = vcmp.le.f32.partialorder %v486, 16.5
    %vm651 = vcmp.le.f32.partialorder %v487, 16.5
    %vm652 = vcmp.le.f32.partialorder %v488, 16.5
    %vm653 = vcmp.le.f32.partialorder %v489, 16.5
    %vm654 = vcmp.le.f32.partialorder %v490, 16.5
    %vm655 = vcmp.le.f32.partialorder %v491, 16.5
    %vm656 = vcmp.le.f32.partialorder %v492, 16.5
    %vm657 = vcmp.le.f32.partialorder %v493, 16.5
    %vm658 = vcmp.le.f32.partialorder %v494, 16.5
    %vm659 = vcmp.le.f32.partialorder %v495, 16.5
    %vm660 = vcmp.le.f32.partialorder %v496, 16.5
    %vm661 = vcmp.le.f32.partialorder %v497, 16.5
    %vm662 = vcmp.le.f32.partialorder %v498, 16.5
    %vm663 = vcmp.le.f32.partialorder %v499, 16.5
    %vm664 = vcmp.le.f32.partialorder %v500, 16.5
    %vm665 = vcmp.le.f32.partialorder %v501, 16.5
    %vm666 = vcmp.le.f32.partialorder %v502, 16.5
    %vm667 = vcmp.le.f32.partialorder %v503, 16.5
    %vm668 = vmand %vm586, %vm627
    %vm669 = vmand %vm587, %vm628
    %vm670 = vmand %vm588, %vm629
    %vm671 = vmand %vm589, %vm630
    %vm672 = vmand %vm590, %vm631
    %vm673 = vmand %vm591, %vm632
    %vm674 = vmand %vm592, %vm633
    %vm675 = vmand %vm593, %vm634
    %vm676 = vmand %vm594, %vm635
    %vm677 = vmand %vm595, %vm636
    %vm678 = vmand %vm596, %vm637
    %vm679 = vmand %vm597, %vm638
    %vm680 = vmand %vm598, %vm639
    %vm681 = vmand %vm599, %vm640
    %vm682 = vmand %vm600, %vm641
    %vm683 = vmand %vm601, %vm642
    %vm684 = vmand %vm602, %vm643
    %vm685 = vmand %vm603, %vm644
    %vm686 = vmand %vm604, %vm645
    %vm687 = vmand %vm605, %vm646
    %vm688 = vmand %vm606, %vm647
    %vm689 = vmand %vm607, %vm648
    %vm690 = vmand %vm608, %vm649
    %vm691 = vmand %vm609, %vm650
    %vm692 = vmand %vm610, %vm651
    %vm693 = vmand %vm611, %vm652
    %vm694 = vmand %vm612, %vm653
    %vm695 = vmand %vm613, %vm654
    %vm696 = vmand %vm614, %vm655
    %vm697 = vmand %vm615, %vm656
    %vm698 = vmand %vm616, %vm657
    %vm699 = vmand %vm617, %vm658
    %vm700 = vmand %vm618, %vm659
    %vm701 = vmand %vm619, %vm660
    %vm702 = vmand %vm620, %vm661
    %vm703 = vmand %vm621, %vm662
    %vm704 = vmand %vm622, %vm663
    %vm705 = vmand %vm623, %vm664
    %vm706 = vmand %vm624, %vm665
    %vm707 = vmand %vm625, %vm666
    %vm708 = vmand %vm626, %vm667
    %vm709 = vcmp.ge.f32.partialorder %v545, 0.5
    %vm710 = vcmp.ge.f32.partialorder %v546, 0.5
    %vm711 = vcmp.ge.f32.partialorder %v547, 0.5
    %vm712 = vcmp.ge.f32.partialorder %v548, 0.5
    %vm713 = vcmp.ge.f32.partialorder %v549, 0.5
    %vm714 = vcmp.ge.f32.partialorder %v550, 0.5
    %vm715 = vcmp.ge.f32.partialorder %v551, 0.5
    %vm716 = vcmp.ge.f32.partialorder %v552, 0.5
    %vm717 = vcmp.ge.f32.partialorder %v553, 0.5
    %vm718 = vcmp.ge.f32.partialorder %v554, 0.5
    %vm719 = vcmp.ge.f32.partialorder %v555, 0.5
    %vm720 = vcmp.ge.f32.partialorder %v556, 0.5
    %vm721 = vcmp.ge.f32.partialorder %v557, 0.5
    %vm722 = vcmp.ge.f32.partialorder %v558, 0.5
    %vm723 = vcmp.ge.f32.partialorder %v559, 0.5
    %vm724 = vcmp.ge.f32.partialorder %v560, 0.5
    %vm725 = vcmp.ge.f32.partialorder %v561, 0.5
    %vm726 = vcmp.ge.f32.partialorder %v562, 0.5
    %vm727 = vcmp.ge.f32.partialorder %v563, 0.5
    %vm728 = vcmp.ge.f32.partialorder %v564, 0.5
    %vm729 = vcmp.ge.f32.partialorder %v565, 0.5
    %vm730 = vcmp.ge.f32.partialorder %v566, 0.5
    %vm731 = vcmp.ge.f32.partialorder %v567, 0.5
    %vm732 = vcmp.ge.f32.partialorder %v568, 0.5
    %vm733 = vcmp.ge.f32.partialorder %v569, 0.5
    %vm734 = vcmp.ge.f32.partialorder %v570, 0.5
    %vm735 = vcmp.ge.f32.partialorder %v571, 0.5
    %vm736 = vcmp.ge.f32.partialorder %v572, 0.5
    %vm737 = vcmp.ge.f32.partialorder %v573, 0.5
    %vm738 = vcmp.ge.f32.partialorder %v574, 0.5
    %vm739 = vcmp.ge.f32.partialorder %v575, 0.5
    %vm740 = vcmp.ge.f32.partialorder %v576, 0.5
    %vm741 = vcmp.ge.f32.partialorder %v577, 0.5
    %vm742 = vcmp.ge.f32.partialorder %v578, 0.5
    %vm743 = vcmp.ge.f32.partialorder %v579, 0.5
    %vm744 = vcmp.ge.f32.partialorder %v580, 0.5
    %vm745 = vcmp.ge.f32.partialorder %v581, 0.5
    %vm746 = vcmp.ge.f32.partialorder %v582, 0.5
    %vm747 = vcmp.ge.f32.partialorder %v583, 0.5
    %vm748 = vcmp.ge.f32.partialorder %v584, 0.5
    %vm749 = vcmp.ge.f32.partialorder %v585, 0.5
    %vm750 = vmand %vm668, %vm709
    %vm751 = vmand %vm669, %vm710
    %vm752 = vmand %vm670, %vm711
    %vm753 = vmand %vm671, %vm712
    %vm754 = vmand %vm672, %vm713
    %vm755 = vmand %vm673, %vm714
    %vm756 = vmand %vm674, %vm715
    %vm757 = vmand %vm675, %vm716
    %vm758 = vmand %vm676, %vm717
    %vm759 = vmand %vm677, %vm718
    %vm760 = vmand %vm678, %vm719
    %vm761 = vmand %vm679, %vm720
    %vm762 = vmand %vm680, %vm721
    %vm763 = vmand %vm681, %vm722
    %vm764 = vmand %vm682, %vm723
    %vm765 = vmand %vm683, %vm724
    %vm766 = vmand %vm684, %vm725
    %vm767 = vmand %vm685, %vm726
    %vm768 = vmand %vm686, %vm727
    %vm769 = vmand %vm687, %vm728
    %vm770 = vmand %vm688, %vm729
    %vm771 = vmand %vm689, %vm730
    %vm772 = vmand %vm690, %vm731
    %vm773 = vmand %vm691, %vm732
    %vm774 = vmand %vm692, %vm733
    %vm775 = vmand %vm693, %vm734
    %vm776 = vmand %vm694, %vm735
    %vm777 = vmand %vm695, %vm736
    %vm778 = vmand %vm696, %vm737
    %vm779 = vmand %vm697, %vm738
    %vm780 = vmand %vm698, %vm739
    %vm781 = vmand %vm699, %vm740
    %vm782 = vmand %vm700, %vm741
    %vm783 = vmand %vm701, %vm742
    %vm784 = vmand %vm702, %vm743
    %vm785 = vmand %vm703, %vm744
    %vm786 = vmand %vm704, %vm745
    %vm787 = vmand %vm705, %vm746
    %vm788 = vmand %vm706, %vm747
    %vm789 = vmand %vm707, %vm748
    %vm790 = vmand %vm708, %vm749
    %vm791 = vcmp.le.f32.partialorder %v545, 16.5
    %vm792 = vcmp.le.f32.partialorder %v546, 16.5
    %vm793 = vcmp.le.f32.partialorder %v547, 16.5
    %vm794 = vcmp.le.f32.partialorder %v548, 16.5
    %vm795 = vcmp.le.f32.partialorder %v549, 16.5
    %vm796 = vcmp.le.f32.partialorder %v550, 16.5
    %vm797 = vcmp.le.f32.partialorder %v551, 16.5
    %vm798 = vcmp.le.f32.partialorder %v552, 16.5
    %vm799 = vcmp.le.f32.partialorder %v553, 16.5
    %vm800 = vcmp.le.f32.partialorder %v554, 16.5
    %vm801 = vcmp.le.f32.partialorder %v555, 16.5
    %vm802 = vcmp.le.f32.partialorder %v556, 16.5
    %vm803 = vcmp.le.f32.partialorder %v557, 16.5
    %vm804 = vcmp.le.f32.partialorder %v558, 16.5
    %vm805 = vcmp.le.f32.partialorder %v559, 16.5
    %vm806 = vcmp.le.f32.partialorder %v560, 16.5
    %vm807 = vcmp.le.f32.partialorder %v561, 16.5
    %vm808 = vcmp.le.f32.partialorder %v562, 16.5
    %vm809 = vcmp.le.f32.partialorder %v563, 16.5
    %vm810 = vcmp.le.f32.partialorder %v564, 16.5
    %vm811 = vcmp.le.f32.partialorder %v565, 16.5
    %vm812 = vcmp.le.f32.partialorder %v566, 16.5
    %vm813 = vcmp.le.f32.partialorder %v567, 16.5
    %vm814 = vcmp.le.f32.partialorder %v568, 16.5
    %vm815 = vcmp.le.f32.partialorder %v569, 16.5
    %vm816 = vcmp.le.f32.partialorder %v570, 16.5
    %vm817 = vcmp.le.f32.partialorder %v571, 16.5
    %vm818 = vcmp.le.f32.partialorder %v572, 16.5
    %vm819 = vcmp.le.f32.partialorder %v573, 16.5
    %vm820 = vcmp.le.f32.partialorder %v574, 16.5
    %vm821 = vcmp.le.f32.partialorder %v575, 16.5
    %vm822 = vcmp.le.f32.partialorder %v576, 16.5
    %vm823 = vcmp.le.f32.partialorder %v577, 16.5
    %vm824 = vcmp.le.f32.partialorder %v578, 16.5
    %vm825 = vcmp.le.f32.partialorder %v579, 16.5
    %vm826 = vcmp.le.f32.partialorder %v580, 16.5
    %vm827 = vcmp.le.f32.partialorder %v581, 16.5
    %vm828 = vcmp.le.f32.partialorder %v582, 16.5
    %vm829 = vcmp.le.f32.partialorder %v583, 16.5
    %vm830 = vcmp.le.f32.partialorder %v584, 16.5
    %vm831 = vcmp.le.f32.partialorder %v585, 16.5
    %vm832 = vmand %vm750, %vm791
    %vm833 = vmand %vm751, %vm792
    %vm834 = vmand %vm752, %vm793
    %vm835 = vmand %vm753, %vm794
    %vm836 = vmand %vm754, %vm795
    %vm837 = vmand %vm755, %vm796
    %vm838 = vmand %vm756, %vm797
    %vm839 = vmand %vm757, %vm798
    %vm840 = vmand %vm758, %vm799
    %vm841 = vmand %vm759, %vm800
    %vm842 = vmand %vm760, %vm801
    %vm843 = vmand %vm761, %vm802
    %vm844 = vmand %vm762, %vm803
    %vm845 = vmand %vm763, %vm804
    %vm846 = vmand %vm764, %vm805
    %vm847 = vmand %vm765, %vm806
    %vm848 = vmand %vm766, %vm807
    %vm849 = vmand %vm767, %vm808
    %vm850 = vmand %vm768, %vm809
    %vm851 = vmand %vm769, %vm810
    %vm852 = vmand %vm770, %vm811
    %vm853 = vmand %vm771, %vm812
    %vm854 = vmand %vm772, %vm813
    %vm855 = vmand %vm773, %vm814
    %vm856 = vmand %vm774, %vm815
    %vm857 = vmand %vm775, %vm816
    %vm858 = vmand %vm776, %vm817
    %vm859 = vmand %vm777, %vm818
    %vm860 = vmand %vm778, %vm819
    %vm861 = vmand %vm779, %vm820
    %vm862 = vmand %vm780, %vm821
    %vm863 = vmand %vm781, %vm822
    %vm864 = vmand %vm782, %vm823
    %vm865 = vmand %vm783, %vm824
    %vm866 = vmand %vm784, %vm825
    %vm867 = vmand %vm785, %vm826
    %vm868 = vmand %vm786, %vm827
    %vm869 = vmand %vm787, %vm828
    %vm870 = vmand %vm788, %vm829
    %vm871 = vmand %vm789, %vm830
    %vm872 = vmand %vm790, %vm831
    %v873 = vld [vmem:[%s0] sm:$0xff]
    %v874 = vld [vmem:[%s0 + $0x8] sm:$0xff]
    %v875 = vld [vmem:[%s0 + $0x10] sm:$0xff]
    %v876 = vld [vmem:[%s0 + $0x18] sm:$0xff]
    %v877 = vld [vmem:[%s0 + $0x20] sm:$0xff]
    %v878 = vld [vmem:[%s0 + $0x28] sm:$0xff]
    %v879 = vld [vmem:[%s0 + $0x30] sm:$0xff]
    %v880 = vld [vmem:[%s0 + $0x38] sm:$0xff]
    %v881 = vld [vmem:[%s0 + $0x40] sm:$0xff]
    %v882 = vld [vmem:[%s0 + $0x48] sm:$0xff]
    %v883 = vld [vmem:[%s0 + $0x50] sm:$0xff]
    %v884 = vld [vmem:[%s0 + $0x58] sm:$0xff]
    %v885 = vld [vmem:[%s0 + $0x60] sm:$0xff]
    %v886 = vld [vmem:[%s0 + $0x68] sm:$0xff]
    %v887 = vld [vmem:[%s0 + $0x70] sm:$0xff]
    %v888 = vld [vmem:[%s0 + $0x78] sm:$0xff]
    %v889 = vld [vmem:[%s0 + $0x80] sm:$0xff]
    %v890 = vld [vmem:[%s0 + $0x88] sm:$0xff]
    %v891 = vld [vmem:[%s0 + $0x90] sm:$0xff]
    %v892 = vld [vmem:[%s0 + $0x98] sm:$0xff]
    %v893 = vld [vmem:[%s0 + $0xa0] sm:$0xff]
    %v894 = vld [vmem:[%s0 + $0xa8] sm:$0xff]
    %v895 = vld [vmem:[%s0 + $0xb0] sm:$0xff]
    %v896 = vld [vmem:[%s0 + $0xb8] sm:$0xff]
    %v897 = vld [vmem:[%s0 + $0xc0] sm:$0xff]
    %v898 = vld [vmem:[%s0 + $0xc8] sm:$0xff]
    %v899 = vld [vmem:[%s0 + $0xd0] sm:$0xff]
    %v900 = vld [vmem:[%s0 + $0xd8] sm:$0xff]
    %v901 = vld [vmem:[%s0 + $0xe0] sm:$0xff]
    %v902 = vld [vmem:[%s0 + $0xe8] sm:$0xff]
    %v903 = vld [vmem:[%s0 + $0xf0] sm:$0xff]
    %v904 = vld [vmem:[%s0 + $0xf8] sm:$0xff]
    %v905 = vld [vmem:[%s0 + $0x100] sm:$0xff]
    %v906 = vld [vmem:[%s0 + $0x108] sm:$0xff]
    %v907 = vld [vmem:[%s0 + $0x110] sm:$0xff]
    %v908 = vld [vmem:[%s0 + $0x118] sm:$0xff]
    %v909 = vld [vmem:[%s0 + $0x120] sm:$0xff]
    %v910 = vld [vmem:[%s0 + $0x128] sm:$0xff]
    %v911 = vld [vmem:[%s0 + $0x130] sm:$0xff]
    %v912 = vld [vmem:[%s0 + $0x138] sm:$0xff]
    %v913 = vld [vmem:[%s0 + $0x140] sm:$0xff]
    %v914 = vld [vmem:[%s0 + $0x148] sm:$0xff]
    %v915 = vld [vmem:[%s0 + $0x150] sm:$0xff]
    %v916 = vld [vmem:[%s0 + $0x158] sm:$0xff]
    %v917 = vld [vmem:[%s0 + $0x160] sm:$0xff]
    %v918 = vld [vmem:[%s0 + $0x168] sm:$0xff]
    %v919 = vld [vmem:[%s0 + $0x170] sm:$0xff]
    %v920 = vld [vmem:[%s0 + $0x178] sm:$0xff]
    %v921 = vld [vmem:[%s0 + $0x180] sm:$0xff]
    %v922 = vld [vmem:[%s0 + $0x188] sm:$0xff]
    %v923 = vld [vmem:[%s0 + $0x190] sm:$0xff]
    %v924 = vld [vmem:[%s0 + $0x198] sm:$0xff]
    %v925 = vld [vmem:[%s0 + $0x1a0] sm:$0xff]
    %v926 = vld [vmem:[%s0 + $0x1a8] sm:$0xff]
    %v927 = vld [vmem:[%s0 + $0x1b0] sm:$0xff]
    %v928 = vld [vmem:[%s0 + $0x1b8] sm:$0xff]
    %v929 = vld [vmem:[%s0 + $0x1c0] sm:$0xff]
    %v930 = vld [vmem:[%s0 + $0x1c8] sm:$0xff]
    %v931 = vld [vmem:[%s0 + $0x1d0] sm:$0xff]
    %v932 = vld [vmem:[%s0 + $0x1d8] sm:$0xff]
    %v933 = vld [vmem:[%s0 + $0x1e0] sm:$0xff]
    %v934 = vld [vmem:[%s0 + $0x1e8] sm:$0xff]
    %v935 = vld [vmem:[%s0 + $0x1f0] sm:$0xff]
    %v936 = vld [vmem:[%s0 + $0x1f8] sm:$0xff]
    %v937 = vld [vmem:[%s0 + $0x200] sm:$0xff]
    %v938 = vld [vmem:[%s0 + $0x208] sm:$0xff]
    %v939 = vld [vmem:[%s0 + $0x210] sm:$0xff]
    %v940 = vld [vmem:[%s0 + $0x218] sm:$0xff]
    %v941 = vld [vmem:[%s0 + $0x220] sm:$0xff]
    %v942 = vld [vmem:[%s0 + $0x228] sm:$0xff]
    %v943 = vld [vmem:[%s0 + $0x230] sm:$0xff]
    %v944 = vld [vmem:[%s0 + $0x238] sm:$0xff]
    %v945 = vld [vmem:[%s0 + $0x240] sm:$0xff]
    %v946 = vld [vmem:[%s0 + $0x248] sm:$0xff]
    %v947 = vld [vmem:[%s0 + $0x250] sm:$0xff]
    %v948 = vld [vmem:[%s0 + $0x258] sm:$0xff]
    %v949 = vld [vmem:[%s0 + $0x260] sm:$0xff]
    %v950 = vld [vmem:[%s0 + $0x268] sm:$0xff]
    %v951 = vld [vmem:[%s0 + $0x270] sm:$0xff]
    %v952 = vld [vmem:[%s0 + $0x278] sm:$0xff]
    %v953 = vld [vmem:[%s0 + $0x280] sm:$0xff]
    %v954 = vld [vmem:[%s0 + $0x288] sm:$0xff]
    %vm955 = vcmask 31744
    %956 = vst.msk [vmem:[#allocation2 + $0x18] sm:$0xff] %vm955, %v873
    %957 = vst.msk [vmem:[#allocation2 + $0x20] sm:$0xff] %vm955, %v874
    %958 = vst.msk [vmem:[#allocation2 + $0x28] sm:$0xff] %vm955, %v875
    %959 = vst.msk [vmem:[#allocation2 + $0x30] sm:$0xff] %vm955, %v876
    %960 = vst.msk [vmem:[#allocation2 + $0x38] sm:$0xff] %vm955, %v877
    %961 = vst.msk [vmem:[#allocation2 + $0x40] sm:$0xff] %vm955, %v878
    %962 = vst.msk [vmem:[#allocation2 + $0x48] sm:$0xff] %vm955, %v879
    %963 = vst.msk [vmem:[#allocation2 + $0x50] sm:$0xff] %vm955, %v880
    %964 = vst.msk [vmem:[#allocation2 + $0x58] sm:$0xff] %vm955, %v881
    %965 = vst.msk [vmem:[#allocation2 + $0x60] sm:$0xff] %vm955, %v882
    %966 = vst.msk [vmem:[#allocation2 + $0x68] sm:$0xff] %vm955, %v883
    %967 = vst.msk [vmem:[#allocation2 + $0x70] sm:$0xff] %vm955, %v884
    %968 = vst.msk [vmem:[#allocation2 + $0x78] sm:$0xff] %vm955, %v885
    %969 = vst.msk [vmem:[#allocation2 + $0x80] sm:$0xff] %vm955, %v886
    %970 = vst.msk [vmem:[#allocation2 + $0x88] sm:$0xff] %vm955, %v887
    %971 = vst.msk [vmem:[#allocation2 + $0x90] sm:$0xff] %vm955, %v888
    %972 = vst.msk [vmem:[#allocation2 + $0x98] sm:$0xff] %vm955, %v889
    %973 = vst.msk [vmem:[#allocation2 + $0xa0] sm:$0xff] %vm955, %v890
    %974 = vst.msk [vmem:[#allocation2 + $0xa8] sm:$0xff] %vm955, %v891
    %975 = vst.msk [vmem:[#allocation2 + $0xb0] sm:$0xff] %vm955, %v892
    %976 = vst.msk [vmem:[#allocation2 + $0xb8] sm:$0xff] %vm955, %v893
    %977 = vst.msk [vmem:[#allocation2 + $0xc0] sm:$0xff] %vm955, %v894
    %978 = vst.msk [vmem:[#allocation2 + $0xc8] sm:$0xff] %vm955, %v895
    %979 = vst.msk [vmem:[#allocation2 + $0xd0] sm:$0xff] %vm955, %v896
    %980 = vst.msk [vmem:[#allocation2 + $0xd8] sm:$0xff] %vm955, %v897
    %981 = vst.msk [vmem:[#allocation2 + $0xe0] sm:$0xff] %vm955, %v898
    %982 = vst.msk [vmem:[#allocation2 + $0xe8] sm:$0xff] %vm955, %v899
    %983 = vst.msk [vmem:[#allocation2 + $0xf0] sm:$0xff] %vm955, %v900
    %984 = vst.msk [vmem:[#allocation2 + $0xf8] sm:$0xff] %vm955, %v901
    %985 = vst.msk [vmem:[#allocation2 + $0x100] sm:$0xff] %vm955, %v902
    %986 = vst.msk [vmem:[#allocation2 + $0x108] sm:$0xff] %vm955, %v903
    %987 = vst.msk [vmem:[#allocation2 + $0x110] sm:$0xff] %vm955, %v904
    %988 = vst.msk [vmem:[#allocation2 + $0x118] sm:$0xff] %vm955, %v905
    %989 = vst.msk [vmem:[#allocation2 + $0x120] sm:$0xff] %vm955, %v906
    %990 = vst.msk [vmem:[#allocation2 + $0x128] sm:$0xff] %vm955, %v907
    %991 = vst.msk [vmem:[#allocation2 + $0x130] sm:$0xff] %vm955, %v908
    %992 = vst.msk [vmem:[#allocation2 + $0x138] sm:$0xff] %vm955, %v909
    %993 = vst.msk [vmem:[#allocation2 + $0x140] sm:$0xff] %vm955, %v910
    %994 = vst.msk [vmem:[#allocation2 + $0x148] sm:$0xff] %vm955, %v911
    %995 = vst.msk [vmem:[#allocation2 + $0x150] sm:$0xff] %vm955, %v912
    %996 = vst.msk [vmem:[#allocation2 + $0x158] sm:$0xff] %vm955, %v913
    %997 = vst.msk [vmem:[#allocation2 + $0x160] sm:$0xff] %vm955, %v914
    %998 = vst.msk [vmem:[#allocation2 + $0x168] sm:$0xff] %vm955, %v915
    %999 = vst.msk [vmem:[#allocation2 + $0x170] sm:$0xff] %vm955, %v916
    %1000 = vst.msk [vmem:[#allocation2 + $0x178] sm:$0xff] %vm955, %v917
    %1001 = vst.msk [vmem:[#allocation2 + $0x180] sm:$0xff] %vm955, %v918
    %1002 = vst.msk [vmem:[#allocation2 + $0x188] sm:$0xff] %vm955, %v919
    %1003 = vst.msk [vmem:[#allocation2 + $0x190] sm:$0xff] %vm955, %v920
    %1004 = vst.msk [vmem:[#allocation2 + $0x198] sm:$0xff] %vm955, %v921
    %1005 = vst.msk [vmem:[#allocation2 + $0x1a0] sm:$0xff] %vm955, %v922
    %1006 = vst.msk [vmem:[#allocation2 + $0x1a8] sm:$0xff] %vm955, %v923
    %1007 = vst.msk [vmem:[#allocation2 + $0x1b0] sm:$0xff] %vm955, %v924
    %1008 = vst.msk [vmem:[#allocation2 + $0x1b8] sm:$0xff] %vm955, %v925
    %1009 = vst.msk [vmem:[#allocation2 + $0x1c0] sm:$0xff] %vm955, %v926
    %1010 = vst.msk [vmem:[#allocation2 + $0x1c8] sm:$0xff] %vm955, %v927
    %1011 = vst.msk [vmem:[#allocation2 + $0x1d0] sm:$0xff] %vm955, %v928
    %1012 = vst.msk [vmem:[#allocation2 + $0x1d8] sm:$0xff] %vm955, %v929
    %1013 = vst.msk [vmem:[#allocation2 + $0x1e0] sm:$0xff] %vm955, %v930
    %1014 = vst.msk [vmem:[#allocation2 + $0x1e8] sm:$0xff] %vm955, %v931
    %1015 = vst.msk [vmem:[#allocation2 + $0x1f0] sm:$0xff] %vm955, %v932
    %1016 = vst.msk [vmem:[#allocation2 + $0x1f8] sm:$0xff] %vm955, %v933
    %1017 = vst.msk [vmem:[#allocation2 + $0x200] sm:$0xff] %vm955, %v934
    %1018 = vst.msk [vmem:[#allocation2 + $0x208] sm:$0xff] %vm955, %v935
    %1019 = vst.msk [vmem:[#allocation2 + $0x210] sm:$0xff] %vm955, %v936
    %1020 = vst.msk [vmem:[#allocation2 + $0x218] sm:$0xff] %vm955, %v937
    %1021 = vst.msk [vmem:[#allocation2 + $0x220] sm:$0xff] %vm955, %v938
    %1022 = vst.msk [vmem:[#allocation2 + $0x228] sm:$0xff] %vm955, %v939
    %1023 = vst.msk [vmem:[#allocation2 + $0x230] sm:$0xff] %vm955, %v940
    %1024 = vst.msk [vmem:[#allocation2 + $0x238] sm:$0xff] %vm955, %v941
    %1025 = vst.msk [vmem:[#allocation2 + $0x240] sm:$0xff] %vm955, %v942
    %1026 = vst.msk [vmem:[#allocation2 + $0x248] sm:$0xff] %vm955, %v943
    %1027 = vst.msk [vmem:[#allocation2 + $0x250] sm:$0xff] %vm955, %v944
    %1028 = vst.msk [vmem:[#allocation2 + $0x258] sm:$0xff] %vm955, %v945
    %1029 = vst.msk [vmem:[#allocation2 + $0x260] sm:$0xff] %vm955, %v946
    %1030 = vst.msk [vmem:[#allocation2 + $0x268] sm:$0xff] %vm955, %v947
    %1031 = vst.msk [vmem:[#allocation2 + $0x270] sm:$0xff] %vm955, %v948
    %1032 = vst.msk [vmem:[#allocation2 + $0x278] sm:$0xff] %vm955, %v949
    %1033 = vst.msk [vmem:[#allocation2 + $0x280] sm:$0xff] %vm955, %v950
    %1034 = vst.msk [vmem:[#allocation2 + $0x288] sm:$0xff] %vm955, %v951
    %1035 = vst.msk [vmem:[#allocation2 + $0x290] sm:$0xff] %vm955, %v952
    %1036 = vst.msk [vmem:[#allocation2 + $0x298] sm:$0xff] %vm955, %v953
    %1037 = vst.msk [vmem:[#allocation2 + $0x2a0] sm:$0xff] %vm955, %v954
    %v1038 = vld [vmem:[#allocation2 + $0x17] sm:$0xff]
    %v1039 = vld [vmem:[#allocation2 + $0x1f] sm:$0xff]
    %v1040 = vld [vmem:[#allocation2 + $0x27] sm:$0xff]
    %v1041 = vld [vmem:[#allocation2 + $0x2f] sm:$0xff]
    %v1042 = vld [vmem:[#allocation2 + $0x37] sm:$0xff]
    %v1043 = vld [vmem:[#allocation2 + $0x3f] sm:$0xff]
    %v1044 = vld [vmem:[#allocation2 + $0x47] sm:$0xff]
    %v1045 = vld [vmem:[#allocation2 + $0x4f] sm:$0xff]
    %v1046 = vld [vmem:[#allocation2 + $0x57] sm:$0xff]
    %v1047 = vld [vmem:[#allocation2 + $0x5f] sm:$0xff]
    %v1048 = vld [vmem:[#allocation2 + $0x67] sm:$0xff]
    %v1049 = vld [vmem:[#allocation2 + $0x6f] sm:$0xff]
    %v1050 = vld [vmem:[#allocation2 + $0x77] sm:$0xff]
    %v1051 = vld [vmem:[#allocation2 + $0x7f] sm:$0xff]
    %v1052 = vld [vmem:[#allocation2 + $0x87] sm:$0xff]
    %v1053 = vld [vmem:[#allocation2 + $0x8f] sm:$0xff]
    %v1054 = vld [vmem:[#allocation2 + $0x97] sm:$0xff]
    %v1055 = vld [vmem:[#allocation2 + $0x9f] sm:$0xff]
    %v1056 = vld [vmem:[#allocation2 + $0xa7] sm:$0xff]
    %v1057 = vld [vmem:[#allocation2 + $0xaf] sm:$0xff]
    %v1058 = vld [vmem:[#allocation2 + $0xb7] sm:$0xff]
    %v1059 = vld [vmem:[#allocation2 + $0xbf] sm:$0xff]
    %v1060 = vld [vmem:[#allocation2 + $0xc7] sm:$0xff]
    %v1061 = vld [vmem:[#allocation2 + $0xcf] sm:$0xff]
    %v1062 = vld [vmem:[#allocation2 + $0xd7] sm:$0xff]
    %v1063 = vld [vmem:[#allocation2 + $0xdf] sm:$0xff]
    %v1064 = vld [vmem:[#allocation2 + $0xe7] sm:$0xff]
    %v1065 = vld [vmem:[#allocation2 + $0xef] sm:$0xff]
    %v1066 = vld [vmem:[#allocation2 + $0xf7] sm:$0xff]
    %v1067 = vld [vmem:[#allocation2 + $0xff] sm:$0xff]
    %v1068 = vld [vmem:[#allocation2 + $0x107] sm:$0xff]
    %v1069 = vld [vmem:[#allocation2 + $0x10f] sm:$0xff]
    %v1070 = vld [vmem:[#allocation2 + $0x117] sm:$0xff]
    %v1071 = vld [vmem:[#allocation2 + $0x11f] sm:$0xff]
    %v1072 = vld [vmem:[#allocation2 + $0x127] sm:$0xff]
    %v1073 = vld [vmem:[#allocation2 + $0x12f] sm:$0xff]
    %v1074 = vld [vmem:[#allocation2 + $0x137] sm:$0xff]
    %v1075 = vld [vmem:[#allocation2 + $0x13f] sm:$0xff]
    %v1076 = vld [vmem:[#allocation2 + $0x147] sm:$0xff]
    %v1077 = vld [vmem:[#allocation2 + $0x14f] sm:$0xff]
    %v1078 = vld [vmem:[#allocation2 + $0x157] sm:$0xff]
    %v1079 = vld [vmem:[#allocation2 + $0x15f] sm:$0xff]
    %v1080 = vld [vmem:[#allocation2 + $0x167] sm:$0xff]
    %v1081 = vld [vmem:[#allocation2 + $0x16f] sm:$0xff]
    %v1082 = vld [vmem:[#allocation2 + $0x177] sm:$0xff]
    %v1083 = vld [vmem:[#allocation2 + $0x17f] sm:$0xff]
    %v1084 = vld [vmem:[#allocation2 + $0x187] sm:$0xff]
    %v1085 = vld [vmem:[#allocation2 + $0x18f] sm:$0xff]
    %v1086 = vld [vmem:[#allocation2 + $0x197] sm:$0xff]
    %v1087 = vld [vmem:[#allocation2 + $0x19f] sm:$0xff]
    %v1088 = vld [vmem:[#allocation2 + $0x1a7] sm:$0xff]
    %v1089 = vld [vmem:[#allocation2 + $0x1af] sm:$0xff]
    %v1090 = vld [vmem:[#allocation2 + $0x1b7] sm:$0xff]
    %v1091 = vld [vmem:[#allocation2 + $0x1bf] sm:$0xff]
    %v1092 = vld [vmem:[#allocation2 + $0x1c7] sm:$0xff]
    %v1093 = vld [vmem:[#allocation2 + $0x1cf] sm:$0xff]
    %v1094 = vld [vmem:[#allocation2 + $0x1d7] sm:$0xff]
    %v1095 = vld [vmem:[#allocation2 + $0x1df] sm:$0xff]
    %v1096 = vld [vmem:[#allocation2 + $0x1e7] sm:$0xff]
    %v1097 = vld [vmem:[#allocation2 + $0x1ef] sm:$0xff]
    %v1098 = vld [vmem:[#allocation2 + $0x1f7] sm:$0xff]
    %v1099 = vld [vmem:[#allocation2 + $0x1ff] sm:$0xff]
    %v1100 = vld [vmem:[#allocation2 + $0x207] sm:$0xff]
    %v1101 = vld [vmem:[#allocation2 + $0x20f] sm:$0xff]
    %v1102 = vld [vmem:[#allocation2 + $0x217] sm:$0xff]
    %v1103 = vld [vmem:[#allocation2 + $0x21f] sm:$0xff]
    %v1104 = vld [vmem:[#allocation2 + $0x227] sm:$0xff]
    %v1105 = vld [vmem:[#allocation2 + $0x22f] sm:$0xff]
    %v1106 = vld [vmem:[#allocation2 + $0x237] sm:$0xff]
    %v1107 = vld [vmem:[#allocation2 + $0x23f] sm:$0xff]
    %v1108 = vld [vmem:[#allocation2 + $0x247] sm:$0xff]
    %v1109 = vld [vmem:[#allocation2 + $0x24f] sm:$0xff]
    %v1110 = vld [vmem:[#allocation2 + $0x257] sm:$0xff]
    %v1111 = vld [vmem:[#allocation2 + $0x25f] sm:$0xff]
    %v1112 = vld [vmem:[#allocation2 + $0x267] sm:$0xff]
    %v1113 = vld [vmem:[#allocation2 + $0x26f] sm:$0xff]
    %v1114 = vld [vmem:[#allocation2 + $0x277] sm:$0xff]
    %v1115 = vld [vmem:[#allocation2 + $0x27f] sm:$0xff]
    %v1116 = vld [vmem:[#allocation2 + $0x287] sm:$0xff]
    %v1117 = vld [vmem:[#allocation2 + $0x28f] sm:$0xff]
    %v1118 = vld [vmem:[#allocation2 + $0x297] sm:$0xff]
    %v1119 = vld [vmem:[#allocation2 + $0x29f] sm:$0xff]
    %v1120 = vld [vmem:[#allocation2 + $0x19] sm:$0xff]
    %v1121 = vld [vmem:[#allocation2 + $0x21] sm:$0xff]
    %v1122 = vld [vmem:[#allocation2 + $0x29] sm:$0xff]
    %v1123 = vld [vmem:[#allocation2 + $0x31] sm:$0xff]
    %v1124 = vld [vmem:[#allocation2 + $0x39] sm:$0xff]
    %v1125 = vld [vmem:[#allocation2 + $0x41] sm:$0xff]
    %v1126 = vld [vmem:[#allocation2 + $0x49] sm:$0xff]
    %v1127 = vld [vmem:[#allocation2 + $0x51] sm:$0xff]
    %v1128 = vld [vmem:[#allocation2 + $0x59] sm:$0xff]
    %v1129 = vld [vmem:[#allocation2 + $0x61] sm:$0xff]
    %v1130 = vld [vmem:[#allocation2 + $0x69] sm:$0xff]
    %v1131 = vld [vmem:[#allocation2 + $0x71] sm:$0xff]
    %v1132 = vld [vmem:[#allocation2 + $0x79] sm:$0xff]
    %v1133 = vld [vmem:[#allocation2 + $0x81] sm:$0xff]
    %v1134 = vld [vmem:[#allocation2 + $0x89] sm:$0xff]
    %v1135 = vld [vmem:[#allocation2 + $0x91] sm:$0xff]
    %v1136 = vld [vmem:[#allocation2 + $0x99] sm:$0xff]
    %v1137 = vld [vmem:[#allocation2 + $0xa1] sm:$0xff]
    %v1138 = vld [vmem:[#allocation2 + $0xa9] sm:$0xff]
    %v1139 = vld [vmem:[#allocation2 + $0xb1] sm:$0xff]
    %v1140 = vld [vmem:[#allocation2 + $0xb9] sm:$0xff]
    %v1141 = vld [vmem:[#allocation2 + $0xc1] sm:$0xff]
    %v1142 = vld [vmem:[#allocation2 + $0xc9] sm:$0xff]
    %v1143 = vld [vmem:[#allocation2 + $0xd1] sm:$0xff]
    %v1144 = vld [vmem:[#allocation2 + $0xd9] sm:$0xff]
    %v1145 = vld [vmem:[#allocation2 + $0xe1] sm:$0xff]
    %v1146 = vld [vmem:[#allocation2 + $0xe9] sm:$0xff]
    %v1147 = vld [vmem:[#allocation2 + $0xf1] sm:$0xff]
    %v1148 = vld [vmem:[#allocation2 + $0xf9] sm:$0xff]
    %v1149 = vld [vmem:[#allocation2 + $0x101] sm:$0xff]
    %v1150 = vld [vmem:[#allocation2 + $0x109] sm:$0xff]
    %v1151 = vld [vmem:[#allocation2 + $0x111] sm:$0xff]
    %v1152 = vld [vmem:[#allocation2 + $0x119] sm:$0xff]
    %v1153 = vld [vmem:[#allocation2 + $0x121] sm:$0xff]
    %v1154 = vld [vmem:[#allocation2 + $0x129] sm:$0xff]
    %v1155 = vld [vmem:[#allocation2 + $0x131] sm:$0xff]
    %v1156 = vld [vmem:[#allocation2 + $0x139] sm:$0xff]
    %v1157 = vld [vmem:[#allocation2 + $0x141] sm:$0xff]
    %v1158 = vld [vmem:[#allocation2 + $0x149] sm:$0xff]
    %v1159 = vld [vmem:[#allocation2 + $0x151] sm:$0xff]
    %v1160 = vld [vmem:[#allocation2 + $0x159] sm:$0xff]
    %v1161 = vld [vmem:[#allocation2 + $0x161] sm:$0xff]
    %v1162 = vld [vmem:[#allocation2 + $0x169] sm:$0xff]
    %v1163 = vld [vmem:[#allocation2 + $0x171] sm:$0xff]
    %v1164 = vld [vmem:[#allocation2 + $0x179] sm:$0xff]
    %v1165 = vld [vmem:[#allocation2 + $0x181] sm:$0xff]
    %v1166 = vld [vmem:[#allocation2 + $0x189] sm:$0xff]
    %v1167 = vld [vmem:[#allocation2 + $0x191] sm:$0xff]
    %v1168 = vld [vmem:[#allocation2 + $0x199] sm:$0xff]
    %v1169 = vld [vmem:[#allocation2 + $0x1a1] sm:$0xff]
    %v1170 = vld [vmem:[#allocation2 + $0x1a9] sm:$0xff]
    %v1171 = vld [vmem:[#allocation2 + $0x1b1] sm:$0xff]
    %v1172 = vld [vmem:[#allocation2 + $0x1b9] sm:$0xff]
    %v1173 = vld [vmem:[#allocation2 + $0x1c1] sm:$0xff]
    %v1174 = vld [vmem:[#allocation2 + $0x1c9] sm:$0xff]
    %v1175 = vld [vmem:[#allocation2 + $0x1d1] sm:$0xff]
    %v1176 = vld [vmem:[#allocation2 + $0x1d9] sm:$0xff]
    %v1177 = vld [vmem:[#allocation2 + $0x1e1] sm:$0xff]
    %v1178 = vld [vmem:[#allocation2 + $0x1e9] sm:$0xff]
    %v1179 = vld [vmem:[#allocation2 + $0x1f1] sm:$0xff]
    %v1180 = vld [vmem:[#allocation2 + $0x1f9] sm:$0xff]
    %v1181 = vld [vmem:[#allocation2 + $0x201] sm:$0xff]
    %v1182 = vld [vmem:[#allocation2 + $0x209] sm:$0xff]
    %v1183 = vld [vmem:[#allocation2 + $0x211] sm:$0xff]
    %v1184 = vld [vmem:[#allocation2 + $0x219] sm:$0xff]
    %v1185 = vld [vmem:[#allocation2 + $0x221] sm:$0xff]
    %v1186 = vld [vmem:[#allocation2 + $0x229] sm:$0xff]
    %v1187 = vld [vmem:[#allocation2 + $0x231] sm:$0xff]
    %v1188 = vld [vmem:[#allocation2 + $0x239] sm:$0xff]
    %v1189 = vld [vmem:[#allocation2 + $0x241] sm:$0xff]
    %v1190 = vld [vmem:[#allocation2 + $0x249] sm:$0xff]
    %v1191 = vld [vmem:[#allocation2 + $0x251] sm:$0xff]
    %v1192 = vld [vmem:[#allocation2 + $0x259] sm:$0xff]
    %v1193 = vld [vmem:[#allocation2 + $0x261] sm:$0xff]
    %v1194 = vld [vmem:[#allocation2 + $0x269] sm:$0xff]
    %v1195 = vld [vmem:[#allocation2 + $0x271] sm:$0xff]
    %v1196 = vld [vmem:[#allocation2 + $0x279] sm:$0xff]
    %v1197 = vld [vmem:[#allocation2 + $0x281] sm:$0xff]
    %v1198 = vld [vmem:[#allocation2 + $0x289] sm:$0xff]
    %v1199 = vld [vmem:[#allocation2 + $0x291] sm:$0xff]
    %v1200 = vld [vmem:[#allocation2 + $0x299] sm:$0xff]
    %v1201 = vld [vmem:[#allocation2 + $0x2a1] sm:$0xff]
    %1284 = vrot.lane.b32.xlu0 %v1038, 4
    %v1285 = vpop.permute.xlu0 %1284
    %1286 = vrot.lane.b32.xlu0 %v1039, 4
    %v1287 = vpop.permute.xlu0 %1286
    %1288 = vrot.lane.b32.xlu0 %v1040, 4
    %v1289 = vpop.permute.xlu0 %1288
    %1290 = vrot.lane.b32.xlu0 %v1041, 4
    %v1291 = vpop.permute.xlu0 %1290
    %1292 = vrot.lane.b32.xlu0 %v1042, 4
    %v1293 = vpop.permute.xlu0 %1292
    %1294 = vrot.lane.b32.xlu0 %v1043, 4
    %v1295 = vpop.permute.xlu0 %1294
    %1296 = vrot.lane.b32.xlu0 %v1044, 4
    %v1297 = vpop.permute.xlu0 %1296
    %1298 = vrot.lane.b32.xlu0 %v1045, 4
    %v1299 = vpop.permute.xlu0 %1298
    %1300 = vrot.lane.b32.xlu0 %v1046, 4
    %v1301 = vpop.permute.xlu0 %1300
    %1302 = vrot.lane.b32.xlu0 %v1047, 4
    %v1303 = vpop.permute.xlu0 %1302
    %1304 = vrot.lane.b32.xlu0 %v1048, 4
    %v1305 = vpop.permute.xlu0 %1304
    %1306 = vrot.lane.b32.xlu0 %v1049, 4
    %v1307 = vpop.permute.xlu0 %1306
    %1308 = vrot.lane.b32.xlu0 %v1050, 4
    %v1309 = vpop.permute.xlu0 %1308
    %1310 = vrot.lane.b32.xlu0 %v1051, 4
    %v1311 = vpop.permute.xlu0 %1310
    %1312 = vrot.lane.b32.xlu0 %v1052, 4
    %v1313 = vpop.permute.xlu0 %1312
    %1314 = vrot.lane.b32.xlu0 %v1053, 4
    %v1315 = vpop.permute.xlu0 %1314
    %1316 = vrot.lane.b32.xlu0 %v1054, 4
    %v1317 = vpop.permute.xlu0 %1316
    %1318 = vrot.lane.b32.xlu0 %v1055, 4
    %v1319 = vpop.permute.xlu0 %1318
    %1320 = vrot.lane.b32.xlu0 %v1056, 4
    %v1321 = vpop.permute.xlu0 %1320
    %1322 = vrot.lane.b32.xlu0 %v1057, 4
    %v1323 = vpop.permute.xlu0 %1322
    %1324 = vrot.lane.b32.xlu0 %v1058, 4
    %v1325 = vpop.permute.xlu0 %1324
    %1326 = vrot.lane.b32.xlu0 %v1059, 4
    %v1327 = vpop.permute.xlu0 %1326
    %1328 = vrot.lane.b32.xlu0 %v1060, 4
    %v1329 = vpop.permute.xlu0 %1328
    %1330 = vrot.lane.b32.xlu0 %v1061, 4
    %v1331 = vpop.permute.xlu0 %1330
    %1332 = vrot.lane.b32.xlu0 %v1062, 4
    %v1333 = vpop.permute.xlu0 %1332
    %1334 = vrot.lane.b32.xlu0 %v1063, 4
    %v1335 = vpop.permute.xlu0 %1334
    %1336 = vrot.lane.b32.xlu0 %v1064, 4
    %v1337 = vpop.permute.xlu0 %1336
    %1338 = vrot.lane.b32.xlu0 %v1065, 4
    %v1339 = vpop.permute.xlu0 %1338
    %1340 = vrot.lane.b32.xlu0 %v1066, 4
    %v1341 = vpop.permute.xlu0 %1340
    %1342 = vrot.lane.b32.xlu0 %v1067, 4
    %v1343 = vpop.permute.xlu0 %1342
    %1344 = vrot.lane.b32.xlu0 %v1068, 4
    %v1345 = vpop.permute.xlu0 %1344
    %1346 = vrot.lane.b32.xlu0 %v1069, 4
    %v1347 = vpop.permute.xlu0 %1346
    %1348 = vrot.lane.b32.xlu0 %v1070, 4
    %v1349 = vpop.permute.xlu0 %1348
    %1350 = vrot.lane.b32.xlu0 %v1071, 4
    %v1351 = vpop.permute.xlu0 %1350
    %1352 = vrot.lane.b32.xlu0 %v1072, 4
    %v1353 = vpop.permute.xlu0 %1352
    %1354 = vrot.lane.b32.xlu0 %v1073, 4
    %v1355 = vpop.permute.xlu0 %1354
    %1356 = vrot.lane.b32.xlu0 %v1074, 4
    %v1357 = vpop.permute.xlu0 %1356
    %1358 = vrot.lane.b32.xlu0 %v1075, 4
    %v1359 = vpop.permute.xlu0 %1358
    %1360 = vrot.lane.b32.xlu0 %v1076, 4
    %v1361 = vpop.permute.xlu0 %1360
    %1362 = vrot.lane.b32.xlu0 %v1077, 4
    %v1363 = vpop.permute.xlu0 %1362
    %1364 = vrot.lane.b32.xlu0 %v1078, 4
    %v1365 = vpop.permute.xlu0 %1364
    %1366 = vrot.lane.b32.xlu0 %v1079, 4
    %v1367 = vpop.permute.xlu0 %1366
    %1368 = vrot.lane.b32.xlu0 %v1080, 4
    %v1369 = vpop.permute.xlu0 %1368
    %1370 = vrot.lane.b32.xlu0 %v1081, 4
    %v1371 = vpop.permute.xlu0 %1370
    %1372 = vrot.lane.b32.xlu0 %v1082, 4
    %v1373 = vpop.permute.xlu0 %1372
    %1374 = vrot.lane.b32.xlu0 %v1083, 4
    %v1375 = vpop.permute.xlu0 %1374
    %1376 = vrot.lane.b32.xlu0 %v1084, 4
    %v1377 = vpop.permute.xlu0 %1376
    %1378 = vrot.lane.b32.xlu0 %v1085, 4
    %v1379 = vpop.permute.xlu0 %1378
    %1380 = vrot.lane.b32.xlu0 %v1086, 4
    %v1381 = vpop.permute.xlu0 %1380
    %1382 = vrot.lane.b32.xlu0 %v1087, 4
    %v1383 = vpop.permute.xlu0 %1382
    %1384 = vrot.lane.b32.xlu0 %v1088, 4
    %v1385 = vpop.permute.xlu0 %1384
    %1386 = vrot.lane.b32.xlu0 %v1089, 4
    %v1387 = vpop.permute.xlu0 %1386
    %1388 = vrot.lane.b32.xlu0 %v1090, 4
    %v1389 = vpop.permute.xlu0 %1388
    %1390 = vrot.lane.b32.xlu0 %v1091, 4
    %v1391 = vpop.permute.xlu0 %1390
    %1392 = vrot.lane.b32.xlu0 %v1092, 4
    %v1393 = vpop.permute.xlu0 %1392
    %1394 = vrot.lane.b32.xlu0 %v1093, 4
    %v1395 = vpop.permute.xlu0 %1394
    %1396 = vrot.lane.b32.xlu0 %v1094, 4
    %v1397 = vpop.permute.xlu0 %1396
    %1398 = vrot.lane.b32.xlu0 %v1095, 4
    %v1399 = vpop.permute.xlu0 %1398
    %1400 = vrot.lane.b32.xlu0 %v1096, 4
    %v1401 = vpop.permute.xlu0 %1400
    %1402 = vrot.lane.b32.xlu0 %v1097, 4
    %v1403 = vpop.permute.xlu0 %1402
    %1404 = vrot.lane.b32.xlu0 %v1098, 4
    %v1405 = vpop.permute.xlu0 %1404
    %1406 = vrot.lane.b32.xlu0 %v1099, 4
    %v1407 = vpop.permute.xlu0 %1406
    %1408 = vrot.lane.b32.xlu0 %v1100, 4
    %v1409 = vpop.permute.xlu0 %1408
    %1410 = vrot.lane.b32.xlu0 %v1101, 4
    %v1411 = vpop.permute.xlu0 %1410
    %1412 = vrot.lane.b32.xlu0 %v1102, 4
    %v1413 = vpop.permute.xlu0 %1412
    %1414 = vrot.lane.b32.xlu0 %v1103, 4
    %v1415 = vpop.permute.xlu0 %1414
    %1416 = vrot.lane.b32.xlu0 %v1104, 4
    %v1417 = vpop.permute.xlu0 %1416
    %1418 = vrot.lane.b32.xlu0 %v1105, 4
    %v1419 = vpop.permute.xlu0 %1418
    %1420 = vrot.lane.b32.xlu0 %v1106, 4
    %v1421 = vpop.permute.xlu0 %1420
    %1422 = vrot.lane.b32.xlu0 %v1107, 4
    %v1423 = vpop.permute.xlu0 %1422
    %1424 = vrot.lane.b32.xlu0 %v1108, 4
    %v1425 = vpop.permute.xlu0 %1424
    %1426 = vrot.lane.b32.xlu0 %v1109, 4
    %v1427 = vpop.permute.xlu0 %1426
    %1428 = vrot.lane.b32.xlu0 %v1110, 4
    %v1429 = vpop.permute.xlu0 %1428
    %1430 = vrot.lane.b32.xlu0 %v1111, 4
    %v1431 = vpop.permute.xlu0 %1430
    %1432 = vrot.lane.b32.xlu0 %v1112, 4
    %v1433 = vpop.permute.xlu0 %1432
    %1434 = vrot.lane.b32.xlu0 %v1113, 4
    %v1435 = vpop.permute.xlu0 %1434
    %1436 = vrot.lane.b32.xlu0 %v1114, 4
    %v1437 = vpop.permute.xlu0 %1436
    %1438 = vrot.lane.b32.xlu0 %v1115, 4
    %v1439 = vpop.permute.xlu0 %1438
    %1440 = vrot.lane.b32.xlu0 %v1116, 4
    %v1441 = vpop.permute.xlu0 %1440
    %1442 = vrot.lane.b32.xlu0 %v1117, 4
    %v1443 = vpop.permute.xlu0 %1442
    %1444 = vrot.lane.b32.xlu0 %v1118, 4
    %v1445 = vpop.permute.xlu0 %1444
    %1446 = vrot.lane.b32.xlu0 %v1119, 4
    %v1447 = vpop.permute.xlu0 %1446
    %1612 = vrot.lane.b32.xlu0 %v1120, 8
    %v1613 = vpop.permute.xlu0 %1612
    %1614 = vrot.lane.b32.xlu0 %v1121, 8
    %v1615 = vpop.permute.xlu0 %1614
    %1616 = vrot.lane.b32.xlu0 %v1122, 8
    %v1617 = vpop.permute.xlu0 %1616
    %1618 = vrot.lane.b32.xlu0 %v1123, 8
    %v1619 = vpop.permute.xlu0 %1618
    %1620 = vrot.lane.b32.xlu0 %v1124, 8
    %v1621 = vpop.permute.xlu0 %1620
    %1622 = vrot.lane.b32.xlu0 %v1125, 8
    %v1623 = vpop.permute.xlu0 %1622
    %1624 = vrot.lane.b32.xlu0 %v1126, 8
    %v1625 = vpop.permute.xlu0 %1624
    %1626 = vrot.lane.b32.xlu0 %v1127, 8
    %v1627 = vpop.permute.xlu0 %1626
    %1628 = vrot.lane.b32.xlu0 %v1128, 8
    %v1629 = vpop.permute.xlu0 %1628
    %1630 = vrot.lane.b32.xlu0 %v1129, 8
    %v1631 = vpop.permute.xlu0 %1630
    %1632 = vrot.lane.b32.xlu0 %v1130, 8
    %v1633 = vpop.permute.xlu0 %1632
    %1634 = vrot.lane.b32.xlu0 %v1131, 8
    %v1635 = vpop.permute.xlu0 %1634
    %1636 = vrot.lane.b32.xlu0 %v1132, 8
    %v1637 = vpop.permute.xlu0 %1636
    %1638 = vrot.lane.b32.xlu0 %v1133, 8
    %v1639 = vpop.permute.xlu0 %1638
    %1640 = vrot.lane.b32.xlu0 %v1134, 8
    %v1641 = vpop.permute.xlu0 %1640
    %1642 = vrot.lane.b32.xlu0 %v1135, 8
    %v1643 = vpop.permute.xlu0 %1642
    %1644 = vrot.lane.b32.xlu0 %v1136, 8
    %v1645 = vpop.permute.xlu0 %1644
    %1646 = vrot.lane.b32.xlu0 %v1137, 8
    %v1647 = vpop.permute.xlu0 %1646
    %1648 = vrot.lane.b32.xlu0 %v1138, 8
    %v1649 = vpop.permute.xlu0 %1648
    %1650 = vrot.lane.b32.xlu0 %v1139, 8
    %v1651 = vpop.permute.xlu0 %1650
    %1652 = vrot.lane.b32.xlu0 %v1140, 8
    %v1653 = vpop.permute.xlu0 %1652
    %1654 = vrot.lane.b32.xlu0 %v1141, 8
    %v1655 = vpop.permute.xlu0 %1654
    %1656 = vrot.lane.b32.xlu0 %v1142, 8
    %v1657 = vpop.permute.xlu0 %1656
    %1658 = vrot.lane.b32.xlu0 %v1143, 8
    %v1659 = vpop.permute.xlu0 %1658
    %1660 = vrot.lane.b32.xlu0 %v1144, 8
    %v1661 = vpop.permute.xlu0 %1660
    %1662 = vrot.lane.b32.xlu0 %v1145, 8
    %v1663 = vpop.permute.xlu0 %1662
    %1664 = vrot.lane.b32.xlu0 %v1146, 8
    %v1665 = vpop.permute.xlu0 %1664
    %1666 = vrot.lane.b32.xlu0 %v1147, 8
    %v1667 = vpop.permute.xlu0 %1666
    %1668 = vrot.lane.b32.xlu0 %v1148, 8
    %v1669 = vpop.permute.xlu0 %1668
    %1670 = vrot.lane.b32.xlu0 %v1149, 8
    %v1671 = vpop.permute.xlu0 %1670
    %1672 = vrot.lane.b32.xlu0 %v1150, 8
    %v1673 = vpop.permute.xlu0 %1672
    %1674 = vrot.lane.b32.xlu0 %v1151, 8
    %v1675 = vpop.permute.xlu0 %1674
    %1676 = vrot.lane.b32.xlu0 %v1152, 8
    %v1677 = vpop.permute.xlu0 %1676
    %1678 = vrot.lane.b32.xlu0 %v1153, 8
    %v1679 = vpop.permute.xlu0 %1678
    %1680 = vrot.lane.b32.xlu0 %v1154, 8
    %v1681 = vpop.permute.xlu0 %1680
    %1682 = vrot.lane.b32.xlu0 %v1155, 8
    %v1683 = vpop.permute.xlu0 %1682
    %1684 = vrot.lane.b32.xlu0 %v1156, 8
    %v1685 = vpop.permute.xlu0 %1684
    %1686 = vrot.lane.b32.xlu0 %v1157, 8
    %v1687 = vpop.permute.xlu0 %1686
    %1688 = vrot.lane.b32.xlu0 %v1158, 8
    %v1689 = vpop.permute.xlu0 %1688
    %1690 = vrot.lane.b32.xlu0 %v1159, 8
    %v1691 = vpop.permute.xlu0 %1690
    %1692 = vrot.lane.b32.xlu0 %v1160, 8
    %v1693 = vpop.permute.xlu0 %1692
    %1694 = vrot.lane.b32.xlu0 %v1161, 8
    %v1695 = vpop.permute.xlu0 %1694
    %1696 = vrot.lane.b32.xlu0 %v1162, 8
    %v1697 = vpop.permute.xlu0 %1696
    %1698 = vrot.lane.b32.xlu0 %v1163, 8
    %v1699 = vpop.permute.xlu0 %1698
    %1700 = vrot.lane.b32.xlu0 %v1164, 8
    %v1701 = vpop.permute.xlu0 %1700
    %1702 = vrot.lane.b32.xlu0 %v1165, 8
    %v1703 = vpop.permute.xlu0 %1702
    %1704 = vrot.lane.b32.xlu0 %v1166, 8
    %v1705 = vpop.permute.xlu0 %1704
    %1706 = vrot.lane.b32.xlu0 %v1167, 8
    %v1707 = vpop.permute.xlu0 %1706
    %1708 = vrot.lane.b32.xlu0 %v1168, 8
    %v1709 = vpop.permute.xlu0 %1708
    %1710 = vrot.lane.b32.xlu0 %v1169, 8
    %v1711 = vpop.permute.xlu0 %1710
    %1712 = vrot.lane.b32.xlu0 %v1170, 8
    %v1713 = vpop.permute.xlu0 %1712
    %1714 = vrot.lane.b32.xlu0 %v1171, 8
    %v1715 = vpop.permute.xlu0 %1714
    %1716 = vrot.lane.b32.xlu0 %v1172, 8
    %v1717 = vpop.permute.xlu0 %1716
    %1718 = vrot.lane.b32.xlu0 %v1173, 8
    %v1719 = vpop.permute.xlu0 %1718
    %1720 = vrot.lane.b32.xlu0 %v1174, 8
    %v1721 = vpop.permute.xlu0 %1720
    %1722 = vrot.lane.b32.xlu0 %v1175, 8
    %v1723 = vpop.permute.xlu0 %1722
    %1724 = vrot.lane.b32.xlu0 %v1176, 8
    %v1725 = vpop.permute.xlu0 %1724
    %1726 = vrot.lane.b32.xlu0 %v1177, 8
    %v1727 = vpop.permute.xlu0 %1726
    %1728 = vrot.lane.b32.xlu0 %v1178, 8
    %v1729 = vpop.permute.xlu0 %1728
    %1730 = vrot.lane.b32.xlu0 %v1179, 8
    %v1731 = vpop.permute.xlu0 %1730
    %1732 = vrot.lane.b32.xlu0 %v1180, 8
    %v1733 = vpop.permute.xlu0 %1732
    %1734 = vrot.lane.b32.xlu0 %v1181, 8
    %v1735 = vpop.permute.xlu0 %1734
    %1736 = vrot.lane.b32.xlu0 %v1182, 8
    %v1737 = vpop.permute.xlu0 %1736
    %1738 = vrot.lane.b32.xlu0 %v1183, 8
    %v1739 = vpop.permute.xlu0 %1738
    %1740 = vrot.lane.b32.xlu0 %v1184, 8
    %v1741 = vpop.permute.xlu0 %1740
    %1742 = vrot.lane.b32.xlu0 %v1185, 8
    %v1743 = vpop.permute.xlu0 %1742
    %1744 = vrot.lane.b32.xlu0 %v1186, 8
    %v1745 = vpop.permute.xlu0 %1744
    %1746 = vrot.lane.b32.xlu0 %v1187, 8
    %v1747 = vpop.permute.xlu0 %1746
    %1748 = vrot.lane.b32.xlu0 %v1188, 8
    %v1749 = vpop.permute.xlu0 %1748
    %1750 = vrot.lane.b32.xlu0 %v1189, 8
    %v1751 = vpop.permute.xlu0 %1750
    %1752 = vrot.lane.b32.xlu0 %v1190, 8
    %v1753 = vpop.permute.xlu0 %1752
    %1754 = vrot.lane.b32.xlu0 %v1191, 8
    %v1755 = vpop.permute.xlu0 %1754
    %1756 = vrot.lane.b32.xlu0 %v1192, 8
    %v1757 = vpop.permute.xlu0 %1756
    %1758 = vrot.lane.b32.xlu0 %v1193, 8
    %v1759 = vpop.permute.xlu0 %1758
    %1760 = vrot.lane.b32.xlu0 %v1194, 8
    %v1761 = vpop.permute.xlu0 %1760
    %1762 = vrot.lane.b32.xlu0 %v1195, 8
    %v1763 = vpop.permute.xlu0 %1762
    %1764 = vrot.lane.b32.xlu0 %v1196, 8
    %v1765 = vpop.permute.xlu0 %1764
    %1766 = vrot.lane.b32.xlu0 %v1197, 8
    %v1767 = vpop.permute.xlu0 %1766
    %1768 = vrot.lane.b32.xlu0 %v1198, 8
    %v1769 = vpop.permute.xlu0 %1768
    %1770 = vrot.lane.b32.xlu0 %v1199, 8
    %v1771 = vpop.permute.xlu0 %1770
    %1772 = vrot.lane.b32.xlu0 %v1200, 8
    %v1773 = vpop.permute.xlu0 %1772
    %1774 = vrot.lane.b32.xlu0 %v1201, 8
    %v1775 = vpop.permute.xlu0 %1774
    %v1858 = vsel %vm955, %v873, %v1285
    %v1859 = vsel %vm955, %v874, %v1287
    %v1860 = vsel %vm955, %v875, %v1289
    %v1861 = vsel %vm955, %v876, %v1291
    %v1862 = vsel %vm955, %v877, %v1293
    %v1863 = vsel %vm955, %v878, %v1295
    %v1864 = vsel %vm955, %v879, %v1297
    %v1865 = vsel %vm955, %v880, %v1299
    %v1866 = vsel %vm955, %v881, %v1301
    %v1867 = vsel %vm955, %v882, %v1303
    %v1868 = vsel %vm955, %v883, %v1305
    %v1869 = vsel %vm955, %v884, %v1307
    %v1870 = vsel %vm955, %v885, %v1309
    %v1871 = vsel %vm955, %v886, %v1311
    %v1872 = vsel %vm955, %v887, %v1313
    %v1873 = vsel %vm955, %v888, %v1315
    %v1874 = vsel %vm955, %v889, %v1317
    %v1875 = vsel %vm955, %v890, %v1319
    %v1876 = vsel %vm955, %v891, %v1321
    %v1877 = vsel %vm955, %v892, %v1323
    %v1878 = vsel %vm955, %v893, %v1325
    %v1879 = vsel %vm955, %v894, %v1327
    %v1880 = vsel %vm955, %v895, %v1329
    %v1881 = vsel %vm955, %v896, %v1331
    %v1882 = vsel %vm955, %v897, %v1333
    %v1883 = vsel %vm955, %v898, %v1335
    %v1884 = vsel %vm955, %v899, %v1337
    %v1885 = vsel %vm955, %v900, %v1339
    %v1886 = vsel %vm955, %v901, %v1341
    %v1887 = vsel %vm955, %v902, %v1343
    %v1888 = vsel %vm955, %v903, %v1345
    %v1889 = vsel %vm955, %v904, %v1347
    %v1890 = vsel %vm955, %v905, %v1349
    %v1891 = vsel %vm955, %v906, %v1351
    %v1892 = vsel %vm955, %v907, %v1353
    %v1893 = vsel %vm955, %v908, %v1355
    %v1894 = vsel %vm955, %v909, %v1357
    %v1895 = vsel %vm955, %v910, %v1359
    %v1896 = vsel %vm955, %v911, %v1361
    %v1897 = vsel %vm955, %v912, %v1363
    %v1898 = vsel %vm955, %v913, %v1365
    %v1899 = vsel %vm955, %v914, %v1367
    %v1900 = vsel %vm955, %v915, %v1369
    %v1901 = vsel %vm955, %v916, %v1371
    %v1902 = vsel %vm955, %v917, %v1373
    %v1903 = vsel %vm955, %v918, %v1375
    %v1904 = vsel %vm955, %v919, %v1377
    %v1905 = vsel %vm955, %v920, %v1379
    %v1906 = vsel %vm955, %v921, %v1381
    %v1907 = vsel %vm955, %v922, %v1383
    %v1908 = vsel %vm955, %v923, %v1385
    %v1909 = vsel %vm955, %v924, %v1387
    %v1910 = vsel %vm955, %v925, %v1389
    %v1911 = vsel %vm955, %v926, %v1391
    %v1912 = vsel %vm955, %v927, %v1393
    %v1913 = vsel %vm955, %v928, %v1395
    %v1914 = vsel %vm955, %v929, %v1397
    %v1915 = vsel %vm955, %v930, %v1399
    %v1916 = vsel %vm955, %v931, %v1401
    %v1917 = vsel %vm955, %v932, %v1403
    %v1918 = vsel %vm955, %v933, %v1405
    %v1919 = vsel %vm955, %v934, %v1407
    %v1920 = vsel %vm955, %v935, %v1409
    %v1921 = vsel %vm955, %v936, %v1411
    %v1922 = vsel %vm955, %v937, %v1413
    %v1923 = vsel %vm955, %v938, %v1415
    %v1924 = vsel %vm955, %v939, %v1417
    %v1925 = vsel %vm955, %v940, %v1419
    %v1926 = vsel %vm955, %v941, %v1421
    %v1927 = vsel %vm955, %v942, %v1423
    %v1928 = vsel %vm955, %v943, %v1425
    %v1929 = vsel %vm955, %v944, %v1427
    %v1930 = vsel %vm955, %v945, %v1429
    %v1931 = vsel %vm955, %v946, %v1431
    %v1932 = vsel %vm955, %v947, %v1433
    %v1933 = vsel %vm955, %v948, %v1435
    %v1934 = vsel %vm955, %v949, %v1437
    %v1935 = vsel %vm955, %v950, %v1439
    %v1936 = vsel %vm955, %v951, %v1441
    %v1937 = vsel %vm955, %v952, %v1443
    %v1938 = vsel %vm955, %v953, %v1445
    %v1939 = vsel %vm955, %v954, %v1447
    %vm1940 = vcmask 64512
    %v1941 = vsel %vm1940, %v1858, %v1613
    %v1942 = vsel %vm1940, %v1859, %v1615
    %v1943 = vsel %vm1940, %v1860, %v1617
    %v1944 = vsel %vm1940, %v1861, %v1619
    %v1945 = vsel %vm1940, %v1862, %v1621
    %v1946 = vsel %vm1940, %v1863, %v1623
    %v1947 = vsel %vm1940, %v1864, %v1625
    %v1948 = vsel %vm1940, %v1865, %v1627
    %v1949 = vsel %vm1940, %v1866, %v1629
    %v1950 = vsel %vm1940, %v1867, %v1631
    %v1951 = vsel %vm1940, %v1868, %v1633
    %v1952 = vsel %vm1940, %v1869, %v1635
    %v1953 = vsel %vm1940, %v1870, %v1637
    %v1954 = vsel %vm1940, %v1871, %v1639
    %v1955 = vsel %vm1940, %v1872, %v1641
    %v1956 = vsel %vm1940, %v1873, %v1643
    %v1957 = vsel %vm1940, %v1874, %v1645
    %v1958 = vsel %vm1940, %v1875, %v1647
    %v1959 = vsel %vm1940, %v1876, %v1649
    %v1960 = vsel %vm1940, %v1877, %v1651
    %v1961 = vsel %vm1940, %v1878, %v1653
    %v1962 = vsel %vm1940, %v1879, %v1655
    %v1963 = vsel %vm1940, %v1880, %v1657
    %v1964 = vsel %vm1940, %v1881, %v1659
    %v1965 = vsel %vm1940, %v1882, %v1661
    %v1966 = vsel %vm1940, %v1883, %v1663
    %v1967 = vsel %vm1940, %v1884, %v1665
    %v1968 = vsel %vm1940, %v1885, %v1667
    %v1969 = vsel %vm1940, %v1886, %v1669
    %v1970 = vsel %vm1940, %v1887, %v1671
    %v1971 = vsel %vm1940, %v1888, %v1673
    %v1972 = vsel %vm1940, %v1889, %v1675
    %v1973 = vsel %vm1940, %v1890, %v1677
    %v1974 = vsel %vm1940, %v1891, %v1679
    %v1975 = vsel %vm1940, %v1892, %v1681
    %v1976 = vsel %vm1940, %v1893, %v1683
    %v1977 = vsel %vm1940, %v1894, %v1685
    %v1978 = vsel %vm1940, %v1895, %v1687
    %v1979 = vsel %vm1940, %v1896, %v1689
    %v1980 = vsel %vm1940, %v1897, %v1691
    %v1981 = vsel %vm1940, %v1898, %v1693
    %v1982 = vsel %vm1940, %v1899, %v1695
    %v1983 = vsel %vm1940, %v1900, %v1697
    %v1984 = vsel %vm1940, %v1901, %v1699
    %v1985 = vsel %vm1940, %v1902, %v1701
    %v1986 = vsel %vm1940, %v1903, %v1703
    %v1987 = vsel %vm1940, %v1904, %v1705
    %v1988 = vsel %vm1940, %v1905, %v1707
    %v1989 = vsel %vm1940, %v1906, %v1709
    %v1990 = vsel %vm1940, %v1907, %v1711
    %v1991 = vsel %vm1940, %v1908, %v1713
    %v1992 = vsel %vm1940, %v1909, %v1715
    %v1993 = vsel %vm1940, %v1910, %v1717
    %v1994 = vsel %vm1940, %v1911, %v1719
    %v1995 = vsel %vm1940, %v1912, %v1721
    %v1996 = vsel %vm1940, %v1913, %v1723
    %v1997 = vsel %vm1940, %v1914, %v1725
    %v1998 = vsel %vm1940, %v1915, %v1727
    %v1999 = vsel %vm1940, %v1916, %v1729
    %v2000 = vsel %vm1940, %v1917, %v1731
    %v2001 = vsel %vm1940, %v1918, %v1733
    %v2002 = vsel %vm1940, %v1919, %v1735
    %v2003 = vsel %vm1940, %v1920, %v1737
    %v2004 = vsel %vm1940, %v1921, %v1739
    %v2005 = vsel %vm1940, %v1922, %v1741
    %v2006 = vsel %vm1940, %v1923, %v1743
    %v2007 = vsel %vm1940, %v1924, %v1745
    %v2008 = vsel %vm1940, %v1925, %v1747
    %v2009 = vsel %vm1940, %v1926, %v1749
    %v2010 = vsel %vm1940, %v1927, %v1751
    %v2011 = vsel %vm1940, %v1928, %v1753
    %v2012 = vsel %vm1940, %v1929, %v1755
    %v2013 = vsel %vm1940, %v1930, %v1757
    %v2014 = vsel %vm1940, %v1931, %v1759
    %v2015 = vsel %vm1940, %v1932, %v1761
    %v2016 = vsel %vm1940, %v1933, %v1763
    %v2017 = vsel %vm1940, %v1934, %v1765
    %v2018 = vsel %vm1940, %v1935, %v1767
    %v2019 = vsel %vm1940, %v1936, %v1769
    %v2020 = vsel %vm1940, %v1937, %v1771
    %v2021 = vsel %vm1940, %v1938, %v1773
    %v2022 = vsel %vm1940, %v1939, %v1775
    %vm2023 = vcmask 97280
    %2024 = vst.msk [vmem:[#allocation2 + $0x18] sm:$0xff] %vm2023, %v1941
    %2025 = vst.msk [vmem:[#allocation2 + $0x20] sm:$0xff] %vm2023, %v1942
    %2026 = vst.msk [vmem:[#allocation2 + $0x28] sm:$0xff] %vm2023, %v1943
    %2027 = vst.msk [vmem:[#allocation2 + $0x30] sm:$0xff] %vm2023, %v1944
    %2028 = vst.msk [vmem:[#allocation2 + $0x38] sm:$0xff] %vm2023, %v1945
    %2029 = vst.msk [vmem:[#allocation2 + $0x40] sm:$0xff] %vm2023, %v1946
    %2030 = vst.msk [vmem:[#allocation2 + $0x48] sm:$0xff] %vm2023, %v1947
    %2031 = vst.msk [vmem:[#allocation2 + $0x50] sm:$0xff] %vm2023, %v1948
    %2032 = vst.msk [vmem:[#allocation2 + $0x58] sm:$0xff] %vm2023, %v1949
    %2033 = vst.msk [vmem:[#allocation2 + $0x60] sm:$0xff] %vm2023, %v1950
    %2034 = vst.msk [vmem:[#allocation2 + $0x68] sm:$0xff] %vm2023, %v1951
    %2035 = vst.msk [vmem:[#allocation2 + $0x70] sm:$0xff] %vm2023, %v1952
    %2036 = vst.msk [vmem:[#allocation2 + $0x78] sm:$0xff] %vm2023, %v1953
    %2037 = vst.msk [vmem:[#allocation2 + $0x80] sm:$0xff] %vm2023, %v1954
    %2038 = vst.msk [vmem:[#allocation2 + $0x88] sm:$0xff] %vm2023, %v1955
    %2039 = vst.msk [vmem:[#allocation2 + $0x90] sm:$0xff] %vm2023, %v1956
    %2040 = vst.msk [vmem:[#allocation2 + $0x98] sm:$0xff] %vm2023, %v1957
    %2041 = vst.msk [vmem:[#allocation2 + $0xa0] sm:$0xff] %vm2023, %v1958
    %2042 = vst.msk [vmem:[#allocation2 + $0xa8] sm:$0xff] %vm2023, %v1959
    %2043 = vst.msk [vmem:[#allocation2 + $0xb0] sm:$0xff] %vm2023, %v1960
    %2044 = vst.msk [vmem:[#allocation2 + $0xb8] sm:$0xff] %vm2023, %v1961
    %2045 = vst.msk [vmem:[#allocation2 + $0xc0] sm:$0xff] %vm2023, %v1962
    %2046 = vst.msk [vmem:[#allocation2 + $0xc8] sm:$0xff] %vm2023, %v1963
    %2047 = vst.msk [vmem:[#allocation2 + $0xd0] sm:$0xff] %vm2023, %v1964
    %2048 = vst.msk [vmem:[#allocation2 + $0xd8] sm:$0xff] %vm2023, %v1965
    %2049 = vst.msk [vmem:[#allocation2 + $0xe0] sm:$0xff] %vm2023, %v1966
    %2050 = vst.msk [vmem:[#allocation2 + $0xe8] sm:$0xff] %vm2023, %v1967
    %2051 = vst.msk [vmem:[#allocation2 + $0xf0] sm:$0xff] %vm2023, %v1968
    %2052 = vst.msk [vmem:[#allocation2 + $0xf8] sm:$0xff] %vm2023, %v1969
    %2053 = vst.msk [vmem:[#allocation2 + $0x100] sm:$0xff] %vm2023, %v1970
    %2054 = vst.msk [vmem:[#allocation2 + $0x108] sm:$0xff] %vm2023, %v1971
    %2055 = vst.msk [vmem:[#allocation2 + $0x110] sm:$0xff] %vm2023, %v1972
    %2056 = vst.msk [vmem:[#allocation2 + $0x118] sm:$0xff] %vm2023, %v1973
    %2057 = vst.msk [vmem:[#allocation2 + $0x120] sm:$0xff] %vm2023, %v1974
    %2058 = vst.msk [vmem:[#allocation2 + $0x128] sm:$0xff] %vm2023, %v1975
    %2059 = vst.msk [vmem:[#allocation2 + $0x130] sm:$0xff] %vm2023, %v1976
    %2060 = vst.msk [vmem:[#allocation2 + $0x138] sm:$0xff] %vm2023, %v1977
    %2061 = vst.msk [vmem:[#allocation2 + $0x140] sm:$0xff] %vm2023, %v1978
    %2062 = vst.msk [vmem:[#allocation2 + $0x148] sm:$0xff] %vm2023, %v1979
    %2063 = vst.msk [vmem:[#allocation2 + $0x150] sm:$0xff] %vm2023, %v1980
    %2064 = vst.msk [vmem:[#allocation2 + $0x158] sm:$0xff] %vm2023, %v1981
    %2065 = vst.msk [vmem:[#allocation2 + $0x160] sm:$0xff] %vm2023, %v1982
    %2066 = vst.msk [vmem:[#allocation2 + $0x168] sm:$0xff] %vm2023, %v1983
    %2067 = vst.msk [vmem:[#allocation2 + $0x170] sm:$0xff] %vm2023, %v1984
    %2068 = vst.msk [vmem:[#allocation2 + $0x178] sm:$0xff] %vm2023, %v1985
    %2069 = vst.msk [vmem:[#allocation2 + $0x180] sm:$0xff] %vm2023, %v1986
    %2070 = vst.msk [vmem:[#allocation2 + $0x188] sm:$0xff] %vm2023, %v1987
    %2071 = vst.msk [vmem:[#allocation2 + $0x190] sm:$0xff] %vm2023, %v1988
    %2072 = vst.msk [vmem:[#allocation2 + $0x198] sm:$0xff] %vm2023, %v1989
    %2073 = vst.msk [vmem:[#allocation2 + $0x1a0] sm:$0xff] %vm2023, %v1990
    %2074 = vst.msk [vmem:[#allocation2 + $0x1a8] sm:$0xff] %vm2023, %v1991
    %2075 = vst.msk [vmem:[#allocation2 + $0x1b0] sm:$0xff] %vm2023, %v1992
    %2076 = vst.msk [vmem:[#allocation2 + $0x1b8] sm:$0xff] %vm2023, %v1993
    %2077 = vst.msk [vmem:[#allocation2 + $0x1c0] sm:$0xff] %vm2023, %v1994
    %2078 = vst.msk [vmem:[#allocation2 + $0x1c8] sm:$0xff] %vm2023, %v1995
    %2079 = vst.msk [vmem:[#allocation2 + $0x1d0] sm:$0xff] %vm2023, %v1996
    %2080 = vst.msk [vmem:[#allocation2 + $0x1d8] sm:$0xff] %vm2023, %v1997
    %2081 = vst.msk [vmem:[#allocation2 + $0x1e0] sm:$0xff] %vm2023, %v1998
    %2082 = vst.msk [vmem:[#allocation2 + $0x1e8] sm:$0xff] %vm2023, %v1999
    %2083 = vst.msk [vmem:[#allocation2 + $0x1f0] sm:$0xff] %vm2023, %v2000
    %2084 = vst.msk [vmem:[#allocation2 + $0x1f8] sm:$0xff] %vm2023, %v2001
    %2085 = vst.msk [vmem:[#allocation2 + $0x200] sm:$0xff] %vm2023, %v2002
    %2086 = vst.msk [vmem:[#allocation2 + $0x208] sm:$0xff] %vm2023, %v2003
    %2087 = vst.msk [vmem:[#allocation2 + $0x210] sm:$0xff] %vm2023, %v2004
    %2088 = vst.msk [vmem:[#allocation2 + $0x218] sm:$0xff] %vm2023, %v2005
    %2089 = vst.msk [vmem:[#allocation2 + $0x220] sm:$0xff] %vm2023, %v2006
    %2090 = vst.msk [vmem:[#allocation2 + $0x228] sm:$0xff] %vm2023, %v2007
    %2091 = vst.msk [vmem:[#allocation2 + $0x230] sm:$0xff] %vm2023, %v2008
    %2092 = vst.msk [vmem:[#allocation2 + $0x238] sm:$0xff] %vm2023, %v2009
    %2093 = vst.msk [vmem:[#allocation2 + $0x240] sm:$0xff] %vm2023, %v2010
    %2094 = vst.msk [vmem:[#allocation2 + $0x248] sm:$0xff] %vm2023, %v2011
    %2095 = vst.msk [vmem:[#allocation2 + $0x250] sm:$0xff] %vm2023, %v2012
    %2096 = vst.msk [vmem:[#allocation2 + $0x258] sm:$0xff] %vm2023, %v2013
    %2097 = vst.msk [vmem:[#allocation2 + $0x260] sm:$0xff] %vm2023, %v2014
    %2098 = vst.msk [vmem:[#allocation2 + $0x268] sm:$0xff] %vm2023, %v2015
    %2099 = vst.msk [vmem:[#allocation2 + $0x270] sm:$0xff] %vm2023, %v2016
    %2100 = vst.msk [vmem:[#allocation2 + $0x278] sm:$0xff] %vm2023, %v2017
    %2101 = vst.msk [vmem:[#allocation2 + $0x280] sm:$0xff] %vm2023, %v2018
    %2102 = vst.msk [vmem:[#allocation2 + $0x288] sm:$0xff] %vm2023, %v2019
    %2103 = vst.msk [vmem:[#allocation2 + $0x290] sm:$0xff] %vm2023, %v2020
    %2104 = vst.msk [vmem:[#allocation2 + $0x298] sm:$0xff] %vm2023, %v2021
    %2105 = vst.msk [vmem:[#allocation2 + $0x2a0] sm:$0xff] %vm2023, %v2022
    %v2106 = vld [vmem:[#allocation2 + $0x6] sm:$0xff]
    %v2107 = vld [vmem:[#allocation2 + $0xe] sm:$0xff]
    %v2108 = vld [vmem:[#allocation2 + $0x16] sm:$0xff]
    %v2109 = vld [vmem:[#allocation2 + $0x1e] sm:$0xff]
    %v2110 = vld [vmem:[#allocation2 + $0x26] sm:$0xff]
    %v2111 = vld [vmem:[#allocation2 + $0x2e] sm:$0xff]
    %v2112 = vld [vmem:[#allocation2 + $0x36] sm:$0xff]
    %v2113 = vld [vmem:[#allocation2 + $0x3e] sm:$0xff]
    %v2114 = vld [vmem:[#allocation2 + $0x46] sm:$0xff]
    %v2115 = vld [vmem:[#allocation2 + $0x4e] sm:$0xff]
    %v2116 = vld [vmem:[#allocation2 + $0x56] sm:$0xff]
    %v2117 = vld [vmem:[#allocation2 + $0x5e] sm:$0xff]
    %v2118 = vld [vmem:[#allocation2 + $0x66] sm:$0xff]
    %v2119 = vld [vmem:[#allocation2 + $0x6e] sm:$0xff]
    %v2120 = vld [vmem:[#allocation2 + $0x76] sm:$0xff]
    %v2121 = vld [vmem:[#allocation2 + $0x7e] sm:$0xff]
    %v2122 = vld [vmem:[#allocation2 + $0x86] sm:$0xff]
    %v2123 = vld [vmem:[#allocation2 + $0x8e] sm:$0xff]
    %v2124 = vld [vmem:[#allocation2 + $0x96] sm:$0xff]
    %v2125 = vld [vmem:[#allocation2 + $0x9e] sm:$0xff]
    %v2126 = vld [vmem:[#allocation2 + $0xa6] sm:$0xff]
    %v2127 = vld [vmem:[#allocation2 + $0xae] sm:$0xff]
    %v2128 = vld [vmem:[#allocation2 + $0xb6] sm:$0xff]
    %v2129 = vld [vmem:[#allocation2 + $0xbe] sm:$0xff]
    %v2130 = vld [vmem:[#allocation2 + $0xc6] sm:$0xff]
    %v2131 = vld [vmem:[#allocation2 + $0xce] sm:$0xff]
    %v2132 = vld [vmem:[#allocation2 + $0xd6] sm:$0xff]
    %v2133 = vld [vmem:[#allocation2 + $0xde] sm:$0xff]
    %v2134 = vld [vmem:[#allocation2 + $0xe6] sm:$0xff]
    %v2135 = vld [vmem:[#allocation2 + $0xee] sm:$0xff]
    %v2136 = vld [vmem:[#allocation2 + $0xf6] sm:$0xff]
    %v2137 = vld [vmem:[#allocation2 + $0xfe] sm:$0xff]
    %v2138 = vld [vmem:[#allocation2 + $0x106] sm:$0xff]
    %v2139 = vld [vmem:[#allocation2 + $0x10e] sm:$0xff]
    %v2140 = vld [vmem:[#allocation2 + $0x116] sm:$0xff]
    %v2141 = vld [vmem:[#allocation2 + $0x11e] sm:$0xff]
    %v2142 = vld [vmem:[#allocation2 + $0x126] sm:$0xff]
    %v2143 = vld [vmem:[#allocation2 + $0x12e] sm:$0xff]
    %v2144 = vld [vmem:[#allocation2 + $0x136] sm:$0xff]
    %v2145 = vld [vmem:[#allocation2 + $0x13e] sm:$0xff]
    %v2146 = vld [vmem:[#allocation2 + $0x146] sm:$0xff]
    %v2147 = vld [vmem:[#allocation2 + $0x14e] sm:$0xff]
    %v2148 = vld [vmem:[#allocation2 + $0x156] sm:$0xff]
    %v2149 = vld [vmem:[#allocation2 + $0x15e] sm:$0xff]
    %v2150 = vld [vmem:[#allocation2 + $0x166] sm:$0xff]
    %v2151 = vld [vmem:[#allocation2 + $0x16e] sm:$0xff]
    %v2152 = vld [vmem:[#allocation2 + $0x176] sm:$0xff]
    %v2153 = vld [vmem:[#allocation2 + $0x17e] sm:$0xff]
    %v2154 = vld [vmem:[#allocation2 + $0x186] sm:$0xff]
    %v2155 = vld [vmem:[#allocation2 + $0x18e] sm:$0xff]
    %v2156 = vld [vmem:[#allocation2 + $0x196] sm:$0xff]
    %v2157 = vld [vmem:[#allocation2 + $0x19e] sm:$0xff]
    %v2158 = vld [vmem:[#allocation2 + $0x1a6] sm:$0xff]
    %v2159 = vld [vmem:[#allocation2 + $0x1ae] sm:$0xff]
    %v2160 = vld [vmem:[#allocation2 + $0x1b6] sm:$0xff]
    %v2161 = vld [vmem:[#allocation2 + $0x1be] sm:$0xff]
    %v2162 = vld [vmem:[#allocation2 + $0x1c6] sm:$0xff]
    %v2163 = vld [vmem:[#allocation2 + $0x1ce] sm:$0xff]
    %v2164 = vld [vmem:[#allocation2 + $0x1d6] sm:$0xff]
    %v2165 = vld [vmem:[#allocation2 + $0x1de] sm:$0xff]
    %v2166 = vld [vmem:[#allocation2 + $0x1e6] sm:$0xff]
    %v2167 = vld [vmem:[#allocation2 + $0x1ee] sm:$0xff]
    %v2168 = vld [vmem:[#allocation2 + $0x1f6] sm:$0xff]
    %v2169 = vld [vmem:[#allocation2 + $0x1fe] sm:$0xff]
    %v2170 = vld [vmem:[#allocation2 + $0x206] sm:$0xff]
    %v2171 = vld [vmem:[#allocation2 + $0x20e] sm:$0xff]
    %v2172 = vld [vmem:[#allocation2 + $0x216] sm:$0xff]
    %v2173 = vld [vmem:[#allocation2 + $0x21e] sm:$0xff]
    %v2174 = vld [vmem:[#allocation2 + $0x226] sm:$0xff]
    %v2175 = vld [vmem:[#allocation2 + $0x22e] sm:$0xff]
    %v2176 = vld [vmem:[#allocation2 + $0x236] sm:$0xff]
    %v2177 = vld [vmem:[#allocation2 + $0x23e] sm:$0xff]
    %v2178 = vld [vmem:[#allocation2 + $0x246] sm:$0xff]
    %v2179 = vld [vmem:[#allocation2 + $0x24e] sm:$0xff]
    %v2180 = vld [vmem:[#allocation2 + $0x256] sm:$0xff]
    %v2181 = vld [vmem:[#allocation2 + $0x25e] sm:$0xff]
    %v2182 = vld [vmem:[#allocation2 + $0x266] sm:$0xff]
    %v2183 = vld [vmem:[#allocation2 + $0x26e] sm:$0xff]
    %v2184 = vld [vmem:[#allocation2 + $0x276] sm:$0xff]
    %v2185 = vld [vmem:[#allocation2 + $0x27e] sm:$0xff]
    %v2186 = vld [vmem:[#allocation2 + $0x286] sm:$0xff]
    %v2187 = vld [vmem:[#allocation2 + $0x28e] sm:$0xff]
    %v2188 = vld [vmem:[%s1] sm:$0xff]
    %v2189 = vld [vmem:[%s1 + $0x8] sm:$0xf]
    %v2190 = vld [vmem:[#allocation2 + $0x18] sm:$0xff]
    %v2191 = vld [vmem:[#allocation2 + $0x20] sm:$0xff]
    %v2192 = vld [vmem:[#allocation2 + $0x28] sm:$0xff]
    %v2193 = vld [vmem:[#allocation2 + $0x30] sm:$0xff]
    %v2194 = vld [vmem:[#allocation2 + $0x38] sm:$0xff]
    %v2195 = vld [vmem:[#allocation2 + $0x40] sm:$0xff]
    %v2196 = vld [vmem:[#allocation2 + $0x48] sm:$0xff]
    %v2197 = vld [vmem:[#allocation2 + $0x50] sm:$0xff]
    %v2198 = vld [vmem:[#allocation2 + $0x58] sm:$0xff]
    %v2199 = vld [vmem:[#allocation2 + $0x60] sm:$0xff]
    %v2200 = vld [vmem:[#allocation2 + $0x68] sm:$0xff]
    %v2201 = vld [vmem:[#allocation2 + $0x70] sm:$0xff]
    %v2202 = vld [vmem:[#allocation2 + $0x78] sm:$0xff]
    %v2203 = vld [vmem:[#allocation2 + $0x80] sm:$0xff]
    %v2204 = vld [vmem:[#allocation2 + $0x88] sm:$0xff]
    %v2205 = vld [vmem:[#allocation2 + $0x90] sm:$0xff]
    %v2206 = vld [vmem:[#allocation2 + $0x98] sm:$0xff]
    %v2207 = vld [vmem:[#allocation2 + $0xa0] sm:$0xff]
    %v2208 = vld [vmem:[#allocation2 + $0xa8] sm:$0xff]
    %v2209 = vld [vmem:[#allocation2 + $0xb0] sm:$0xff]
    %v2210 = vld [vmem:[#allocation2 + $0xb8] sm:$0xff]
    %v2211 = vld [vmem:[#allocation2 + $0xc0] sm:$0xff]
    %v2212 = vld [vmem:[#allocation2 + $0xc8] sm:$0xff]
    %v2213 = vld [vmem:[#allocation2 + $0xd0] sm:$0xff]
    %v2214 = vld [vmem:[#allocation2 + $0xd8] sm:$0xff]
    %v2215 = vld [vmem:[#allocation2 + $0xe0] sm:$0xff]
    %v2216 = vld [vmem:[#allocation2 + $0xe8] sm:$0xff]
    %v2217 = vld [vmem:[#allocation2 + $0xf0] sm:$0xff]
    %v2218 = vld [vmem:[#allocation2 + $0xf8] sm:$0xff]
    %v2219 = vld [vmem:[#allocation2 + $0x100] sm:$0xff]
    %v2220 = vld [vmem:[#allocation2 + $0x108] sm:$0xff]
    %v2221 = vld [vmem:[#allocation2 + $0x110] sm:$0xff]
    %v2222 = vld [vmem:[#allocation2 + $0x118] sm:$0xff]
    %v2223 = vld [vmem:[#allocation2 + $0x120] sm:$0xff]
    %v2224 = vld [vmem:[#allocation2 + $0x128] sm:$0xff]
    %v2225 = vld [vmem:[#allocation2 + $0x130] sm:$0xff]
    %v2226 = vld [vmem:[#allocation2 + $0x138] sm:$0xff]
    %v2227 = vld [vmem:[#allocation2 + $0x140] sm:$0xff]
    %v2228 = vld [vmem:[#allocation2 + $0x148] sm:$0xff]
    %v2229 = vld [vmem:[#allocation2 + $0x150] sm:$0xff]
    %v2230 = vld [vmem:[#allocation2 + $0x158] sm:$0xff]
    %v2231 = vld [vmem:[#allocation2 + $0x160] sm:$0xff]
    %v2232 = vld [vmem:[#allocation2 + $0x168] sm:$0xff]
    %v2233 = vld [vmem:[#allocation2 + $0x170] sm:$0xff]
    %v2234 = vld [vmem:[#allocation2 + $0x178] sm:$0xff]
    %v2235 = vld [vmem:[#allocation2 + $0x180] sm:$0xff]
    %v2236 = vld [vmem:[#allocation2 + $0x188] sm:$0xff]
    %v2237 = vld [vmem:[#allocation2 + $0x190] sm:$0xff]
    %v2238 = vld [vmem:[#allocation2 + $0x198] sm:$0xff]
    %v2239 = vld [vmem:[#allocation2 + $0x1a0] sm:$0xff]
    %v2240 = vld [vmem:[#allocation2 + $0x1a8] sm:$0xff]
    %v2241 = vld [vmem:[#allocation2 + $0x1b0] sm:$0xff]
    %v2242 = vld [vmem:[#allocation2 + $0x1b8] sm:$0xff]
    %v2243 = vld [vmem:[#allocation2 + $0x1c0] sm:$0xff]
    %v2244 = vld [vmem:[#allocation2 + $0x1c8] sm:$0xff]
    %v2245 = vld [vmem:[#allocation2 + $0x1d0] sm:$0xff]
    %v2246 = vld [vmem:[#allocation2 + $0x1d8] sm:$0xff]
    %v2247 = vld [vmem:[#allocation2 + $0x1e0] sm:$0xff]
    %v2248 = vld [vmem:[#allocation2 + $0x1e8] sm:$0xff]
    %v2249 = vld [vmem:[#allocation2 + $0x1f0] sm:$0xff]
    %v2250 = vld [vmem:[#allocation2 + $0x1f8] sm:$0xff]
    %v2251 = vld [vmem:[#allocation2 + $0x200] sm:$0xff]
    %v2252 = vld [vmem:[#allocation2 + $0x208] sm:$0xff]
    %v2253 = vld [vmem:[#allocation2 + $0x210] sm:$0xff]
    %v2254 = vld [vmem:[#allocation2 + $0x218] sm:$0xff]
    %v2255 = vld [vmem:[#allocation2 + $0x220] sm:$0xff]
    %v2256 = vld [vmem:[#allocation2 + $0x228] sm:$0xff]
    %v2257 = vld [vmem:[#allocation2 + $0x230] sm:$0xff]
    %v2258 = vld [vmem:[#allocation2 + $0x238] sm:$0xff]
    %v2259 = vld [vmem:[#allocation2 + $0x240] sm:$0xff]
    %v2260 = vld [vmem:[#allocation2 + $0x248] sm:$0xff]
    %v2261 = vld [vmem:[#allocation2 + $0x250] sm:$0xff]
    %v2262 = vld [vmem:[#allocation2 + $0x258] sm:$0xff]
    %v2263 = vld [vmem:[#allocation2 + $0x260] sm:$0xff]
    %v2264 = vld [vmem:[#allocation2 + $0x268] sm:$0xff]
    %v2265 = vld [vmem:[#allocation2 + $0x270] sm:$0xff]
    %v2266 = vld [vmem:[#allocation2 + $0x278] sm:$0xff]
    %v2267 = vld [vmem:[#allocation2 + $0x280] sm:$0xff]
    %v2268 = vld [vmem:[#allocation2 + $0x288] sm:$0xff]
    %v2269 = vld [vmem:[#allocation2 + $0x290] sm:$0xff]
    %v2270 = vld [vmem:[#allocation2 + $0x298] sm:$0xff]
    %v2271 = vld [vmem:[#allocation2 + $0x2a0] sm:$0xff]
    %s2272 = scalar_lea.vmem %s1, 16
    %v2273 = vld [vmem:[%s2272] sm:$0xff]
    %v2274 = vld [vmem:[%s2272 + $0x8] sm:$0xf]
    %v2276 = vsel %vm2023, %v2190, 0
    %v2279 = vsel %vm2023, %v2191, 0
    %v2282 = vsel %vm2023, %v2192, 0
    %v2285 = vsel %vm2023, %v2193, 0
    %v2288 = vsel %vm2023, %v2194, 0
    %v2291 = vsel %vm2023, %v2195, 0
    %v2294 = vsel %vm2023, %v2196, 0
    %v2297 = vsel %vm2023, %v2197, 0
    %v2300 = vsel %vm2023, %v2198, 0
    %v2303 = vsel %vm2023, %v2199, 0
    %v2306 = vsel %vm2023, %v2200, 0
    %v2309 = vsel %vm2023, %v2201, 0
    %v2312 = vsel %vm2023, %v2202, 0
    %v2315 = vsel %vm2023, %v2203, 0
    %v2318 = vsel %vm2023, %v2204, 0
    %v2321 = vsel %vm2023, %v2205, 0
    %v2324 = vsel %vm2023, %v2206, 0
    %v2327 = vsel %vm2023, %v2207, 0
    %v2330 = vsel %vm2023, %v2208, 0
    %v2333 = vsel %vm2023, %v2209, 0
    %v2336 = vsel %vm2023, %v2210, 0
    %v2339 = vsel %vm2023, %v2211, 0
    %v2342 = vsel %vm2023, %v2212, 0
    %v2345 = vsel %vm2023, %v2213, 0
    %v2348 = vsel %vm2023, %v2214, 0
    %v2351 = vsel %vm2023, %v2215, 0
    %v2354 = vsel %vm2023, %v2216, 0
    %v2357 = vsel %vm2023, %v2217, 0
    %v2360 = vsel %vm2023, %v2218, 0
    %v2363 = vsel %vm2023, %v2219, 0
    %v2366 = vsel %vm2023, %v2220, 0
    %v2369 = vsel %vm2023, %v2221, 0
    %v2372 = vsel %vm2023, %v2222, 0
    %v2375 = vsel %vm2023, %v2223, 0
    %v2378 = vsel %vm2023, %v2224, 0
    %v2381 = vsel %vm2023, %v2225, 0
    %v2384 = vsel %vm2023, %v2226, 0
    %v2387 = vsel %vm2023, %v2227, 0
    %v2390 = vsel %vm2023, %v2228, 0
    %v2393 = vsel %vm2023, %v2229, 0
    %v2396 = vsel %vm2023, %v2230, 0
    %v2399 = vsel %vm2023, %v2231, 0
    %v2402 = vsel %vm2023, %v2232, 0
    %v2405 = vsel %vm2023, %v2233, 0
    %v2408 = vsel %vm2023, %v2234, 0
    %v2411 = vsel %vm2023, %v2235, 0
    %v2414 = vsel %vm2023, %v2236, 0
    %v2417 = vsel %vm2023, %v2237, 0
    %v2420 = vsel %vm2023, %v2238, 0
    %v2423 = vsel %vm2023, %v2239, 0
    %v2426 = vsel %vm2023, %v2240, 0
    %v2429 = vsel %vm2023, %v2241, 0
    %v2432 = vsel %vm2023, %v2242, 0
    %v2435 = vsel %vm2023, %v2243, 0
    %v2438 = vsel %vm2023, %v2244, 0
    %v2441 = vsel %vm2023, %v2245, 0
    %v2444 = vsel %vm2023, %v2246, 0
    %v2447 = vsel %vm2023, %v2247, 0
    %v2450 = vsel %vm2023, %v2248, 0
    %v2453 = vsel %vm2023, %v2249, 0
    %v2456 = vsel %vm2023, %v2250, 0
    %v2459 = vsel %vm2023, %v2251, 0
    %v2462 = vsel %vm2023, %v2252, 0
    %v2465 = vsel %vm2023, %v2253, 0
    %v2468 = vsel %vm2023, %v2254, 0
    %v2471 = vsel %vm2023, %v2255, 0
    %v2474 = vsel %vm2023, %v2256, 0
    %v2477 = vsel %vm2023, %v2257, 0
    %v2480 = vsel %vm2023, %v2258, 0
    %v2483 = vsel %vm2023, %v2259, 0
    %v2486 = vsel %vm2023, %v2260, 0
    %v2489 = vsel %vm2023, %v2261, 0
    %v2492 = vsel %vm2023, %v2262, 0
    %v2495 = vsel %vm2023, %v2263, 0
    %v2498 = vsel %vm2023, %v2264, 0
    %v2501 = vsel %vm2023, %v2265, 0
    %v2504 = vsel %vm2023, %v2266, 0
    %v2507 = vsel %vm2023, %v2267, 0
    %v2510 = vsel %vm2023, %v2268, 0
    %v2513 = vsel %vm2023, %v2269, 0
    %v2516 = vsel %vm2023, %v2270, 0
    %v2519 = vsel %vm2023, %v2271, 0
    %vm2521 = vcmask 1043456
    %v2523 = vsel %vm2521, %v2274, 0
    %2525 = vmatprep.subr.mxu0 0.0
    %2526 = vmatpush1.msra.mxu0 %v2273
    %2527 = vmatprep.subr.mxu0 0.0
    %2528 = vmatpush1.msra.mxu0 %v2523
    %2529 = vmatprep.subr.mxu0 0.0
    %2530 = vmatpush1.msra.mxu0 0.0
    %2531 = vmatprep.subr.mxu0 0.0
    %2532 = vmatpush1.msra.mxu0 0.0
    %2533 = vmatprep.subr.mxu0 0.0
    %2534 = vmatpush1.msra.mxu0 0.0
    %2535 = vmatprep.subr.mxu0 0.0
    %2536 = vmatpush1.msra.mxu0 0.0
    %2537 = vmatprep.subr.mxu0 0.0
    %2538 = vmatpush1.msra.mxu0 0.0
    %2539 = vmatprep.subr.mxu0 0.0
    %2540 = vmatpush1.msra.mxu0 0.0
    %2541 = vmatprep.subr.mxu0 0.0
    %2542 = vmatpush1.msra.mxu0 0.0
    %2543 = vmatprep.subr.mxu0 0.0
    %2544 = vmatpush1.msra.mxu0 0.0
    %2545 = vmatprep.subr.mxu0 0.0
    %2546 = vmatpush1.msra.mxu0 0.0
    %2547 = vmatprep.subr.mxu0 0.0
    %2548 = vmatpush1.msra.mxu0 0.0
    %2549 = vmatprep.subr.mxu0 0.0
    %2550 = vmatpush1.msra.mxu0 0.0
    %2551 = vmatprep.subr.mxu0 0.0
    %2552 = vmatpush1.msra.mxu0 0.0
    %2553 = vmatprep.subr.mxu0 0.0
    %2554 = vmatpush1.msra.mxu0 0.0
    %2555 = vmatprep.subr.mxu0 0.0
    %2556 = vmatpush1.msra.mxu0 0.0
    %2557 = vmatprep.subr.mxu0 0.0
    %2558 = vmatpush1.msra.mxu0 0.0
    %2559 = vmatprep.subr.mxu0 0.0
    %2560 = vmatpush1.msra.mxu0 0.0
    %2561 = vmatprep.subr.mxu0 0.0
    %2562 = vmatpush1.msra.mxu0 0.0
    %2563 = vmatprep.subr.mxu0 0.0
    %2564 = vmatpush1.msra.mxu0 0.0
    %2565 = vmatprep.subr.mxu0 0.0
    %2566 = vmatpush1.msra.mxu0 0.0
    %2567 = vmatprep.subr.mxu0 0.0
    %2568 = vmatpush1.msra.mxu0 0.0
    %2569 = vmatprep.subr.mxu0 0.0
    %2570 = vmatpush1.msra.mxu0 0.0
    %2571 = vmatprep.subr.mxu0 0.0
    %2572 = vmatpush1.msra.mxu0 0.0
    %2573 = vmatprep.subr.mxu0 0.0
    %2574 = vmatpush1.msra.mxu0 0.0
    %2575 = vmatprep.subr.mxu0 0.0
    %2576 = vmatpush1.msra.mxu0 0.0
    %2577 = vmatprep.subr.mxu0 0.0
    %2578 = vmatpush1.msra.mxu0 0.0
    %2579 = vmatprep.subr.mxu0 0.0
    %2580 = vmatpush1.msra.mxu0 0.0
    %2581 = vmatprep.subr.mxu0 0.0
    %2582 = vmatpush1.msra.mxu0 0.0
    %2583 = vmatprep.subr.mxu0 0.0
    %2584 = vmatpush1.msra.mxu0 0.0
    %2585 = vmatprep.subr.mxu0 0.0
    %2586 = vmatpush1.msra.mxu0 0.0
    %2587 = vmatprep.subr.mxu0 0.0
    %2588 = vmatpush1.msra.mxu0 0.0
    %2589 = vmatprep.mubr.f32.mxu0 0.0
    %2590 = vmatmul.mubr.f32.gmra.mrb[0].mxu0 %v2276
    %v2591 = vpop.f32.mrb[0].mxu0
    %v2592 = vadd.f32 0.0, %v2591
    %v2593 = vpop.f32.mrb[0].mxu0
    %2594 = vmatprep.mubr.f32.mxu0 0.0
    %2595 = vmatmul.mubr.f32.gmra.mrb[0].mxu0 %v2279
    %v2596 = vpop.f32.mrb[0].mxu0
    %v2597 = vadd.f32 0.0, %v2596
    %v2598 = vpop.f32.mrb[0].mxu0
    %2599 = vmatprep.mubr.f32.mxu0 0.0
    %2600 = vmatmul.mubr.f32.gmra.mrb[0].mxu0 %v2282
    %v2601 = vpop.f32.mrb[0].mxu0
    %v2602 = vadd.f32 0.0, %v2601
    %v2603 = vpop.f32.mrb[0].mxu0
    %2604 = vmatprep.mubr.f32.mxu0 0.0
    %2605 = vmatmul.mubr.f32.gmra.mrb[0].mxu0 %v2285
    %v2606 = vpop.f32.mrb[0].mxu0
    %v2607 = vadd.f32 0.0, %v2606
    %v2608 = vpop.f32.mrb[0].mxu0
    %2609 = vmatprep.mubr.f32.mxu0 0.0
    %2610 = vmatmul.mubr.f32.gmra.mrb[0].mxu0 %v2288
    %v2611 = vpop.f32.mrb[0].mxu0
    %v2612 = vadd.f32 0.0, %v2611
    %v2613 = vpop.f32.mrb[0].mxu0
    %2614 = vmatprep.mubr.f32.mxu0 0.0
    %2615 = vmatmul.mubr.f32.gmra.mrb[0].mxu0 %v2291
    %v2616 = vpop.f32.mrb[0].mxu0
    %v2617 = vadd.f32 0.0, %v2616
    %v2618 = vpop.f32.mrb[0].mxu0
    %2619 = vmatprep.mubr.f32.mxu0 0.0
    %2620 = vmatmul.mubr.f32.gmra.mrb[0].mxu0 %v2294
    %v2621 = vpop.f32.mrb[0].mxu0
    %v2622 = vadd.f32 0.0, %v2621
    %v2623 = vpop.f32.mrb[0].mxu0
    %2624 = vmatprep.mubr.f32.mxu0 0.0
    %2625 = vmatmul.mubr.f32.gmra.mrb[0].mxu0 %v2297
    %v2626 = vpop.f32.mrb[0].mxu0
    %v2627 = vadd.f32 0.0, %v2626
    %v2628 = vpop.f32.mrb[0].mxu0
    %2629 = vmatprep.mubr.f32.mxu0 0.0
    %2630 = vmatmul.mubr.f32.gmra.mrb[0].mxu0 %v2300
    %v2631 = vpop.f32.mrb[0].mxu0
    %v2632 = vadd.f32 0.0, %v2631
    %v2633 = vpop.f32.mrb[0].mxu0
    %2634 = vmatprep.mubr.f32.mxu0 0.0
    %2635 = vmatmul.mubr.f32.gmra.mrb[0].mxu0 %v2303
    %v2636 = vpop.f32.mrb[0].mxu0
    %v2637 = vadd.f32 0.0, %v2636
    %v2638 = vpop.f32.mrb[0].mxu0
    %2639 = vmatprep.mubr.f32.mxu0 0.0
    %2640 = vmatmul.mubr.f32.gmra.mrb[0].mxu0 %v2306
    %v2641 = vpop.f32.mrb[0].mxu0
    %v2642 = vadd.f32 0.0, %v2641
    %v2643 = vpop.f32.mrb[0].mxu0
    %2644 = vmatprep.mubr.f32.mxu0 0.0
    %2645 = vmatmul.mubr.f32.gmra.mrb[0].mxu0 %v2309
    %v2646 = vpop.f32.mrb[0].mxu0
    %v2647 = vadd.f32 0.0, %v2646
    %v2648 = vpop.f32.mrb[0].mxu0
    %2649 = vmatprep.mubr.f32.mxu0 0.0
    %2650 = vmatmul.mubr.f32.gmra.mrb[0].mxu0 %v2312
    %v2651 = vpop.f32.mrb[0].mxu0
    %v2652 = vadd.f32 0.0, %v2651
    %v2653 = vpop.f32.mrb[0].mxu0
    %2654 = vmatprep.mubr.f32.mxu0 0.0
    %2655 = vmatmul.mubr.f32.gmra.mrb[0].mxu0 %v2315
    %v2656 = vpop.f32.mrb[0].mxu0
    %v2657 = vadd.f32 0.0, %v2656
    %v2658 = vpop.f32.mrb[0].mxu0
    %2659 = vmatprep.mubr.f32.mxu0 0.0
    %2660 = vmatmul.mubr.f32.gmra.mrb[0].mxu0 %v2318
    %v2661 = vpop.f32.mrb[0].mxu0
    %v2662 = vadd.f32 0.0, %v2661
    %v2663 = vpop.f32.mrb[0].mxu0
    %2664 = vmatprep.mubr.f32.mxu0 0.0
    %2665 = vmatmul.mubr.f32.gmra.mrb[0].mxu0 %v2321
    %v2666 = vpop.f32.mrb[0].mxu0
    %v2667 = vadd.f32 0.0, %v2666
    %v2668 = vpop.f32.mrb[0].mxu0
    %2669 = vmatprep.mubr.f32.mxu0 0.0
    %2670 = vmatmul.mubr.f32.gmra.mrb[0].mxu0 %v2324
    %v2671 = vpop.f32.mrb[0].mxu0
    %v2672 = vadd.f32 0.0, %v2671
    %v2673 = vpop.f32.mrb[0].mxu0
    %2674 = vmatprep.mubr.f32.mxu0 0.0
    %2675 = vmatmul.mubr.f32.gmra.mrb[0].mxu0 %v2327
    %v2676 = vpop.f32.mrb[0].mxu0
    %v2677 = vadd.f32 0.0, %v2676
    %v2678 = vpop.f32.mrb[0].mxu0
    %2679 = vmatprep.mubr.f32.mxu0 0.0
    %2680 = vmatmul.mubr.f32.gmra.mrb[0].mxu0 %v2330
    %v2681 = vpop.f32.mrb[0].mxu0
    %v2682 = vadd.f32 0.0, %v2681
    %v2683 = vpop.f32.mrb[0].mxu0
    %2684 = vmatprep.mubr.f32.mxu0 0.0
    %2685 = vmatmul.mubr.f32.gmra.mrb[0].mxu0 %v2333
    %v2686 = vpop.f32.mrb[0].mxu0
    %v2687 = vadd.f32 0.0, %v2686
    %v2688 = vpop.f32.mrb[0].mxu0
    %2689 = vmatprep.mubr.f32.mxu0 0.0
    %2690 = vmatmul.mubr.f32.gmra.mrb[0].mxu0 %v2336
    %v2691 = vpop.f32.mrb[0].mxu0
    %v2692 = vadd.f32 0.0, %v2691
    %v2693 = vpop.f32.mrb[0].mxu0
    %2694 = vmatprep.mubr.f32.mxu0 0.0
    %2695 = vmatmul.mubr.f32.gmra.mrb[0].mxu0 %v2339
    %v2696 = vpop.f32.mrb[0].mxu0
    %v2697 = vadd.f32 0.0, %v2696
    %v2698 = vpop.f32.mrb[0].mxu0
    %2699 = vmatprep.mubr.f32.mxu0 0.0
    %2700 = vmatmul.mubr.f32.gmra.mrb[0].mxu0 %v2342
    %v2701 = vpop.f32.mrb[0].mxu0
    %v2702 = vadd.f32 0.0, %v2701
    %v2703 = vpop.f32.mrb[0].mxu0
    %2704 = vmatprep.mubr.f32.mxu0 0.0
    %2705 = vmatmul.mubr.f32.gmra.mrb[0].mxu0 %v2345
    %v2706 = vpop.f32.mrb[0].mxu0
    %v2707 = vadd.f32 0.0, %v2706
    %v2708 = vpop.f32.mrb[0].mxu0
    %2709 = vmatprep.mubr.f32.mxu0 0.0
    %2710 = vmatmul.mubr.f32.gmra.mrb[0].mxu0 %v2348
    %v2711 = vpop.f32.mrb[0].mxu0
    %v2712 = vadd.f32 0.0, %v2711
    %v2713 = vpop.f32.mrb[0].mxu0
    %2714 = vmatprep.mubr.f32.mxu0 0.0
    %2715 = vmatmul.mubr.f32.gmra.mrb[0].mxu0 %v2351
    %v2716 = vpop.f32.mrb[0].mxu0
    %v2717 = vadd.f32 0.0, %v2716
    %v2718 = vpop.f32.mrb[0].mxu0
    %2719 = vmatprep.mubr.f32.mxu0 0.0
    %2720 = vmatmul.mubr.f32.gmra.mrb[0].mxu0 %v2354
    %v2721 = vpop.f32.mrb[0].mxu0
    %v2722 = vadd.f32 0.0, %v2721
    %v2723 = vpop.f32.mrb[0].mxu0
    %2724 = vmatprep.mubr.f32.mxu0 0.0
    %2725 = vmatmul.mubr.f32.gmra.mrb[0].mxu0 %v2357
    %v2726 = vpop.f32.mrb[0].mxu0
    %v2727 = vadd.f32 0.0, %v2726
    %v2728 = vpop.f32.mrb[0].mxu0
    %2729 = vmatprep.mubr.f32.mxu0 0.0
    %2730 = vmatmul.mubr.f32.gmra.mrb[0].mxu0 %v2360
    %v2731 = vpop.f32.mrb[0].mxu0
    %v2732 = vadd.f32 0.0, %v2731
    %v2733 = vpop.f32.mrb[0].mxu0
    %2734 = vmatprep.mubr.f32.mxu0 0.0
    %2735 = vmatmul.mubr.f32.gmra.mrb[0].mxu0 %v2363
    %v2736 = vpop.f32.mrb[0].mxu0
    %v2737 = vadd.f32 0.0, %v2736
    %v2738 = vpop.f32.mrb[0].mxu0
    %2739 = vmatprep.mubr.f32.mxu0 0.0
    %2740 = vmatmul.mubr.f32.gmra.mrb[0].mxu0 %v2366
    %v2741 = vpop.f32.mrb[0].mxu0
    %v2742 = vadd.f32 0.0, %v2741
    %v2743 = vpop.f32.mrb[0].mxu0
    %2744 = vmatprep.mubr.f32.mxu0 0.0
    %2745 = vmatmul.mubr.f32.gmra.mrb[0].mxu0 %v2369
    %v2746 = vpop.f32.mrb[0].mxu0
    %v2747 = vadd.f32 0.0, %v2746
    %v2748 = vpop.f32.mrb[0].mxu0
    %2749 = vmatprep.mubr.f32.mxu0 0.0
    %2750 = vmatmul.mubr.f32.gmra.mrb[0].mxu0 %v2372
    %v2751 = vpop.f32.mrb[0].mxu0
    %v2752 = vadd.f32 0.0, %v2751
    %v2753 = vpop.f32.mrb[0].mxu0
    %2754 = vmatprep.mubr.f32.mxu0 0.0
    %2755 = vmatmul.mubr.f32.gmra.mrb[0].mxu0 %v2375
    %v2756 = vpop.f32.mrb[0].mxu0
    %v2757 = vadd.f32 0.0, %v2756
    %v2758 = vpop.f32.mrb[0].mxu0
    %2759 = vmatprep.mubr.f32.mxu0 0.0
    %2760 = vmatmul.mubr.f32.gmra.mrb[0].mxu0 %v2378
    %v2761 = vpop.f32.mrb[0].mxu0
    %v2762 = vadd.f32 0.0, %v2761
    %v2763 = vpop.f32.mrb[0].mxu0
    %2764 = vmatprep.mubr.f32.mxu0 0.0
    %2765 = vmatmul.mubr.f32.gmra.mrb[0].mxu0 %v2381
    %v2766 = vpop.f32.mrb[0].mxu0
    %v2767 = vadd.f32 0.0, %v2766
    %v2768 = vpop.f32.mrb[0].mxu0
    %2769 = vmatprep.mubr.f32.mxu0 0.0
    %2770 = vmatmul.mubr.f32.gmra.mrb[0].mxu0 %v2384
    %v2771 = vpop.f32.mrb[0].mxu0
    %v2772 = vadd.f32 0.0, %v2771
    %v2773 = vpop.f32.mrb[0].mxu0
    %2774 = vmatprep.mubr.f32.mxu0 0.0
    %2775 = vmatmul.mubr.f32.gmra.mrb[0].mxu0 %v2387
    %v2776 = vpop.f32.mrb[0].mxu0
    %v2777 = vadd.f32 0.0, %v2776
    %v2778 = vpop.f32.mrb[0].mxu0
    %2779 = vmatprep.mubr.f32.mxu0 0.0
    %2780 = vmatmul.mubr.f32.gmra.mrb[0].mxu0 %v2390
    %v2781 = vpop.f32.mrb[0].mxu0
    %v2782 = vadd.f32 0.0, %v2781
    %v2783 = vpop.f32.mrb[0].mxu0
    %2784 = vmatprep.mubr.f32.mxu0 0.0
    %2785 = vmatmul.mubr.f32.gmra.mrb[0].mxu0 %v2393
    %v2786 = vpop.f32.mrb[0].mxu0
    %v2787 = vadd.f32 0.0, %v2786
    %v2788 = vpop.f32.mrb[0].mxu0
    %2789 = vmatprep.mubr.f32.mxu0 0.0
    %2790 = vmatmul.mubr.f32.gmra.mrb[0].mxu0 %v2396
    %v2791 = vpop.f32.mrb[0].mxu0
    %v2792 = vadd.f32 0.0, %v2791
    %v2793 = vpop.f32.mrb[0].mxu0
    %2794 = vmatprep.mubr.f32.mxu0 0.0
    %2795 = vmatmul.mubr.f32.gmra.mrb[0].mxu0 %v2399
    %v2796 = vpop.f32.mrb[0].mxu0
    %v2797 = vadd.f32 0.0, %v2796
    %v2798 = vpop.f32.mrb[0].mxu0
    %2799 = vmatprep.mubr.f32.mxu0 0.0
    %2800 = vmatmul.mubr.f32.gmra.mrb[0].mxu0 %v2402
    %v2801 = vpop.f32.mrb[0].mxu0
    %v2802 = vadd.f32 0.0, %v2801
    %v2803 = vpop.f32.mrb[0].mxu0
    %2804 = vmatprep.mubr.f32.mxu0 0.0
    %2805 = vmatmul.mubr.f32.gmra.mrb[0].mxu0 %v2405
    %v2806 = vpop.f32.mrb[0].mxu0
    %v2807 = vadd.f32 0.0, %v2806
    %v2808 = vpop.f32.mrb[0].mxu0
    %2809 = vmatprep.mubr.f32.mxu0 0.0
    %2810 = vmatmul.mubr.f32.gmra.mrb[0].mxu0 %v2408
    %v2811 = vpop.f32.mrb[0].mxu0
    %v2812 = vadd.f32 0.0, %v2811
    %v2813 = vpop.f32.mrb[0].mxu0
    %2814 = vmatprep.mubr.f32.mxu0 0.0
    %2815 = vmatmul.mubr.f32.gmra.mrb[0].mxu0 %v2411
    %v2816 = vpop.f32.mrb[0].mxu0
    %v2817 = vadd.f32 0.0, %v2816
    %v2818 = vpop.f32.mrb[0].mxu0
    %2819 = vmatprep.mubr.f32.mxu0 0.0
    %2820 = vmatmul.mubr.f32.gmra.mrb[0].mxu0 %v2414
    %v2821 = vpop.f32.mrb[0].mxu0
    %v2822 = vadd.f32 0.0, %v2821
    %v2823 = vpop.f32.mrb[0].mxu0
    %2824 = vmatprep.mubr.f32.mxu0 0.0
    %2825 = vmatmul.mubr.f32.gmra.mrb[0].mxu0 %v2417
    %v2826 = vpop.f32.mrb[0].mxu0
    %v2827 = vadd.f32 0.0, %v2826
    %v2828 = vpop.f32.mrb[0].mxu0
    %2829 = vmatprep.mubr.f32.mxu0 0.0
    %2830 = vmatmul.mubr.f32.gmra.mrb[0].mxu0 %v2420
    %v2831 = vpop.f32.mrb[0].mxu0
    %v2832 = vadd.f32 0.0, %v2831
    %v2833 = vpop.f32.mrb[0].mxu0
    %2834 = vmatprep.mubr.f32.mxu0 0.0
    %2835 = vmatmul.mubr.f32.gmra.mrb[0].mxu0 %v2423
    %v2836 = vpop.f32.mrb[0].mxu0
    %v2837 = vadd.f32 0.0, %v2836
    %v2838 = vpop.f32.mrb[0].mxu0
    %2839 = vmatprep.mubr.f32.mxu0 0.0
    %2840 = vmatmul.mubr.f32.gmra.mrb[0].mxu0 %v2426
    %v2841 = vpop.f32.mrb[0].mxu0
    %v2842 = vadd.f32 0.0, %v2841
    %v2843 = vpop.f32.mrb[0].mxu0
    %2844 = vmatprep.mubr.f32.mxu0 0.0
    %2845 = vmatmul.mubr.f32.gmra.mrb[0].mxu0 %v2429
    %v2846 = vpop.f32.mrb[0].mxu0
    %v2847 = vadd.f32 0.0, %v2846
    %v2848 = vpop.f32.mrb[0].mxu0
    %2849 = vmatprep.mubr.f32.mxu0 0.0
    %2850 = vmatmul.mubr.f32.gmra.mrb[0].mxu0 %v2432
    %v2851 = vpop.f32.mrb[0].mxu0
    %v2852 = vadd.f32 0.0, %v2851
    %v2853 = vpop.f32.mrb[0].mxu0
    %2854 = vmatprep.mubr.f32.mxu0 0.0
    %2855 = vmatmul.mubr.f32.gmra.mrb[0].mxu0 %v2435
    %v2856 = vpop.f32.mrb[0].mxu0
    %v2857 = vadd.f32 0.0, %v2856
    %v2858 = vpop.f32.mrb[0].mxu0
    %2859 = vmatprep.mubr.f32.mxu0 0.0
    %2860 = vmatmul.mubr.f32.gmra.mrb[0].mxu0 %v2438
    %v2861 = vpop.f32.mrb[0].mxu0
    %v2862 = vadd.f32 0.0, %v2861
    %v2863 = vpop.f32.mrb[0].mxu0
    %2864 = vmatprep.mubr.f32.mxu0 0.0
    %2865 = vmatmul.mubr.f32.gmra.mrb[0].mxu0 %v2441
    %v2866 = vpop.f32.mrb[0].mxu0
    %v2867 = vadd.f32 0.0, %v2866
    %v2868 = vpop.f32.mrb[0].mxu0
    %2869 = vmatprep.mubr.f32.mxu0 0.0
    %2870 = vmatmul.mubr.f32.gmra.mrb[0].mxu0 %v2444
    %v2871 = vpop.f32.mrb[0].mxu0
    %v2872 = vadd.f32 0.0, %v2871
    %v2873 = vpop.f32.mrb[0].mxu0
    %2874 = vmatprep.mubr.f32.mxu0 0.0
    %2875 = vmatmul.mubr.f32.gmra.mrb[0].mxu0 %v2447
    %v2876 = vpop.f32.mrb[0].mxu0
    %v2877 = vadd.f32 0.0, %v2876
    %v2878 = vpop.f32.mrb[0].mxu0
    %2879 = vmatprep.mubr.f32.mxu0 0.0
    %2880 = vmatmul.mubr.f32.gmra.mrb[0].mxu0 %v2450
    %v2881 = vpop.f32.mrb[0].mxu0
    %v2882 = vadd.f32 0.0, %v2881
    %v2883 = vpop.f32.mrb[0].mxu0
    %2884 = vmatprep.mubr.f32.mxu0 0.0
    %2885 = vmatmul.mubr.f32.gmra.mrb[0].mxu0 %v2453
    %v2886 = vpop.f32.mrb[0].mxu0
    %v2887 = vadd.f32 0.0, %v2886
    %v2888 = vpop.f32.mrb[0].mxu0
    %2889 = vmatprep.mubr.f32.mxu0 0.0
    %2890 = vmatmul.mubr.f32.gmra.mrb[0].mxu0 %v2456
    %v2891 = vpop.f32.mrb[0].mxu0
    %v2892 = vadd.f32 0.0, %v2891
    %v2893 = vpop.f32.mrb[0].mxu0
    %2894 = vmatprep.mubr.f32.mxu0 0.0
    %2895 = vmatmul.mubr.f32.gmra.mrb[0].mxu0 %v2459
    %v2896 = vpop.f32.mrb[0].mxu0
    %v2897 = vadd.f32 0.0, %v2896
    %v2898 = vpop.f32.mrb[0].mxu0
    %2899 = vmatprep.mubr.f32.mxu0 0.0
    %2900 = vmatmul.mubr.f32.gmra.mrb[0].mxu0 %v2462
    %v2901 = vpop.f32.mrb[0].mxu0
    %v2902 = vadd.f32 0.0, %v2901
    %v2903 = vpop.f32.mrb[0].mxu0
    %2904 = vmatprep.mubr.f32.mxu0 0.0
    %2905 = vmatmul.mubr.f32.gmra.mrb[0].mxu0 %v2465
    %v2906 = vpop.f32.mrb[0].mxu0
    %v2907 = vadd.f32 0.0, %v2906
    %v2908 = vpop.f32.mrb[0].mxu0
    %2909 = vmatprep.mubr.f32.mxu0 0.0
    %2910 = vmatmul.mubr.f32.gmra.mrb[0].mxu0 %v2468
    %v2911 = vpop.f32.mrb[0].mxu0
    %v2912 = vadd.f32 0.0, %v2911
    %v2913 = vpop.f32.mrb[0].mxu0
    %2914 = vmatprep.mubr.f32.mxu0 0.0
    %2915 = vmatmul.mubr.f32.gmra.mrb[0].mxu0 %v2471
    %v2916 = vpop.f32.mrb[0].mxu0
    %v2917 = vadd.f32 0.0, %v2916
    %v2918 = vpop.f32.mrb[0].mxu0
    %2919 = vmatprep.mubr.f32.mxu0 0.0
    %2920 = vmatmul.mubr.f32.gmra.mrb[0].mxu0 %v2474
    %v2921 = vpop.f32.mrb[0].mxu0
    %v2922 = vadd.f32 0.0, %v2921
    %v2923 = vpop.f32.mrb[0].mxu0
    %2924 = vmatprep.mubr.f32.mxu0 0.0
    %2925 = vmatmul.mubr.f32.gmra.mrb[0].mxu0 %v2477
    %v2926 = vpop.f32.mrb[0].mxu0
    %v2927 = vadd.f32 0.0, %v2926
    %v2928 = vpop.f32.mrb[0].mxu0
    %2929 = vmatprep.mubr.f32.mxu0 0.0
    %2930 = vmatmul.mubr.f32.gmra.mrb[0].mxu0 %v2480
    %v2931 = vpop.f32.mrb[0].mxu0
    %v2932 = vadd.f32 0.0, %v2931
    %v2933 = vpop.f32.mrb[0].mxu0
    %2934 = vmatprep.mubr.f32.mxu0 0.0
    %2935 = vmatmul.mubr.f32.gmra.mrb[0].mxu0 %v2483
    %v2936 = vpop.f32.mrb[0].mxu0
    %v2937 = vadd.f32 0.0, %v2936
    %v2938 = vpop.f32.mrb[0].mxu0
    %2939 = vmatprep.mubr.f32.mxu0 0.0
    %2940 = vmatmul.mubr.f32.gmra.mrb[0].mxu0 %v2486
    %v2941 = vpop.f32.mrb[0].mxu0
    %v2942 = vadd.f32 0.0, %v2941
    %v2943 = vpop.f32.mrb[0].mxu0
    %2944 = vmatprep.mubr.f32.mxu0 0.0
    %2945 = vmatmul.mubr.f32.gmra.mrb[0].mxu0 %v2489
    %v2946 = vpop.f32.mrb[0].mxu0
    %v2947 = vadd.f32 0.0, %v2946
    %v2948 = vpop.f32.mrb[0].mxu0
    %2949 = vmatprep.mubr.f32.mxu0 0.0
    %2950 = vmatmul.mubr.f32.gmra.mrb[0].mxu0 %v2492
    %v2951 = vpop.f32.mrb[0].mxu0
    %v2952 = vadd.f32 0.0, %v2951
    %v2953 = vpop.f32.mrb[0].mxu0
    %2954 = vmatprep.mubr.f32.mxu0 0.0
    %2955 = vmatmul.mubr.f32.gmra.mrb[0].mxu0 %v2495
    %v2956 = vpop.f32.mrb[0].mxu0
    %v2957 = vadd.f32 0.0, %v2956
    %v2958 = vpop.f32.mrb[0].mxu0
    %2959 = vmatprep.mubr.f32.mxu0 0.0
    %2960 = vmatmul.mubr.f32.gmra.mrb[0].mxu0 %v2498
    %v2961 = vpop.f32.mrb[0].mxu0
    %v2962 = vadd.f32 0.0, %v2961
    %v2963 = vpop.f32.mrb[0].mxu0
    %2964 = vmatprep.mubr.f32.mxu0 0.0
    %2965 = vmatmul.mubr.f32.gmra.mrb[0].mxu0 %v2501
    %v2966 = vpop.f32.mrb[0].mxu0
    %v2967 = vadd.f32 0.0, %v2966
    %v2968 = vpop.f32.mrb[0].mxu0
    %2969 = vmatprep.mubr.f32.mxu0 0.0
    %2970 = vmatmul.mubr.f32.gmra.mrb[0].mxu0 %v2504
    %v2971 = vpop.f32.mrb[0].mxu0
    %v2972 = vadd.f32 0.0, %v2971
    %v2973 = vpop.f32.mrb[0].mxu0
    %2974 = vmatprep.mubr.f32.mxu0 0.0
    %2975 = vmatmul.mubr.f32.gmra.mrb[0].mxu0 %v2507
    %v2976 = vpop.f32.mrb[0].mxu0
    %v2977 = vadd.f32 0.0, %v2976
    %v2978 = vpop.f32.mrb[0].mxu0
    %2979 = vmatprep.mubr.f32.mxu0 0.0
    %2980 = vmatmul.mubr.f32.gmra.mrb[0].mxu0 %v2510
    %v2981 = vpop.f32.mrb[0].mxu0
    %v2982 = vadd.f32 0.0, %v2981
    %v2983 = vpop.f32.mrb[0].mxu0
    %2984 = vmatprep.mubr.f32.mxu0 0.0
    %2985 = vmatmul.mubr.f32.gmra.mrb[0].mxu0 %v2513
    %v2986 = vpop.f32.mrb[0].mxu0
    %v2987 = vadd.f32 0.0, %v2986
    %v2988 = vpop.f32.mrb[0].mxu0
    %2989 = vmatprep.mubr.f32.mxu0 0.0
    %2990 = vmatmul.mubr.f32.gmra.mrb[0].mxu0 %v2516
    %v2991 = vpop.f32.mrb[0].mxu0
    %v2992 = vadd.f32 0.0, %v2991
    %v2993 = vpop.f32.mrb[0].mxu0
    %2994 = vmatprep.mubr.f32.mxu0 0.0
    %2995 = vmatmul.mubr.f32.gmra.mrb[0].mxu0 %v2519
    %v2996 = vpop.f32.mrb[0].mxu0
    %v2997 = vadd.f32 0.0, %v2996
    %v2998 = vpop.f32.mrb[0].mxu0
    %2999 = vdwg.mxu0
    %v3001 = vsel %vm2023, %v2106, 0
    %v3004 = vsel %vm2023, %v2107, 0
    %v3007 = vsel %vm2023, %v2108, 0
    %v3010 = vsel %vm2023, %v2109, 0
    %v3013 = vsel %vm2023, %v2110, 0
    %v3016 = vsel %vm2023, %v2111, 0
    %v3019 = vsel %vm2023, %v2112, 0
    %v3022 = vsel %vm2023, %v2113, 0
    %v3025 = vsel %vm2023, %v2114, 0
    %v3028 = vsel %vm2023, %v2115, 0
    %v3031 = vsel %vm2023, %v2116, 0
    %v3034 = vsel %vm2023, %v2117, 0
    %v3037 = vsel %vm2023, %v2118, 0
    %v3040 = vsel %vm2023, %v2119, 0
    %v3043 = vsel %vm2023, %v2120, 0
    %v3046 = vsel %vm2023, %v2121, 0
    %v3049 = vsel %vm2023, %v2122, 0
    %v3052 = vsel %vm2023, %v2123, 0
    %v3055 = vsel %vm2023, %v2124, 0
    %v3058 = vsel %vm2023, %v2125, 0
    %v3061 = vsel %vm2023, %v2126, 0
    %v3064 = vsel %vm2023, %v2127, 0
    %v3067 = vsel %vm2023, %v2128, 0
    %v3070 = vsel %vm2023, %v2129, 0
    %v3073 = vsel %vm2023, %v2130, 0
    %v3076 = vsel %vm2023, %v2131, 0
    %v3079 = vsel %vm2023, %v2132, 0
    %v3082 = vsel %vm2023, %v2133, 0
    %v3085 = vsel %vm2023, %v2134, 0
    %v3088 = vsel %vm2023, %v2135, 0
    %v3091 = vsel %vm2023, %v2136, 0
    %v3094 = vsel %vm2023, %v2137, 0
    %v3097 = vsel %vm2023, %v2138, 0
    %v3100 = vsel %vm2023, %v2139, 0
    %v3103 = vsel %vm2023, %v2140, 0
    %v3106 = vsel %vm2023, %v2141, 0
    %v3109 = vsel %vm2023, %v2142, 0
    %v3112 = vsel %vm2023, %v2143, 0
    %v3115 = vsel %vm2023, %v2144, 0
    %v3118 = vsel %vm2023, %v2145, 0
    %v3121 = vsel %vm2023, %v2146, 0
    %v3124 = vsel %vm2023, %v2147, 0
    %v3127 = vsel %vm2023, %v2148, 0
    %v3130 = vsel %vm2023, %v2149, 0
    %v3133 = vsel %vm2023, %v2150, 0
    %v3136 = vsel %vm2023, %v2151, 0
    %v3139 = vsel %vm2023, %v2152, 0
    %v3142 = vsel %vm2023, %v2153, 0
    %v3145 = vsel %vm2023, %v2154, 0
    %v3148 = vsel %vm2023, %v2155, 0
    %v3151 = vsel %vm2023, %v2156, 0
    %v3154 = vsel %vm2023, %v2157, 0
    %v3157 = vsel %vm2023, %v2158, 0
    %v3160 = vsel %vm2023, %v2159, 0
    %v3163 = vsel %vm2023, %v2160, 0
    %v3166 = vsel %vm2023, %v2161, 0
    %v3169 = vsel %vm2023, %v2162, 0
    %v3172 = vsel %vm2023, %v2163, 0
    %v3175 = vsel %vm2023, %v2164, 0
    %v3178 = vsel %vm2023, %v2165, 0
    %v3181 = vsel %vm2023, %v2166, 0
    %v3184 = vsel %vm2023, %v2167, 0
    %v3187 = vsel %vm2023, %v2168, 0
    %v3190 = vsel %vm2023, %v2169, 0
    %v3193 = vsel %vm2023, %v2170, 0
    %v3196 = vsel %vm2023, %v2171, 0
    %v3199 = vsel %vm2023, %v2172, 0
    %v3202 = vsel %vm2023, %v2173, 0
    %v3205 = vsel %vm2023, %v2174, 0
    %v3208 = vsel %vm2023, %v2175, 0
    %v3211 = vsel %vm2023, %v2176, 0
    %v3214 = vsel %vm2023, %v2177, 0
    %v3217 = vsel %vm2023, %v2178, 0
    %v3220 = vsel %vm2023, %v2179, 0
    %v3223 = vsel %vm2023, %v2180, 0
    %v3226 = vsel %vm2023, %v2181, 0
    %v3229 = vsel %vm2023, %v2182, 0
    %v3232 = vsel %vm2023, %v2183, 0
    %v3235 = vsel %vm2023, %v2184, 0
    %v3238 = vsel %vm2023, %v2185, 0
    %v3241 = vsel %vm2023, %v2186, 0
    %v3244 = vsel %vm2023, %v2187, 0
    %v3247 = vsel %vm2521, %v2189, 0
    %3249 = vmatprep.subr.mxu0 0.0
    %3250 = vmatpush1.msra.mxu0 %v2188
    %3251 = vmatprep.subr.mxu0 0.0
    %3252 = vmatpush1.msra.mxu0 %v3247
    %3253 = vmatprep.subr.mxu0 0.0
    %3254 = vmatpush1.msra.mxu0 0.0
    %3255 = vmatprep.subr.mxu0 0.0
    %3256 = vmatpush1.msra.mxu0 0.0
    %3257 = vmatprep.subr.mxu0 0.0
    %3258 = vmatpush1.msra.mxu0 0.0
    %3259 = vmatprep.subr.mxu0 0.0
    %3260 = vmatpush1.msra.mxu0 0.0
    %3261 = vmatprep.subr.mxu0 0.0
    %3262 = vmatpush1.msra.mxu0 0.0
    %3263 = vmatprep.subr.mxu0 0.0
    %3264 = vmatpush1.msra.mxu0 0.0
    %3265 = vmatprep.subr.mxu0 0.0
    %3266 = vmatpush1.msra.mxu0 0.0
    %3267 = vmatprep.subr.mxu0 0.0
    %3268 = vmatpush1.msra.mxu0 0.0
    %3269 = vmatprep.subr.mxu0 0.0
    %3270 = vmatpush1.msra.mxu0 0.0
    %3271 = vmatprep.subr.mxu0 0.0
    %3272 = vmatpush1.msra.mxu0 0.0
    %3273 = vmatprep.subr.mxu0 0.0
    %3274 = vmatpush1.msra.mxu0 0.0
    %3275 = vmatprep.subr.mxu0 0.0
    %3276 = vmatpush1.msra.mxu0 0.0
    %3277 = vmatprep.subr.mxu0 0.0
    %3278 = vmatpush1.msra.mxu0 0.0
    %3279 = vmatprep.subr.mxu0 0.0
    %3280 = vmatpush1.msra.mxu0 0.0
    %3281 = vmatprep.subr.mxu0 0.0
    %3282 = vmatpush1.msra.mxu0 0.0
    %3283 = vmatprep.subr.mxu0 0.0
    %3284 = vmatpush1.msra.mxu0 0.0
    %3285 = vmatprep.subr.mxu0 0.0
    %3286 = vmatpush1.msra.mxu0 0.0
    %3287 = vmatprep.subr.mxu0 0.0
    %3288 = vmatpush1.msra.mxu0 0.0
    %3289 = vmatprep.subr.mxu0 0.0
    %3290 = vmatpush1.msra.mxu0 0.0
    %3291 = vmatprep.subr.mxu0 0.0
    %3292 = vmatpush1.msra.mxu0 0.0
    %3293 = vmatprep.subr.mxu0 0.0
    %3294 = vmatpush1.msra.mxu0 0.0
    %3295 = vmatprep.subr.mxu0 0.0
    %3296 = vmatpush1.msra.mxu0 0.0
    %3297 = vmatprep.subr.mxu0 0.0
    %3298 = vmatpush1.msra.mxu0 0.0
    %3299 = vmatprep.subr.mxu0 0.0
    %3300 = vmatpush1.msra.mxu0 0.0
    %3301 = vmatprep.subr.mxu0 0.0
    %3302 = vmatpush1.msra.mxu0 0.0
    %3303 = vmatprep.subr.mxu0 0.0
    %3304 = vmatpush1.msra.mxu0 0.0
    %3305 = vmatprep.subr.mxu0 0.0
    %3306 = vmatpush1.msra.mxu0 0.0
    %3307 = vmatprep.subr.mxu0 0.0
    %3308 = vmatpush1.msra.mxu0 0.0
    %3309 = vmatprep.subr.mxu0 0.0
    %3310 = vmatpush1.msra.mxu0 0.0
    %3311 = vmatprep.subr.mxu0 0.0
    %3312 = vmatpush1.msra.mxu0 0.0
    %3313 = vmatprep.mubr.f32.mxu0 0.0
    %3314 = vmatmul.mubr.f32.gmra.mrb[0].mxu0 %v3001
    %v3315 = vpop.f32.mrb[0].mxu0
    %v3316 = vadd.f32 %v2592, %v3315
    %v3317 = vpop.f32.mrb[0].mxu0
    %3318 = vmatprep.mubr.f32.mxu0 0.0
    %3319 = vmatmul.mubr.f32.gmra.mrb[0].mxu0 %v3004
    %v3320 = vpop.f32.mrb[0].mxu0
    %v3321 = vadd.f32 %v2597, %v3320
    %v3322 = vpop.f32.mrb[0].mxu0
    %3323 = vmatprep.mubr.f32.mxu0 0.0
    %3324 = vmatmul.mubr.f32.gmra.mrb[0].mxu0 %v3007
    %v3325 = vpop.f32.mrb[0].mxu0
    %v3326 = vadd.f32 %v2602, %v3325
    %v3327 = vpop.f32.mrb[0].mxu0
    %3328 = vmatprep.mubr.f32.mxu0 0.0
    %3329 = vmatmul.mubr.f32.gmra.mrb[0].mxu0 %v3010
    %v3330 = vpop.f32.mrb[0].mxu0
    %v3331 = vadd.f32 %v2607, %v3330
    %v3332 = vpop.f32.mrb[0].mxu0
    %3333 = vmatprep.mubr.f32.mxu0 0.0
    %3334 = vmatmul.mubr.f32.gmra.mrb[0].mxu0 %v3013
    %v3335 = vpop.f32.mrb[0].mxu0
    %v3336 = vadd.f32 %v2612, %v3335
    %v3337 = vpop.f32.mrb[0].mxu0
    %3338 = vmatprep.mubr.f32.mxu0 0.0
    %3339 = vmatmul.mubr.f32.gmra.mrb[0].mxu0 %v3016
    %v3340 = vpop.f32.mrb[0].mxu0
    %v3341 = vadd.f32 %v2617, %v3340
    %v3342 = vpop.f32.mrb[0].mxu0
    %3343 = vmatprep.mubr.f32.mxu0 0.0
    %3344 = vmatmul.mubr.f32.gmra.mrb[0].mxu0 %v3019
    %v3345 = vpop.f32.mrb[0].mxu0
    %v3346 = vadd.f32 %v2622, %v3345
    %v3347 = vpop.f32.mrb[0].mxu0
    %3348 = vmatprep.mubr.f32.mxu0 0.0
    %3349 = vmatmul.mubr.f32.gmra.mrb[0].mxu0 %v3022
    %v3350 = vpop.f32.mrb[0].mxu0
    %v3351 = vadd.f32 %v2627, %v3350
    %v3352 = vpop.f32.mrb[0].mxu0
    %3353 = vmatprep.mubr.f32.mxu0 0.0
    %3354 = vmatmul.mubr.f32.gmra.mrb[0].mxu0 %v3025
    %v3355 = vpop.f32.mrb[0].mxu0
    %v3356 = vadd.f32 %v2632, %v3355
    %v3357 = vpop.f32.mrb[0].mxu0
    %3358 = vmatprep.mubr.f32.mxu0 0.0
    %3359 = vmatmul.mubr.f32.gmra.mrb[0].mxu0 %v3028
    %v3360 = vpop.f32.mrb[0].mxu0
    %v3361 = vadd.f32 %v2637, %v3360
    %v3362 = vpop.f32.mrb[0].mxu0
    %3363 = vmatprep.mubr.f32.mxu0 0.0
    %3364 = vmatmul.mubr.f32.gmra.mrb[0].mxu0 %v3031
    %v3365 = vpop.f32.mrb[0].mxu0
    %v3366 = vadd.f32 %v2642, %v3365
    %v3367 = vpop.f32.mrb[0].mxu0
    %3368 = vmatprep.mubr.f32.mxu0 0.0
    %3369 = vmatmul.mubr.f32.gmra.mrb[0].mxu0 %v3034
    %v3370 = vpop.f32.mrb[0].mxu0
    %v3371 = vadd.f32 %v2647, %v3370
    %v3372 = vpop.f32.mrb[0].mxu0
    %3373 = vmatprep.mubr.f32.mxu0 0.0
    %3374 = vmatmul.mubr.f32.gmra.mrb[0].mxu0 %v3037
    %v3375 = vpop.f32.mrb[0].mxu0
    %v3376 = vadd.f32 %v2652, %v3375
    %v3377 = vpop.f32.mrb[0].mxu0
    %3378 = vmatprep.mubr.f32.mxu0 0.0
    %3379 = vmatmul.mubr.f32.gmra.mrb[0].mxu0 %v3040
    %v3380 = vpop.f32.mrb[0].mxu0
    %v3381 = vadd.f32 %v2657, %v3380
    %v3382 = vpop.f32.mrb[0].mxu0
    %3383 = vmatprep.mubr.f32.mxu0 0.0
    %3384 = vmatmul.mubr.f32.gmra.mrb[0].mxu0 %v3043
    %v3385 = vpop.f32.mrb[0].mxu0
    %v3386 = vadd.f32 %v2662, %v3385
    %v3387 = vpop.f32.mrb[0].mxu0
    %3388 = vmatprep.mubr.f32.mxu0 0.0
    %3389 = vmatmul.mubr.f32.gmra.mrb[0].mxu0 %v3046
    %v3390 = vpop.f32.mrb[0].mxu0
    %v3391 = vadd.f32 %v2667, %v3390
    %v3392 = vpop.f32.mrb[0].mxu0
    %3393 = vmatprep.mubr.f32.mxu0 0.0
    %3394 = vmatmul.mubr.f32.gmra.mrb[0].mxu0 %v3049
    %v3395 = vpop.f32.mrb[0].mxu0
    %v3396 = vadd.f32 %v2672, %v3395
    %v3397 = vpop.f32.mrb[0].mxu0
    %3398 = vmatprep.mubr.f32.mxu0 0.0
    %3399 = vmatmul.mubr.f32.gmra.mrb[0].mxu0 %v3052
    %v3400 = vpop.f32.mrb[0].mxu0
    %v3401 = vadd.f32 %v2677, %v3400
    %v3402 = vpop.f32.mrb[0].mxu0
    %3403 = vmatprep.mubr.f32.mxu0 0.0
    %3404 = vmatmul.mubr.f32.gmra.mrb[0].mxu0 %v3055
    %v3405 = vpop.f32.mrb[0].mxu0
    %v3406 = vadd.f32 %v2682, %v3405
    %v3407 = vpop.f32.mrb[0].mxu0
    %3408 = vmatprep.mubr.f32.mxu0 0.0
    %3409 = vmatmul.mubr.f32.gmra.mrb[0].mxu0 %v3058
    %v3410 = vpop.f32.mrb[0].mxu0
    %v3411 = vadd.f32 %v2687, %v3410
    %v3412 = vpop.f32.mrb[0].mxu0
    %3413 = vmatprep.mubr.f32.mxu0 0.0
    %3414 = vmatmul.mubr.f32.gmra.mrb[0].mxu0 %v3061
    %v3415 = vpop.f32.mrb[0].mxu0
    %v3416 = vadd.f32 %v2692, %v3415
    %v3417 = vpop.f32.mrb[0].mxu0
    %3418 = vmatprep.mubr.f32.mxu0 0.0
    %3419 = vmatmul.mubr.f32.gmra.mrb[0].mxu0 %v3064
    %v3420 = vpop.f32.mrb[0].mxu0
    %v3421 = vadd.f32 %v2697, %v3420
    %v3422 = vpop.f32.mrb[0].mxu0
    %3423 = vmatprep.mubr.f32.mxu0 0.0
    %3424 = vmatmul.mubr.f32.gmra.mrb[0].mxu0 %v3067
    %v3425 = vpop.f32.mrb[0].mxu0
    %v3426 = vadd.f32 %v2702, %v3425
    %v3427 = vpop.f32.mrb[0].mxu0
    %3428 = vmatprep.mubr.f32.mxu0 0.0
    %3429 = vmatmul.mubr.f32.gmra.mrb[0].mxu0 %v3070
    %v3430 = vpop.f32.mrb[0].mxu0
    %v3431 = vadd.f32 %v2707, %v3430
    %v3432 = vpop.f32.mrb[0].mxu0
    %3433 = vmatprep.mubr.f32.mxu0 0.0
    %3434 = vmatmul.mubr.f32.gmra.mrb[0].mxu0 %v3073
    %v3435 = vpop.f32.mrb[0].mxu0
    %v3436 = vadd.f32 %v2712, %v3435
    %v3437 = vpop.f32.mrb[0].mxu0
    %3438 = vmatprep.mubr.f32.mxu0 0.0
    %3439 = vmatmul.mubr.f32.gmra.mrb[0].mxu0 %v3076
    %v3440 = vpop.f32.mrb[0].mxu0
    %v3441 = vadd.f32 %v2717, %v3440
    %v3442 = vpop.f32.mrb[0].mxu0
    %3443 = vmatprep.mubr.f32.mxu0 0.0
    %3444 = vmatmul.mubr.f32.gmra.mrb[0].mxu0 %v3079
    %v3445 = vpop.f32.mrb[0].mxu0
    %v3446 = vadd.f32 %v2722, %v3445
    %v3447 = vpop.f32.mrb[0].mxu0
    %3448 = vmatprep.mubr.f32.mxu0 0.0
    %3449 = vmatmul.mubr.f32.gmra.mrb[0].mxu0 %v3082
    %v3450 = vpop.f32.mrb[0].mxu0
    %v3451 = vadd.f32 %v2727, %v3450
    %v3452 = vpop.f32.mrb[0].mxu0
    %3453 = vmatprep.mubr.f32.mxu0 0.0
    %3454 = vmatmul.mubr.f32.gmra.mrb[0].mxu0 %v3085
    %v3455 = vpop.f32.mrb[0].mxu0
    %v3456 = vadd.f32 %v2732, %v3455
    %v3457 = vpop.f32.mrb[0].mxu0
    %3458 = vmatprep.mubr.f32.mxu0 0.0
    %3459 = vmatmul.mubr.f32.gmra.mrb[0].mxu0 %v3088
    %v3460 = vpop.f32.mrb[0].mxu0
    %v3461 = vadd.f32 %v2737, %v3460
    %v3462 = vpop.f32.mrb[0].mxu0
    %3463 = vmatprep.mubr.f32.mxu0 0.0
    %3464 = vmatmul.mubr.f32.gmra.mrb[0].mxu0 %v3091
    %v3465 = vpop.f32.mrb[0].mxu0
    %v3466 = vadd.f32 %v2742, %v3465
    %v3467 = vpop.f32.mrb[0].mxu0
    %3468 = vmatprep.mubr.f32.mxu0 0.0
    %3469 = vmatmul.mubr.f32.gmra.mrb[0].mxu0 %v3094
    %v3470 = vpop.f32.mrb[0].mxu0
    %v3471 = vadd.f32 %v2747, %v3470
    %v3472 = vpop.f32.mrb[0].mxu0
    %3473 = vmatprep.mubr.f32.mxu0 0.0
    %3474 = vmatmul.mubr.f32.gmra.mrb[0].mxu0 %v3097
    %v3475 = vpop.f32.mrb[0].mxu0
    %v3476 = vadd.f32 %v2752, %v3475
    %v3477 = vpop.f32.mrb[0].mxu0
    %3478 = vmatprep.mubr.f32.mxu0 0.0
    %3479 = vmatmul.mubr.f32.gmra.mrb[0].mxu0 %v3100
    %v3480 = vpop.f32.mrb[0].mxu0
    %v3481 = vadd.f32 %v2757, %v3480
    %v3482 = vpop.f32.mrb[0].mxu0
    %3483 = vmatprep.mubr.f32.mxu0 0.0
    %3484 = vmatmul.mubr.f32.gmra.mrb[0].mxu0 %v3103
    %v3485 = vpop.f32.mrb[0].mxu0
    %v3486 = vadd.f32 %v2762, %v3485
    %v3487 = vpop.f32.mrb[0].mxu0
    %3488 = vmatprep.mubr.f32.mxu0 0.0
    %3489 = vmatmul.mubr.f32.gmra.mrb[0].mxu0 %v3106
    %v3490 = vpop.f32.mrb[0].mxu0
    %v3491 = vadd.f32 %v2767, %v3490
    %v3492 = vpop.f32.mrb[0].mxu0
    %3493 = vmatprep.mubr.f32.mxu0 0.0
    %3494 = vmatmul.mubr.f32.gmra.mrb[0].mxu0 %v3109
    %v3495 = vpop.f32.mrb[0].mxu0
    %v3496 = vadd.f32 %v2772, %v3495
    %v3497 = vpop.f32.mrb[0].mxu0
    %3498 = vmatprep.mubr.f32.mxu0 0.0
    %3499 = vmatmul.mubr.f32.gmra.mrb[0].mxu0 %v3112
    %v3500 = vpop.f32.mrb[0].mxu0
    %v3501 = vadd.f32 %v2777, %v3500
    %v3502 = vpop.f32.mrb[0].mxu0
    %3503 = vmatprep.mubr.f32.mxu0 0.0
    %3504 = vmatmul.mubr.f32.gmra.mrb[0].mxu0 %v3115
    %v3505 = vpop.f32.mrb[0].mxu0
    %v3506 = vadd.f32 %v2782, %v3505
    %v3507 = vpop.f32.mrb[0].mxu0
    %3508 = vmatprep.mubr.f32.mxu0 0.0
    %3509 = vmatmul.mubr.f32.gmra.mrb[0].mxu0 %v3118
    %v3510 = vpop.f32.mrb[0].mxu0
    %v3511 = vadd.f32 %v2787, %v3510
    %v3512 = vpop.f32.mrb[0].mxu0
    %3513 = vmatprep.mubr.f32.mxu0 0.0
    %3514 = vmatmul.mubr.f32.gmra.mrb[0].mxu0 %v3121
    %v3515 = vpop.f32.mrb[0].mxu0
    %v3516 = vadd.f32 %v2792, %v3515
    %v3517 = vpop.f32.mrb[0].mxu0
    %3518 = vmatprep.mubr.f32.mxu0 0.0
    %3519 = vmatmul.mubr.f32.gmra.mrb[0].mxu0 %v3124
    %v3520 = vpop.f32.mrb[0].mxu0
    %v3521 = vadd.f32 %v2797, %v3520
    %v3522 = vpop.f32.mrb[0].mxu0
    %3523 = vmatprep.mubr.f32.mxu0 0.0
    %3524 = vmatmul.mubr.f32.gmra.mrb[0].mxu0 %v3127
    %v3525 = vpop.f32.mrb[0].mxu0
    %v3526 = vadd.f32 %v2802, %v3525
    %v3527 = vpop.f32.mrb[0].mxu0
    %3528 = vmatprep.mubr.f32.mxu0 0.0
    %3529 = vmatmul.mubr.f32.gmra.mrb[0].mxu0 %v3130
    %v3530 = vpop.f32.mrb[0].mxu0
    %v3531 = vadd.f32 %v2807, %v3530
    %v3532 = vpop.f32.mrb[0].mxu0
    %3533 = vmatprep.mubr.f32.mxu0 0.0
    %3534 = vmatmul.mubr.f32.gmra.mrb[0].mxu0 %v3133
    %v3535 = vpop.f32.mrb[0].mxu0
    %v3536 = vadd.f32 %v2812, %v3535
    %v3537 = vpop.f32.mrb[0].mxu0
    %3538 = vmatprep.mubr.f32.mxu0 0.0
    %3539 = vmatmul.mubr.f32.gmra.mrb[0].mxu0 %v3136
    %v3540 = vpop.f32.mrb[0].mxu0
    %v3541 = vadd.f32 %v2817, %v3540
    %v3542 = vpop.f32.mrb[0].mxu0
    %3543 = vmatprep.mubr.f32.mxu0 0.0
    %3544 = vmatmul.mubr.f32.gmra.mrb[0].mxu0 %v3139
    %v3545 = vpop.f32.mrb[0].mxu0
    %v3546 = vadd.f32 %v2822, %v3545
    %v3547 = vpop.f32.mrb[0].mxu0
    %3548 = vmatprep.mubr.f32.mxu0 0.0
    %3549 = vmatmul.mubr.f32.gmra.mrb[0].mxu0 %v3142
    %v3550 = vpop.f32.mrb[0].mxu0
    %v3551 = vadd.f32 %v2827, %v3550
    %v3552 = vpop.f32.mrb[0].mxu0
    %3553 = vmatprep.mubr.f32.mxu0 0.0
    %3554 = vmatmul.mubr.f32.gmra.mrb[0].mxu0 %v3145
    %v3555 = vpop.f32.mrb[0].mxu0
    %v3556 = vadd.f32 %v2832, %v3555
    %v3557 = vpop.f32.mrb[0].mxu0
    %3558 = vmatprep.mubr.f32.mxu0 0.0
    %3559 = vmatmul.mubr.f32.gmra.mrb[0].mxu0 %v3148
    %v3560 = vpop.f32.mrb[0].mxu0
    %v3561 = vadd.f32 %v2837, %v3560
    %v3562 = vpop.f32.mrb[0].mxu0
    %3563 = vmatprep.mubr.f32.mxu0 0.0
    %3564 = vmatmul.mubr.f32.gmra.mrb[0].mxu0 %v3151
    %v3565 = vpop.f32.mrb[0].mxu0
    %v3566 = vadd.f32 %v2842, %v3565
    %v3567 = vpop.f32.mrb[0].mxu0
    %3568 = vmatprep.mubr.f32.mxu0 0.0
    %3569 = vmatmul.mubr.f32.gmra.mrb[0].mxu0 %v3154
    %v3570 = vpop.f32.mrb[0].mxu0
    %v3571 = vadd.f32 %v2847, %v3570
    %v3572 = vpop.f32.mrb[0].mxu0
    %3573 = vmatprep.mubr.f32.mxu0 0.0
    %3574 = vmatmul.mubr.f32.gmra.mrb[0].mxu0 %v3157
    %v3575 = vpop.f32.mrb[0].mxu0
    %v3576 = vadd.f32 %v2852, %v3575
    %v3577 = vpop.f32.mrb[0].mxu0
    %3578 = vmatprep.mubr.f32.mxu0 0.0
    %3579 = vmatmul.mubr.f32.gmra.mrb[0].mxu0 %v3160
    %v3580 = vpop.f32.mrb[0].mxu0
    %v3581 = vadd.f32 %v2857, %v3580
    %v3582 = vpop.f32.mrb[0].mxu0
    %3583 = vmatprep.mubr.f32.mxu0 0.0
    %3584 = vmatmul.mubr.f32.gmra.mrb[0].mxu0 %v3163
    %v3585 = vpop.f32.mrb[0].mxu0
    %v3586 = vadd.f32 %v2862, %v3585
    %v3587 = vpop.f32.mrb[0].mxu0
    %3588 = vmatprep.mubr.f32.mxu0 0.0
    %3589 = vmatmul.mubr.f32.gmra.mrb[0].mxu0 %v3166
    %v3590 = vpop.f32.mrb[0].mxu0
    %v3591 = vadd.f32 %v2867, %v3590
    %v3592 = vpop.f32.mrb[0].mxu0
    %3593 = vmatprep.mubr.f32.mxu0 0.0
    %3594 = vmatmul.mubr.f32.gmra.mrb[0].mxu0 %v3169
    %v3595 = vpop.f32.mrb[0].mxu0
    %v3596 = vadd.f32 %v2872, %v3595
    %v3597 = vpop.f32.mrb[0].mxu0
    %3598 = vmatprep.mubr.f32.mxu0 0.0
    %3599 = vmatmul.mubr.f32.gmra.mrb[0].mxu0 %v3172
    %v3600 = vpop.f32.mrb[0].mxu0
    %v3601 = vadd.f32 %v2877, %v3600
    %v3602 = vpop.f32.mrb[0].mxu0
    %3603 = vmatprep.mubr.f32.mxu0 0.0
    %3604 = vmatmul.mubr.f32.gmra.mrb[0].mxu0 %v3175
    %v3605 = vpop.f32.mrb[0].mxu0
    %v3606 = vadd.f32 %v2882, %v3605
    %v3607 = vpop.f32.mrb[0].mxu0
    %3608 = vmatprep.mubr.f32.mxu0 0.0
    %3609 = vmatmul.mubr.f32.gmra.mrb[0].mxu0 %v3178
    %v3610 = vpop.f32.mrb[0].mxu0
    %v3611 = vadd.f32 %v2887, %v3610
    %v3612 = vpop.f32.mrb[0].mxu0
    %3613 = vmatprep.mubr.f32.mxu0 0.0
    %3614 = vmatmul.mubr.f32.gmra.mrb[0].mxu0 %v3181
    %v3615 = vpop.f32.mrb[0].mxu0
    %v3616 = vadd.f32 %v2892, %v3615
    %v3617 = vpop.f32.mrb[0].mxu0
    %3618 = vmatprep.mubr.f32.mxu0 0.0
    %3619 = vmatmul.mubr.f32.gmra.mrb[0].mxu0 %v3184
    %v3620 = vpop.f32.mrb[0].mxu0
    %v3621 = vadd.f32 %v2897, %v3620
    %v3622 = vpop.f32.mrb[0].mxu0
    %3623 = vmatprep.mubr.f32.mxu0 0.0
    %3624 = vmatmul.mubr.f32.gmra.mrb[0].mxu0 %v3187
    %v3625 = vpop.f32.mrb[0].mxu0
    %v3626 = vadd.f32 %v2902, %v3625
    %v3627 = vpop.f32.mrb[0].mxu0
    %3628 = vmatprep.mubr.f32.mxu0 0.0
    %3629 = vmatmul.mubr.f32.gmra.mrb[0].mxu0 %v3190
    %v3630 = vpop.f32.mrb[0].mxu0
    %v3631 = vadd.f32 %v2907, %v3630
    %v3632 = vpop.f32.mrb[0].mxu0
    %3633 = vmatprep.mubr.f32.mxu0 0.0
    %3634 = vmatmul.mubr.f32.gmra.mrb[0].mxu0 %v3193
    %v3635 = vpop.f32.mrb[0].mxu0
    %v3636 = vadd.f32 %v2912, %v3635
    %v3637 = vpop.f32.mrb[0].mxu0
    %3638 = vmatprep.mubr.f32.mxu0 0.0
    %3639 = vmatmul.mubr.f32.gmra.mrb[0].mxu0 %v3196
    %v3640 = vpop.f32.mrb[0].mxu0
    %v3641 = vadd.f32 %v2917, %v3640
    %v3642 = vpop.f32.mrb[0].mxu0
    %3643 = vmatprep.mubr.f32.mxu0 0.0
    %3644 = vmatmul.mubr.f32.gmra.mrb[0].mxu0 %v3199
    %v3645 = vpop.f32.mrb[0].mxu0
    %v3646 = vadd.f32 %v2922, %v3645
    %v3647 = vpop.f32.mrb[0].mxu0
    %3648 = vmatprep.mubr.f32.mxu0 0.0
    %3649 = vmatmul.mubr.f32.gmra.mrb[0].mxu0 %v3202
    %v3650 = vpop.f32.mrb[0].mxu0
    %v3651 = vadd.f32 %v2927, %v3650
    %v3652 = vpop.f32.mrb[0].mxu0
    %3653 = vmatprep.mubr.f32.mxu0 0.0
    %3654 = vmatmul.mubr.f32.gmra.mrb[0].mxu0 %v3205
    %v3655 = vpop.f32.mrb[0].mxu0
    %v3656 = vadd.f32 %v2932, %v3655
    %v3657 = vpop.f32.mrb[0].mxu0
    %3658 = vmatprep.mubr.f32.mxu0 0.0
    %3659 = vmatmul.mubr.f32.gmra.mrb[0].mxu0 %v3208
    %v3660 = vpop.f32.mrb[0].mxu0
    %v3661 = vadd.f32 %v2937, %v3660
    %v3662 = vpop.f32.mrb[0].mxu0
    %3663 = vmatprep.mubr.f32.mxu0 0.0
    %3664 = vmatmul.mubr.f32.gmra.mrb[0].mxu0 %v3211
    %v3665 = vpop.f32.mrb[0].mxu0
    %v3666 = vadd.f32 %v2942, %v3665
    %v3667 = vpop.f32.mrb[0].mxu0
    %3668 = vmatprep.mubr.f32.mxu0 0.0
    %3669 = vmatmul.mubr.f32.gmra.mrb[0].mxu0 %v3214
    %v3670 = vpop.f32.mrb[0].mxu0
    %v3671 = vadd.f32 %v2947, %v3670
    %v3672 = vpop.f32.mrb[0].mxu0
    %3673 = vmatprep.mubr.f32.mxu0 0.0
    %3674 = vmatmul.mubr.f32.gmra.mrb[0].mxu0 %v3217
    %v3675 = vpop.f32.mrb[0].mxu0
    %v3676 = vadd.f32 %v2952, %v3675
    %v3677 = vpop.f32.mrb[0].mxu0
    %3678 = vmatprep.mubr.f32.mxu0 0.0
    %3679 = vmatmul.mubr.f32.gmra.mrb[0].mxu0 %v3220
    %v3680 = vpop.f32.mrb[0].mxu0
    %v3681 = vadd.f32 %v2957, %v3680
    %v3682 = vpop.f32.mrb[0].mxu0
    %3683 = vmatprep.mubr.f32.mxu0 0.0
    %3684 = vmatmul.mubr.f32.gmra.mrb[0].mxu0 %v3223
    %v3685 = vpop.f32.mrb[0].mxu0
    %v3686 = vadd.f32 %v2962, %v3685
    %v3687 = vpop.f32.mrb[0].mxu0
    %3688 = vmatprep.mubr.f32.mxu0 0.0
    %3689 = vmatmul.mubr.f32.gmra.mrb[0].mxu0 %v3226
    %v3690 = vpop.f32.mrb[0].mxu0
    %v3691 = vadd.f32 %v2967, %v3690
    %v3692 = vpop.f32.mrb[0].mxu0
    %3693 = vmatprep.mubr.f32.mxu0 0.0
    %3694 = vmatmul.mubr.f32.gmra.mrb[0].mxu0 %v3229
    %v3695 = vpop.f32.mrb[0].mxu0
    %v3696 = vadd.f32 %v2972, %v3695
    %v3697 = vpop.f32.mrb[0].mxu0
    %3698 = vmatprep.mubr.f32.mxu0 0.0
    %3699 = vmatmul.mubr.f32.gmra.mrb[0].mxu0 %v3232
    %v3700 = vpop.f32.mrb[0].mxu0
    %v3701 = vadd.f32 %v2977, %v3700
    %v3702 = vpop.f32.mrb[0].mxu0
    %3703 = vmatprep.mubr.f32.mxu0 0.0
    %3704 = vmatmul.mubr.f32.gmra.mrb[0].mxu0 %v3235
    %v3705 = vpop.f32.mrb[0].mxu0
    %v3706 = vadd.f32 %v2982, %v3705
    %v3707 = vpop.f32.mrb[0].mxu0
    %3708 = vmatprep.mubr.f32.mxu0 0.0
    %3709 = vmatmul.mubr.f32.gmra.mrb[0].mxu0 %v3238
    %v3710 = vpop.f32.mrb[0].mxu0
    %v3711 = vadd.f32 %v2987, %v3710
    %v3712 = vpop.f32.mrb[0].mxu0
    %3713 = vmatprep.mubr.f32.mxu0 0.0
    %3714 = vmatmul.mubr.f32.gmra.mrb[0].mxu0 %v3241
    %v3715 = vpop.f32.mrb[0].mxu0
    %v3716 = vadd.f32 %v2992, %v3715
    %v3717 = vpop.f32.mrb[0].mxu0
    %3718 = vmatprep.mubr.f32.mxu0 0.0
    %3719 = vmatmul.mubr.f32.gmra.mrb[0].mxu0 %v3244
    %v3720 = vpop.f32.mrb[0].mxu0
    %v3721 = vadd.f32 %v2997, %v3720
    %v3722 = vpop.f32.mrb[0].mxu0
    %3723 = vdwg.mxu0
    %v3724 = vld [vmem:[#allocation2 + $0x2a] sm:$0xff]
    %v3725 = vld [vmem:[#allocation2 + $0x32] sm:$0xff]
    %v3726 = vld [vmem:[#allocation2 + $0x3a] sm:$0xff]
    %v3727 = vld [vmem:[#allocation2 + $0x42] sm:$0xff]
    %v3728 = vld [vmem:[#allocation2 + $0x4a] sm:$0xff]
    %v3729 = vld [vmem:[#allocation2 + $0x52] sm:$0xff]
    %v3730 = vld [vmem:[#allocation2 + $0x5a] sm:$0xff]
    %v3731 = vld [vmem:[#allocation2 + $0x62] sm:$0xff]
    %v3732 = vld [vmem:[#allocation2 + $0x6a] sm:$0xff]
    %v3733 = vld [vmem:[#allocation2 + $0x72] sm:$0xff]
    %v3734 = vld [vmem:[#allocation2 + $0x7a] sm:$0xff]
    %v3735 = vld [vmem:[#allocation2 + $0x82] sm:$0xff]
    %v3736 = vld [vmem:[#allocation2 + $0x8a] sm:$0xff]
    %v3737 = vld [vmem:[#allocation2 + $0x92] sm:$0xff]
    %v3738 = vld [vmem:[#allocation2 + $0x9a] sm:$0xff]
    %v3739 = vld [vmem:[#allocation2 + $0xa2] sm:$0xff]
    %v3740 = vld [vmem:[#allocation2 + $0xaa] sm:$0xff]
    %v3741 = vld [vmem:[#allocation2 + $0xb2] sm:$0xff]
    %v3742 = vld [vmem:[#allocation2 + $0xba] sm:$0xff]
    %v3743 = vld [vmem:[#allocation2 + $0xc2] sm:$0xff]
    %v3744 = vld [vmem:[#allocation2 + $0xca] sm:$0xff]
    %v3745 = vld [vmem:[#allocation2 + $0xd2] sm:$0xff]
    %v3746 = vld [vmem:[#allocation2 + $0xda] sm:$0xff]
    %v3747 = vld [vmem:[#allocation2 + $0xe2] sm:$0xff]
    %v3748 = vld [vmem:[#allocation2 + $0xea] sm:$0xff]
    %v3749 = vld [vmem:[#allocation2 + $0xf2] sm:$0xff]
    %v3750 = vld [vmem:[#allocation2 + $0xfa] sm:$0xff]
    %v3751 = vld [vmem:[#allocation2 + $0x102] sm:$0xff]
    %v3752 = vld [vmem:[#allocation2 + $0x10a] sm:$0xff]
    %v3753 = vld [vmem:[#allocation2 + $0x112] sm:$0xff]
    %v3754 = vld [vmem:[#allocation2 + $0x11a] sm:$0xff]
    %v3755 = vld [vmem:[#allocation2 + $0x122] sm:$0xff]
    %v3756 = vld [vmem:[#allocation2 + $0x12a] sm:$0xff]
    %v3757 = vld [vmem:[#allocation2 + $0x132] sm:$0xff]
    %v3758 = vld [vmem:[#allocation2 + $0x13a] sm:$0xff]
    %v3759 = vld [vmem:[#allocation2 + $0x142] sm:$0xff]
    %v3760 = vld [vmem:[#allocation2 + $0x14a] sm:$0xff]
    %v3761 = vld [vmem:[#allocation2 + $0x152] sm:$0xff]
    %v3762 = vld [vmem:[#allocation2 + $0x15a] sm:$0xff]
    %v3763 = vld [vmem:[#allocation2 + $0x162] sm:$0xff]
    %v3764 = vld [vmem:[#allocation2 + $0x16a] sm:$0xff]
    %v3765 = vld [vmem:[#allocation2 + $0x172] sm:$0xff]
    %v3766 = vld [vmem:[#allocation2 + $0x17a] sm:$0xff]
    %v3767 = vld [vmem:[#allocation2 + $0x182] sm:$0xff]
    %v3768 = vld [vmem:[#allocation2 + $0x18a] sm:$0xff]
    %v3769 = vld [vmem:[#allocation2 + $0x192] sm:$0xff]
    %v3770 = vld [vmem:[#allocation2 + $0x19a] sm:$0xff]
    %v3771 = vld [vmem:[#allocation2 + $0x1a2] sm:$0xff]
    %v3772 = vld [vmem:[#allocation2 + $0x1aa] sm:$0xff]
    %v3773 = vld [vmem:[#allocation2 + $0x1b2] sm:$0xff]
    %v3774 = vld [vmem:[#allocation2 + $0x1ba] sm:$0xff]
    %v3775 = vld [vmem:[#allocation2 + $0x1c2] sm:$0xff]
    %v3776 = vld [vmem:[#allocation2 + $0x1ca] sm:$0xff]
    %v3777 = vld [vmem:[#allocation2 + $0x1d2] sm:$0xff]
    %v3778 = vld [vmem:[#allocation2 + $0x1da] sm:$0xff]
    %v3779 = vld [vmem:[#allocation2 + $0x1e2] sm:$0xff]
    %v3780 = vld [vmem:[#allocation2 + $0x1ea] sm:$0xff]
    %v3781 = vld [vmem:[#allocation2 + $0x1f2] sm:$0xff]
    %v3782 = vld [vmem:[#allocation2 + $0x1fa] sm:$0xff]
    %v3783 = vld [vmem:[#allocation2 + $0x202] sm:$0xff]
    %v3784 = vld [vmem:[#allocation2 + $0x20a] sm:$0xff]
    %v3785 = vld [vmem:[#allocation2 + $0x212] sm:$0xff]
    %v3786 = vld [vmem:[#allocation2 + $0x21a] sm:$0xff]
    %v3787 = vld [vmem:[#allocation2 + $0x222] sm:$0xff]
    %v3788 = vld [vmem:[#allocation2 + $0x22a] sm:$0xff]
    %v3789 = vld [vmem:[#allocation2 + $0x232] sm:$0xff]
    %v3790 = vld [vmem:[#allocation2 + $0x23a] sm:$0xff]
    %v3791 = vld [vmem:[#allocation2 + $0x242] sm:$0xff]
    %v3792 = vld [vmem:[#allocation2 + $0x24a] sm:$0xff]
    %v3793 = vld [vmem:[#allocation2 + $0x252] sm:$0xff]
    %v3794 = vld [vmem:[#allocation2 + $0x25a] sm:$0xff]
    %v3795 = vld [vmem:[#allocation2 + $0x262] sm:$0xff]
    %v3796 = vld [vmem:[#allocation2 + $0x26a] sm:$0xff]
    %v3797 = vld [vmem:[#allocation2 + $0x272] sm:$0xff]
    %v3798 = vld [vmem:[#allocation2 + $0x27a] sm:$0xff]
    %v3799 = vld [vmem:[#allocation2 + $0x282] sm:$0xff]
    %v3800 = vld [vmem:[#allocation2 + $0x28a] sm:$0xff]
    %v3801 = vld [vmem:[#allocation2 + $0x292] sm:$0xff]
    %v3802 = vld [vmem:[#allocation2 + $0x29a] sm:$0xff]
    %v3803 = vld [vmem:[#allocation2 + $0x2a2] sm:$0xff]
    %v3804 = vld [vmem:[#allocation2 + $0x2aa] sm:$0xff]
    %v3805 = vld [vmem:[#allocation2 + $0x2b2] sm:$0xff]
    %s3806 = scalar_lea.vmem %s1, 32
    %v3807 = vld [vmem:[%s3806] sm:$0xff]
    %v3808 = vld [vmem:[%s3806 + $0x8] sm:$0xf]
    %v3810 = vsel %vm2023, %v3724, 0
    %v3813 = vsel %vm2023, %v3725, 0
    %v3816 = vsel %vm2023, %v3726, 0
    %v3819 = vsel %vm2023, %v3727, 0
    %v3822 = vsel %vm2023, %v3728, 0
    %v3825 = vsel %vm2023, %v3729, 0
    %v3828 = vsel %vm2023, %v3730, 0
    %v3831 = vsel %vm2023, %v3731, 0
    %v3834 = vsel %vm2023, %v3732, 0
    %v3837 = vsel %vm2023, %v3733, 0
    %v3840 = vsel %vm2023, %v3734, 0
    %v3843 = vsel %vm2023, %v3735, 0
    %v3846 = vsel %vm2023, %v3736, 0
    %v3849 = vsel %vm2023, %v3737, 0
    %v3852 = vsel %vm2023, %v3738, 0
    %v3855 = vsel %vm2023, %v3739, 0
    %v3858 = vsel %vm2023, %v3740, 0
    %v3861 = vsel %vm2023, %v3741, 0
    %v3864 = vsel %vm2023, %v3742, 0
    %v3867 = vsel %vm2023, %v3743, 0
    %v3870 = vsel %vm2023, %v3744, 0
    %v3873 = vsel %vm2023, %v3745, 0
    %v3876 = vsel %vm2023, %v3746, 0
    %v3879 = vsel %vm2023, %v3747, 0
    %v3882 = vsel %vm2023, %v3748, 0
    %v3885 = vsel %vm2023, %v3749, 0
    %v3888 = vsel %vm2023, %v3750, 0
    %v3891 = vsel %vm2023, %v3751, 0
    %v3894 = vsel %vm2023, %v3752, 0
    %v3897 = vsel %vm2023, %v3753, 0
    %v3900 = vsel %vm2023, %v3754, 0
    %v3903 = vsel %vm2023, %v3755, 0
    %v3906 = vsel %vm2023, %v3756, 0
    %v3909 = vsel %vm2023, %v3757, 0
    %v3912 = vsel %vm2023, %v3758, 0
    %v3915 = vsel %vm2023, %v3759, 0
    %v3918 = vsel %vm2023, %v3760, 0
    %v3921 = vsel %vm2023, %v3761, 0
    %v3924 = vsel %vm2023, %v3762, 0
    %v3927 = vsel %vm2023, %v3763, 0
    %v3930 = vsel %vm2023, %v3764, 0
    %v3933 = vsel %vm2023, %v3765, 0
    %v3936 = vsel %vm2023, %v3766, 0
    %v3939 = vsel %vm2023, %v3767, 0
    %v3942 = vsel %vm2023, %v3768, 0
    %v3945 = vsel %vm2023, %v3769, 0
    %v3948 = vsel %vm2023, %v3770, 0
    %v3951 = vsel %vm2023, %v3771, 0
    %v3954 = vsel %vm2023, %v3772, 0
    %v3957 = vsel %vm2023, %v3773, 0
    %v3960 = vsel %vm2023, %v3774, 0
    %v3963 = vsel %vm2023, %v3775, 0
    %v3966 = vsel %vm2023, %v3776, 0
    %v3969 = vsel %vm2023, %v3777, 0
    %v3972 = vsel %vm2023, %v3778, 0
    %v3975 = vsel %vm2023, %v3779, 0
    %v3978 = vsel %vm2023, %v3780, 0
    %v3981 = vsel %vm2023, %v3781, 0
    %v3984 = vsel %vm2023, %v3782, 0
    %v3987 = vsel %vm2023, %v3783, 0
    %v3990 = vsel %vm2023, %v3784, 0
    %v3993 = vsel %vm2023, %v3785, 0
    %v3996 = vsel %vm2023, %v3786, 0
    %v3999 = vsel %vm2023, %v3787, 0
    %v4002 = vsel %vm2023, %v3788, 0
    %v4005 = vsel %vm2023, %v3789, 0
    %v4008 = vsel %vm2023, %v3790, 0
    %v4011 = vsel %vm2023, %v3791, 0
    %v4014 = vsel %vm2023, %v3792, 0
    %v4017 = vsel %vm2023, %v3793, 0
    %v4020 = vsel %vm2023, %v3794, 0
    %v4023 = vsel %vm2023, %v3795, 0
    %v4026 = vsel %vm2023, %v3796, 0
    %v4029 = vsel %vm2023, %v3797, 0
    %v4032 = vsel %vm2023, %v3798, 0
    %v4035 = vsel %vm2023, %v3799, 0
    %v4038 = vsel %vm2023, %v3800, 0
    %v4041 = vsel %vm2023, %v3801, 0
    %v4044 = vsel %vm2023, %v3802, 0
    %v4047 = vsel %vm2023, %v3803, 0
    %v4050 = vsel %vm2023, %v3804, 0
    %v4053 = vsel %vm2023, %v3805, 0
    %v4056 = vsel %vm2521, %v3808, 0
    %4058 = vmatprep.subr.mxu0 0.0
    %4059 = vmatpush1.msra.mxu0 %v3807
    %4060 = vmatprep.subr.mxu0 0.0
    %4061 = vmatpush1.msra.mxu0 %v4056
    %4062 = vmatprep.subr.mxu0 0.0
    %4063 = vmatpush1.msra.mxu0 0.0
    %4064 = vmatprep.subr.mxu0 0.0
    %4065 = vmatpush1.msra.mxu0 0.0
    %4066 = vmatprep.subr.mxu0 0.0
    %4067 = vmatpush1.msra.mxu0 0.0
    %4068 = vmatprep.subr.mxu0 0.0
    %4069 = vmatpush1.msra.mxu0 0.0
    %4070 = vmatprep.subr.mxu0 0.0
    %4071 = vmatpush1.msra.mxu0 0.0
    %4072 = vmatprep.subr.mxu0 0.0
    %4073 = vmatpush1.msra.mxu0 0.0
    %4074 = vmatprep.subr.mxu0 0.0
    %4075 = vmatpush1.msra.mxu0 0.0
    %4076 = vmatprep.subr.mxu0 0.0
    %4077 = vmatpush1.msra.mxu0 0.0
    %4078 = vmatprep.subr.mxu0 0.0
    %4079 = vmatpush1.msra.mxu0 0.0
    %4080 = vmatprep.subr.mxu0 0.0
    %4081 = vmatpush1.msra.mxu0 0.0
    %4082 = vmatprep.subr.mxu0 0.0
    %4083 = vmatpush1.msra.mxu0 0.0
    %4084 = vmatprep.subr.mxu0 0.0
    %4085 = vmatpush1.msra.mxu0 0.0
    %4086 = vmatprep.subr.mxu0 0.0
    %4087 = vmatpush1.msra.mxu0 0.0
    %4088 = vmatprep.subr.mxu0 0.0
    %4089 = vmatpush1.msra.mxu0 0.0
    %4090 = vmatprep.subr.mxu0 0.0
    %4091 = vmatpush1.msra.mxu0 0.0
    %4092 = vmatprep.subr.mxu0 0.0
    %4093 = vmatpush1.msra.mxu0 0.0
    %4094 = vmatprep.subr.mxu0 0.0
    %4095 = vmatpush1.msra.mxu0 0.0
    %4096 = vmatprep.subr.mxu0 0.0
    %4097 = vmatpush1.msra.mxu0 0.0
    %4098 = vmatprep.subr.mxu0 0.0
    %4099 = vmatpush1.msra.mxu0 0.0
    %4100 = vmatprep.subr.mxu0 0.0
    %4101 = vmatpush1.msra.mxu0 0.0
    %4102 = vmatprep.subr.mxu0 0.0
    %4103 = vmatpush1.msra.mxu0 0.0
    %4104 = vmatprep.subr.mxu0 0.0
    %4105 = vmatpush1.msra.mxu0 0.0
    %4106 = vmatprep.subr.mxu0 0.0
    %4107 = vmatpush1.msra.mxu0 0.0
    %4108 = vmatprep.subr.mxu0 0.0
    %4109 = vmatpush1.msra.mxu0 0.0
    %4110 = vmatprep.subr.mxu0 0.0
    %4111 = vmatpush1.msra.mxu0 0.0
    %4112 = vmatprep.subr.mxu0 0.0
    %4113 = vmatpush1.msra.mxu0 0.0
    %4114 = vmatprep.subr.mxu0 0.0
    %4115 = vmatpush1.msra.mxu0 0.0
    %4116 = vmatprep.subr.mxu0 0.0
    %4117 = vmatpush1.msra.mxu0 0.0
    %4118 = vmatprep.subr.mxu0 0.0
    %4119 = vmatpush1.msra.mxu0 0.0
    %4120 = vmatprep.subr.mxu0 0.0
    %4121 = vmatpush1.msra.mxu0 0.0
    %4122 = vmatprep.mubr.f32.mxu0 0.0
    %4123 = vmatmul.mubr.f32.gmra.mrb[0].mxu0 %v3810
    %v4124 = vpop.f32.mrb[0].mxu0
    %v4125 = vadd.f32 0.0, %v4124
    %v4126 = vpop.f32.mrb[0].mxu0
    %4127 = vmatprep.mubr.f32.mxu0 0.0
    %4128 = vmatmul.mubr.f32.gmra.mrb[0].mxu0 %v3813
    %v4129 = vpop.f32.mrb[0].mxu0
    %v4130 = vadd.f32 0.0, %v4129
    %v4131 = vpop.f32.mrb[0].mxu0
    %4132 = vmatprep.mubr.f32.mxu0 0.0
    %4133 = vmatmul.mubr.f32.gmra.mrb[0].mxu0 %v3816
    %v4134 = vpop.f32.mrb[0].mxu0
    %v4135 = vadd.f32 0.0, %v4134
    %v4136 = vpop.f32.mrb[0].mxu0
    %4137 = vmatprep.mubr.f32.mxu0 0.0
    %4138 = vmatmul.mubr.f32.gmra.mrb[0].mxu0 %v3819
    %v4139 = vpop.f32.mrb[0].mxu0
    %v4140 = vadd.f32 0.0, %v4139
    %v4141 = vpop.f32.mrb[0].mxu0
    %4142 = vmatprep.mubr.f32.mxu0 0.0
    %4143 = vmatmul.mubr.f32.gmra.mrb[0].mxu0 %v3822
    %v4144 = vpop.f32.mrb[0].mxu0
    %v4145 = vadd.f32 0.0, %v4144
    %v4146 = vpop.f32.mrb[0].mxu0
    %4147 = vmatprep.mubr.f32.mxu0 0.0
    %4148 = vmatmul.mubr.f32.gmra.mrb[0].mxu0 %v3825
    %v4149 = vpop.f32.mrb[0].mxu0
    %v4150 = vadd.f32 0.0, %v4149
    %v4151 = vpop.f32.mrb[0].mxu0
    %4152 = vmatprep.mubr.f32.mxu0 0.0
    %4153 = vmatmul.mubr.f32.gmra.mrb[0].mxu0 %v3828
    %v4154 = vpop.f32.mrb[0].mxu0
    %v4155 = vadd.f32 0.0, %v4154
    %v4156 = vpop.f32.mrb[0].mxu0
    %4157 = vmatprep.mubr.f32.mxu0 0.0
    %4158 = vmatmul.mubr.f32.gmra.mrb[0].mxu0 %v3831
    %v4159 = vpop.f32.mrb[0].mxu0
    %v4160 = vadd.f32 0.0, %v4159
    %v4161 = vpop.f32.mrb[0].mxu0
    %4162 = vmatprep.mubr.f32.mxu0 0.0
    %4163 = vmatmul.mubr.f32.gmra.mrb[0].mxu0 %v3834
    %v4164 = vpop.f32.mrb[0].mxu0
    %v4165 = vadd.f32 0.0, %v4164
    %v4166 = vpop.f32.mrb[0].mxu0
    %4167 = vmatprep.mubr.f32.mxu0 0.0
    %4168 = vmatmul.mubr.f32.gmra.mrb[0].mxu0 %v3837
    %v4169 = vpop.f32.mrb[0].mxu0
    %v4170 = vadd.f32 0.0, %v4169
    %v4171 = vpop.f32.mrb[0].mxu0
    %4172 = vmatprep.mubr.f32.mxu0 0.0
    %4173 = vmatmul.mubr.f32.gmra.mrb[0].mxu0 %v3840
    %v4174 = vpop.f32.mrb[0].mxu0
    %v4175 = vadd.f32 0.0, %v4174
    %v4176 = vpop.f32.mrb[0].mxu0
    %4177 = vmatprep.mubr.f32.mxu0 0.0
    %4178 = vmatmul.mubr.f32.gmra.mrb[0].mxu0 %v3843
    %v4179 = vpop.f32.mrb[0].mxu0
    %v4180 = vadd.f32 0.0, %v4179
    %v4181 = vpop.f32.mrb[0].mxu0
    %4182 = vmatprep.mubr.f32.mxu0 0.0
    %4183 = vmatmul.mubr.f32.gmra.mrb[0].mxu0 %v3846
    %v4184 = vpop.f32.mrb[0].mxu0
    %v4185 = vadd.f32 0.0, %v4184
    %v4186 = vpop.f32.mrb[0].mxu0
    %4187 = vmatprep.mubr.f32.mxu0 0.0
    %4188 = vmatmul.mubr.f32.gmra.mrb[0].mxu0 %v3849
    %v4189 = vpop.f32.mrb[0].mxu0
    %v4190 = vadd.f32 0.0, %v4189
    %v4191 = vpop.f32.mrb[0].mxu0
    %4192 = vmatprep.mubr.f32.mxu0 0.0
    %4193 = vmatmul.mubr.f32.gmra.mrb[0].mxu0 %v3852
    %v4194 = vpop.f32.mrb[0].mxu0
    %v4195 = vadd.f32 0.0, %v4194
    %v4196 = vpop.f32.mrb[0].mxu0
    %4197 = vmatprep.mubr.f32.mxu0 0.0
    %4198 = vmatmul.mubr.f32.gmra.mrb[0].mxu0 %v3855
    %v4199 = vpop.f32.mrb[0].mxu0
    %v4200 = vadd.f32 0.0, %v4199
    %v4201 = vpop.f32.mrb[0].mxu0
    %4202 = vmatprep.mubr.f32.mxu0 0.0
    %4203 = vmatmul.mubr.f32.gmra.mrb[0].mxu0 %v3858
    %v4204 = vpop.f32.mrb[0].mxu0
    %v4205 = vadd.f32 0.0, %v4204
    %v4206 = vpop.f32.mrb[0].mxu0
    %4207 = vmatprep.mubr.f32.mxu0 0.0
    %4208 = vmatmul.mubr.f32.gmra.mrb[0].mxu0 %v3861
    %v4209 = vpop.f32.mrb[0].mxu0
    %v4210 = vadd.f32 0.0, %v4209
    %v4211 = vpop.f32.mrb[0].mxu0
    %4212 = vmatprep.mubr.f32.mxu0 0.0
    %4213 = vmatmul.mubr.f32.gmra.mrb[0].mxu0 %v3864
    %v4214 = vpop.f32.mrb[0].mxu0
    %v4215 = vadd.f32 0.0, %v4214
    %v4216 = vpop.f32.mrb[0].mxu0
    %4217 = vmatprep.mubr.f32.mxu0 0.0
    %4218 = vmatmul.mubr.f32.gmra.mrb[0].mxu0 %v3867
    %v4219 = vpop.f32.mrb[0].mxu0
    %v4220 = vadd.f32 0.0, %v4219
    %v4221 = vpop.f32.mrb[0].mxu0
    %4222 = vmatprep.mubr.f32.mxu0 0.0
    %4223 = vmatmul.mubr.f32.gmra.mrb[0].mxu0 %v3870
    %v4224 = vpop.f32.mrb[0].mxu0
    %v4225 = vadd.f32 0.0, %v4224
    %v4226 = vpop.f32.mrb[0].mxu0
    %4227 = vmatprep.mubr.f32.mxu0 0.0
    %4228 = vmatmul.mubr.f32.gmra.mrb[0].mxu0 %v3873
    %v4229 = vpop.f32.mrb[0].mxu0
    %v4230 = vadd.f32 0.0, %v4229
    %v4231 = vpop.f32.mrb[0].mxu0
    %4232 = vmatprep.mubr.f32.mxu0 0.0
    %4233 = vmatmul.mubr.f32.gmra.mrb[0].mxu0 %v3876
    %v4234 = vpop.f32.mrb[0].mxu0
    %v4235 = vadd.f32 0.0, %v4234
    %v4236 = vpop.f32.mrb[0].mxu0
    %4237 = vmatprep.mubr.f32.mxu0 0.0
    %4238 = vmatmul.mubr.f32.gmra.mrb[0].mxu0 %v3879
    %v4239 = vpop.f32.mrb[0].mxu0
    %v4240 = vadd.f32 0.0, %v4239
    %v4241 = vpop.f32.mrb[0].mxu0
    %4242 = vmatprep.mubr.f32.mxu0 0.0
    %4243 = vmatmul.mubr.f32.gmra.mrb[0].mxu0 %v3882
    %v4244 = vpop.f32.mrb[0].mxu0
    %v4245 = vadd.f32 0.0, %v4244
    %v4246 = vpop.f32.mrb[0].mxu0
    %4247 = vmatprep.mubr.f32.mxu0 0.0
    %4248 = vmatmul.mubr.f32.gmra.mrb[0].mxu0 %v3885
    %v4249 = vpop.f32.mrb[0].mxu0
    %v4250 = vadd.f32 0.0, %v4249
    %v4251 = vpop.f32.mrb[0].mxu0
    %4252 = vmatprep.mubr.f32.mxu0 0.0
    %4253 = vmatmul.mubr.f32.gmra.mrb[0].mxu0 %v3888
    %v4254 = vpop.f32.mrb[0].mxu0
    %v4255 = vadd.f32 0.0, %v4254
    %v4256 = vpop.f32.mrb[0].mxu0
    %4257 = vmatprep.mubr.f32.mxu0 0.0
    %4258 = vmatmul.mubr.f32.gmra.mrb[0].mxu0 %v3891
    %v4259 = vpop.f32.mrb[0].mxu0
    %v4260 = vadd.f32 0.0, %v4259
    %v4261 = vpop.f32.mrb[0].mxu0
    %4262 = vmatprep.mubr.f32.mxu0 0.0
    %4263 = vmatmul.mubr.f32.gmra.mrb[0].mxu0 %v3894
    %v4264 = vpop.f32.mrb[0].mxu0
    %v4265 = vadd.f32 0.0, %v4264
    %v4266 = vpop.f32.mrb[0].mxu0
    %4267 = vmatprep.mubr.f32.mxu0 0.0
    %4268 = vmatmul.mubr.f32.gmra.mrb[0].mxu0 %v3897
    %v4269 = vpop.f32.mrb[0].mxu0
    %v4270 = vadd.f32 0.0, %v4269
    %v4271 = vpop.f32.mrb[0].mxu0
    %4272 = vmatprep.mubr.f32.mxu0 0.0
    %4273 = vmatmul.mubr.f32.gmra.mrb[0].mxu0 %v3900
    %v4274 = vpop.f32.mrb[0].mxu0
    %v4275 = vadd.f32 0.0, %v4274
    %v4276 = vpop.f32.mrb[0].mxu0
    %4277 = vmatprep.mubr.f32.mxu0 0.0
    %4278 = vmatmul.mubr.f32.gmra.mrb[0].mxu0 %v3903
    %v4279 = vpop.f32.mrb[0].mxu0
    %v4280 = vadd.f32 0.0, %v4279
    %v4281 = vpop.f32.mrb[0].mxu0
    %4282 = vmatprep.mubr.f32.mxu0 0.0
    %4283 = vmatmul.mubr.f32.gmra.mrb[0].mxu0 %v3906
    %v4284 = vpop.f32.mrb[0].mxu0
    %v4285 = vadd.f32 0.0, %v4284
    %v4286 = vpop.f32.mrb[0].mxu0
    %4287 = vmatprep.mubr.f32.mxu0 0.0
    %4288 = vmatmul.mubr.f32.gmra.mrb[0].mxu0 %v3909
    %v4289 = vpop.f32.mrb[0].mxu0
    %v4290 = vadd.f32 0.0, %v4289
    %v4291 = vpop.f32.mrb[0].mxu0
    %4292 = vmatprep.mubr.f32.mxu0 0.0
    %4293 = vmatmul.mubr.f32.gmra.mrb[0].mxu0 %v3912
    %v4294 = vpop.f32.mrb[0].mxu0
    %v4295 = vadd.f32 0.0, %v4294
    %v4296 = vpop.f32.mrb[0].mxu0
    %4297 = vmatprep.mubr.f32.mxu0 0.0
    %4298 = vmatmul.mubr.f32.gmra.mrb[0].mxu0 %v3915
    %v4299 = vpop.f32.mrb[0].mxu0
    %v4300 = vadd.f32 0.0, %v4299
    %v4301 = vpop.f32.mrb[0].mxu0
    %4302 = vmatprep.mubr.f32.mxu0 0.0
    %4303 = vmatmul.mubr.f32.gmra.mrb[0].mxu0 %v3918
    %v4304 = vpop.f32.mrb[0].mxu0
    %v4305 = vadd.f32 0.0, %v4304
    %v4306 = vpop.f32.mrb[0].mxu0
    %4307 = vmatprep.mubr.f32.mxu0 0.0
    %4308 = vmatmul.mubr.f32.gmra.mrb[0].mxu0 %v3921
    %v4309 = vpop.f32.mrb[0].mxu0
    %v4310 = vadd.f32 0.0, %v4309
    %v4311 = vpop.f32.mrb[0].mxu0
    %4312 = vmatprep.mubr.f32.mxu0 0.0
    %4313 = vmatmul.mubr.f32.gmra.mrb[0].mxu0 %v3924
    %v4314 = vpop.f32.mrb[0].mxu0
    %v4315 = vadd.f32 0.0, %v4314
    %v4316 = vpop.f32.mrb[0].mxu0
    %4317 = vmatprep.mubr.f32.mxu0 0.0
    %4318 = vmatmul.mubr.f32.gmra.mrb[0].mxu0 %v3927
    %v4319 = vpop.f32.mrb[0].mxu0
    %v4320 = vadd.f32 0.0, %v4319
    %v4321 = vpop.f32.mrb[0].mxu0
    %4322 = vmatprep.mubr.f32.mxu0 0.0
    %4323 = vmatmul.mubr.f32.gmra.mrb[0].mxu0 %v3930
    %v4324 = vpop.f32.mrb[0].mxu0
    %v4325 = vadd.f32 0.0, %v4324
    %v4326 = vpop.f32.mrb[0].mxu0
    %4327 = vmatprep.mubr.f32.mxu0 0.0
    %4328 = vmatmul.mubr.f32.gmra.mrb[0].mxu0 %v3933
    %v4329 = vpop.f32.mrb[0].mxu0
    %v4330 = vadd.f32 0.0, %v4329
    %v4331 = vpop.f32.mrb[0].mxu0
    %4332 = vmatprep.mubr.f32.mxu0 0.0
    %4333 = vmatmul.mubr.f32.gmra.mrb[0].mxu0 %v3936
    %v4334 = vpop.f32.mrb[0].mxu0
    %v4335 = vadd.f32 0.0, %v4334
    %v4336 = vpop.f32.mrb[0].mxu0
    %4337 = vmatprep.mubr.f32.mxu0 0.0
    %4338 = vmatmul.mubr.f32.gmra.mrb[0].mxu0 %v3939
    %v4339 = vpop.f32.mrb[0].mxu0
    %v4340 = vadd.f32 0.0, %v4339
    %v4341 = vpop.f32.mrb[0].mxu0
    %4342 = vmatprep.mubr.f32.mxu0 0.0
    %4343 = vmatmul.mubr.f32.gmra.mrb[0].mxu0 %v3942
    %v4344 = vpop.f32.mrb[0].mxu0
    %v4345 = vadd.f32 0.0, %v4344
    %v4346 = vpop.f32.mrb[0].mxu0
    %4347 = vmatprep.mubr.f32.mxu0 0.0
    %4348 = vmatmul.mubr.f32.gmra.mrb[0].mxu0 %v3945
    %v4349 = vpop.f32.mrb[0].mxu0
    %v4350 = vadd.f32 0.0, %v4349
    %v4351 = vpop.f32.mrb[0].mxu0
    %4352 = vmatprep.mubr.f32.mxu0 0.0
    %4353 = vmatmul.mubr.f32.gmra.mrb[0].mxu0 %v3948
    %v4354 = vpop.f32.mrb[0].mxu0
    %v4355 = vadd.f32 0.0, %v4354
    %v4356 = vpop.f32.mrb[0].mxu0
    %4357 = vmatprep.mubr.f32.mxu0 0.0
    %4358 = vmatmul.mubr.f32.gmra.mrb[0].mxu0 %v3951
    %v4359 = vpop.f32.mrb[0].mxu0
    %v4360 = vadd.f32 0.0, %v4359
    %v4361 = vpop.f32.mrb[0].mxu0
    %4362 = vmatprep.mubr.f32.mxu0 0.0
    %4363 = vmatmul.mubr.f32.gmra.mrb[0].mxu0 %v3954
    %v4364 = vpop.f32.mrb[0].mxu0
    %v4365 = vadd.f32 0.0, %v4364
    %v4366 = vpop.f32.mrb[0].mxu0
    %4367 = vmatprep.mubr.f32.mxu0 0.0
    %4368 = vmatmul.mubr.f32.gmra.mrb[0].mxu0 %v3957
    %v4369 = vpop.f32.mrb[0].mxu0
    %v4370 = vadd.f32 0.0, %v4369
    %v4371 = vpop.f32.mrb[0].mxu0
    %4372 = vmatprep.mubr.f32.mxu0 0.0
    %4373 = vmatmul.mubr.f32.gmra.mrb[0].mxu0 %v3960
    %v4374 = vpop.f32.mrb[0].mxu0
    %v4375 = vadd.f32 0.0, %v4374
    %v4376 = vpop.f32.mrb[0].mxu0
    %4377 = vmatprep.mubr.f32.mxu0 0.0
    %4378 = vmatmul.mubr.f32.gmra.mrb[0].mxu0 %v3963
    %v4379 = vpop.f32.mrb[0].mxu0
    %v4380 = vadd.f32 0.0, %v4379
    %v4381 = vpop.f32.mrb[0].mxu0
    %4382 = vmatprep.mubr.f32.mxu0 0.0
    %4383 = vmatmul.mubr.f32.gmra.mrb[0].mxu0 %v3966
    %v4384 = vpop.f32.mrb[0].mxu0
    %v4385 = vadd.f32 0.0, %v4384
    %v4386 = vpop.f32.mrb[0].mxu0
    %4387 = vmatprep.mubr.f32.mxu0 0.0
    %4388 = vmatmul.mubr.f32.gmra.mrb[0].mxu0 %v3969
    %v4389 = vpop.f32.mrb[0].mxu0
    %v4390 = vadd.f32 0.0, %v4389
    %v4391 = vpop.f32.mrb[0].mxu0
    %4392 = vmatprep.mubr.f32.mxu0 0.0
    %4393 = vmatmul.mubr.f32.gmra.mrb[0].mxu0 %v3972
    %v4394 = vpop.f32.mrb[0].mxu0
    %v4395 = vadd.f32 0.0, %v4394
    %v4396 = vpop.f32.mrb[0].mxu0
    %4397 = vmatprep.mubr.f32.mxu0 0.0
    %4398 = vmatmul.mubr.f32.gmra.mrb[0].mxu0 %v3975
    %v4399 = vpop.f32.mrb[0].mxu0
    %v4400 = vadd.f32 0.0, %v4399
    %v4401 = vpop.f32.mrb[0].mxu0
    %4402 = vmatprep.mubr.f32.mxu0 0.0
    %4403 = vmatmul.mubr.f32.gmra.mrb[0].mxu0 %v3978
    %v4404 = vpop.f32.mrb[0].mxu0
    %v4405 = vadd.f32 0.0, %v4404
    %v4406 = vpop.f32.mrb[0].mxu0
    %4407 = vmatprep.mubr.f32.mxu0 0.0
    %4408 = vmatmul.mubr.f32.gmra.mrb[0].mxu0 %v3981
    %v4409 = vpop.f32.mrb[0].mxu0
    %v4410 = vadd.f32 0.0, %v4409
    %v4411 = vpop.f32.mrb[0].mxu0
    %4412 = vmatprep.mubr.f32.mxu0 0.0
    %4413 = vmatmul.mubr.f32.gmra.mrb[0].mxu0 %v3984
    %v4414 = vpop.f32.mrb[0].mxu0
    %v4415 = vadd.f32 0.0, %v4414
    %v4416 = vpop.f32.mrb[0].mxu0
    %4417 = vmatprep.mubr.f32.mxu0 0.0
    %4418 = vmatmul.mubr.f32.gmra.mrb[0].mxu0 %v3987
    %v4419 = vpop.f32.mrb[0].mxu0
    %v4420 = vadd.f32 0.0, %v4419
    %v4421 = vpop.f32.mrb[0].mxu0
    %4422 = vmatprep.mubr.f32.mxu0 0.0
    %4423 = vmatmul.mubr.f32.gmra.mrb[0].mxu0 %v3990
    %v4424 = vpop.f32.mrb[0].mxu0
    %v4425 = vadd.f32 0.0, %v4424
    %v4426 = vpop.f32.mrb[0].mxu0
    %4427 = vmatprep.mubr.f32.mxu0 0.0
    %4428 = vmatmul.mubr.f32.gmra.mrb[0].mxu0 %v3993
    %v4429 = vpop.f32.mrb[0].mxu0
    %v4430 = vadd.f32 0.0, %v4429
    %v4431 = vpop.f32.mrb[0].mxu0
    %4432 = vmatprep.mubr.f32.mxu0 0.0
    %4433 = vmatmul.mubr.f32.gmra.mrb[0].mxu0 %v3996
    %v4434 = vpop.f32.mrb[0].mxu0
    %v4435 = vadd.f32 0.0, %v4434
    %v4436 = vpop.f32.mrb[0].mxu0
    %4437 = vmatprep.mubr.f32.mxu0 0.0
    %4438 = vmatmul.mubr.f32.gmra.mrb[0].mxu0 %v3999
    %v4439 = vpop.f32.mrb[0].mxu0
    %v4440 = vadd.f32 0.0, %v4439
    %v4441 = vpop.f32.mrb[0].mxu0
    %4442 = vmatprep.mubr.f32.mxu0 0.0
    %4443 = vmatmul.mubr.f32.gmra.mrb[0].mxu0 %v4002
    %v4444 = vpop.f32.mrb[0].mxu0
    %v4445 = vadd.f32 0.0, %v4444
    %v4446 = vpop.f32.mrb[0].mxu0
    %4447 = vmatprep.mubr.f32.mxu0 0.0
    %4448 = vmatmul.mubr.f32.gmra.mrb[0].mxu0 %v4005
    %v4449 = vpop.f32.mrb[0].mxu0
    %v4450 = vadd.f32 0.0, %v4449
    %v4451 = vpop.f32.mrb[0].mxu0
    %4452 = vmatprep.mubr.f32.mxu0 0.0
    %4453 = vmatmul.mubr.f32.gmra.mrb[0].mxu0 %v4008
    %v4454 = vpop.f32.mrb[0].mxu0
    %v4455 = vadd.f32 0.0, %v4454
    %v4456 = vpop.f32.mrb[0].mxu0
    %4457 = vmatprep.mubr.f32.mxu0 0.0
    %4458 = vmatmul.mubr.f32.gmra.mrb[0].mxu0 %v4011
    %v4459 = vpop.f32.mrb[0].mxu0
    %v4460 = vadd.f32 0.0, %v4459
    %v4461 = vpop.f32.mrb[0].mxu0
    %4462 = vmatprep.mubr.f32.mxu0 0.0
    %4463 = vmatmul.mubr.f32.gmra.mrb[0].mxu0 %v4014
    %v4464 = vpop.f32.mrb[0].mxu0
    %v4465 = vadd.f32 0.0, %v4464
    %v4466 = vpop.f32.mrb[0].mxu0
    %4467 = vmatprep.mubr.f32.mxu0 0.0
    %4468 = vmatmul.mubr.f32.gmra.mrb[0].mxu0 %v4017
    %v4469 = vpop.f32.mrb[0].mxu0
    %v4470 = vadd.f32 0.0, %v4469
    %v4471 = vpop.f32.mrb[0].mxu0
    %4472 = vmatprep.mubr.f32.mxu0 0.0
    %4473 = vmatmul.mubr.f32.gmra.mrb[0].mxu0 %v4020
    %v4474 = vpop.f32.mrb[0].mxu0
    %v4475 = vadd.f32 0.0, %v4474
    %v4476 = vpop.f32.mrb[0].mxu0
    %4477 = vmatprep.mubr.f32.mxu0 0.0
    %4478 = vmatmul.mubr.f32.gmra.mrb[0].mxu0 %v4023
    %v4479 = vpop.f32.mrb[0].mxu0
    %v4480 = vadd.f32 0.0, %v4479
    %v4481 = vpop.f32.mrb[0].mxu0
    %4482 = vmatprep.mubr.f32.mxu0 0.0
    %4483 = vmatmul.mubr.f32.gmra.mrb[0].mxu0 %v4026
    %v4484 = vpop.f32.mrb[0].mxu0
    %v4485 = vadd.f32 0.0, %v4484
    %v4486 = vpop.f32.mrb[0].mxu0
    %4487 = vmatprep.mubr.f32.mxu0 0.0
    %4488 = vmatmul.mubr.f32.gmra.mrb[0].mxu0 %v4029
    %v4489 = vpop.f32.mrb[0].mxu0
    %v4490 = vadd.f32 0.0, %v4489
    %v4491 = vpop.f32.mrb[0].mxu0
    %4492 = vmatprep.mubr.f32.mxu0 0.0
    %4493 = vmatmul.mubr.f32.gmra.mrb[0].mxu0 %v4032
    %v4494 = vpop.f32.mrb[0].mxu0
    %v4495 = vadd.f32 0.0, %v4494
    %v4496 = vpop.f32.mrb[0].mxu0
    %4497 = vmatprep.mubr.f32.mxu0 0.0
    %4498 = vmatmul.mubr.f32.gmra.mrb[0].mxu0 %v4035
    %v4499 = vpop.f32.mrb[0].mxu0
    %v4500 = vadd.f32 0.0, %v4499
    %v4501 = vpop.f32.mrb[0].mxu0
    %4502 = vmatprep.mubr.f32.mxu0 0.0
    %4503 = vmatmul.mubr.f32.gmra.mrb[0].mxu0 %v4038
    %v4504 = vpop.f32.mrb[0].mxu0
    %v4505 = vadd.f32 0.0, %v4504
    %v4506 = vpop.f32.mrb[0].mxu0
    %4507 = vmatprep.mubr.f32.mxu0 0.0
    %4508 = vmatmul.mubr.f32.gmra.mrb[0].mxu0 %v4041
    %v4509 = vpop.f32.mrb[0].mxu0
    %v4510 = vadd.f32 0.0, %v4509
    %v4511 = vpop.f32.mrb[0].mxu0
    %4512 = vmatprep.mubr.f32.mxu0 0.0
    %4513 = vmatmul.mubr.f32.gmra.mrb[0].mxu0 %v4044
    %v4514 = vpop.f32.mrb[0].mxu0
    %v4515 = vadd.f32 0.0, %v4514
    %v4516 = vpop.f32.mrb[0].mxu0
    %4517 = vmatprep.mubr.f32.mxu0 0.0
    %4518 = vmatmul.mubr.f32.gmra.mrb[0].mxu0 %v4047
    %v4519 = vpop.f32.mrb[0].mxu0
    %v4520 = vadd.f32 0.0, %v4519
    %v4521 = vpop.f32.mrb[0].mxu0
    %4522 = vmatprep.mubr.f32.mxu0 0.0
    %4523 = vmatmul.mubr.f32.gmra.mrb[0].mxu0 %v4050
    %v4524 = vpop.f32.mrb[0].mxu0
    %v4525 = vadd.f32 0.0, %v4524
    %v4526 = vpop.f32.mrb[0].mxu0
    %4527 = vmatprep.mubr.f32.mxu0 0.0
    %4528 = vmatmul.mubr.f32.gmra.mrb[0].mxu0 %v4053
    %v4529 = vpop.f32.mrb[0].mxu0
    %v4530 = vadd.f32 0.0, %v4529
    %v4531 = vpop.f32.mrb[0].mxu0
    %4532 = vdwg.mxu0
    %v4533 = vadd.f32 %v3316, %v4125
    %v4534 = vadd.f32 %v3321, %v4130
    %v4535 = vadd.f32 %v3326, %v4135
    %v4536 = vadd.f32 %v3331, %v4140
    %v4537 = vadd.f32 %v3336, %v4145
    %v4538 = vadd.f32 %v3341, %v4150
    %v4539 = vadd.f32 %v3346, %v4155
    %v4540 = vadd.f32 %v3351, %v4160
    %v4541 = vadd.f32 %v3356, %v4165
    %v4542 = vadd.f32 %v3361, %v4170
    %v4543 = vadd.f32 %v3366, %v4175
    %v4544 = vadd.f32 %v3371, %v4180
    %v4545 = vadd.f32 %v3376, %v4185
    %v4546 = vadd.f32 %v3381, %v4190
    %v4547 = vadd.f32 %v3386, %v4195
    %v4548 = vadd.f32 %v3391, %v4200
    %v4549 = vadd.f32 %v3396, %v4205
    %v4550 = vadd.f32 %v3401, %v4210
    %v4551 = vadd.f32 %v3406, %v4215
    %v4552 = vadd.f32 %v3411, %v4220
    %v4553 = vadd.f32 %v3416, %v4225
    %v4554 = vadd.f32 %v3421, %v4230
    %v4555 = vadd.f32 %v3426, %v4235
    %v4556 = vadd.f32 %v3431, %v4240
    %v4557 = vadd.f32 %v3436, %v4245
    %v4558 = vadd.f32 %v3441, %v4250
    %v4559 = vadd.f32 %v3446, %v4255
    %v4560 = vadd.f32 %v3451, %v4260
    %v4561 = vadd.f32 %v3456, %v4265
    %v4562 = vadd.f32 %v3461, %v4270
    %v4563 = vadd.f32 %v3466, %v4275
    %v4564 = vadd.f32 %v3471, %v4280
    %v4565 = vadd.f32 %v3476, %v4285
    %v4566 = vadd.f32 %v3481, %v4290
    %v4567 = vadd.f32 %v3486, %v4295
    %v4568 = vadd.f32 %v3491, %v4300
    %v4569 = vadd.f32 %v3496, %v4305
    %v4570 = vadd.f32 %v3501, %v4310
    %v4571 = vadd.f32 %v3506, %v4315
    %v4572 = vadd.f32 %v3511, %v4320
    %v4573 = vadd.f32 %v3516, %v4325
    %v4574 = vadd.f32 %v3521, %v4330
    %v4575 = vadd.f32 %v3526, %v4335
    %v4576 = vadd.f32 %v3531, %v4340
    %v4577 = vadd.f32 %v3536, %v4345
    %v4578 = vadd.f32 %v3541, %v4350
    %v4579 = vadd.f32 %v3546, %v4355
    %v4580 = vadd.f32 %v3551, %v4360
    %v4581 = vadd.f32 %v3556, %v4365
    %v4582 = vadd.f32 %v3561, %v4370
    %v4583 = vadd.f32 %v3566, %v4375
    %v4584 = vadd.f32 %v3571, %v4380
    %v4585 = vadd.f32 %v3576, %v4385
    %v4586 = vadd.f32 %v3581, %v4390
    %v4587 = vadd.f32 %v3586, %v4395
    %v4588 = vadd.f32 %v3591, %v4400
    %v4589 = vadd.f32 %v3596, %v4405
    %v4590 = vadd.f32 %v3601, %v4410
    %v4591 = vadd.f32 %v3606, %v4415
    %v4592 = vadd.f32 %v3611, %v4420
    %v4593 = vadd.f32 %v3616, %v4425
    %v4594 = vadd.f32 %v3621, %v4430
    %v4595 = vadd.f32 %v3626, %v4435
    %v4596 = vadd.f32 %v3631, %v4440
    %v4597 = vadd.f32 %v3636, %v4445
    %v4598 = vadd.f32 %v3641, %v4450
    %v4599 = vadd.f32 %v3646, %v4455
    %v4600 = vadd.f32 %v3651, %v4460
    %v4601 = vadd.f32 %v3656, %v4465
    %v4602 = vadd.f32 %v3661, %v4470
    %v4603 = vadd.f32 %v3666, %v4475
    %v4604 = vadd.f32 %v3671, %v4480
    %v4605 = vadd.f32 %v3676, %v4485
    %v4606 = vadd.f32 %v3681, %v4490
    %v4607 = vadd.f32 %v3686, %v4495
    %v4608 = vadd.f32 %v3691, %v4500
    %v4609 = vadd.f32 %v3696, %v4505
    %v4610 = vadd.f32 %v3701, %v4510
    %v4611 = vadd.f32 %v3706, %v4515
    %v4612 = vadd.f32 %v3711, %v4520
    %v4613 = vadd.f32 %v3716, %v4525
    %v4614 = vadd.f32 %v3721, %v4530
    %v4615 = vld [vmem:[%s2] sm:$0x1]
    %v4617 = vlaneseq
    %v4618 = vshrl.u32 %v4617, 7
    %v4619 = vsub.s32 0, %v4618
    %v4620 = vrot.slane %v4615, %v4619
    %v4622 = vadd.f32 %v4533, %v4620
    %v4623 = vadd.f32 %v4534, %v4620
    %v4624 = vadd.f32 %v4535, %v4620
    %v4625 = vadd.f32 %v4536, %v4620
    %v4626 = vadd.f32 %v4537, %v4620
    %v4627 = vadd.f32 %v4538, %v4620
    %v4628 = vadd.f32 %v4539, %v4620
    %v4629 = vadd.f32 %v4540, %v4620
    %v4630 = vadd.f32 %v4541, %v4620
    %v4631 = vadd.f32 %v4542, %v4620
    %v4632 = vadd.f32 %v4543, %v4620
    %v4633 = vadd.f32 %v4544, %v4620
    %v4634 = vadd.f32 %v4545, %v4620
    %v4635 = vadd.f32 %v4546, %v4620
    %v4636 = vadd.f32 %v4547, %v4620
    %v4637 = vadd.f32 %v4548, %v4620
    %v4638 = vadd.f32 %v4549, %v4620
    %v4639 = vadd.f32 %v4550, %v4620
    %v4640 = vadd.f32 %v4551, %v4620
    %v4641 = vadd.f32 %v4552, %v4620
    %v4642 = vadd.f32 %v4553, %v4620
    %v4643 = vadd.f32 %v4554, %v4620
    %v4644 = vadd.f32 %v4555, %v4620
    %v4645 = vadd.f32 %v4556, %v4620
    %v4646 = vadd.f32 %v4557, %v4620
    %v4647 = vadd.f32 %v4558, %v4620
    %v4648 = vadd.f32 %v4559, %v4620
    %v4649 = vadd.f32 %v4560, %v4620
    %v4650 = vadd.f32 %v4561, %v4620
    %v4651 = vadd.f32 %v4562, %v4620
    %v4652 = vadd.f32 %v4563, %v4620
    %v4653 = vadd.f32 %v4564, %v4620
    %v4654 = vadd.f32 %v4565, %v4620
    %v4655 = vadd.f32 %v4566, %v4620
    %v4656 = vadd.f32 %v4567, %v4620
    %v4657 = vadd.f32 %v4568, %v4620
    %v4658 = vadd.f32 %v4569, %v4620
    %v4659 = vadd.f32 %v4570, %v4620
    %v4660 = vadd.f32 %v4571, %v4620
    %v4661 = vadd.f32 %v4572, %v4620
    %v4662 = vadd.f32 %v4573, %v4620
    %v4663 = vadd.f32 %v4574, %v4620
    %v4664 = vadd.f32 %v4575, %v4620
    %v4665 = vadd.f32 %v4576, %v4620
    %v4666 = vadd.f32 %v4577, %v4620
    %v4667 = vadd.f32 %v4578, %v4620
    %v4668 = vadd.f32 %v4579, %v4620
    %v4669 = vadd.f32 %v4580, %v4620
    %v4670 = vadd.f32 %v4581, %v4620
    %v4671 = vadd.f32 %v4582, %v4620
    %v4672 = vadd.f32 %v4583, %v4620
    %v4673 = vadd.f32 %v4584, %v4620
    %v4674 = vadd.f32 %v4585, %v4620
    %v4675 = vadd.f32 %v4586, %v4620
    %v4676 = vadd.f32 %v4587, %v4620
    %v4677 = vadd.f32 %v4588, %v4620
    %v4678 = vadd.f32 %v4589, %v4620
    %v4679 = vadd.f32 %v4590, %v4620
    %v4680 = vadd.f32 %v4591, %v4620
    %v4681 = vadd.f32 %v4592, %v4620
    %v4682 = vadd.f32 %v4593, %v4620
    %v4683 = vadd.f32 %v4594, %v4620
    %v4684 = vadd.f32 %v4595, %v4620
    %v4685 = vadd.f32 %v4596, %v4620
    %v4686 = vadd.f32 %v4597, %v4620
    %v4687 = vadd.f32 %v4598, %v4620
    %v4688 = vadd.f32 %v4599, %v4620
    %v4689 = vadd.f32 %v4600, %v4620
    %v4690 = vadd.f32 %v4601, %v4620
    %v4691 = vadd.f32 %v4602, %v4620
    %v4692 = vadd.f32 %v4603, %v4620
    %v4693 = vadd.f32 %v4604, %v4620
    %v4694 = vadd.f32 %v4605, %v4620
    %v4695 = vadd.f32 %v4606, %v4620
    %v4696 = vadd.f32 %v4607, %v4620
    %v4697 = vadd.f32 %v4608, %v4620
    %v4698 = vadd.f32 %v4609, %v4620
    %v4699 = vadd.f32 %v4610, %v4620
    %v4700 = vadd.f32 %v4611, %v4620
    %v4701 = vadd.f32 %v4612, %v4620
    %v4702 = vadd.f32 %v4613, %v4620
    %v4703 = vadd.f32 %v4614, %v4620
    %v4704 = vmax.f32 %v4622, 0.0
    %v4705 = vmax.f32 %v4623, 0.0
    %v4706 = vmax.f32 %v4624, 0.0
    %v4707 = vmax.f32 %v4625, 0.0
    %v4708 = vmax.f32 %v4626, 0.0
    %v4709 = vmax.f32 %v4627, 0.0
    %v4710 = vmax.f32 %v4628, 0.0
    %v4711 = vmax.f32 %v4629, 0.0
    %v4712 = vmax.f32 %v4630, 0.0
    %v4713 = vmax.f32 %v4631, 0.0
    %v4714 = vmax.f32 %v4632, 0.0
    %v4715 = vmax.f32 %v4633, 0.0
    %v4716 = vmax.f32 %v4634, 0.0
    %v4717 = vmax.f32 %v4635, 0.0
    %v4718 = vmax.f32 %v4636, 0.0
    %v4719 = vmax.f32 %v4637, 0.0
    %v4720 = vmax.f32 %v4638, 0.0
    %v4721 = vmax.f32 %v4639, 0.0
    %v4722 = vmax.f32 %v4640, 0.0
    %v4723 = vmax.f32 %v4641, 0.0
    %v4724 = vmax.f32 %v4642, 0.0
    %v4725 = vmax.f32 %v4643, 0.0
    %v4726 = vmax.f32 %v4644, 0.0
    %v4727 = vmax.f32 %v4645, 0.0
    %v4728 = vmax.f32 %v4646, 0.0
    %v4729 = vmax.f32 %v4647, 0.0
    %v4730 = vmax.f32 %v4648, 0.0
    %v4731 = vmax.f32 %v4649, 0.0
    %v4732 = vmax.f32 %v4650, 0.0
    %v4733 = vmax.f32 %v4651, 0.0
    %v4734 = vmax.f32 %v4652, 0.0
    %v4735 = vmax.f32 %v4653, 0.0
    %v4736 = vmax.f32 %v4654, 0.0
    %v4737 = vmax.f32 %v4655, 0.0
    %v4738 = vmax.f32 %v4656, 0.0
    %v4739 = vmax.f32 %v4657, 0.0
    %v4740 = vmax.f32 %v4658, 0.0
    %v4741 = vmax.f32 %v4659, 0.0
    %v4742 = vmax.f32 %v4660, 0.0
    %v4743 = vmax.f32 %v4661, 0.0
    %v4744 = vmax.f32 %v4662, 0.0
    %v4745 = vmax.f32 %v4663, 0.0
    %v4746 = vmax.f32 %v4664, 0.0
    %v4747 = vmax.f32 %v4665, 0.0
    %v4748 = vmax.f32 %v4666, 0.0
    %v4749 = vmax.f32 %v4667, 0.0
    %v4750 = vmax.f32 %v4668, 0.0
    %v4751 = vmax.f32 %v4669, 0.0
    %v4752 = vmax.f32 %v4670, 0.0
    %v4753 = vmax.f32 %v4671, 0.0
    %v4754 = vmax.f32 %v4672, 0.0
    %v4755 = vmax.f32 %v4673, 0.0
    %v4756 = vmax.f32 %v4674, 0.0
    %v4757 = vmax.f32 %v4675, 0.0
    %v4758 = vmax.f32 %v4676, 0.0
    %v4759 = vmax.f32 %v4677, 0.0
    %v4760 = vmax.f32 %v4678, 0.0
    %v4761 = vmax.f32 %v4679, 0.0
    %v4762 = vmax.f32 %v4680, 0.0
    %v4763 = vmax.f32 %v4681, 0.0
    %v4764 = vmax.f32 %v4682, 0.0
    %v4765 = vmax.f32 %v4683, 0.0
    %v4766 = vmax.f32 %v4684, 0.0
    %v4767 = vmax.f32 %v4685, 0.0
    %v4768 = vmax.f32 %v4686, 0.0
    %v4769 = vmax.f32 %v4687, 0.0
    %v4770 = vmax.f32 %v4688, 0.0
    %v4771 = vmax.f32 %v4689, 0.0
    %v4772 = vmax.f32 %v4690, 0.0
    %v4773 = vmax.f32 %v4691, 0.0
    %v4774 = vmax.f32 %v4692, 0.0
    %v4775 = vmax.f32 %v4693, 0.0
    %v4776 = vmax.f32 %v4694, 0.0
    %v4777 = vmax.f32 %v4695, 0.0
    %v4778 = vmax.f32 %v4696, 0.0
    %v4779 = vmax.f32 %v4697, 0.0
    %v4780 = vmax.f32 %v4698, 0.0
    %v4781 = vmax.f32 %v4699, 0.0
    %v4782 = vmax.f32 %v4700, 0.0
    %v4783 = vmax.f32 %v4701, 0.0
    %v4784 = vmax.f32 %v4702, 0.0
    %v4785 = vmax.f32 %v4703, 0.0
    %v4786 = vsel %vm832, 1, 0
    %v4787 = vsel %vm833, 1, 0
    %v4788 = vsel %vm834, 1, 0
    %v4789 = vsel %vm835, 1, 0
    %v4790 = vsel %vm836, 1, 0
    %v4791 = vsel %vm837, 1, 0
    %v4792 = vsel %vm838, 1, 0
    %v4793 = vsel %vm839, 1, 0
    %v4794 = vsel %vm840, 1, 0
    %v4795 = vsel %vm841, 1, 0
    %v4796 = vsel %vm842, 1, 0
    %v4797 = vsel %vm843, 1, 0
    %v4798 = vsel %vm844, 1, 0
    %v4799 = vsel %vm845, 1, 0
    %v4800 = vsel %vm846, 1, 0
    %v4801 = vsel %vm847, 1, 0
    %v4802 = vsel %vm848, 1, 0
    %v4803 = vsel %vm849, 1, 0
    %v4804 = vsel %vm850, 1, 0
    %v4805 = vsel %vm851, 1, 0
    %v4806 = vsel %vm852, 1, 0
    %v4807 = vsel %vm853, 1, 0
    %v4808 = vsel %vm854, 1, 0
    %v4809 = vsel %vm855, 1, 0
    %v4810 = vsel %vm856, 1, 0
    %v4811 = vsel %vm857, 1, 0
    %v4812 = vsel %vm858, 1, 0
    %v4813 = vsel %vm859, 1, 0
    %v4814 = vsel %vm860, 1, 0
    %v4815 = vsel %vm861, 1, 0
    %v4816 = vsel %vm862, 1, 0
    %v4817 = vsel %vm863, 1, 0
    %v4818 = vsel %vm864, 1, 0
    %v4819 = vsel %vm865, 1, 0
    %v4820 = vsel %vm866, 1, 0
    %v4821 = vsel %vm867, 1, 0
    %v4822 = vsel %vm868, 1, 0
    %v4823 = vsel %vm869, 1, 0
    %v4824 = vsel %vm870, 1, 0
    %v4825 = vsel %vm871, 1, 0
    %v4826 = vsel %vm872, 1, 0
    %vm4827 = vcmp.eq.s32.totalorder %v4786, 1
    %vm4828 = vcmp.eq.s32.totalorder %v4787, 1
    %vm4829 = vcmp.eq.s32.totalorder %v4788, 1
    %vm4830 = vcmp.eq.s32.totalorder %v4789, 1
    %vm4831 = vcmp.eq.s32.totalorder %v4790, 1
    %vm4832 = vcmp.eq.s32.totalorder %v4791, 1
    %vm4833 = vcmp.eq.s32.totalorder %v4792, 1
    %vm4834 = vcmp.eq.s32.totalorder %v4793, 1
    %vm4835 = vcmp.eq.s32.totalorder %v4794, 1
    %vm4836 = vcmp.eq.s32.totalorder %v4795, 1
    %vm4837 = vcmp.eq.s32.totalorder %v4796, 1
    %vm4838 = vcmp.eq.s32.totalorder %v4797, 1
    %vm4839 = vcmp.eq.s32.totalorder %v4798, 1
    %vm4840 = vcmp.eq.s32.totalorder %v4799, 1
    %vm4841 = vcmp.eq.s32.totalorder %v4800, 1
    %vm4842 = vcmp.eq.s32.totalorder %v4801, 1
    %vm4843 = vcmp.eq.s32.totalorder %v4802, 1
    %vm4844 = vcmp.eq.s32.totalorder %v4803, 1
    %vm4845 = vcmp.eq.s32.totalorder %v4804, 1
    %vm4846 = vcmp.eq.s32.totalorder %v4805, 1
    %vm4847 = vcmp.eq.s32.totalorder %v4806, 1
    %vm4848 = vcmp.eq.s32.totalorder %v4807, 1
    %vm4849 = vcmp.eq.s32.totalorder %v4808, 1
    %vm4850 = vcmp.eq.s32.totalorder %v4809, 1
    %vm4851 = vcmp.eq.s32.totalorder %v4810, 1
    %vm4852 = vcmp.eq.s32.totalorder %v4811, 1
    %vm4853 = vcmp.eq.s32.totalorder %v4812, 1
    %vm4854 = vcmp.eq.s32.totalorder %v4813, 1
    %vm4855 = vcmp.eq.s32.totalorder %v4814, 1
    %vm4856 = vcmp.eq.s32.totalorder %v4815, 1
    %vm4857 = vcmp.eq.s32.totalorder %v4816, 1
    %vm4858 = vcmp.eq.s32.totalorder %v4817, 1
    %vm4859 = vcmp.eq.s32.totalorder %v4818, 1
    %vm4860 = vcmp.eq.s32.totalorder %v4819, 1
    %vm4861 = vcmp.eq.s32.totalorder %v4820, 1
    %vm4862 = vcmp.eq.s32.totalorder %v4821, 1
    %vm4863 = vcmp.eq.s32.totalorder %v4822, 1
    %vm4864 = vcmp.eq.s32.totalorder %v4823, 1
    %vm4865 = vcmp.eq.s32.totalorder %v4824, 1
    %vm4866 = vcmp.eq.s32.totalorder %v4825, 1
    %vm4867 = vcmp.eq.s32.totalorder %v4826, 1
    %v4868 = vsel %vm4827, %v4704, 0.0
    %v4869 = vsel %vm4828, %v4705, 0.0
    %v4870 = vsel %vm4829, %v4706, 0.0
    %v4871 = vsel %vm4830, %v4707, 0.0
    %v4872 = vsel %vm4831, %v4708, 0.0
    %v4873 = vsel %vm4832, %v4709, 0.0
    %v4874 = vsel %vm4833, %v4710, 0.0
    %v4875 = vsel %vm4834, %v4711, 0.0
    %v4876 = vsel %vm4835, %v4712, 0.0
    %v4877 = vsel %vm4836, %v4713, 0.0
    %v4878 = vsel %vm4837, %v4714, 0.0
    %v4879 = vsel %vm4838, %v4715, 0.0
    %v4880 = vsel %vm4839, %v4716, 0.0
    %v4881 = vsel %vm4840, %v4717, 0.0
    %v4882 = vsel %vm4841, %v4718, 0.0
    %v4883 = vsel %vm4842, %v4719, 0.0
    %v4884 = vsel %vm4843, %v4720, 0.0
    %v4885 = vsel %vm4844, %v4721, 0.0
    %v4886 = vsel %vm4845, %v4722, 0.0
    %v4887 = vsel %vm4846, %v4723, 0.0
    %v4888 = vsel %vm4847, %v4724, 0.0
    %v4889 = vsel %vm4848, %v4725, 0.0
    %v4890 = vsel %vm4849, %v4726, 0.0
    %v4891 = vsel %vm4850, %v4727, 0.0
    %v4892 = vsel %vm4851, %v4728, 0.0
    %v4893 = vsel %vm4852, %v4729, 0.0
    %v4894 = vsel %vm4853, %v4730, 0.0
    %v4895 = vsel %vm4854, %v4731, 0.0
    %v4896 = vsel %vm4855, %v4732, 0.0
    %v4897 = vsel %vm4856, %v4733, 0.0
    %v4898 = vsel %vm4857, %v4734, 0.0
    %v4899 = vsel %vm4858, %v4735, 0.0
    %v4900 = vsel %vm4859, %v4736, 0.0
    %v4901 = vsel %vm4860, %v4737, 0.0
    %v4902 = vsel %vm4861, %v4738, 0.0
    %v4903 = vsel %vm4862, %v4739, 0.0
    %v4904 = vsel %vm4863, %v4740, 0.0
    %v4905 = vsel %vm4864, %v4741, 0.0
    %v4906 = vsel %vm4865, %v4742, 0.0
    %v4907 = vsel %vm4866, %v4743, 0.0
    %v4908 = vsel %vm4867, %v4744, 0.0
    %v4909 = vsel %vm4827, %v4745, 0.0
    %v4910 = vsel %vm4828, %v4746, 0.0
    %v4911 = vsel %vm4829, %v4747, 0.0
    %v4912 = vsel %vm4830, %v4748, 0.0
    %v4913 = vsel %vm4831, %v4749, 0.0
    %v4914 = vsel %vm4832, %v4750, 0.0
    %v4915 = vsel %vm4833, %v4751, 0.0
    %v4916 = vsel %vm4834, %v4752, 0.0
    %v4917 = vsel %vm4835, %v4753, 0.0
    %v4918 = vsel %vm4836, %v4754, 0.0
    %v4919 = vsel %vm4837, %v4755, 0.0
    %v4920 = vsel %vm4838, %v4756, 0.0
    %v4921 = vsel %vm4839, %v4757, 0.0
    %v4922 = vsel %vm4840, %v4758, 0.0
    %v4923 = vsel %vm4841, %v4759, 0.0
    %v4924 = vsel %vm4842, %v4760, 0.0
    %v4925 = vsel %vm4843, %v4761, 0.0
    %v4926 = vsel %vm4844, %v4762, 0.0
    %v4927 = vsel %vm4845, %v4763, 0.0
    %v4928 = vsel %vm4846, %v4764, 0.0
    %v4929 = vsel %vm4847, %v4765, 0.0
    %v4930 = vsel %vm4848, %v4766, 0.0
    %v4931 = vsel %vm4849, %v4767, 0.0
    %v4932 = vsel %vm4850, %v4768, 0.0
    %v4933 = vsel %vm4851, %v4769, 0.0
    %v4934 = vsel %vm4852, %v4770, 0.0
    %v4935 = vsel %vm4853, %v4771, 0.0
    %v4936 = vsel %vm4854, %v4772, 0.0
    %v4937 = vsel %vm4855, %v4773, 0.0
    %v4938 = vsel %vm4856, %v4774, 0.0
    %v4939 = vsel %vm4857, %v4775, 0.0
    %v4940 = vsel %vm4858, %v4776, 0.0
    %v4941 = vsel %vm4859, %v4777, 0.0
    %v4942 = vsel %vm4860, %v4778, 0.0
    %v4943 = vsel %vm4861, %v4779, 0.0
    %v4944 = vsel %vm4862, %v4780, 0.0
    %v4945 = vsel %vm4863, %v4781, 0.0
    %v4946 = vsel %vm4864, %v4782, 0.0
    %v4947 = vsel %vm4865, %v4783, 0.0
    %v4948 = vsel %vm4866, %v4784, 0.0
    %v4949 = vsel %vm4867, %v4785, 0.0
    %4950 = vst.msk [vmem:[#allocation3 + $0x18] sm:$0xff] %vm1940, %v4868
    %4951 = vst.msk [vmem:[#allocation3 + $0x20] sm:$0xff] %vm1940, %v4869
    %4952 = vst.msk [vmem:[#allocation3 + $0x28] sm:$0xff] %vm1940, %v4870
    %4953 = vst.msk [vmem:[#allocation3 + $0x30] sm:$0xff] %vm1940, %v4871
    %4954 = vst.msk [vmem:[#allocation3 + $0x38] sm:$0xff] %vm1940, %v4872
    %4955 = vst.msk [vmem:[#allocation3 + $0x40] sm:$0xff] %vm1940, %v4873
    %4956 = vst.msk [vmem:[#allocation3 + $0x48] sm:$0xff] %vm1940, %v4874
    %4957 = vst.msk [vmem:[#allocation3 + $0x50] sm:$0xff] %vm1940, %v4875
    %4958 = vst.msk [vmem:[#allocation3 + $0x58] sm:$0xff] %vm1940, %v4876
    %4959 = vst.msk [vmem:[#allocation3 + $0x60] sm:$0xff] %vm1940, %v4877
    %4960 = vst.msk [vmem:[#allocation3 + $0x68] sm:$0xff] %vm1940, %v4878
    %4961 = vst.msk [vmem:[#allocation3 + $0x70] sm:$0xff] %vm1940, %v4879
    %4962 = vst.msk [vmem:[#allocation3 + $0x78] sm:$0xff] %vm1940, %v4880
    %4963 = vst.msk [vmem:[#allocation3 + $0x80] sm:$0xff] %vm1940, %v4881
    %4964 = vst.msk [vmem:[#allocation3 + $0x88] sm:$0xff] %vm1940, %v4882
    %4965 = vst.msk [vmem:[#allocation3 + $0x90] sm:$0xff] %vm1940, %v4883
    %4966 = vst.msk [vmem:[#allocation3 + $0x98] sm:$0xff] %vm1940, %v4884
    %4967 = vst.msk [vmem:[#allocation3 + $0xa0] sm:$0xff] %vm1940, %v4885
    %4968 = vst.msk [vmem:[#allocation3 + $0xa8] sm:$0xff] %vm1940, %v4886
    %4969 = vst.msk [vmem:[#allocation3 + $0xb0] sm:$0xff] %vm1940, %v4887
    %4970 = vst.msk [vmem:[#allocation3 + $0xb8] sm:$0xff] %vm1940, %v4888
    %4971 = vst.msk [vmem:[#allocation3 + $0xc0] sm:$0xff] %vm1940, %v4889
    %4972 = vst.msk [vmem:[#allocation3 + $0xc8] sm:$0xff] %vm1940, %v4890
    %4973 = vst.msk [vmem:[#allocation3 + $0xd0] sm:$0xff] %vm1940, %v4891
    %4974 = vst.msk [vmem:[#allocation3 + $0xd8] sm:$0xff] %vm1940, %v4892
    %4975 = vst.msk [vmem:[#allocation3 + $0xe0] sm:$0xff] %vm1940, %v4893
    %4976 = vst.msk [vmem:[#allocation3 + $0xe8] sm:$0xff] %vm1940, %v4894
    %4977 = vst.msk [vmem:[#allocation3 + $0xf0] sm:$0xff] %vm1940, %v4895
    %4978 = vst.msk [vmem:[#allocation3 + $0xf8] sm:$0xff] %vm1940, %v4896
    %4979 = vst.msk [vmem:[#allocation3 + $0x100] sm:$0xff] %vm1940, %v4897
    %4980 = vst.msk [vmem:[#allocation3 + $0x108] sm:$0xff] %vm1940, %v4898
    %4981 = vst.msk [vmem:[#allocation3 + $0x110] sm:$0xff] %vm1940, %v4899
    %4982 = vst.msk [vmem:[#allocation3 + $0x118] sm:$0xff] %vm1940, %v4900
    %4983 = vst.msk [vmem:[#allocation3 + $0x120] sm:$0xff] %vm1940, %v4901
    %4984 = vst.msk [vmem:[#allocation3 + $0x128] sm:$0xff] %vm1940, %v4902
    %4985 = vst.msk [vmem:[#allocation3 + $0x130] sm:$0xff] %vm1940, %v4903
    %4986 = vst.msk [vmem:[#allocation3 + $0x138] sm:$0xff] %vm1940, %v4904
    %4987 = vst.msk [vmem:[#allocation3 + $0x140] sm:$0xff] %vm1940, %v4905
    %4988 = vst.msk [vmem:[#allocation3 + $0x148] sm:$0xff] %vm1940, %v4906
    %4989 = vst.msk [vmem:[#allocation3 + $0x150] sm:$0xff] %vm1940, %v4907
    %4990 = vst.msk [vmem:[#allocation3 + $0x158] sm:$0xff] %vm1940, %v4908
    %4991 = vst.msk [vmem:[#allocation3 + $0x160] sm:$0xff] %vm1940, %v4909
    %4992 = vst.msk [vmem:[#allocation3 + $0x168] sm:$0xff] %vm1940, %v4910
    %4993 = vst.msk [vmem:[#allocation3 + $0x170] sm:$0xff] %vm1940, %v4911
    %4994 = vst.msk [vmem:[#allocation3 + $0x178] sm:$0xff] %vm1940, %v4912
    %4995 = vst.msk [vmem:[#allocation3 + $0x180] sm:$0xff] %vm1940, %v4913
    %4996 = vst.msk [vmem:[#allocation3 + $0x188] sm:$0xff] %vm1940, %v4914
    %4997 = vst.msk [vmem:[#allocation3 + $0x190] sm:$0xff] %vm1940, %v4915
    %4998 = vst.msk [vmem:[#allocation3 + $0x198] sm:$0xff] %vm1940, %v4916
    %4999 = vst.msk [vmem:[#allocation3 + $0x1a0] sm:$0xff] %vm1940, %v4917
    %5000 = vst.msk [vmem:[#allocation3 + $0x1a8] sm:$0xff] %vm1940, %v4918
    %5001 = vst.msk [vmem:[#allocation3 + $0x1b0] sm:$0xff] %vm1940, %v4919
    %5002 = vst.msk [vmem:[#allocation3 + $0x1b8] sm:$0xff] %vm1940, %v4920
    %5003 = vst.msk [vmem:[#allocation3 + $0x1c0] sm:$0xff] %vm1940, %v4921
    %5004 = vst.msk [vmem:[#allocation3 + $0x1c8] sm:$0xff] %vm1940, %v4922
    %5005 = vst.msk [vmem:[#allocation3 + $0x1d0] sm:$0xff] %vm1940, %v4923
    %5006 = vst.msk [vmem:[#allocation3 + $0x1d8] sm:$0xff] %vm1940, %v4924
    %5007 = vst.msk [vmem:[#allocation3 + $0x1e0] sm:$0xff] %vm1940, %v4925
    %5008 = vst.msk [vmem:[#allocation3 + $0x1e8] sm:$0xff] %vm1940, %v4926
    %5009 = vst.msk [vmem:[#allocation3 + $0x1f0] sm:$0xff] %vm1940, %v4927
    %5010 = vst.msk [vmem:[#allocation3 + $0x1f8] sm:$0xff] %vm1940, %v4928
    %5011 = vst.msk [vmem:[#allocation3 + $0x200] sm:$0xff] %vm1940, %v4929
    %5012 = vst.msk [vmem:[#allocation3 + $0x208] sm:$0xff] %vm1940, %v4930
    %5013 = vst.msk [vmem:[#allocation3 + $0x210] sm:$0xff] %vm1940, %v4931
    %5014 = vst.msk [vmem:[#allocation3 + $0x218] sm:$0xff] %vm1940, %v4932
    %5015 = vst.msk [vmem:[#allocation3 + $0x220] sm:$0xff] %vm1940, %v4933
    %5016 = vst.msk [vmem:[#allocation3 + $0x228] sm:$0xff] %vm1940, %v4934
    %5017 = vst.msk [vmem:[#allocation3 + $0x230] sm:$0xff] %vm1940, %v4935
    %5018 = vst.msk [vmem:[#allocation3 + $0x238] sm:$0xff] %vm1940, %v4936
    %5019 = vst.msk [vmem:[#allocation3 + $0x240] sm:$0xff] %vm1940, %v4937
    %5020 = vst.msk [vmem:[#allocation3 + $0x248] sm:$0xff] %vm1940, %v4938
    %5021 = vst.msk [vmem:[#allocation3 + $0x250] sm:$0xff] %vm1940, %v4939
    %5022 = vst.msk [vmem:[#allocation3 + $0x258] sm:$0xff] %vm1940, %v4940
    %5023 = vst.msk [vmem:[#allocation3 + $0x260] sm:$0xff] %vm1940, %v4941
    %5024 = vst.msk [vmem:[#allocation3 + $0x268] sm:$0xff] %vm1940, %v4942
    %5025 = vst.msk [vmem:[#allocation3 + $0x270] sm:$0xff] %vm1940, %v4943
    %5026 = vst.msk [vmem:[#allocation3 + $0x278] sm:$0xff] %vm1940, %v4944
    %5027 = vst.msk [vmem:[#allocation3 + $0x280] sm:$0xff] %vm1940, %v4945
    %5028 = vst.msk [vmem:[#allocation3 + $0x288] sm:$0xff] %vm1940, %v4946
    %5029 = vst.msk [vmem:[#allocation3 + $0x290] sm:$0xff] %vm1940, %v4947
    %5030 = vst.msk [vmem:[#allocation3 + $0x298] sm:$0xff] %vm1940, %v4948
    %5031 = vst.msk [vmem:[#allocation3 + $0x2a0] sm:$0xff] %vm1940, %v4949
    %v5032 = vld [vmem:[#allocation3 + $0x17] sm:$0xff]
    %v5033 = vld [vmem:[#allocation3 + $0x1f] sm:$0xff]
    %v5034 = vld [vmem:[#allocation3 + $0x27] sm:$0xff]
    %v5035 = vld [vmem:[#allocation3 + $0x2f] sm:$0xff]
    %v5036 = vld [vmem:[#allocation3 + $0x37] sm:$0xff]
    %v5037 = vld [vmem:[#allocation3 + $0x3f] sm:$0xff]
    %v5038 = vld [vmem:[#allocation3 + $0x47] sm:$0xff]
    %v5039 = vld [vmem:[#allocation3 + $0x4f] sm:$0xff]
    %v5040 = vld [vmem:[#allocation3 + $0x57] sm:$0xff]
    %v5041 = vld [vmem:[#allocation3 + $0x5f] sm:$0xff]
    %v5042 = vld [vmem:[#allocation3 + $0x67] sm:$0xff]
    %v5043 = vld [vmem:[#allocation3 + $0x6f] sm:$0xff]
    %v5044 = vld [vmem:[#allocation3 + $0x77] sm:$0xff]
    %v5045 = vld [vmem:[#allocation3 + $0x7f] sm:$0xff]
    %v5046 = vld [vmem:[#allocation3 + $0x87] sm:$0xff]
    %v5047 = vld [vmem:[#allocation3 + $0x8f] sm:$0xff]
    %v5048 = vld [vmem:[#allocation3 + $0x97] sm:$0xff]
    %v5049 = vld [vmem:[#allocation3 + $0x9f] sm:$0xff]
    %v5050 = vld [vmem:[#allocation3 + $0xa7] sm:$0xff]
    %v5051 = vld [vmem:[#allocation3 + $0xaf] sm:$0xff]
    %v5052 = vld [vmem:[#allocation3 + $0xb7] sm:$0xff]
    %v5053 = vld [vmem:[#allocation3 + $0xbf] sm:$0xff]
    %v5054 = vld [vmem:[#allocation3 + $0xc7] sm:$0xff]
    %v5055 = vld [vmem:[#allocation3 + $0xcf] sm:$0xff]
    %v5056 = vld [vmem:[#allocation3 + $0xd7] sm:$0xff]
    %v5057 = vld [vmem:[#allocation3 + $0xdf] sm:$0xff]
    %v5058 = vld [vmem:[#allocation3 + $0xe7] sm:$0xff]
    %v5059 = vld [vmem:[#allocation3 + $0xef] sm:$0xff]
    %v5060 = vld [vmem:[#allocation3 + $0xf7] sm:$0xff]
    %v5061 = vld [vmem:[#allocation3 + $0xff] sm:$0xff]
    %v5062 = vld [vmem:[#allocation3 + $0x107] sm:$0xff]
    %v5063 = vld [vmem:[#allocation3 + $0x10f] sm:$0xff]
    %v5064 = vld [vmem:[#allocation3 + $0x117] sm:$0xff]
    %v5065 = vld [vmem:[#allocation3 + $0x11f] sm:$0xff]
    %v5066 = vld [vmem:[#allocation3 + $0x127] sm:$0xff]
    %v5067 = vld [vmem:[#allocation3 + $0x12f] sm:$0xff]
    %v5068 = vld [vmem:[#allocation3 + $0x137] sm:$0xff]
    %v5069 = vld [vmem:[#allocation3 + $0x13f] sm:$0xff]
    %v5070 = vld [vmem:[#allocation3 + $0x147] sm:$0xff]
    %v5071 = vld [vmem:[#allocation3 + $0x14f] sm:$0xff]
    %v5072 = vld [vmem:[#allocation3 + $0x157] sm:$0xff]
    %v5073 = vld [vmem:[#allocation3 + $0x15f] sm:$0xff]
    %v5074 = vld [vmem:[#allocation3 + $0x167] sm:$0xff]
    %v5075 = vld [vmem:[#allocation3 + $0x16f] sm:$0xff]
    %v5076 = vld [vmem:[#allocation3 + $0x177] sm:$0xff]
    %v5077 = vld [vmem:[#allocation3 + $0x17f] sm:$0xff]
    %v5078 = vld [vmem:[#allocation3 + $0x187] sm:$0xff]
    %v5079 = vld [vmem:[#allocation3 + $0x18f] sm:$0xff]
    %v5080 = vld [vmem:[#allocation3 + $0x197] sm:$0xff]
    %v5081 = vld [vmem:[#allocation3 + $0x19f] sm:$0xff]
    %v5082 = vld [vmem:[#allocation3 + $0x1a7] sm:$0xff]
    %v5083 = vld [vmem:[#allocation3 + $0x1af] sm:$0xff]
    %v5084 = vld [vmem:[#allocation3 + $0x1b7] sm:$0xff]
    %v5085 = vld [vmem:[#allocation3 + $0x1bf] sm:$0xff]
    %v5086 = vld [vmem:[#allocation3 + $0x1c7] sm:$0xff]
    %v5087 = vld [vmem:[#allocation3 + $0x1cf] sm:$0xff]
    %v5088 = vld [vmem:[#allocation3 + $0x1d7] sm:$0xff]
    %v5089 = vld [vmem:[#allocation3 + $0x1df] sm:$0xff]
    %v5090 = vld [vmem:[#allocation3 + $0x1e7] sm:$0xff]
    %v5091 = vld [vmem:[#allocation3 + $0x1ef] sm:$0xff]
    %v5092 = vld [vmem:[#allocation3 + $0x1f7] sm:$0xff]
    %v5093 = vld [vmem:[#allocation3 + $0x1ff] sm:$0xff]
    %v5094 = vld [vmem:[#allocation3 + $0x207] sm:$0xff]
    %v5095 = vld [vmem:[#allocation3 + $0x20f] sm:$0xff]
    %v5096 = vld [vmem:[#allocation3 + $0x217] sm:$0xff]
    %v5097 = vld [vmem:[#allocation3 + $0x21f] sm:$0xff]
    %v5098 = vld [vmem:[#allocation3 + $0x227] sm:$0xff]
    %v5099 = vld [vmem:[#allocation3 + $0x22f] sm:$0xff]
    %v5100 = vld [vmem:[#allocation3 + $0x237] sm:$0xff]
    %v5101 = vld [vmem:[#allocation3 + $0x23f] sm:$0xff]
    %v5102 = vld [vmem:[#allocation3 + $0x247] sm:$0xff]
    %v5103 = vld [vmem:[#allocation3 + $0x24f] sm:$0xff]
    %v5104 = vld [vmem:[#allocation3 + $0x257] sm:$0xff]
    %v5105 = vld [vmem:[#allocation3 + $0x25f] sm:$0xff]
    %v5106 = vld [vmem:[#allocation3 + $0x267] sm:$0xff]
    %v5107 = vld [vmem:[#allocation3 + $0x26f] sm:$0xff]
    %v5108 = vld [vmem:[#allocation3 + $0x277] sm:$0xff]
    %v5109 = vld [vmem:[#allocation3 + $0x27f] sm:$0xff]
    %v5110 = vld [vmem:[#allocation3 + $0x287] sm:$0xff]
    %v5111 = vld [vmem:[#allocation3 + $0x28f] sm:$0xff]
    %v5112 = vld [vmem:[#allocation3 + $0x297] sm:$0xff]
    %v5113 = vld [vmem:[#allocation3 + $0x29f] sm:$0xff]
    %v5114 = vld [vmem:[#allocation3 + $0x19] sm:$0xff]
    %v5115 = vld [vmem:[#allocation3 + $0x21] sm:$0xff]
    %v5116 = vld [vmem:[#allocation3 + $0x29] sm:$0xff]
    %v5117 = vld [vmem:[#allocation3 + $0x31] sm:$0xff]
    %v5118 = vld [vmem:[#allocation3 + $0x39] sm:$0xff]
    %v5119 = vld [vmem:[#allocation3 + $0x41] sm:$0xff]
    %v5120 = vld [vmem:[#allocation3 + $0x49] sm:$0xff]
    %v5121 = vld [vmem:[#allocation3 + $0x51] sm:$0xff]
    %v5122 = vld [vmem:[#allocation3 + $0x59] sm:$0xff]
    %v5123 = vld [vmem:[#allocation3 + $0x61] sm:$0xff]
    %v5124 = vld [vmem:[#allocation3 + $0x69] sm:$0xff]
    %v5125 = vld [vmem:[#allocation3 + $0x71] sm:$0xff]
    %v5126 = vld [vmem:[#allocation3 + $0x79] sm:$0xff]
    %v5127 = vld [vmem:[#allocation3 + $0x81] sm:$0xff]
    %v5128 = vld [vmem:[#allocation3 + $0x89] sm:$0xff]
    %v5129 = vld [vmem:[#allocation3 + $0x91] sm:$0xff]
    %v5130 = vld [vmem:[#allocation3 + $0x99] sm:$0xff]
    %v5131 = vld [vmem:[#allocation3 + $0xa1] sm:$0xff]
    %v5132 = vld [vmem:[#allocation3 + $0xa9] sm:$0xff]
    %v5133 = vld [vmem:[#allocation3 + $0xb1] sm:$0xff]
    %v5134 = vld [vmem:[#allocation3 + $0xb9] sm:$0xff]
    %v5135 = vld [vmem:[#allocation3 + $0xc1] sm:$0xff]
    %v5136 = vld [vmem:[#allocation3 + $0xc9] sm:$0xff]
    %v5137 = vld [vmem:[#allocation3 + $0xd1] sm:$0xff]
    %v5138 = vld [vmem:[#allocation3 + $0xd9] sm:$0xff]
    %v5139 = vld [vmem:[#allocation3 + $0xe1] sm:$0xff]
    %v5140 = vld [vmem:[#allocation3 + $0xe9] sm:$0xff]
    %v5141 = vld [vmem:[#allocation3 + $0xf1] sm:$0xff]
    %v5142 = vld [vmem:[#allocation3 + $0xf9] sm:$0xff]
    %v5143 = vld [vmem:[#allocation3 + $0x101] sm:$0xff]
    %v5144 = vld [vmem:[#allocation3 + $0x109] sm:$0xff]
    %v5145 = vld [vmem:[#allocation3 + $0x111] sm:$0xff]
    %v5146 = vld [vmem:[#allocation3 + $0x119] sm:$0xff]
    %v5147 = vld [vmem:[#allocation3 + $0x121] sm:$0xff]
    %v5148 = vld [vmem:[#allocation3 + $0x129] sm:$0xff]
    %v5149 = vld [vmem:[#allocation3 + $0x131] sm:$0xff]
    %v5150 = vld [vmem:[#allocation3 + $0x139] sm:$0xff]
    %v5151 = vld [vmem:[#allocation3 + $0x141] sm:$0xff]
    %v5152 = vld [vmem:[#allocation3 + $0x149] sm:$0xff]
    %v5153 = vld [vmem:[#allocation3 + $0x151] sm:$0xff]
    %v5154 = vld [vmem:[#allocation3 + $0x159] sm:$0xff]
    %v5155 = vld [vmem:[#allocation3 + $0x161] sm:$0xff]
    %v5156 = vld [vmem:[#allocation3 + $0x169] sm:$0xff]
    %v5157 = vld [vmem:[#allocation3 + $0x171] sm:$0xff]
    %v5158 = vld [vmem:[#allocation3 + $0x179] sm:$0xff]
    %v5159 = vld [vmem:[#allocation3 + $0x181] sm:$0xff]
    %v5160 = vld [vmem:[#allocation3 + $0x189] sm:$0xff]
    %v5161 = vld [vmem:[#allocation3 + $0x191] sm:$0xff]
    %v5162 = vld [vmem:[#allocation3 + $0x199] sm:$0xff]
    %v5163 = vld [vmem:[#allocation3 + $0x1a1] sm:$0xff]
    %v5164 = vld [vmem:[#allocation3 + $0x1a9] sm:$0xff]
    %v5165 = vld [vmem:[#allocation3 + $0x1b1] sm:$0xff]
    %v5166 = vld [vmem:[#allocation3 + $0x1b9] sm:$0xff]
    %v5167 = vld [vmem:[#allocation3 + $0x1c1] sm:$0xff]
    %v5168 = vld [vmem:[#allocation3 + $0x1c9] sm:$0xff]
    %v5169 = vld [vmem:[#allocation3 + $0x1d1] sm:$0xff]
    %v5170 = vld [vmem:[#allocation3 + $0x1d9] sm:$0xff]
    %v5171 = vld [vmem:[#allocation3 + $0x1e1] sm:$0xff]
    %v5172 = vld [vmem:[#allocation3 + $0x1e9] sm:$0xff]
    %v5173 = vld [vmem:[#allocation3 + $0x1f1] sm:$0xff]
    %v5174 = vld [vmem:[#allocation3 + $0x1f9] sm:$0xff]
    %v5175 = vld [vmem:[#allocation3 + $0x201] sm:$0xff]
    %v5176 = vld [vmem:[#allocation3 + $0x209] sm:$0xff]
    %v5177 = vld [vmem:[#allocation3 + $0x211] sm:$0xff]
    %v5178 = vld [vmem:[#allocation3 + $0x219] sm:$0xff]
    %v5179 = vld [vmem:[#allocation3 + $0x221] sm:$0xff]
    %v5180 = vld [vmem:[#allocation3 + $0x229] sm:$0xff]
    %v5181 = vld [vmem:[#allocation3 + $0x231] sm:$0xff]
    %v5182 = vld [vmem:[#allocation3 + $0x239] sm:$0xff]
    %v5183 = vld [vmem:[#allocation3 + $0x241] sm:$0xff]
    %v5184 = vld [vmem:[#allocation3 + $0x249] sm:$0xff]
    %v5185 = vld [vmem:[#allocation3 + $0x251] sm:$0xff]
    %v5186 = vld [vmem:[#allocation3 + $0x259] sm:$0xff]
    %v5187 = vld [vmem:[#allocation3 + $0x261] sm:$0xff]
    %v5188 = vld [vmem:[#allocation3 + $0x269] sm:$0xff]
    %v5189 = vld [vmem:[#allocation3 + $0x271] sm:$0xff]
    %v5190 = vld [vmem:[#allocation3 + $0x279] sm:$0xff]
    %v5191 = vld [vmem:[#allocation3 + $0x281] sm:$0xff]
    %v5192 = vld [vmem:[#allocation3 + $0x289] sm:$0xff]
    %v5193 = vld [vmem:[#allocation3 + $0x291] sm:$0xff]
    %v5194 = vld [vmem:[#allocation3 + $0x299] sm:$0xff]
    %v5195 = vld [vmem:[#allocation3 + $0x2a1] sm:$0xff]
    %5278 = vrot.lane.b32.xlu0 %v5032, 8
    %v5279 = vpop.permute.xlu0 %5278
    %5280 = vrot.lane.b32.xlu0 %v5033, 8
    %v5281 = vpop.permute.xlu0 %5280
    %5282 = vrot.lane.b32.xlu0 %v5034, 8
    %v5283 = vpop.permute.xlu0 %5282
    %5284 = vrot.lane.b32.xlu0 %v5035, 8
    %v5285 = vpop.permute.xlu0 %5284
    %5286 = vrot.lane.b32.xlu0 %v5036, 8
    %v5287 = vpop.permute.xlu0 %5286
    %5288 = vrot.lane.b32.xlu0 %v5037, 8
    %v5289 = vpop.permute.xlu0 %5288
    %5290 = vrot.lane.b32.xlu0 %v5038, 8
    %v5291 = vpop.permute.xlu0 %5290
    %5292 = vrot.lane.b32.xlu0 %v5039, 8
    %v5293 = vpop.permute.xlu0 %5292
    %5294 = vrot.lane.b32.xlu0 %v5040, 8
    %v5295 = vpop.permute.xlu0 %5294
    %5296 = vrot.lane.b32.xlu0 %v5041, 8
    %v5297 = vpop.permute.xlu0 %5296
    %5298 = vrot.lane.b32.xlu0 %v5042, 8
    %v5299 = vpop.permute.xlu0 %5298
    %5300 = vrot.lane.b32.xlu0 %v5043, 8
    %v5301 = vpop.permute.xlu0 %5300
    %5302 = vrot.lane.b32.xlu0 %v5044, 8
    %v5303 = vpop.permute.xlu0 %5302
    %5304 = vrot.lane.b32.xlu0 %v5045, 8
    %v5305 = vpop.permute.xlu0 %5304
    %5306 = vrot.lane.b32.xlu0 %v5046, 8
    %v5307 = vpop.permute.xlu0 %5306
    %5308 = vrot.lane.b32.xlu0 %v5047, 8
    %v5309 = vpop.permute.xlu0 %5308
    %5310 = vrot.lane.b32.xlu0 %v5048, 8
    %v5311 = vpop.permute.xlu0 %5310
    %5312 = vrot.lane.b32.xlu0 %v5049, 8
    %v5313 = vpop.permute.xlu0 %5312
    %5314 = vrot.lane.b32.xlu0 %v5050, 8
    %v5315 = vpop.permute.xlu0 %5314
    %5316 = vrot.lane.b32.xlu0 %v5051, 8
    %v5317 = vpop.permute.xlu0 %5316
    %5318 = vrot.lane.b32.xlu0 %v5052, 8
    %v5319 = vpop.permute.xlu0 %5318
    %5320 = vrot.lane.b32.xlu0 %v5053, 8
    %v5321 = vpop.permute.xlu0 %5320
    %5322 = vrot.lane.b32.xlu0 %v5054, 8
    %v5323 = vpop.permute.xlu0 %5322
    %5324 = vrot.lane.b32.xlu0 %v5055, 8
    %v5325 = vpop.permute.xlu0 %5324
    %5326 = vrot.lane.b32.xlu0 %v5056, 8
    %v5327 = vpop.permute.xlu0 %5326
    %5328 = vrot.lane.b32.xlu0 %v5057, 8
    %v5329 = vpop.permute.xlu0 %5328
    %5330 = vrot.lane.b32.xlu0 %v5058, 8
    %v5331 = vpop.permute.xlu0 %5330
    %5332 = vrot.lane.b32.xlu0 %v5059, 8
    %v5333 = vpop.permute.xlu0 %5332
    %5334 = vrot.lane.b32.xlu0 %v5060, 8
    %v5335 = vpop.permute.xlu0 %5334
    %5336 = vrot.lane.b32.xlu0 %v5061, 8
    %v5337 = vpop.permute.xlu0 %5336
    %5338 = vrot.lane.b32.xlu0 %v5062, 8
    %v5339 = vpop.permute.xlu0 %5338
    %5340 = vrot.lane.b32.xlu0 %v5063, 8
    %v5341 = vpop.permute.xlu0 %5340
    %5342 = vrot.lane.b32.xlu0 %v5064, 8
    %v5343 = vpop.permute.xlu0 %5342
    %5344 = vrot.lane.b32.xlu0 %v5065, 8
    %v5345 = vpop.permute.xlu0 %5344
    %5346 = vrot.lane.b32.xlu0 %v5066, 8
    %v5347 = vpop.permute.xlu0 %5346
    %5348 = vrot.lane.b32.xlu0 %v5067, 8
    %v5349 = vpop.permute.xlu0 %5348
    %5350 = vrot.lane.b32.xlu0 %v5068, 8
    %v5351 = vpop.permute.xlu0 %5350
    %5352 = vrot.lane.b32.xlu0 %v5069, 8
    %v5353 = vpop.permute.xlu0 %5352
    %5354 = vrot.lane.b32.xlu0 %v5070, 8
    %v5355 = vpop.permute.xlu0 %5354
    %5356 = vrot.lane.b32.xlu0 %v5071, 8
    %v5357 = vpop.permute.xlu0 %5356
    %5358 = vrot.lane.b32.xlu0 %v5072, 8
    %v5359 = vpop.permute.xlu0 %5358
    %5360 = vrot.lane.b32.xlu0 %v5073, 8
    %v5361 = vpop.permute.xlu0 %5360
    %5362 = vrot.lane.b32.xlu0 %v5074, 8
    %v5363 = vpop.permute.xlu0 %5362
    %5364 = vrot.lane.b32.xlu0 %v5075, 8
    %v5365 = vpop.permute.xlu0 %5364
    %5366 = vrot.lane.b32.xlu0 %v5076, 8
    %v5367 = vpop.permute.xlu0 %5366
    %5368 = vrot.lane.b32.xlu0 %v5077, 8
    %v5369 = vpop.permute.xlu0 %5368
    %5370 = vrot.lane.b32.xlu0 %v5078, 8
    %v5371 = vpop.permute.xlu0 %5370
    %5372 = vrot.lane.b32.xlu0 %v5079, 8
    %v5373 = vpop.permute.xlu0 %5372
    %5374 = vrot.lane.b32.xlu0 %v5080, 8
    %v5375 = vpop.permute.xlu0 %5374
    %5376 = vrot.lane.b32.xlu0 %v5081, 8
    %v5377 = vpop.permute.xlu0 %5376
    %5378 = vrot.lane.b32.xlu0 %v5082, 8
    %v5379 = vpop.permute.xlu0 %5378
    %5380 = vrot.lane.b32.xlu0 %v5083, 8
    %v5381 = vpop.permute.xlu0 %5380
    %5382 = vrot.lane.b32.xlu0 %v5084, 8
    %v5383 = vpop.permute.xlu0 %5382
    %5384 = vrot.lane.b32.xlu0 %v5085, 8
    %v5385 = vpop.permute.xlu0 %5384
    %5386 = vrot.lane.b32.xlu0 %v5086, 8
    %v5387 = vpop.permute.xlu0 %5386
    %5388 = vrot.lane.b32.xlu0 %v5087, 8
    %v5389 = vpop.permute.xlu0 %5388
    %5390 = vrot.lane.b32.xlu0 %v5088, 8
    %v5391 = vpop.permute.xlu0 %5390
    %5392 = vrot.lane.b32.xlu0 %v5089, 8
    %v5393 = vpop.permute.xlu0 %5392
    %5394 = vrot.lane.b32.xlu0 %v5090, 8
    %v5395 = vpop.permute.xlu0 %5394
    %5396 = vrot.lane.b32.xlu0 %v5091, 8
    %v5397 = vpop.permute.xlu0 %5396
    %5398 = vrot.lane.b32.xlu0 %v5092, 8
    %v5399 = vpop.permute.xlu0 %5398
    %5400 = vrot.lane.b32.xlu0 %v5093, 8
    %v5401 = vpop.permute.xlu0 %5400
    %5402 = vrot.lane.b32.xlu0 %v5094, 8
    %v5403 = vpop.permute.xlu0 %5402
    %5404 = vrot.lane.b32.xlu0 %v5095, 8
    %v5405 = vpop.permute.xlu0 %5404
    %5406 = vrot.lane.b32.xlu0 %v5096, 8
    %v5407 = vpop.permute.xlu0 %5406
    %5408 = vrot.lane.b32.xlu0 %v5097, 8
    %v5409 = vpop.permute.xlu0 %5408
    %5410 = vrot.lane.b32.xlu0 %v5098, 8
    %v5411 = vpop.permute.xlu0 %5410
    %5412 = vrot.lane.b32.xlu0 %v5099, 8
    %v5413 = vpop.permute.xlu0 %5412
    %5414 = vrot.lane.b32.xlu0 %v5100, 8
    %v5415 = vpop.permute.xlu0 %5414
    %5416 = vrot.lane.b32.xlu0 %v5101, 8
    %v5417 = vpop.permute.xlu0 %5416
    %5418 = vrot.lane.b32.xlu0 %v5102, 8
    %v5419 = vpop.permute.xlu0 %5418
    %5420 = vrot.lane.b32.xlu0 %v5103, 8
    %v5421 = vpop.permute.xlu0 %5420
    %5422 = vrot.lane.b32.xlu0 %v5104, 8
    %v5423 = vpop.permute.xlu0 %5422
    %5424 = vrot.lane.b32.xlu0 %v5105, 8
    %v5425 = vpop.permute.xlu0 %5424
    %5426 = vrot.lane.b32.xlu0 %v5106, 8
    %v5427 = vpop.permute.xlu0 %5426
    %5428 = vrot.lane.b32.xlu0 %v5107, 8
    %v5429 = vpop.permute.xlu0 %5428
    %5430 = vrot.lane.b32.xlu0 %v5108, 8
    %v5431 = vpop.permute.xlu0 %5430
    %5432 = vrot.lane.b32.xlu0 %v5109, 8
    %v5433 = vpop.permute.xlu0 %5432
    %5434 = vrot.lane.b32.xlu0 %v5110, 8
    %v5435 = vpop.permute.xlu0 %5434
    %5436 = vrot.lane.b32.xlu0 %v5111, 8
    %v5437 = vpop.permute.xlu0 %5436
    %5438 = vrot.lane.b32.xlu0 %v5112, 8
    %v5439 = vpop.permute.xlu0 %5438
    %5440 = vrot.lane.b32.xlu0 %v5113, 8
    %v5441 = vpop.permute.xlu0 %5440
    %5606 = vrot.lane.b32.xlu0 %v5114, 16
    %v5607 = vpop.permute.xlu0 %5606
    %5608 = vrot.lane.b32.xlu0 %v5115, 16
    %v5609 = vpop.permute.xlu0 %5608
    %5610 = vrot.lane.b32.xlu0 %v5116, 16
    %v5611 = vpop.permute.xlu0 %5610
    %5612 = vrot.lane.b32.xlu0 %v5117, 16
    %v5613 = vpop.permute.xlu0 %5612
    %5614 = vrot.lane.b32.xlu0 %v5118, 16
    %v5615 = vpop.permute.xlu0 %5614
    %5616 = vrot.lane.b32.xlu0 %v5119, 16
    %v5617 = vpop.permute.xlu0 %5616
    %5618 = vrot.lane.b32.xlu0 %v5120, 16
    %v5619 = vpop.permute.xlu0 %5618
    %5620 = vrot.lane.b32.xlu0 %v5121, 16
    %v5621 = vpop.permute.xlu0 %5620
    %5622 = vrot.lane.b32.xlu0 %v5122, 16
    %v5623 = vpop.permute.xlu0 %5622
    %5624 = vrot.lane.b32.xlu0 %v5123, 16
    %v5625 = vpop.permute.xlu0 %5624
    %5626 = vrot.lane.b32.xlu0 %v5124, 16
    %v5627 = vpop.permute.xlu0 %5626
    %5628 = vrot.lane.b32.xlu0 %v5125, 16
    %v5629 = vpop.permute.xlu0 %5628
    %5630 = vrot.lane.b32.xlu0 %v5126, 16
    %v5631 = vpop.permute.xlu0 %5630
    %5632 = vrot.lane.b32.xlu0 %v5127, 16
    %v5633 = vpop.permute.xlu0 %5632
    %5634 = vrot.lane.b32.xlu0 %v5128, 16
    %v5635 = vpop.permute.xlu0 %5634
    %5636 = vrot.lane.b32.xlu0 %v5129, 16
    %v5637 = vpop.permute.xlu0 %5636
    %5638 = vrot.lane.b32.xlu0 %v5130, 16
    %v5639 = vpop.permute.xlu0 %5638
    %5640 = vrot.lane.b32.xlu0 %v5131, 16
    %v5641 = vpop.permute.xlu0 %5640
    %5642 = vrot.lane.b32.xlu0 %v5132, 16
    %v5643 = vpop.permute.xlu0 %5642
    %5644 = vrot.lane.b32.xlu0 %v5133, 16
    %v5645 = vpop.permute.xlu0 %5644
    %5646 = vrot.lane.b32.xlu0 %v5134, 16
    %v5647 = vpop.permute.xlu0 %5646
    %5648 = vrot.lane.b32.xlu0 %v5135, 16
    %v5649 = vpop.permute.xlu0 %5648
    %5650 = vrot.lane.b32.xlu0 %v5136, 16
    %v5651 = vpop.permute.xlu0 %5650
    %5652 = vrot.lane.b32.xlu0 %v5137, 16
    %v5653 = vpop.permute.xlu0 %5652
    %5654 = vrot.lane.b32.xlu0 %v5138, 16
    %v5655 = vpop.permute.xlu0 %5654
    %5656 = vrot.lane.b32.xlu0 %v5139, 16
    %v5657 = vpop.permute.xlu0 %5656
    %5658 = vrot.lane.b32.xlu0 %v5140, 16
    %v5659 = vpop.permute.xlu0 %5658
    %5660 = vrot.lane.b32.xlu0 %v5141, 16
    %v5661 = vpop.permute.xlu0 %5660
    %5662 = vrot.lane.b32.xlu0 %v5142, 16
    %v5663 = vpop.permute.xlu0 %5662
    %5664 = vrot.lane.b32.xlu0 %v5143, 16
    %v5665 = vpop.permute.xlu0 %5664
    %5666 = vrot.lane.b32.xlu0 %v5144, 16
    %v5667 = vpop.permute.xlu0 %5666
    %5668 = vrot.lane.b32.xlu0 %v5145, 16
    %v5669 = vpop.permute.xlu0 %5668
    %5670 = vrot.lane.b32.xlu0 %v5146, 16
    %v5671 = vpop.permute.xlu0 %5670
    %5672 = vrot.lane.b32.xlu0 %v5147, 16
    %v5673 = vpop.permute.xlu0 %5672
    %5674 = vrot.lane.b32.xlu0 %v5148, 16
    %v5675 = vpop.permute.xlu0 %5674
    %5676 = vrot.lane.b32.xlu0 %v5149, 16
    %v5677 = vpop.permute.xlu0 %5676
    %5678 = vrot.lane.b32.xlu0 %v5150, 16
    %v5679 = vpop.permute.xlu0 %5678
    %5680 = vrot.lane.b32.xlu0 %v5151, 16
    %v5681 = vpop.permute.xlu0 %5680
    %5682 = vrot.lane.b32.xlu0 %v5152, 16
    %v5683 = vpop.permute.xlu0 %5682
    %5684 = vrot.lane.b32.xlu0 %v5153, 16
    %v5685 = vpop.permute.xlu0 %5684
    %5686 = vrot.lane.b32.xlu0 %v5154, 16
    %v5687 = vpop.permute.xlu0 %5686
    %5688 = vrot.lane.b32.xlu0 %v5155, 16
    %v5689 = vpop.permute.xlu0 %5688
    %5690 = vrot.lane.b32.xlu0 %v5156, 16
    %v5691 = vpop.permute.xlu0 %5690
    %5692 = vrot.lane.b32.xlu0 %v5157, 16
    %v5693 = vpop.permute.xlu0 %5692
    %5694 = vrot.lane.b32.xlu0 %v5158, 16
    %v5695 = vpop.permute.xlu0 %5694
    %5696 = vrot.lane.b32.xlu0 %v5159, 16
    %v5697 = vpop.permute.xlu0 %5696
    %5698 = vrot.lane.b32.xlu0 %v5160, 16
    %v5699 = vpop.permute.xlu0 %5698
    %5700 = vrot.lane.b32.xlu0 %v5161, 16
    %v5701 = vpop.permute.xlu0 %5700
    %5702 = vrot.lane.b32.xlu0 %v5162, 16
    %v5703 = vpop.permute.xlu0 %5702
    %5704 = vrot.lane.b32.xlu0 %v5163, 16
    %v5705 = vpop.permute.xlu0 %5704
    %5706 = vrot.lane.b32.xlu0 %v5164, 16
    %v5707 = vpop.permute.xlu0 %5706
    %5708 = vrot.lane.b32.xlu0 %v5165, 16
    %v5709 = vpop.permute.xlu0 %5708
    %5710 = vrot.lane.b32.xlu0 %v5166, 16
    %v5711 = vpop.permute.xlu0 %5710
    %5712 = vrot.lane.b32.xlu0 %v5167, 16
    %v5713 = vpop.permute.xlu0 %5712
    %5714 = vrot.lane.b32.xlu0 %v5168, 16
    %v5715 = vpop.permute.xlu0 %5714
    %5716 = vrot.lane.b32.xlu0 %v5169, 16
    %v5717 = vpop.permute.xlu0 %5716
    %5718 = vrot.lane.b32.xlu0 %v5170, 16
    %v5719 = vpop.permute.xlu0 %5718
    %5720 = vrot.lane.b32.xlu0 %v5171, 16
    %v5721 = vpop.permute.xlu0 %5720
    %5722 = vrot.lane.b32.xlu0 %v5172, 16
    %v5723 = vpop.permute.xlu0 %5722
    %5724 = vrot.lane.b32.xlu0 %v5173, 16
    %v5725 = vpop.permute.xlu0 %5724
    %5726 = vrot.lane.b32.xlu0 %v5174, 16
    %v5727 = vpop.permute.xlu0 %5726
    %5728 = vrot.lane.b32.xlu0 %v5175, 16
    %v5729 = vpop.permute.xlu0 %5728
    %5730 = vrot.lane.b32.xlu0 %v5176, 16
    %v5731 = vpop.permute.xlu0 %5730
    %5732 = vrot.lane.b32.xlu0 %v5177, 16
    %v5733 = vpop.permute.xlu0 %5732
    %5734 = vrot.lane.b32.xlu0 %v5178, 16
    %v5735 = vpop.permute.xlu0 %5734
    %5736 = vrot.lane.b32.xlu0 %v5179, 16
    %v5737 = vpop.permute.xlu0 %5736
    %5738 = vrot.lane.b32.xlu0 %v5180, 16
    %v5739 = vpop.permute.xlu0 %5738
    %5740 = vrot.lane.b32.xlu0 %v5181, 16
    %v5741 = vpop.permute.xlu0 %5740
    %5742 = vrot.lane.b32.xlu0 %v5182, 16
    %v5743 = vpop.permute.xlu0 %5742
    %5744 = vrot.lane.b32.xlu0 %v5183, 16
    %v5745 = vpop.permute.xlu0 %5744
    %5746 = vrot.lane.b32.xlu0 %v5184, 16
    %v5747 = vpop.permute.xlu0 %5746
    %5748 = vrot.lane.b32.xlu0 %v5185, 16
    %v5749 = vpop.permute.xlu0 %5748
    %5750 = vrot.lane.b32.xlu0 %v5186, 16
    %v5751 = vpop.permute.xlu0 %5750
    %5752 = vrot.lane.b32.xlu0 %v5187, 16
    %v5753 = vpop.permute.xlu0 %5752
    %5754 = vrot.lane.b32.xlu0 %v5188, 16
    %v5755 = vpop.permute.xlu0 %5754
    %5756 = vrot.lane.b32.xlu0 %v5189, 16
    %v5757 = vpop.permute.xlu0 %5756
    %5758 = vrot.lane.b32.xlu0 %v5190, 16
    %v5759 = vpop.permute.xlu0 %5758
    %5760 = vrot.lane.b32.xlu0 %v5191, 16
    %v5761 = vpop.permute.xlu0 %5760
    %5762 = vrot.lane.b32.xlu0 %v5192, 16
    %v5763 = vpop.permute.xlu0 %5762
    %5764 = vrot.lane.b32.xlu0 %v5193, 16
    %v5765 = vpop.permute.xlu0 %5764
    %5766 = vrot.lane.b32.xlu0 %v5194, 16
    %v5767 = vpop.permute.xlu0 %5766
    %5768 = vrot.lane.b32.xlu0 %v5195, 16
    %v5769 = vpop.permute.xlu0 %5768
    %v5852 = vsel %vm1940, %v4868, %v5279
    %v5853 = vsel %vm1940, %v4869, %v5281
    %v5854 = vsel %vm1940, %v4870, %v5283
    %v5855 = vsel %vm1940, %v4871, %v5285
    %v5856 = vsel %vm1940, %v4872, %v5287
    %v5857 = vsel %vm1940, %v4873, %v5289
    %v5858 = vsel %vm1940, %v4874, %v5291
    %v5859 = vsel %vm1940, %v4875, %v5293
    %v5860 = vsel %vm1940, %v4876, %v5295
    %v5861 = vsel %vm1940, %v4877, %v5297
    %v5862 = vsel %vm1940, %v4878, %v5299
    %v5863 = vsel %vm1940, %v4879, %v5301
    %v5864 = vsel %vm1940, %v4880, %v5303
    %v5865 = vsel %vm1940, %v4881, %v5305
    %v5866 = vsel %vm1940, %v4882, %v5307
    %v5867 = vsel %vm1940, %v4883, %v5309
    %v5868 = vsel %vm1940, %v4884, %v5311
    %v5869 = vsel %vm1940, %v4885, %v5313
    %v5870 = vsel %vm1940, %v4886, %v5315
    %v5871 = vsel %vm1940, %v4887, %v5317
    %v5872 = vsel %vm1940, %v4888, %v5319
    %v5873 = vsel %vm1940, %v4889, %v5321
    %v5874 = vsel %vm1940, %v4890, %v5323
    %v5875 = vsel %vm1940, %v4891, %v5325
    %v5876 = vsel %vm1940, %v4892, %v5327
    %v5877 = vsel %vm1940, %v4893, %v5329
    %v5878 = vsel %vm1940, %v4894, %v5331
    %v5879 = vsel %vm1940, %v4895, %v5333
    %v5880 = vsel %vm1940, %v4896, %v5335
    %v5881 = vsel %vm1940, %v4897, %v5337
    %v5882 = vsel %vm1940, %v4898, %v5339
    %v5883 = vsel %vm1940, %v4899, %v5341
    %v5884 = vsel %vm1940, %v4900, %v5343
    %v5885 = vsel %vm1940, %v4901, %v5345
    %v5886 = vsel %vm1940, %v4902, %v5347
    %v5887 = vsel %vm1940, %v4903, %v5349
    %v5888 = vsel %vm1940, %v4904, %v5351
    %v5889 = vsel %vm1940, %v4905, %v5353
    %v5890 = vsel %vm1940, %v4906, %v5355
    %v5891 = vsel %vm1940, %v4907, %v5357
    %v5892 = vsel %vm1940, %v4908, %v5359
    %v5893 = vsel %vm1940, %v4909, %v5361
    %v5894 = vsel %vm1940, %v4910, %v5363
    %v5895 = vsel %vm1940, %v4911, %v5365
    %v5896 = vsel %vm1940, %v4912, %v5367
    %v5897 = vsel %vm1940, %v4913, %v5369
    %v5898 = vsel %vm1940, %v4914, %v5371
    %v5899 = vsel %vm1940, %v4915, %v5373
    %v5900 = vsel %vm1940, %v4916, %v5375
    %v5901 = vsel %vm1940, %v4917, %v5377
    %v5902 = vsel %vm1940, %v4918, %v5379
    %v5903 = vsel %vm1940, %v4919, %v5381
    %v5904 = vsel %vm1940, %v4920, %v5383
    %v5905 = vsel %vm1940, %v4921, %v5385
    %v5906 = vsel %vm1940, %v4922, %v5387
    %v5907 = vsel %vm1940, %v4923, %v5389
    %v5908 = vsel %vm1940, %v4924, %v5391
    %v5909 = vsel %vm1940, %v4925, %v5393
    %v5910 = vsel %vm1940, %v4926, %v5395
    %v5911 = vsel %vm1940, %v4927, %v5397
    %v5912 = vsel %vm1940, %v4928, %v5399
    %v5913 = vsel %vm1940, %v4929, %v5401
    %v5914 = vsel %vm1940, %v4930, %v5403
    %v5915 = vsel %vm1940, %v4931, %v5405
    %v5916 = vsel %vm1940, %v4932, %v5407
    %v5917 = vsel %vm1940, %v4933, %v5409
    %v5918 = vsel %vm1940, %v4934, %v5411
    %v5919 = vsel %vm1940, %v4935, %v5413
    %v5920 = vsel %vm1940, %v4936, %v5415
    %v5921 = vsel %vm1940, %v4937, %v5417
    %v5922 = vsel %vm1940, %v4938, %v5419
    %v5923 = vsel %vm1940, %v4939, %v5421
    %v5924 = vsel %vm1940, %v4940, %v5423
    %v5925 = vsel %vm1940, %v4941, %v5425
    %v5926 = vsel %vm1940, %v4942, %v5427
    %v5927 = vsel %vm1940, %v4943, %v5429
    %v5928 = vsel %vm1940, %v4944, %v5431
    %v5929 = vsel %vm1940, %v4945, %v5433
    %v5930 = vsel %vm1940, %v4946, %v5435
    %v5931 = vsel %vm1940, %v4947, %v5437
    %v5932 = vsel %vm1940, %v4948, %v5439
    %v5933 = vsel %vm1940, %v4949, %v5441
    %vm5934 = vcmask 130048
    %v5935 = vsel %vm5934, %v5852, %v5607
    %v5936 = vsel %vm5934, %v5853, %v5609
    %v5937 = vsel %vm5934, %v5854, %v5611
    %v5938 = vsel %vm5934, %v5855, %v5613
    %v5939 = vsel %vm5934, %v5856, %v5615
    %v5940 = vsel %vm5934, %v5857, %v5617
    %v5941 = vsel %vm5934, %v5858, %v5619
    %v5942 = vsel %vm5934, %v5859, %v5621
    %v5943 = vsel %vm5934, %v5860, %v5623
    %v5944 = vsel %vm5934, %v5861, %v5625
    %v5945 = vsel %vm5934, %v5862, %v5627
    %v5946 = vsel %vm5934, %v5863, %v5629
    %v5947 = vsel %vm5934, %v5864, %v5631
    %v5948 = vsel %vm5934, %v5865, %v5633
    %v5949 = vsel %vm5934, %v5866, %v5635
    %v5950 = vsel %vm5934, %v5867, %v5637
    %v5951 = vsel %vm5934, %v5868, %v5639
    %v5952 = vsel %vm5934, %v5869, %v5641
    %v5953 = vsel %vm5934, %v5870, %v5643
    %v5954 = vsel %vm5934, %v5871, %v5645
    %v5955 = vsel %vm5934, %v5872, %v5647
    %v5956 = vsel %vm5934, %v5873, %v5649
    %v5957 = vsel %vm5934, %v5874, %v5651
    %v5958 = vsel %vm5934, %v5875, %v5653
    %v5959 = vsel %vm5934, %v5876, %v5655
    %v5960 = vsel %vm5934, %v5877, %v5657
    %v5961 = vsel %vm5934, %v5878, %v5659
    %v5962 = vsel %vm5934, %v5879, %v5661
    %v5963 = vsel %vm5934, %v5880, %v5663
    %v5964 = vsel %vm5934, %v5881, %v5665
    %v5965 = vsel %vm5934, %v5882, %v5667
    %v5966 = vsel %vm5934, %v5883, %v5669
    %v5967 = vsel %vm5934, %v5884, %v5671
    %v5968 = vsel %vm5934, %v5885, %v5673
    %v5969 = vsel %vm5934, %v5886, %v5675
    %v5970 = vsel %vm5934, %v5887, %v5677
    %v5971 = vsel %vm5934, %v5888, %v5679
    %v5972 = vsel %vm5934, %v5889, %v5681
    %v5973 = vsel %vm5934, %v5890, %v5683
    %v5974 = vsel %vm5934, %v5891, %v5685
    %v5975 = vsel %vm5934, %v5892, %v5687
    %v5976 = vsel %vm5934, %v5893, %v5689
    %v5977 = vsel %vm5934, %v5894, %v5691
    %v5978 = vsel %vm5934, %v5895, %v5693
    %v5979 = vsel %vm5934, %v5896, %v5695
    %v5980 = vsel %vm5934, %v5897, %v5697
    %v5981 = vsel %vm5934, %v5898, %v5699
    %v5982 = vsel %vm5934, %v5899, %v5701
    %v5983 = vsel %vm5934, %v5900, %v5703
    %v5984 = vsel %vm5934, %v5901, %v5705
    %v5985 = vsel %vm5934, %v5902, %v5707
    %v5986 = vsel %vm5934, %v5903, %v5709
    %v5987 = vsel %vm5934, %v5904, %v5711
    %v5988 = vsel %vm5934, %v5905, %v5713
    %v5989 = vsel %vm5934, %v5906, %v5715
    %v5990 = vsel %vm5934, %v5907, %v5717
    %v5991 = vsel %vm5934, %v5908, %v5719
    %v5992 = vsel %vm5934, %v5909, %v5721
    %v5993 = vsel %vm5934, %v5910, %v5723
    %v5994 = vsel %vm5934, %v5911, %v5725
    %v5995 = vsel %vm5934, %v5912, %v5727
    %v5996 = vsel %vm5934, %v5913, %v5729
    %v5997 = vsel %vm5934, %v5914, %v5731
    %v5998 = vsel %vm5934, %v5915, %v5733
    %v5999 = vsel %vm5934, %v5916, %v5735
    %v6000 = vsel %vm5934, %v5917, %v5737
    %v6001 = vsel %vm5934, %v5918, %v5739
    %v6002 = vsel %vm5934, %v5919, %v5741
    %v6003 = vsel %vm5934, %v5920, %v5743
    %v6004 = vsel %vm5934, %v5921, %v5745
    %v6005 = vsel %vm5934, %v5922, %v5747
    %v6006 = vsel %vm5934, %v5923, %v5749
    %v6007 = vsel %vm5934, %v5924, %v5751
    %v6008 = vsel %vm5934, %v5925, %v5753
    %v6009 = vsel %vm5934, %v5926, %v5755
    %v6010 = vsel %vm5934, %v5927, %v5757
    %v6011 = vsel %vm5934, %v5928, %v5759
    %v6012 = vsel %vm5934, %v5929, %v5761
    %v6013 = vsel %vm5934, %v5930, %v5763
    %v6014 = vsel %vm5934, %v5931, %v5765
    %v6015 = vsel %vm5934, %v5932, %v5767
    %v6016 = vsel %vm5934, %v5933, %v5769
    %vm6017 = vcmask 195584
    %6018 = vst.msk [vmem:[#allocation3 + $0x18] sm:$0xff] %vm6017, %v5935
    %6019 = vst.msk [vmem:[#allocation3 + $0x20] sm:$0xff] %vm6017, %v5936
    %6020 = vst.msk [vmem:[#allocation3 + $0x28] sm:$0xff] %vm6017, %v5937
    %6021 = vst.msk [vmem:[#allocation3 + $0x30] sm:$0xff] %vm6017, %v5938
    %6022 = vst.msk [vmem:[#allocation3 + $0x38] sm:$0xff] %vm6017, %v5939
    %6023 = vst.msk [vmem:[#allocation3 + $0x40] sm:$0xff] %vm6017, %v5940
    %6024 = vst.msk [vmem:[#allocation3 + $0x48] sm:$0xff] %vm6017, %v5941
    %6025 = vst.msk [vmem:[#allocation3 + $0x50] sm:$0xff] %vm6017, %v5942
    %6026 = vst.msk [vmem:[#allocation3 + $0x58] sm:$0xff] %vm6017, %v5943
    %6027 = vst.msk [vmem:[#allocation3 + $0x60] sm:$0xff] %vm6017, %v5944
    %6028 = vst.msk [vmem:[#allocation3 + $0x68] sm:$0xff] %vm6017, %v5945
    %6029 = vst.msk [vmem:[#allocation3 + $0x70] sm:$0xff] %vm6017, %v5946
    %6030 = vst.msk [vmem:[#allocation3 + $0x78] sm:$0xff] %vm6017, %v5947
    %6031 = vst.msk [vmem:[#allocation3 + $0x80] sm:$0xff] %vm6017, %v5948
    %6032 = vst.msk [vmem:[#allocation3 + $0x88] sm:$0xff] %vm6017, %v5949
    %6033 = vst.msk [vmem:[#allocation3 + $0x90] sm:$0xff] %vm6017, %v5950
    %6034 = vst.msk [vmem:[#allocation3 + $0x98] sm:$0xff] %vm6017, %v5951
    %6035 = vst.msk [vmem:[#allocation3 + $0xa0] sm:$0xff] %vm6017, %v5952
    %6036 = vst.msk [vmem:[#allocation3 + $0xa8] sm:$0xff] %vm6017, %v5953
    %6037 = vst.msk [vmem:[#allocation3 + $0xb0] sm:$0xff] %vm6017, %v5954
    %6038 = vst.msk [vmem:[#allocation3 + $0xb8] sm:$0xff] %vm6017, %v5955
    %6039 = vst.msk [vmem:[#allocation3 + $0xc0] sm:$0xff] %vm6017, %v5956
    %6040 = vst.msk [vmem:[#allocation3 + $0xc8] sm:$0xff] %vm6017, %v5957
    %6041 = vst.msk [vmem:[#allocation3 + $0xd0] sm:$0xff] %vm6017, %v5958
    %6042 = vst.msk [vmem:[#allocation3 + $0xd8] sm:$0xff] %vm6017, %v5959
    %6043 = vst.msk [vmem:[#allocation3 + $0xe0] sm:$0xff] %vm6017, %v5960
    %6044 = vst.msk [vmem:[#allocation3 + $0xe8] sm:$0xff] %vm6017, %v5961
    %6045 = vst.msk [vmem:[#allocation3 + $0xf0] sm:$0xff] %vm6017, %v5962
    %6046 = vst.msk [vmem:[#allocation3 + $0xf8] sm:$0xff] %vm6017, %v5963
    %6047 = vst.msk [vmem:[#allocation3 + $0x100] sm:$0xff] %vm6017, %v5964
    %6048 = vst.msk [vmem:[#allocation3 + $0x108] sm:$0xff] %vm6017, %v5965
    %6049 = vst.msk [vmem:[#allocation3 + $0x110] sm:$0xff] %vm6017, %v5966
    %6050 = vst.msk [vmem:[#allocation3 + $0x118] sm:$0xff] %vm6017, %v5967
    %6051 = vst.msk [vmem:[#allocation3 + $0x120] sm:$0xff] %vm6017, %v5968
    %6052 = vst.msk [vmem:[#allocation3 + $0x128] sm:$0xff] %vm6017, %v5969
    %6053 = vst.msk [vmem:[#allocation3 + $0x130] sm:$0xff] %vm6017, %v5970
    %6054 = vst.msk [vmem:[#allocation3 + $0x138] sm:$0xff] %vm6017, %v5971
    %6055 = vst.msk [vmem:[#allocation3 + $0x140] sm:$0xff] %vm6017, %v5972
    %6056 = vst.msk [vmem:[#allocation3 + $0x148] sm:$0xff] %vm6017, %v5973
    %6057 = vst.msk [vmem:[#allocation3 + $0x150] sm:$0xff] %vm6017, %v5974
    %6058 = vst.msk [vmem:[#allocation3 + $0x158] sm:$0xff] %vm6017, %v5975
    %6059 = vst.msk [vmem:[#allocation3 + $0x160] sm:$0xff] %vm6017, %v5976
    %6060 = vst.msk [vmem:[#allocation3 + $0x168] sm:$0xff] %vm6017, %v5977
    %6061 = vst.msk [vmem:[#allocation3 + $0x170] sm:$0xff] %vm6017, %v5978
    %6062 = vst.msk [vmem:[#allocation3 + $0x178] sm:$0xff] %vm6017, %v5979
    %6063 = vst.msk [vmem:[#allocation3 + $0x180] sm:$0xff] %vm6017, %v5980
    %6064 = vst.msk [vmem:[#allocation3 + $0x188] sm:$0xff] %vm6017, %v5981
    %6065 = vst.msk [vmem:[#allocation3 + $0x190] sm:$0xff] %vm6017, %v5982
    %6066 = vst.msk [vmem:[#allocation3 + $0x198] sm:$0xff] %vm6017, %v5983
    %6067 = vst.msk [vmem:[#allocation3 + $0x1a0] sm:$0xff] %vm6017, %v5984
    %6068 = vst.msk [vmem:[#allocation3 + $0x1a8] sm:$0xff] %vm6017, %v5985
    %6069 = vst.msk [vmem:[#allocation3 + $0x1b0] sm:$0xff] %vm6017, %v5986
    %6070 = vst.msk [vmem:[#allocation3 + $0x1b8] sm:$0xff] %vm6017, %v5987
    %6071 = vst.msk [vmem:[#allocation3 + $0x1c0] sm:$0xff] %vm6017, %v5988
    %6072 = vst.msk [vmem:[#allocation3 + $0x1c8] sm:$0xff] %vm6017, %v5989
    %6073 = vst.msk [vmem:[#allocation3 + $0x1d0] sm:$0xff] %vm6017, %v5990
    %6074 = vst.msk [vmem:[#allocation3 + $0x1d8] sm:$0xff] %vm6017, %v5991
    %6075 = vst.msk [vmem:[#allocation3 + $0x1e0] sm:$0xff] %vm6017, %v5992
    %6076 = vst.msk [vmem:[#allocation3 + $0x1e8] sm:$0xff] %vm6017, %v5993
    %6077 = vst.msk [vmem:[#allocation3 + $0x1f0] sm:$0xff] %vm6017, %v5994
    %6078 = vst.msk [vmem:[#allocation3 + $0x1f8] sm:$0xff] %vm6017, %v5995
    %6079 = vst.msk [vmem:[#allocation3 + $0x200] sm:$0xff] %vm6017, %v5996
    %6080 = vst.msk [vmem:[#allocation3 + $0x208] sm:$0xff] %vm6017, %v5997
    %6081 = vst.msk [vmem:[#allocation3 + $0x210] sm:$0xff] %vm6017, %v5998
    %6082 = vst.msk [vmem:[#allocation3 + $0x218] sm:$0xff] %vm6017, %v5999
    %6083 = vst.msk [vmem:[#allocation3 + $0x220] sm:$0xff] %vm6017, %v6000
    %6084 = vst.msk [vmem:[#allocation3 + $0x228] sm:$0xff] %vm6017, %v6001
    %6085 = vst.msk [vmem:[#allocation3 + $0x230] sm:$0xff] %vm6017, %v6002
    %6086 = vst.msk [vmem:[#allocation3 + $0x238] sm:$0xff] %vm6017, %v6003
    %6087 = vst.msk [vmem:[#allocation3 + $0x240] sm:$0xff] %vm6017, %v6004
    %6088 = vst.msk [vmem:[#allocation3 + $0x248] sm:$0xff] %vm6017, %v6005
    %6089 = vst.msk [vmem:[#allocation3 + $0x250] sm:$0xff] %vm6017, %v6006
    %6090 = vst.msk [vmem:[#allocation3 + $0x258] sm:$0xff] %vm6017, %v6007
    %6091 = vst.msk [vmem:[#allocation3 + $0x260] sm:$0xff] %vm6017, %v6008
    %6092 = vst.msk [vmem:[#allocation3 + $0x268] sm:$0xff] %vm6017, %v6009
    %6093 = vst.msk [vmem:[#allocation3 + $0x270] sm:$0xff] %vm6017, %v6010
    %6094 = vst.msk [vmem:[#allocation3 + $0x278] sm:$0xff] %vm6017, %v6011
    %6095 = vst.msk [vmem:[#allocation3 + $0x280] sm:$0xff] %vm6017, %v6012
    %6096 = vst.msk [vmem:[#allocation3 + $0x288] sm:$0xff] %vm6017, %v6013
    %6097 = vst.msk [vmem:[#allocation3 + $0x290] sm:$0xff] %vm6017, %v6014
    %6098 = vst.msk [vmem:[#allocation3 + $0x298] sm:$0xff] %vm6017, %v6015
    %6099 = vst.msk [vmem:[#allocation3 + $0x2a0] sm:$0xff] %vm6017, %v6016
    %v6100 = vld [vmem:[#allocation3 + $0x6] sm:$0xff]
    %v6101 = vld [vmem:[#allocation3 + $0xe] sm:$0xff]
    %v6102 = vld [vmem:[#allocation3 + $0x16] sm:$0xff]
    %v6103 = vld [vmem:[#allocation3 + $0x1e] sm:$0xff]
    %v6104 = vld [vmem:[#allocation3 + $0x26] sm:$0xff]
    %v6105 = vld [vmem:[#allocation3 + $0x2e] sm:$0xff]
    %v6106 = vld [vmem:[#allocation3 + $0x36] sm:$0xff]
    %v6107 = vld [vmem:[#allocation3 + $0x3e] sm:$0xff]
    %v6108 = vld [vmem:[#allocation3 + $0x46] sm:$0xff]
    %v6109 = vld [vmem:[#allocation3 + $0x4e] sm:$0xff]
    %v6110 = vld [vmem:[#allocation3 + $0x56] sm:$0xff]
    %v6111 = vld [vmem:[#allocation3 + $0x5e] sm:$0xff]
    %v6112 = vld [vmem:[#allocation3 + $0x66] sm:$0xff]
    %v6113 = vld [vmem:[#allocation3 + $0x6e] sm:$0xff]
    %v6114 = vld [vmem:[#allocation3 + $0x76] sm:$0xff]
    %v6115 = vld [vmem:[#allocation3 + $0x7e] sm:$0xff]
    %v6116 = vld [vmem:[#allocation3 + $0x86] sm:$0xff]
    %v6117 = vld [vmem:[#allocation3 + $0x8e] sm:$0xff]
    %v6118 = vld [vmem:[#allocation3 + $0x96] sm:$0xff]
    %v6119 = vld [vmem:[#allocation3 + $0x9e] sm:$0xff]
    %v6120 = vld [vmem:[#allocation3 + $0xa6] sm:$0xff]
    %v6121 = vld [vmem:[#allocation3 + $0xae] sm:$0xff]
    %v6122 = vld [vmem:[#allocation3 + $0xb6] sm:$0xff]
    %v6123 = vld [vmem:[#allocation3 + $0xbe] sm:$0xff]
    %v6124 = vld [vmem:[#allocation3 + $0xc6] sm:$0xff]
    %v6125 = vld [vmem:[#allocation3 + $0xce] sm:$0xff]
    %v6126 = vld [vmem:[#allocation3 + $0xd6] sm:$0xff]
    %v6127 = vld [vmem:[#allocation3 + $0xde] sm:$0xff]
    %v6128 = vld [vmem:[#allocation3 + $0xe6] sm:$0xff]
    %v6129 = vld [vmem:[#allocation3 + $0xee] sm:$0xff]
    %v6130 = vld [vmem:[#allocation3 + $0xf6] sm:$0xff]
    %v6131 = vld [vmem:[#allocation3 + $0xfe] sm:$0xff]
    %v6132 = vld [vmem:[#allocation3 + $0x106] sm:$0xff]
    %v6133 = vld [vmem:[#allocation3 + $0x10e] sm:$0xff]
    %v6134 = vld [vmem:[#allocation3 + $0x116] sm:$0xff]
    %v6135 = vld [vmem:[#allocation3 + $0x11e] sm:$0xff]
    %v6136 = vld [vmem:[#allocation3 + $0x126] sm:$0xff]
    %v6137 = vld [vmem:[#allocation3 + $0x12e] sm:$0xff]
    %v6138 = vld [vmem:[#allocation3 + $0x136] sm:$0xff]
    %v6139 = vld [vmem:[#allocation3 + $0x13e] sm:$0xff]
    %v6140 = vld [vmem:[#allocation3 + $0x146] sm:$0xff]
    %v6141 = vld [vmem:[#allocation3 + $0x14e] sm:$0xff]
    %v6142 = vld [vmem:[#allocation3 + $0x156] sm:$0xff]
    %v6143 = vld [vmem:[#allocation3 + $0x15e] sm:$0xff]
    %v6144 = vld [vmem:[#allocation3 + $0x166] sm:$0xff]
    %v6145 = vld [vmem:[#allocation3 + $0x16e] sm:$0xff]
    %v6146 = vld [vmem:[#allocation3 + $0x176] sm:$0xff]
    %v6147 = vld [vmem:[#allocation3 + $0x17e] sm:$0xff]
    %v6148 = vld [vmem:[#allocation3 + $0x186] sm:$0xff]
    %v6149 = vld [vmem:[#allocation3 + $0x18e] sm:$0xff]
    %v6150 = vld [vmem:[#allocation3 + $0x196] sm:$0xff]
    %v6151 = vld [vmem:[#allocation3 + $0x19e] sm:$0xff]
    %v6152 = vld [vmem:[#allocation3 + $0x1a6] sm:$0xff]
    %v6153 = vld [vmem:[#allocation3 + $0x1ae] sm:$0xff]
    %v6154 = vld [vmem:[#allocation3 + $0x1b6] sm:$0xff]
    %v6155 = vld [vmem:[#allocation3 + $0x1be] sm:$0xff]
    %v6156 = vld [vmem:[#allocation3 + $0x1c6] sm:$0xff]
    %v6157 = vld [vmem:[#allocation3 + $0x1ce] sm:$0xff]
    %v6158 = vld [vmem:[#allocation3 + $0x1d6] sm:$0xff]
    %v6159 = vld [vmem:[#allocation3 + $0x1de] sm:$0xff]
    %v6160 = vld [vmem:[#allocation3 + $0x1e6] sm:$0xff]
    %v6161 = vld [vmem:[#allocation3 + $0x1ee] sm:$0xff]
    %v6162 = vld [vmem:[#allocation3 + $0x1f6] sm:$0xff]
    %v6163 = vld [vmem:[#allocation3 + $0x1fe] sm:$0xff]
    %v6164 = vld [vmem:[#allocation3 + $0x206] sm:$0xff]
    %v6165 = vld [vmem:[#allocation3 + $0x20e] sm:$0xff]
    %v6166 = vld [vmem:[#allocation3 + $0x216] sm:$0xff]
    %v6167 = vld [vmem:[#allocation3 + $0x21e] sm:$0xff]
    %v6168 = vld [vmem:[#allocation3 + $0x226] sm:$0xff]
    %v6169 = vld [vmem:[#allocation3 + $0x22e] sm:$0xff]
    %v6170 = vld [vmem:[#allocation3 + $0x236] sm:$0xff]
    %v6171 = vld [vmem:[#allocation3 + $0x23e] sm:$0xff]
    %v6172 = vld [vmem:[#allocation3 + $0x246] sm:$0xff]
    %v6173 = vld [vmem:[#allocation3 + $0x24e] sm:$0xff]
    %v6174 = vld [vmem:[#allocation3 + $0x256] sm:$0xff]
    %v6175 = vld [vmem:[#allocation3 + $0x25e] sm:$0xff]
    %v6176 = vld [vmem:[#allocation3 + $0x266] sm:$0xff]
    %v6177 = vld [vmem:[#allocation3 + $0x26e] sm:$0xff]
    %v6178 = vld [vmem:[#allocation3 + $0x276] sm:$0xff]
    %v6179 = vld [vmem:[#allocation3 + $0x27e] sm:$0xff]
    %v6180 = vld [vmem:[#allocation3 + $0x286] sm:$0xff]
    %v6181 = vld [vmem:[#allocation3 + $0x28e] sm:$0xff]
    %v6182 = vld [vmem:[%s3] sm:$0xff]
    %v6183 = vld [vmem:[%s3 + $0x8] sm:$0xff]
    %v6184 = vld [vmem:[%s3 + $0x10] sm:$0xff]
    %v6185 = vld [vmem:[#allocation3 + $0x18] sm:$0xff]
    %v6186 = vld [vmem:[#allocation3 + $0x20] sm:$0xff]
    %v6187 = vld [vmem:[#allocation3 + $0x28] sm:$0xff]
    %v6188 = vld [vmem:[#allocation3 + $0x30] sm:$0xff]
    %v6189 = vld [vmem:[#allocation3 + $0x38] sm:$0xff]
    %v6190 = vld [vmem:[#allocation3 + $0x40] sm:$0xff]
    %v6191 = vld [vmem:[#allocation3 + $0x48] sm:$0xff]
    %v6192 = vld [vmem:[#allocation3 + $0x50] sm:$0xff]
    %v6193 = vld [vmem:[#allocation3 + $0x58] sm:$0xff]
    %v6194 = vld [vmem:[#allocation3 + $0x60] sm:$0xff]
    %v6195 = vld [vmem:[#allocation3 + $0x68] sm:$0xff]
    %v6196 = vld [vmem:[#allocation3 + $0x70] sm:$0xff]
    %v6197 = vld [vmem:[#allocation3 + $0x78] sm:$0xff]
    %v6198 = vld [vmem:[#allocation3 + $0x80] sm:$0xff]
    %v6199 = vld [vmem:[#allocation3 + $0x88] sm:$0xff]
    %v6200 = vld [vmem:[#allocation3 + $0x90] sm:$0xff]
    %v6201 = vld [vmem:[#allocation3 + $0x98] sm:$0xff]
    %v6202 = vld [vmem:[#allocation3 + $0xa0] sm:$0xff]
    %v6203 = vld [vmem:[#allocation3 + $0xa8] sm:$0xff]
    %v6204 = vld [vmem:[#allocation3 + $0xb0] sm:$0xff]
    %v6205 = vld [vmem:[#allocation3 + $0xb8] sm:$0xff]
    %v6206 = vld [vmem:[#allocation3 + $0xc0] sm:$0xff]
    %v6207 = vld [vmem:[#allocation3 + $0xc8] sm:$0xff]
    %v6208 = vld [vmem:[#allocation3 + $0xd0] sm:$0xff]
    %v6209 = vld [vmem:[#allocation3 + $0xd8] sm:$0xff]
    %v6210 = vld [vmem:[#allocation3 + $0xe0] sm:$0xff]
    %v6211 = vld [vmem:[#allocation3 + $0xe8] sm:$0xff]
    %v6212 = vld [vmem:[#allocation3 + $0xf0] sm:$0xff]
    %v6213 = vld [vmem:[#allocation3 + $0xf8] sm:$0xff]
    %v6214 = vld [vmem:[#allocation3 + $0x100] sm:$0xff]
    %v6215 = vld [vmem:[#allocation3 + $0x108] sm:$0xff]
    %v6216 = vld [vmem:[#allocation3 + $0x110] sm:$0xff]
    %v6217 = vld [vmem:[#allocation3 + $0x118] sm:$0xff]
    %v6218 = vld [vmem:[#allocation3 + $0x120] sm:$0xff]
    %v6219 = vld [vmem:[#allocation3 + $0x128] sm:$0xff]
    %v6220 = vld [vmem:[#allocation3 + $0x130] sm:$0xff]
    %v6221 = vld [vmem:[#allocation3 + $0x138] sm:$0xff]
    %v6222 = vld [vmem:[#allocation3 + $0x140] sm:$0xff]
    %v6223 = vld [vmem:[#allocation3 + $0x148] sm:$0xff]
    %v6224 = vld [vmem:[#allocation3 + $0x150] sm:$0xff]
    %v6225 = vld [vmem:[#allocation3 + $0x158] sm:$0xff]
    %v6226 = vld [vmem:[#allocation3 + $0x160] sm:$0xff]
    %v6227 = vld [vmem:[#allocation3 + $0x168] sm:$0xff]
    %v6228 = vld [vmem:[#allocation3 + $0x170] sm:$0xff]
    %v6229 = vld [vmem:[#allocation3 + $0x178] sm:$0xff]
    %v6230 = vld [vmem:[#allocation3 + $0x180] sm:$0xff]
    %v6231 = vld [vmem:[#allocation3 + $0x188] sm:$0xff]
    %v6232 = vld [vmem:[#allocation3 + $0x190] sm:$0xff]
    %v6233 = vld [vmem:[#allocation3 + $0x198] sm:$0xff]
    %v6234 = vld [vmem:[#allocation3 + $0x1a0] sm:$0xff]
    %v6235 = vld [vmem:[#allocation3 + $0x1a8] sm:$0xff]
    %v6236 = vld [vmem:[#allocation3 + $0x1b0] sm:$0xff]
    %v6237 = vld [vmem:[#allocation3 + $0x1b8] sm:$0xff]
    %v6238 = vld [vmem:[#allocation3 + $0x1c0] sm:$0xff]
    %v6239 = vld [vmem:[#allocation3 + $0x1c8] sm:$0xff]
    %v6240 = vld [vmem:[#allocation3 + $0x1d0] sm:$0xff]
    %v6241 = vld [vmem:[#allocation3 + $0x1d8] sm:$0xff]
    %v6242 = vld [vmem:[#allocation3 + $0x1e0] sm:$0xff]
    %v6243 = vld [vmem:[#allocation3 + $0x1e8] sm:$0xff]
    %v6244 = vld [vmem:[#allocation3 + $0x1f0] sm:$0xff]
    %v6245 = vld [vmem:[#allocation3 + $0x1f8] sm:$0xff]
    %v6246 = vld [vmem:[#allocation3 + $0x200] sm:$0xff]
    %v6247 = vld [vmem:[#allocation3 + $0x208] sm:$0xff]
    %v6248 = vld [vmem:[#allocation3 + $0x210] sm:$0xff]
    %v6249 = vld [vmem:[#allocation3 + $0x218] sm:$0xff]
    %v6250 = vld [vmem:[#allocation3 + $0x220] sm:$0xff]
    %v6251 = vld [vmem:[#allocation3 + $0x228] sm:$0xff]
    %v6252 = vld [vmem:[#allocation3 + $0x230] sm:$0xff]
    %v6253 = vld [vmem:[#allocation3 + $0x238] sm:$0xff]
    %v6254 = vld [vmem:[#allocation3 + $0x240] sm:$0xff]
    %v6255 = vld [vmem:[#allocation3 + $0x248] sm:$0xff]
    %v6256 = vld [vmem:[#allocation3 + $0x250] sm:$0xff]
    %v6257 = vld [vmem:[#allocation3 + $0x258] sm:$0xff]
    %v6258 = vld [vmem:[#allocation3 + $0x260] sm:$0xff]
    %v6259 = vld [vmem:[#allocation3 + $0x268] sm:$0xff]
    %v6260 = vld [vmem:[#allocation3 + $0x270] sm:$0xff]
    %v6261 = vld [vmem:[#allocation3 + $0x278] sm:$0xff]
    %v6262 = vld [vmem:[#allocation3 + $0x280] sm:$0xff]
    %v6263 = vld [vmem:[#allocation3 + $0x288] sm:$0xff]
    %v6264 = vld [vmem:[#allocation3 + $0x290] sm:$0xff]
    %v6265 = vld [vmem:[#allocation3 + $0x298] sm:$0xff]
    %v6266 = vld [vmem:[#allocation3 + $0x2a0] sm:$0xff]
    %s6267 = scalar_lea.vmem %s3, 24
    %v6268 = vld [vmem:[%s6267] sm:$0xff]
    %v6269 = vld [vmem:[%s6267 + $0x8] sm:$0xff]
    %v6270 = vld [vmem:[%s6267 + $0x10] sm:$0xff]
    %v6272 = vsel %vm6017, %v6185, 0
    %v6275 = vsel %vm6017, %v6186, 0
    %v6278 = vsel %vm6017, %v6187, 0
    %v6281 = vsel %vm6017, %v6188, 0
    %v6284 = vsel %vm6017, %v6189, 0
    %v6287 = vsel %vm6017, %v6190, 0
    %v6290 = vsel %vm6017, %v6191, 0
    %v6293 = vsel %vm6017, %v6192, 0
    %v6296 = vsel %vm6017, %v6193, 0
    %v6299 = vsel %vm6017, %v6194, 0
    %v6302 = vsel %vm6017, %v6195, 0
    %v6305 = vsel %vm6017, %v6196, 0
    %v6308 = vsel %vm6017, %v6197, 0
    %v6311 = vsel %vm6017, %v6198, 0
    %v6314 = vsel %vm6017, %v6199, 0
    %v6317 = vsel %vm6017, %v6200, 0
    %v6320 = vsel %vm6017, %v6201, 0
    %v6323 = vsel %vm6017, %v6202, 0
    %v6326 = vsel %vm6017, %v6203, 0
    %v6329 = vsel %vm6017, %v6204, 0
    %v6332 = vsel %vm6017, %v6205, 0
    %v6335 = vsel %vm6017, %v6206, 0
    %v6338 = vsel %vm6017, %v6207, 0
    %v6341 = vsel %vm6017, %v6208, 0
    %v6344 = vsel %vm6017, %v6209, 0
    %v6347 = vsel %vm6017, %v6210, 0
    %v6350 = vsel %vm6017, %v6211, 0
    %v6353 = vsel %vm6017, %v6212, 0
    %v6356 = vsel %vm6017, %v6213, 0
    %v6359 = vsel %vm6017, %v6214, 0
    %v6362 = vsel %vm6017, %v6215, 0
    %v6365 = vsel %vm6017, %v6216, 0
    %v6368 = vsel %vm6017, %v6217, 0
    %v6371 = vsel %vm6017, %v6218, 0
    %v6374 = vsel %vm6017, %v6219, 0
    %v6377 = vsel %vm6017, %v6220, 0
    %v6380 = vsel %vm6017, %v6221, 0
    %v6383 = vsel %vm6017, %v6222, 0
    %v6386 = vsel %vm6017, %v6223, 0
    %v6389 = vsel %vm6017, %v6224, 0
    %v6392 = vsel %vm6017, %v6225, 0
    %v6395 = vsel %vm6017, %v6226, 0
    %v6398 = vsel %vm6017, %v6227, 0
    %v6401 = vsel %vm6017, %v6228, 0
    %v6404 = vsel %vm6017, %v6229, 0
    %v6407 = vsel %vm6017, %v6230, 0
    %v6410 = vsel %vm6017, %v6231, 0
    %v6413 = vsel %vm6017, %v6232, 0
    %v6416 = vsel %vm6017, %v6233, 0
    %v6419 = vsel %vm6017, %v6234, 0
    %v6422 = vsel %vm6017, %v6235, 0
    %v6425 = vsel %vm6017, %v6236, 0
    %v6428 = vsel %vm6017, %v6237, 0
    %v6431 = vsel %vm6017, %v6238, 0
    %v6434 = vsel %vm6017, %v6239, 0
    %v6437 = vsel %vm6017, %v6240, 0
    %v6440 = vsel %vm6017, %v6241, 0
    %v6443 = vsel %vm6017, %v6242, 0
    %v6446 = vsel %vm6017, %v6243, 0
    %v6449 = vsel %vm6017, %v6244, 0
    %v6452 = vsel %vm6017, %v6245, 0
    %v6455 = vsel %vm6017, %v6246, 0
    %v6458 = vsel %vm6017, %v6247, 0
    %v6461 = vsel %vm6017, %v6248, 0
    %v6464 = vsel %vm6017, %v6249, 0
    %v6467 = vsel %vm6017, %v6250, 0
    %v6470 = vsel %vm6017, %v6251, 0
    %v6473 = vsel %vm6017, %v6252, 0
    %v6476 = vsel %vm6017, %v6253, 0
    %v6479 = vsel %vm6017, %v6254, 0
    %v6482 = vsel %vm6017, %v6255, 0
    %v6485 = vsel %vm6017, %v6256, 0
    %v6488 = vsel %vm6017, %v6257, 0
    %v6491 = vsel %vm6017, %v6258, 0
    %v6494 = vsel %vm6017, %v6259, 0
    %v6497 = vsel %vm6017, %v6260, 0
    %v6500 = vsel %vm6017, %v6261, 0
    %v6503 = vsel %vm6017, %v6262, 0
    %v6506 = vsel %vm6017, %v6263, 0
    %v6509 = vsel %vm6017, %v6264, 0
    %v6512 = vsel %vm6017, %v6265, 0
    %v6515 = vsel %vm6017, %v6266, 0
    %6517 = vmatprep.subr.mxu0 0.0
    %6518 = vmatpush1.msra.mxu0 %v6268
    %6519 = vmatprep.subr.mxu0 0.0
    %6520 = vmatpush1.msra.mxu0 %v6269
    %6521 = vmatprep.subr.mxu0 0.0
    %6522 = vmatpush1.msra.mxu0 %v6270
    %6523 = vmatprep.subr.mxu0 0.0
    %6524 = vmatpush1.msra.mxu0 0.0
    %6525 = vmatprep.subr.mxu0 0.0
    %6526 = vmatpush1.msra.mxu0 0.0
    %6527 = vmatprep.subr.mxu0 0.0
    %6528 = vmatpush1.msra.mxu0 0.0
    %6529 = vmatprep.subr.mxu0 0.0
    %6530 = vmatpush1.msra.mxu0 0.0
    %6531 = vmatprep.subr.mxu0 0.0
    %6532 = vmatpush1.msra.mxu0 0.0
    %6533 = vmatprep.subr.mxu0 0.0
    %6534 = vmatpush1.msra.mxu0 0.0
    %6535 = vmatprep.subr.mxu0 0.0
    %6536 = vmatpush1.msra.mxu0 0.0
    %6537 = vmatprep.subr.mxu0 0.0
    %6538 = vmatpush1.msra.mxu0 0.0
    %6539 = vmatprep.subr.mxu0 0.0
    %6540 = vmatpush1.msra.mxu0 0.0
    %6541 = vmatprep.subr.mxu0 0.0
    %6542 = vmatpush1.msra.mxu0 0.0
    %6543 = vmatprep.subr.mxu0 0.0
    %6544 = vmatpush1.msra.mxu0 0.0
    %6545 = vmatprep.subr.mxu0 0.0
    %6546 = vmatpush1.msra.mxu0 0.0
    %6547 = vmatprep.subr.mxu0 0.0
    %6548 = vmatpush1.msra.mxu0 0.0
    %6549 = vmatprep.subr.mxu0 0.0
    %6550 = vmatpush1.msra.mxu0 0.0
    %6551 = vmatprep.subr.mxu0 0.0
    %6552 = vmatpush1.msra.mxu0 0.0
    %6553 = vmatprep.subr.mxu0 0.0
    %6554 = vmatpush1.msra.mxu0 0.0
    %6555 = vmatprep.subr.mxu0 0.0
    %6556 = vmatpush1.msra.mxu0 0.0
    %6557 = vmatprep.subr.mxu0 0.0
    %6558 = vmatpush1.msra.mxu0 0.0
    %6559 = vmatprep.subr.mxu0 0.0
    %6560 = vmatpush1.msra.mxu0 0.0
    %6561 = vmatprep.subr.mxu0 0.0
    %6562 = vmatpush1.msra.mxu0 0.0
    %6563 = vmatprep.subr.mxu0 0.0
    %6564 = vmatpush1.msra.mxu0 0.0
    %6565 = vmatprep.subr.mxu0 0.0
    %6566 = vmatpush1.msra.mxu0 0.0
    %6567 = vmatprep.subr.mxu0 0.0
    %6568 = vmatpush1.msra.mxu0 0.0
    %6569 = vmatprep.subr.mxu0 0.0
    %6570 = vmatpush1.msra.mxu0 0.0
    %6571 = vmatprep.subr.mxu0 0.0
    %6572 = vmatpush1.msra.mxu0 0.0
    %6573 = vmatprep.subr.mxu0 0.0
    %6574 = vmatpush1.msra.mxu0 0.0
    %6575 = vmatprep.subr.mxu0 0.0
    %6576 = vmatpush1.msra.mxu0 0.0
    %6577 = vmatprep.subr.mxu0 0.0
    %6578 = vmatpush1.msra.mxu0 0.0
    %6579 = vmatprep.subr.mxu0 0.0
    %6580 = vmatpush1.msra.mxu0 0.0
    %6581 = vmatprep.mubr.f32.mxu0 0.0
    %6582 = vmatmul.mubr.f32.gmra.mrb[0].mxu0 %v6272
    %v6583 = vpop.f32.mrb[0].mxu0
    %v6584 = vadd.f32 0.0, %v6583
    %v6585 = vpop.f32.mrb[0].mxu0
    %6586 = vmatprep.mubr.f32.mxu0 0.0
    %6587 = vmatmul.mubr.f32.gmra.mrb[0].mxu0 %v6275
    %v6588 = vpop.f32.mrb[0].mxu0
    %v6589 = vadd.f32 0.0, %v6588
    %v6590 = vpop.f32.mrb[0].mxu0
    %6591 = vmatprep.mubr.f32.mxu0 0.0
    %6592 = vmatmul.mubr.f32.gmra.mrb[0].mxu0 %v6278
    %v6593 = vpop.f32.mrb[0].mxu0
    %v6594 = vadd.f32 0.0, %v6593
    %v6595 = vpop.f32.mrb[0].mxu0
    %6596 = vmatprep.mubr.f32.mxu0 0.0
    %6597 = vmatmul.mubr.f32.gmra.mrb[0].mxu0 %v6281
    %v6598 = vpop.f32.mrb[0].mxu0
    %v6599 = vadd.f32 0.0, %v6598
    %v6600 = vpop.f32.mrb[0].mxu0
    %6601 = vmatprep.mubr.f32.mxu0 0.0
    %6602 = vmatmul.mubr.f32.gmra.mrb[0].mxu0 %v6284
    %v6603 = vpop.f32.mrb[0].mxu0
    %v6604 = vadd.f32 0.0, %v6603
    %v6605 = vpop.f32.mrb[0].mxu0
    %6606 = vmatprep.mubr.f32.mxu0 0.0
    %6607 = vmatmul.mubr.f32.gmra.mrb[0].mxu0 %v6287
    %v6608 = vpop.f32.mrb[0].mxu0
    %v6609 = vadd.f32 0.0, %v6608
    %v6610 = vpop.f32.mrb[0].mxu0
    %6611 = vmatprep.mubr.f32.mxu0 0.0
    %6612 = vmatmul.mubr.f32.gmra.mrb[0].mxu0 %v6290
    %v6613 = vpop.f32.mrb[0].mxu0
    %v6614 = vadd.f32 0.0, %v6613
    %v6615 = vpop.f32.mrb[0].mxu0
    %6616 = vmatprep.mubr.f32.mxu0 0.0
    %6617 = vmatmul.mubr.f32.gmra.mrb[0].mxu0 %v6293
    %v6618 = vpop.f32.mrb[0].mxu0
    %v6619 = vadd.f32 0.0, %v6618
    %v6620 = vpop.f32.mrb[0].mxu0
    %6621 = vmatprep.mubr.f32.mxu0 0.0
    %6622 = vmatmul.mubr.f32.gmra.mrb[0].mxu0 %v6296
    %v6623 = vpop.f32.mrb[0].mxu0
    %v6624 = vadd.f32 0.0, %v6623
    %v6625 = vpop.f32.mrb[0].mxu0
    %6626 = vmatprep.mubr.f32.mxu0 0.0
    %6627 = vmatmul.mubr.f32.gmra.mrb[0].mxu0 %v6299
    %v6628 = vpop.f32.mrb[0].mxu0
    %v6629 = vadd.f32 0.0, %v6628
    %v6630 = vpop.f32.mrb[0].mxu0
    %6631 = vmatprep.mubr.f32.mxu0 0.0
    %6632 = vmatmul.mubr.f32.gmra.mrb[0].mxu0 %v6302
    %v6633 = vpop.f32.mrb[0].mxu0
    %v6634 = vadd.f32 0.0, %v6633
    %v6635 = vpop.f32.mrb[0].mxu0
    %6636 = vmatprep.mubr.f32.mxu0 0.0
    %6637 = vmatmul.mubr.f32.gmra.mrb[0].mxu0 %v6305
    %v6638 = vpop.f32.mrb[0].mxu0
    %v6639 = vadd.f32 0.0, %v6638
    %v6640 = vpop.f32.mrb[0].mxu0
    %6641 = vmatprep.mubr.f32.mxu0 0.0
    %6642 = vmatmul.mubr.f32.gmra.mrb[0].mxu0 %v6308
    %v6643 = vpop.f32.mrb[0].mxu0
    %v6644 = vadd.f32 0.0, %v6643
    %v6645 = vpop.f32.mrb[0].mxu0
    %6646 = vmatprep.mubr.f32.mxu0 0.0
    %6647 = vmatmul.mubr.f32.gmra.mrb[0].mxu0 %v6311
    %v6648 = vpop.f32.mrb[0].mxu0
    %v6649 = vadd.f32 0.0, %v6648
    %v6650 = vpop.f32.mrb[0].mxu0
    %6651 = vmatprep.mubr.f32.mxu0 0.0
    %6652 = vmatmul.mubr.f32.gmra.mrb[0].mxu0 %v6314
    %v6653 = vpop.f32.mrb[0].mxu0
    %v6654 = vadd.f32 0.0, %v6653
    %v6655 = vpop.f32.mrb[0].mxu0
    %6656 = vmatprep.mubr.f32.mxu0 0.0
    %6657 = vmatmul.mubr.f32.gmra.mrb[0].mxu0 %v6317
    %v6658 = vpop.f32.mrb[0].mxu0
    %v6659 = vadd.f32 0.0, %v6658
    %v6660 = vpop.f32.mrb[0].mxu0
    %6661 = vmatprep.mubr.f32.mxu0 0.0
    %6662 = vmatmul.mubr.f32.gmra.mrb[0].mxu0 %v6320
    %v6663 = vpop.f32.mrb[0].mxu0
    %v6664 = vadd.f32 0.0, %v6663
    %v6665 = vpop.f32.mrb[0].mxu0
    %6666 = vmatprep.mubr.f32.mxu0 0.0
    %6667 = vmatmul.mubr.f32.gmra.mrb[0].mxu0 %v6323
    %v6668 = vpop.f32.mrb[0].mxu0
    %v6669 = vadd.f32 0.0, %v6668
    %v6670 = vpop.f32.mrb[0].mxu0
    %6671 = vmatprep.mubr.f32.mxu0 0.0
    %6672 = vmatmul.mubr.f32.gmra.mrb[0].mxu0 %v6326
    %v6673 = vpop.f32.mrb[0].mxu0
    %v6674 = vadd.f32 0.0, %v6673
    %v6675 = vpop.f32.mrb[0].mxu0
    %6676 = vmatprep.mubr.f32.mxu0 0.0
    %6677 = vmatmul.mubr.f32.gmra.mrb[0].mxu0 %v6329
    %v6678 = vpop.f32.mrb[0].mxu0
    %v6679 = vadd.f32 0.0, %v6678
    %v6680 = vpop.f32.mrb[0].mxu0
    %6681 = vmatprep.mubr.f32.mxu0 0.0
    %6682 = vmatmul.mubr.f32.gmra.mrb[0].mxu0 %v6332
    %v6683 = vpop.f32.mrb[0].mxu0
    %v6684 = vadd.f32 0.0, %v6683
    %v6685 = vpop.f32.mrb[0].mxu0
    %6686 = vmatprep.mubr.f32.mxu0 0.0
    %6687 = vmatmul.mubr.f32.gmra.mrb[0].mxu0 %v6335
    %v6688 = vpop.f32.mrb[0].mxu0
    %v6689 = vadd.f32 0.0, %v6688
    %v6690 = vpop.f32.mrb[0].mxu0
    %6691 = vmatprep.mubr.f32.mxu0 0.0
    %6692 = vmatmul.mubr.f32.gmra.mrb[0].mxu0 %v6338
    %v6693 = vpop.f32.mrb[0].mxu0
    %v6694 = vadd.f32 0.0, %v6693
    %v6695 = vpop.f32.mrb[0].mxu0
    %6696 = vmatprep.mubr.f32.mxu0 0.0
    %6697 = vmatmul.mubr.f32.gmra.mrb[0].mxu0 %v6341
    %v6698 = vpop.f32.mrb[0].mxu0
    %v6699 = vadd.f32 0.0, %v6698
    %v6700 = vpop.f32.mrb[0].mxu0
    %6701 = vmatprep.mubr.f32.mxu0 0.0
    %6702 = vmatmul.mubr.f32.gmra.mrb[0].mxu0 %v6344
    %v6703 = vpop.f32.mrb[0].mxu0
    %v6704 = vadd.f32 0.0, %v6703
    %v6705 = vpop.f32.mrb[0].mxu0
    %6706 = vmatprep.mubr.f32.mxu0 0.0
    %6707 = vmatmul.mubr.f32.gmra.mrb[0].mxu0 %v6347
    %v6708 = vpop.f32.mrb[0].mxu0
    %v6709 = vadd.f32 0.0, %v6708
    %v6710 = vpop.f32.mrb[0].mxu0
    %6711 = vmatprep.mubr.f32.mxu0 0.0
    %6712 = vmatmul.mubr.f32.gmra.mrb[0].mxu0 %v6350
    %v6713 = vpop.f32.mrb[0].mxu0
    %v6714 = vadd.f32 0.0, %v6713
    %v6715 = vpop.f32.mrb[0].mxu0
    %6716 = vmatprep.mubr.f32.mxu0 0.0
    %6717 = vmatmul.mubr.f32.gmra.mrb[0].mxu0 %v6353
    %v6718 = vpop.f32.mrb[0].mxu0
    %v6719 = vadd.f32 0.0, %v6718
    %v6720 = vpop.f32.mrb[0].mxu0
    %6721 = vmatprep.mubr.f32.mxu0 0.0
    %6722 = vmatmul.mubr.f32.gmra.mrb[0].mxu0 %v6356
    %v6723 = vpop.f32.mrb[0].mxu0
    %v6724 = vadd.f32 0.0, %v6723
    %v6725 = vpop.f32.mrb[0].mxu0
    %6726 = vmatprep.mubr.f32.mxu0 0.0
    %6727 = vmatmul.mubr.f32.gmra.mrb[0].mxu0 %v6359
    %v6728 = vpop.f32.mrb[0].mxu0
    %v6729 = vadd.f32 0.0, %v6728
    %v6730 = vpop.f32.mrb[0].mxu0
    %6731 = vmatprep.mubr.f32.mxu0 0.0
    %6732 = vmatmul.mubr.f32.gmra.mrb[0].mxu0 %v6362
    %v6733 = vpop.f32.mrb[0].mxu0
    %v6734 = vadd.f32 0.0, %v6733
    %v6735 = vpop.f32.mrb[0].mxu0
    %6736 = vmatprep.mubr.f32.mxu0 0.0
    %6737 = vmatmul.mubr.f32.gmra.mrb[0].mxu0 %v6365
    %v6738 = vpop.f32.mrb[0].mxu0
    %v6739 = vadd.f32 0.0, %v6738
    %v6740 = vpop.f32.mrb[0].mxu0
    %6741 = vmatprep.mubr.f32.mxu0 0.0
    %6742 = vmatmul.mubr.f32.gmra.mrb[0].mxu0 %v6368
    %v6743 = vpop.f32.mrb[0].mxu0
    %v6744 = vadd.f32 0.0, %v6743
    %v6745 = vpop.f32.mrb[0].mxu0
    %6746 = vmatprep.mubr.f32.mxu0 0.0
    %6747 = vmatmul.mubr.f32.gmra.mrb[0].mxu0 %v6371
    %v6748 = vpop.f32.mrb[0].mxu0
    %v6749 = vadd.f32 0.0, %v6748
    %v6750 = vpop.f32.mrb[0].mxu0
    %6751 = vmatprep.mubr.f32.mxu0 0.0
    %6752 = vmatmul.mubr.f32.gmra.mrb[0].mxu0 %v6374
    %v6753 = vpop.f32.mrb[0].mxu0
    %v6754 = vadd.f32 0.0, %v6753
    %v6755 = vpop.f32.mrb[0].mxu0
    %6756 = vmatprep.mubr.f32.mxu0 0.0
    %6757 = vmatmul.mubr.f32.gmra.mrb[0].mxu0 %v6377
    %v6758 = vpop.f32.mrb[0].mxu0
    %v6759 = vadd.f32 0.0, %v6758
    %v6760 = vpop.f32.mrb[0].mxu0
    %6761 = vmatprep.mubr.f32.mxu0 0.0
    %6762 = vmatmul.mubr.f32.gmra.mrb[0].mxu0 %v6380
    %v6763 = vpop.f32.mrb[0].mxu0
    %v6764 = vadd.f32 0.0, %v6763
    %v6765 = vpop.f32.mrb[0].mxu0
    %6766 = vmatprep.mubr.f32.mxu0 0.0
    %6767 = vmatmul.mubr.f32.gmra.mrb[0].mxu0 %v6383
    %v6768 = vpop.f32.mrb[0].mxu0
    %v6769 = vadd.f32 0.0, %v6768
    %v6770 = vpop.f32.mrb[0].mxu0
    %6771 = vmatprep.mubr.f32.mxu0 0.0
    %6772 = vmatmul.mubr.f32.gmra.mrb[0].mxu0 %v6386
    %v6773 = vpop.f32.mrb[0].mxu0
    %v6774 = vadd.f32 0.0, %v6773
    %v6775 = vpop.f32.mrb[0].mxu0
    %6776 = vmatprep.mubr.f32.mxu0 0.0
    %6777 = vmatmul.mubr.f32.gmra.mrb[0].mxu0 %v6389
    %v6778 = vpop.f32.mrb[0].mxu0
    %v6779 = vadd.f32 0.0, %v6778
    %v6780 = vpop.f32.mrb[0].mxu0
    %6781 = vmatprep.mubr.f32.mxu0 0.0
    %6782 = vmatmul.mubr.f32.gmra.mrb[0].mxu0 %v6392
    %v6783 = vpop.f32.mrb[0].mxu0
    %v6784 = vadd.f32 0.0, %v6783
    %v6785 = vpop.f32.mrb[0].mxu0
    %6786 = vmatprep.mubr.f32.mxu0 0.0
    %6787 = vmatmul.mubr.f32.gmra.mrb[0].mxu0 %v6395
    %v6788 = vpop.f32.mrb[0].mxu0
    %v6789 = vadd.f32 0.0, %v6788
    %v6790 = vpop.f32.mrb[0].mxu0
    %6791 = vmatprep.mubr.f32.mxu0 0.0
    %6792 = vmatmul.mubr.f32.gmra.mrb[0].mxu0 %v6398
    %v6793 = vpop.f32.mrb[0].mxu0
    %v6794 = vadd.f32 0.0, %v6793
    %v6795 = vpop.f32.mrb[0].mxu0
    %6796 = vmatprep.mubr.f32.mxu0 0.0
    %6797 = vmatmul.mubr.f32.gmra.mrb[0].mxu0 %v6401
    %v6798 = vpop.f32.mrb[0].mxu0
    %v6799 = vadd.f32 0.0, %v6798
    %v6800 = vpop.f32.mrb[0].mxu0
    %6801 = vmatprep.mubr.f32.mxu0 0.0
    %6802 = vmatmul.mubr.f32.gmra.mrb[0].mxu0 %v6404
    %v6803 = vpop.f32.mrb[0].mxu0
    %v6804 = vadd.f32 0.0, %v6803
    %v6805 = vpop.f32.mrb[0].mxu0
    %6806 = vmatprep.mubr.f32.mxu0 0.0
    %6807 = vmatmul.mubr.f32.gmra.mrb[0].mxu0 %v6407
    %v6808 = vpop.f32.mrb[0].mxu0
    %v6809 = vadd.f32 0.0, %v6808
    %v6810 = vpop.f32.mrb[0].mxu0
    %6811 = vmatprep.mubr.f32.mxu0 0.0
    %6812 = vmatmul.mubr.f32.gmra.mrb[0].mxu0 %v6410
    %v6813 = vpop.f32.mrb[0].mxu0
    %v6814 = vadd.f32 0.0, %v6813
    %v6815 = vpop.f32.mrb[0].mxu0
    %6816 = vmatprep.mubr.f32.mxu0 0.0
    %6817 = vmatmul.mubr.f32.gmra.mrb[0].mxu0 %v6413
    %v6818 = vpop.f32.mrb[0].mxu0
    %v6819 = vadd.f32 0.0, %v6818
    %v6820 = vpop.f32.mrb[0].mxu0
    %6821 = vmatprep.mubr.f32.mxu0 0.0
    %6822 = vmatmul.mubr.f32.gmra.mrb[0].mxu0 %v6416
    %v6823 = vpop.f32.mrb[0].mxu0
    %v6824 = vadd.f32 0.0, %v6823
    %v6825 = vpop.f32.mrb[0].mxu0
    %6826 = vmatprep.mubr.f32.mxu0 0.0
    %6827 = vmatmul.mubr.f32.gmra.mrb[0].mxu0 %v6419
    %v6828 = vpop.f32.mrb[0].mxu0
    %v6829 = vadd.f32 0.0, %v6828
    %v6830 = vpop.f32.mrb[0].mxu0
    %6831 = vmatprep.mubr.f32.mxu0 0.0
    %6832 = vmatmul.mubr.f32.gmra.mrb[0].mxu0 %v6422
    %v6833 = vpop.f32.mrb[0].mxu0
    %v6834 = vadd.f32 0.0, %v6833
    %v6835 = vpop.f32.mrb[0].mxu0
    %6836 = vmatprep.mubr.f32.mxu0 0.0
    %6837 = vmatmul.mubr.f32.gmra.mrb[0].mxu0 %v6425
    %v6838 = vpop.f32.mrb[0].mxu0
    %v6839 = vadd.f32 0.0, %v6838
    %v6840 = vpop.f32.mrb[0].mxu0
    %6841 = vmatprep.mubr.f32.mxu0 0.0
    %6842 = vmatmul.mubr.f32.gmra.mrb[0].mxu0 %v6428
    %v6843 = vpop.f32.mrb[0].mxu0
    %v6844 = vadd.f32 0.0, %v6843
    %v6845 = vpop.f32.mrb[0].mxu0
    %6846 = vmatprep.mubr.f32.mxu0 0.0
    %6847 = vmatmul.mubr.f32.gmra.mrb[0].mxu0 %v6431
    %v6848 = vpop.f32.mrb[0].mxu0
    %v6849 = vadd.f32 0.0, %v6848
    %v6850 = vpop.f32.mrb[0].mxu0
    %6851 = vmatprep.mubr.f32.mxu0 0.0
    %6852 = vmatmul.mubr.f32.gmra.mrb[0].mxu0 %v6434
    %v6853 = vpop.f32.mrb[0].mxu0
    %v6854 = vadd.f32 0.0, %v6853
    %v6855 = vpop.f32.mrb[0].mxu0
    %6856 = vmatprep.mubr.f32.mxu0 0.0
    %6857 = vmatmul.mubr.f32.gmra.mrb[0].mxu0 %v6437
    %v6858 = vpop.f32.mrb[0].mxu0
    %v6859 = vadd.f32 0.0, %v6858
    %v6860 = vpop.f32.mrb[0].mxu0
    %6861 = vmatprep.mubr.f32.mxu0 0.0
    %6862 = vmatmul.mubr.f32.gmra.mrb[0].mxu0 %v6440
    %v6863 = vpop.f32.mrb[0].mxu0
    %v6864 = vadd.f32 0.0, %v6863
    %v6865 = vpop.f32.mrb[0].mxu0
    %6866 = vmatprep.mubr.f32.mxu0 0.0
    %6867 = vmatmul.mubr.f32.gmra.mrb[0].mxu0 %v6443
    %v6868 = vpop.f32.mrb[0].mxu0
    %v6869 = vadd.f32 0.0, %v6868
    %v6870 = vpop.f32.mrb[0].mxu0
    %6871 = vmatprep.mubr.f32.mxu0 0.0
    %6872 = vmatmul.mubr.f32.gmra.mrb[0].mxu0 %v6446
    %v6873 = vpop.f32.mrb[0].mxu0
    %v6874 = vadd.f32 0.0, %v6873
    %v6875 = vpop.f32.mrb[0].mxu0
    %6876 = vmatprep.mubr.f32.mxu0 0.0
    %6877 = vmatmul.mubr.f32.gmra.mrb[0].mxu0 %v6449
    %v6878 = vpop.f32.mrb[0].mxu0
    %v6879 = vadd.f32 0.0, %v6878
    %v6880 = vpop.f32.mrb[0].mxu0
    %6881 = vmatprep.mubr.f32.mxu0 0.0
    %6882 = vmatmul.mubr.f32.gmra.mrb[0].mxu0 %v6452
    %v6883 = vpop.f32.mrb[0].mxu0
    %v6884 = vadd.f32 0.0, %v6883
    %v6885 = vpop.f32.mrb[0].mxu0
    %6886 = vmatprep.mubr.f32.mxu0 0.0
    %6887 = vmatmul.mubr.f32.gmra.mrb[0].mxu0 %v6455
    %v6888 = vpop.f32.mrb[0].mxu0
    %v6889 = vadd.f32 0.0, %v6888
    %v6890 = vpop.f32.mrb[0].mxu0
    %6891 = vmatprep.mubr.f32.mxu0 0.0
    %6892 = vmatmul.mubr.f32.gmra.mrb[0].mxu0 %v6458
    %v6893 = vpop.f32.mrb[0].mxu0
    %v6894 = vadd.f32 0.0, %v6893
    %v6895 = vpop.f32.mrb[0].mxu0
    %6896 = vmatprep.mubr.f32.mxu0 0.0
    %6897 = vmatmul.mubr.f32.gmra.mrb[0].mxu0 %v6461
    %v6898 = vpop.f32.mrb[0].mxu0
    %v6899 = vadd.f32 0.0, %v6898
    %v6900 = vpop.f32.mrb[0].mxu0
    %6901 = vmatprep.mubr.f32.mxu0 0.0
    %6902 = vmatmul.mubr.f32.gmra.mrb[0].mxu0 %v6464
    %v6903 = vpop.f32.mrb[0].mxu0
    %v6904 = vadd.f32 0.0, %v6903
    %v6905 = vpop.f32.mrb[0].mxu0
    %6906 = vmatprep.mubr.f32.mxu0 0.0
    %6907 = vmatmul.mubr.f32.gmra.mrb[0].mxu0 %v6467
    %v6908 = vpop.f32.mrb[0].mxu0
    %v6909 = vadd.f32 0.0, %v6908
    %v6910 = vpop.f32.mrb[0].mxu0
    %6911 = vmatprep.mubr.f32.mxu0 0.0
    %6912 = vmatmul.mubr.f32.gmra.mrb[0].mxu0 %v6470
    %v6913 = vpop.f32.mrb[0].mxu0
    %v6914 = vadd.f32 0.0, %v6913
    %v6915 = vpop.f32.mrb[0].mxu0
    %6916 = vmatprep.mubr.f32.mxu0 0.0
    %6917 = vmatmul.mubr.f32.gmra.mrb[0].mxu0 %v6473
    %v6918 = vpop.f32.mrb[0].mxu0
    %v6919 = vadd.f32 0.0, %v6918
    %v6920 = vpop.f32.mrb[0].mxu0
    %6921 = vmatprep.mubr.f32.mxu0 0.0
    %6922 = vmatmul.mubr.f32.gmra.mrb[0].mxu0 %v6476
    %v6923 = vpop.f32.mrb[0].mxu0
    %v6924 = vadd.f32 0.0, %v6923
    %v6925 = vpop.f32.mrb[0].mxu0
    %6926 = vmatprep.mubr.f32.mxu0 0.0
    %6927 = vmatmul.mubr.f32.gmra.mrb[0].mxu0 %v6479
    %v6928 = vpop.f32.mrb[0].mxu0
    %v6929 = vadd.f32 0.0, %v6928
    %v6930 = vpop.f32.mrb[0].mxu0
    %6931 = vmatprep.mubr.f32.mxu0 0.0
    %6932 = vmatmul.mubr.f32.gmra.mrb[0].mxu0 %v6482
    %v6933 = vpop.f32.mrb[0].mxu0
    %v6934 = vadd.f32 0.0, %v6933
    %v6935 = vpop.f32.mrb[0].mxu0
    %6936 = vmatprep.mubr.f32.mxu0 0.0
    %6937 = vmatmul.mubr.f32.gmra.mrb[0].mxu0 %v6485
    %v6938 = vpop.f32.mrb[0].mxu0
    %v6939 = vadd.f32 0.0, %v6938
    %v6940 = vpop.f32.mrb[0].mxu0
    %6941 = vmatprep.mubr.f32.mxu0 0.0
    %6942 = vmatmul.mubr.f32.gmra.mrb[0].mxu0 %v6488
    %v6943 = vpop.f32.mrb[0].mxu0
    %v6944 = vadd.f32 0.0, %v6943
    %v6945 = vpop.f32.mrb[0].mxu0
    %6946 = vmatprep.mubr.f32.mxu0 0.0
    %6947 = vmatmul.mubr.f32.gmra.mrb[0].mxu0 %v6491
    %v6948 = vpop.f32.mrb[0].mxu0
    %v6949 = vadd.f32 0.0, %v6948
    %v6950 = vpop.f32.mrb[0].mxu0
    %6951 = vmatprep.mubr.f32.mxu0 0.0
    %6952 = vmatmul.mubr.f32.gmra.mrb[0].mxu0 %v6494
    %v6953 = vpop.f32.mrb[0].mxu0
    %v6954 = vadd.f32 0.0, %v6953
    %v6955 = vpop.f32.mrb[0].mxu0
    %6956 = vmatprep.mubr.f32.mxu0 0.0
    %6957 = vmatmul.mubr.f32.gmra.mrb[0].mxu0 %v6497
    %v6958 = vpop.f32.mrb[0].mxu0
    %v6959 = vadd.f32 0.0, %v6958
    %v6960 = vpop.f32.mrb[0].mxu0
    %6961 = vmatprep.mubr.f32.mxu0 0.0
    %6962 = vmatmul.mubr.f32.gmra.mrb[0].mxu0 %v6500
    %v6963 = vpop.f32.mrb[0].mxu0
    %v6964 = vadd.f32 0.0, %v6963
    %v6965 = vpop.f32.mrb[0].mxu0
    %6966 = vmatprep.mubr.f32.mxu0 0.0
    %6967 = vmatmul.mubr.f32.gmra.mrb[0].mxu0 %v6503
    %v6968 = vpop.f32.mrb[0].mxu0
    %v6969 = vadd.f32 0.0, %v6968
    %v6970 = vpop.f32.mrb[0].mxu0
    %6971 = vmatprep.mubr.f32.mxu0 0.0
    %6972 = vmatmul.mubr.f32.gmra.mrb[0].mxu0 %v6506
    %v6973 = vpop.f32.mrb[0].mxu0
    %v6974 = vadd.f32 0.0, %v6973
    %v6975 = vpop.f32.mrb[0].mxu0
    %6976 = vmatprep.mubr.f32.mxu0 0.0
    %6977 = vmatmul.mubr.f32.gmra.mrb[0].mxu0 %v6509
    %v6978 = vpop.f32.mrb[0].mxu0
    %v6979 = vadd.f32 0.0, %v6978
    %v6980 = vpop.f32.mrb[0].mxu0
    %6981 = vmatprep.mubr.f32.mxu0 0.0
    %6982 = vmatmul.mubr.f32.gmra.mrb[0].mxu0 %v6512
    %v6983 = vpop.f32.mrb[0].mxu0
    %v6984 = vadd.f32 0.0, %v6983
    %v6985 = vpop.f32.mrb[0].mxu0
    %6986 = vmatprep.mubr.f32.mxu0 0.0
    %6987 = vmatmul.mubr.f32.gmra.mrb[0].mxu0 %v6515
    %v6988 = vpop.f32.mrb[0].mxu0
    %v6989 = vadd.f32 0.0, %v6988
    %v6990 = vpop.f32.mrb[0].mxu0
    %6991 = vdwg.mxu0
    %v6993 = vsel %vm6017, %v6100, 0
    %v6996 = vsel %vm6017, %v6101, 0
    %v6999 = vsel %vm6017, %v6102, 0
    %v7002 = vsel %vm6017, %v6103, 0
    %v7005 = vsel %vm6017, %v6104, 0
    %v7008 = vsel %vm6017, %v6105, 0
    %v7011 = vsel %vm6017, %v6106, 0
    %v7014 = vsel %vm6017, %v6107, 0
    %v7017 = vsel %vm6017, %v6108, 0
    %v7020 = vsel %vm6017, %v6109, 0
    %v7023 = vsel %vm6017, %v6110, 0
    %v7026 = vsel %vm6017, %v6111, 0
    %v7029 = vsel %vm6017, %v6112, 0
    %v7032 = vsel %vm6017, %v6113, 0
    %v7035 = vsel %vm6017, %v6114, 0
    %v7038 = vsel %vm6017, %v6115, 0
    %v7041 = vsel %vm6017, %v6116, 0
    %v7044 = vsel %vm6017, %v6117, 0
    %v7047 = vsel %vm6017, %v6118, 0
    %v7050 = vsel %vm6017, %v6119, 0
    %v7053 = vsel %vm6017, %v6120, 0
    %v7056 = vsel %vm6017, %v6121, 0
    %v7059 = vsel %vm6017, %v6122, 0
    %v7062 = vsel %vm6017, %v6123, 0
    %v7065 = vsel %vm6017, %v6124, 0
    %v7068 = vsel %vm6017, %v6125, 0
    %v7071 = vsel %vm6017, %v6126, 0
    %v7074 = vsel %vm6017, %v6127, 0
    %v7077 = vsel %vm6017, %v6128, 0
    %v7080 = vsel %vm6017, %v6129, 0
    %v7083 = vsel %vm6017, %v6130, 0
    %v7086 = vsel %vm6017, %v6131, 0
    %v7089 = vsel %vm6017, %v6132, 0
    %v7092 = vsel %vm6017, %v6133, 0
    %v7095 = vsel %vm6017, %v6134, 0
    %v7098 = vsel %vm6017, %v6135, 0
    %v7101 = vsel %vm6017, %v6136, 0
    %v7104 = vsel %vm6017, %v6137, 0
    %v7107 = vsel %vm6017, %v6138, 0
    %v7110 = vsel %vm6017, %v6139, 0
    %v7113 = vsel %vm6017, %v6140, 0
    %v7116 = vsel %vm6017, %v6141, 0
    %v7119 = vsel %vm6017, %v6142, 0
    %v7122 = vsel %vm6017, %v6143, 0
    %v7125 = vsel %vm6017, %v6144, 0
    %v7128 = vsel %vm6017, %v6145, 0
    %v7131 = vsel %vm6017, %v6146, 0
    %v7134 = vsel %vm6017, %v6147, 0
    %v7137 = vsel %vm6017, %v6148, 0
    %v7140 = vsel %vm6017, %v6149, 0
    %v7143 = vsel %vm6017, %v6150, 0
    %v7146 = vsel %vm6017, %v6151, 0
    %v7149 = vsel %vm6017, %v6152, 0
    %v7152 = vsel %vm6017, %v6153, 0
    %v7155 = vsel %vm6017, %v6154, 0
    %v7158 = vsel %vm6017, %v6155, 0
    %v7161 = vsel %vm6017, %v6156, 0
    %v7164 = vsel %vm6017, %v6157, 0
    %v7167 = vsel %vm6017, %v6158, 0
    %v7170 = vsel %vm6017, %v6159, 0
    %v7173 = vsel %vm6017, %v6160, 0
    %v7176 = vsel %vm6017, %v6161, 0
    %v7179 = vsel %vm6017, %v6162, 0
    %v7182 = vsel %vm6017, %v6163, 0
    %v7185 = vsel %vm6017, %v6164, 0
    %v7188 = vsel %vm6017, %v6165, 0
    %v7191 = vsel %vm6017, %v6166, 0
    %v7194 = vsel %vm6017, %v6167, 0
    %v7197 = vsel %vm6017, %v6168, 0
    %v7200 = vsel %vm6017, %v6169, 0
    %v7203 = vsel %vm6017, %v6170, 0
    %v7206 = vsel %vm6017, %v6171, 0
    %v7209 = vsel %vm6017, %v6172, 0
    %v7212 = vsel %vm6017, %v6173, 0
    %v7215 = vsel %vm6017, %v6174, 0
    %v7218 = vsel %vm6017, %v6175, 0
    %v7221 = vsel %vm6017, %v6176, 0
    %v7224 = vsel %vm6017, %v6177, 0
    %v7227 = vsel %vm6017, %v6178, 0
    %v7230 = vsel %vm6017, %v6179, 0
    %v7233 = vsel %vm6017, %v6180, 0
    %v7236 = vsel %vm6017, %v6181, 0
    %7238 = vmatprep.subr.mxu0 0.0
    %7239 = vmatpush1.msra.mxu0 %v6182
    %7240 = vmatprep.subr.mxu0 0.0
    %7241 = vmatpush1.msra.mxu0 %v6183
    %7242 = vmatprep.subr.mxu0 0.0
    %7243 = vmatpush1.msra.mxu0 %v6184
    %7244 = vmatprep.subr.mxu0 0.0
    %7245 = vmatpush1.msra.mxu0 0.0
    %7246 = vmatprep.subr.mxu0 0.0
    %7247 = vmatpush1.msra.mxu0 0.0
    %7248 = vmatprep.subr.mxu0 0.0
    %7249 = vmatpush1.msra.mxu0 0.0
    %7250 = vmatprep.subr.mxu0 0.0
    %7251 = vmatpush1.msra.mxu0 0.0
    %7252 = vmatprep.subr.mxu0 0.0
    %7253 = vmatpush1.msra.mxu0 0.0
    %7254 = vmatprep.subr.mxu0 0.0
    %7255 = vmatpush1.msra.mxu0 0.0
    %7256 = vmatprep.subr.mxu0 0.0
    %7257 = vmatpush1.msra.mxu0 0.0
    %7258 = vmatprep.subr.mxu0 0.0
    %7259 = vmatpush1.msra.mxu0 0.0
    %7260 = vmatprep.subr.mxu0 0.0
    %7261 = vmatpush1.msra.mxu0 0.0
    %7262 = vmatprep.subr.mxu0 0.0
    %7263 = vmatpush1.msra.mxu0 0.0
    %7264 = vmatprep.subr.mxu0 0.0
    %7265 = vmatpush1.msra.mxu0 0.0
    %7266 = vmatprep.subr.mxu0 0.0
    %7267 = vmatpush1.msra.mxu0 0.0
    %7268 = vmatprep.subr.mxu0 0.0
    %7269 = vmatpush1.msra.mxu0 0.0
    %7270 = vmatprep.subr.mxu0 0.0
    %7271 = vmatpush1.msra.mxu0 0.0
    %7272 = vmatprep.subr.mxu0 0.0
    %7273 = vmatpush1.msra.mxu0 0.0
    %7274 = vmatprep.subr.mxu0 0.0
    %7275 = vmatpush1.msra.mxu0 0.0
    %7276 = vmatprep.subr.mxu0 0.0
    %7277 = vmatpush1.msra.mxu0 0.0
    %7278 = vmatprep.subr.mxu0 0.0
    %7279 = vmatpush1.msra.mxu0 0.0
    %7280 = vmatprep.subr.mxu0 0.0
    %7281 = vmatpush1.msra.mxu0 0.0
    %7282 = vmatprep.subr.mxu0 0.0
    %7283 = vmatpush1.msra.mxu0 0.0
    %7284 = vmatprep.subr.mxu0 0.0
    %7285 = vmatpush1.msra.mxu0 0.0
    %7286 = vmatprep.subr.mxu0 0.0
    %7287 = vmatpush1.msra.mxu0 0.0
    %7288 = vmatprep.subr.mxu0 0.0
    %7289 = vmatpush1.msra.mxu0 0.0
    %7290 = vmatprep.subr.mxu0 0.0
    %7291 = vmatpush1.msra.mxu0 0.0
    %7292 = vmatprep.subr.mxu0 0.0
    %7293 = vmatpush1.msra.mxu0 0.0
    %7294 = vmatprep.subr.mxu0 0.0
    %7295 = vmatpush1.msra.mxu0 0.0
    %7296 = vmatprep.subr.mxu0 0.0
    %7297 = vmatpush1.msra.mxu0 0.0
    %7298 = vmatprep.subr.mxu0 0.0
    %7299 = vmatpush1.msra.mxu0 0.0
    %7300 = vmatprep.subr.mxu0 0.0
    %7301 = vmatpush1.msra.mxu0 0.0
    %7302 = vmatprep.mubr.f32.mxu0 0.0
    %7303 = vmatmul.mubr.f32.gmra.mrb[0].mxu0 %v6993
    %v7304 = vpop.f32.mrb[0].mxu0
    %v7305 = vadd.f32 %v6584, %v7304
    %v7306 = vpop.f32.mrb[0].mxu0
    %7307 = vmatprep.mubr.f32.mxu0 0.0
    %7308 = vmatmul.mubr.f32.gmra.mrb[0].mxu0 %v6996
    %v7309 = vpop.f32.mrb[0].mxu0
    %v7310 = vadd.f32 %v6589, %v7309
    %v7311 = vpop.f32.mrb[0].mxu0
    %7312 = vmatprep.mubr.f32.mxu0 0.0
    %7313 = vmatmul.mubr.f32.gmra.mrb[0].mxu0 %v6999
    %v7314 = vpop.f32.mrb[0].mxu0
    %v7315 = vadd.f32 %v6594, %v7314
    %v7316 = vpop.f32.mrb[0].mxu0
    %7317 = vmatprep.mubr.f32.mxu0 0.0
    %7318 = vmatmul.mubr.f32.gmra.mrb[0].mxu0 %v7002
    %v7319 = vpop.f32.mrb[0].mxu0
    %v7320 = vadd.f32 %v6599, %v7319
    %v7321 = vpop.f32.mrb[0].mxu0
    %7322 = vmatprep.mubr.f32.mxu0 0.0
    %7323 = vmatmul.mubr.f32.gmra.mrb[0].mxu0 %v7005
    %v7324 = vpop.f32.mrb[0].mxu0
    %v7325 = vadd.f32 %v6604, %v7324
    %v7326 = vpop.f32.mrb[0].mxu0
    %7327 = vmatprep.mubr.f32.mxu0 0.0
    %7328 = vmatmul.mubr.f32.gmra.mrb[0].mxu0 %v7008
    %v7329 = vpop.f32.mrb[0].mxu0
    %v7330 = vadd.f32 %v6609, %v7329
    %v7331 = vpop.f32.mrb[0].mxu0
    %7332 = vmatprep.mubr.f32.mxu0 0.0
    %7333 = vmatmul.mubr.f32.gmra.mrb[0].mxu0 %v7011
    %v7334 = vpop.f32.mrb[0].mxu0
    %v7335 = vadd.f32 %v6614, %v7334
    %v7336 = vpop.f32.mrb[0].mxu0
    %7337 = vmatprep.mubr.f32.mxu0 0.0
    %7338 = vmatmul.mubr.f32.gmra.mrb[0].mxu0 %v7014
    %v7339 = vpop.f32.mrb[0].mxu0
    %v7340 = vadd.f32 %v6619, %v7339
    %v7341 = vpop.f32.mrb[0].mxu0
    %7342 = vmatprep.mubr.f32.mxu0 0.0
    %7343 = vmatmul.mubr.f32.gmra.mrb[0].mxu0 %v7017
    %v7344 = vpop.f32.mrb[0].mxu0
    %v7345 = vadd.f32 %v6624, %v7344
    %v7346 = vpop.f32.mrb[0].mxu0
    %7347 = vmatprep.mubr.f32.mxu0 0.0
    %7348 = vmatmul.mubr.f32.gmra.mrb[0].mxu0 %v7020
    %v7349 = vpop.f32.mrb[0].mxu0
    %v7350 = vadd.f32 %v6629, %v7349
    %v7351 = vpop.f32.mrb[0].mxu0
    %7352 = vmatprep.mubr.f32.mxu0 0.0
    %7353 = vmatmul.mubr.f32.gmra.mrb[0].mxu0 %v7023
    %v7354 = vpop.f32.mrb[0].mxu0
    %v7355 = vadd.f32 %v6634, %v7354
    %v7356 = vpop.f32.mrb[0].mxu0
    %7357 = vmatprep.mubr.f32.mxu0 0.0
    %7358 = vmatmul.mubr.f32.gmra.mrb[0].mxu0 %v7026
    %v7359 = vpop.f32.mrb[0].mxu0
    %v7360 = vadd.f32 %v6639, %v7359
    %v7361 = vpop.f32.mrb[0].mxu0
    %7362 = vmatprep.mubr.f32.mxu0 0.0
    %7363 = vmatmul.mubr.f32.gmra.mrb[0].mxu0 %v7029
    %v7364 = vpop.f32.mrb[0].mxu0
    %v7365 = vadd.f32 %v6644, %v7364
    %v7366 = vpop.f32.mrb[0].mxu0
    %7367 = vmatprep.mubr.f32.mxu0 0.0
    %7368 = vmatmul.mubr.f32.gmra.mrb[0].mxu0 %v7032
    %v7369 = vpop.f32.mrb[0].mxu0
    %v7370 = vadd.f32 %v6649, %v7369
    %v7371 = vpop.f32.mrb[0].mxu0
    %7372 = vmatprep.mubr.f32.mxu0 0.0
    %7373 = vmatmul.mubr.f32.gmra.mrb[0].mxu0 %v7035
    %v7374 = vpop.f32.mrb[0].mxu0
    %v7375 = vadd.f32 %v6654, %v7374
    %v7376 = vpop.f32.mrb[0].mxu0
    %7377 = vmatprep.mubr.f32.mxu0 0.0
    %7378 = vmatmul.mubr.f32.gmra.mrb[0].mxu0 %v7038
    %v7379 = vpop.f32.mrb[0].mxu0
    %v7380 = vadd.f32 %v6659, %v7379
    %v7381 = vpop.f32.mrb[0].mxu0
    %7382 = vmatprep.mubr.f32.mxu0 0.0
    %7383 = vmatmul.mubr.f32.gmra.mrb[0].mxu0 %v7041
    %v7384 = vpop.f32.mrb[0].mxu0
    %v7385 = vadd.f32 %v6664, %v7384
    %v7386 = vpop.f32.mrb[0].mxu0
    %7387 = vmatprep.mubr.f32.mxu0 0.0
    %7388 = vmatmul.mubr.f32.gmra.mrb[0].mxu0 %v7044
    %v7389 = vpop.f32.mrb[0].mxu0
    %v7390 = vadd.f32 %v6669, %v7389
    %v7391 = vpop.f32.mrb[0].mxu0
    %7392 = vmatprep.mubr.f32.mxu0 0.0
    %7393 = vmatmul.mubr.f32.gmra.mrb[0].mxu0 %v7047
    %v7394 = vpop.f32.mrb[0].mxu0
    %v7395 = vadd.f32 %v6674, %v7394
    %v7396 = vpop.f32.mrb[0].mxu0
    %7397 = vmatprep.mubr.f32.mxu0 0.0
    %7398 = vmatmul.mubr.f32.gmra.mrb[0].mxu0 %v7050
    %v7399 = vpop.f32.mrb[0].mxu0
    %v7400 = vadd.f32 %v6679, %v7399
    %v7401 = vpop.f32.mrb[0].mxu0
    %7402 = vmatprep.mubr.f32.mxu0 0.0
    %7403 = vmatmul.mubr.f32.gmra.mrb[0].mxu0 %v7053
    %v7404 = vpop.f32.mrb[0].mxu0
    %v7405 = vadd.f32 %v6684, %v7404
    %v7406 = vpop.f32.mrb[0].mxu0
    %7407 = vmatprep.mubr.f32.mxu0 0.0
    %7408 = vmatmul.mubr.f32.gmra.mrb[0].mxu0 %v7056
    %v7409 = vpop.f32.mrb[0].mxu0
    %v7410 = vadd.f32 %v6689, %v7409
    %v7411 = vpop.f32.mrb[0].mxu0
    %7412 = vmatprep.mubr.f32.mxu0 0.0
    %7413 = vmatmul.mubr.f32.gmra.mrb[0].mxu0 %v7059
    %v7414 = vpop.f32.mrb[0].mxu0
    %v7415 = vadd.f32 %v6694, %v7414
    %v7416 = vpop.f32.mrb[0].mxu0
    %7417 = vmatprep.mubr.f32.mxu0 0.0
    %7418 = vmatmul.mubr.f32.gmra.mrb[0].mxu0 %v7062
    %v7419 = vpop.f32.mrb[0].mxu0
    %v7420 = vadd.f32 %v6699, %v7419
    %v7421 = vpop.f32.mrb[0].mxu0
    %7422 = vmatprep.mubr.f32.mxu0 0.0
    %7423 = vmatmul.mubr.f32.gmra.mrb[0].mxu0 %v7065
    %v7424 = vpop.f32.mrb[0].mxu0
    %v7425 = vadd.f32 %v6704, %v7424
    %v7426 = vpop.f32.mrb[0].mxu0
    %7427 = vmatprep.mubr.f32.mxu0 0.0
    %7428 = vmatmul.mubr.f32.gmra.mrb[0].mxu0 %v7068
    %v7429 = vpop.f32.mrb[0].mxu0
    %v7430 = vadd.f32 %v6709, %v7429
    %v7431 = vpop.f32.mrb[0].mxu0
    %7432 = vmatprep.mubr.f32.mxu0 0.0
    %7433 = vmatmul.mubr.f32.gmra.mrb[0].mxu0 %v7071
    %v7434 = vpop.f32.mrb[0].mxu0
    %v7435 = vadd.f32 %v6714, %v7434
    %v7436 = vpop.f32.mrb[0].mxu0
    %7437 = vmatprep.mubr.f32.mxu0 0.0
    %7438 = vmatmul.mubr.f32.gmra.mrb[0].mxu0 %v7074
    %v7439 = vpop.f32.mrb[0].mxu0
    %v7440 = vadd.f32 %v6719, %v7439
    %v7441 = vpop.f32.mrb[0].mxu0
    %7442 = vmatprep.mubr.f32.mxu0 0.0
    %7443 = vmatmul.mubr.f32.gmra.mrb[0].mxu0 %v7077
    %v7444 = vpop.f32.mrb[0].mxu0
    %v7445 = vadd.f32 %v6724, %v7444
    %v7446 = vpop.f32.mrb[0].mxu0
    %7447 = vmatprep.mubr.f32.mxu0 0.0
    %7448 = vmatmul.mubr.f32.gmra.mrb[0].mxu0 %v7080
    %v7449 = vpop.f32.mrb[0].mxu0
    %v7450 = vadd.f32 %v6729, %v7449
    %v7451 = vpop.f32.mrb[0].mxu0
    %7452 = vmatprep.mubr.f32.mxu0 0.0
    %7453 = vmatmul.mubr.f32.gmra.mrb[0].mxu0 %v7083
    %v7454 = vpop.f32.mrb[0].mxu0
    %v7455 = vadd.f32 %v6734, %v7454
    %v7456 = vpop.f32.mrb[0].mxu0
    %7457 = vmatprep.mubr.f32.mxu0 0.0
    %7458 = vmatmul.mubr.f32.gmra.mrb[0].mxu0 %v7086
    %v7459 = vpop.f32.mrb[0].mxu0
    %v7460 = vadd.f32 %v6739, %v7459
    %v7461 = vpop.f32.mrb[0].mxu0
    %7462 = vmatprep.mubr.f32.mxu0 0.0
    %7463 = vmatmul.mubr.f32.gmra.mrb[0].mxu0 %v7089
    %v7464 = vpop.f32.mrb[0].mxu0
    %v7465 = vadd.f32 %v6744, %v7464
    %v7466 = vpop.f32.mrb[0].mxu0
    %7467 = vmatprep.mubr.f32.mxu0 0.0
    %7468 = vmatmul.mubr.f32.gmra.mrb[0].mxu0 %v7092
    %v7469 = vpop.f32.mrb[0].mxu0
    %v7470 = vadd.f32 %v6749, %v7469
    %v7471 = vpop.f32.mrb[0].mxu0
    %7472 = vmatprep.mubr.f32.mxu0 0.0
    %7473 = vmatmul.mubr.f32.gmra.mrb[0].mxu0 %v7095
    %v7474 = vpop.f32.mrb[0].mxu0
    %v7475 = vadd.f32 %v6754, %v7474
    %v7476 = vpop.f32.mrb[0].mxu0
    %7477 = vmatprep.mubr.f32.mxu0 0.0
    %7478 = vmatmul.mubr.f32.gmra.mrb[0].mxu0 %v7098
    %v7479 = vpop.f32.mrb[0].mxu0
    %v7480 = vadd.f32 %v6759, %v7479
    %v7481 = vpop.f32.mrb[0].mxu0
    %7482 = vmatprep.mubr.f32.mxu0 0.0
    %7483 = vmatmul.mubr.f32.gmra.mrb[0].mxu0 %v7101
    %v7484 = vpop.f32.mrb[0].mxu0
    %v7485 = vadd.f32 %v6764, %v7484
    %v7486 = vpop.f32.mrb[0].mxu0
    %7487 = vmatprep.mubr.f32.mxu0 0.0
    %7488 = vmatmul.mubr.f32.gmra.mrb[0].mxu0 %v7104
    %v7489 = vpop.f32.mrb[0].mxu0
    %v7490 = vadd.f32 %v6769, %v7489
    %v7491 = vpop.f32.mrb[0].mxu0
    %7492 = vmatprep.mubr.f32.mxu0 0.0
    %7493 = vmatmul.mubr.f32.gmra.mrb[0].mxu0 %v7107
    %v7494 = vpop.f32.mrb[0].mxu0
    %v7495 = vadd.f32 %v6774, %v7494
    %v7496 = vpop.f32.mrb[0].mxu0
    %7497 = vmatprep.mubr.f32.mxu0 0.0
    %7498 = vmatmul.mubr.f32.gmra.mrb[0].mxu0 %v7110
    %v7499 = vpop.f32.mrb[0].mxu0
    %v7500 = vadd.f32 %v6779, %v7499
    %v7501 = vpop.f32.mrb[0].mxu0
    %7502 = vmatprep.mubr.f32.mxu0 0.0
    %7503 = vmatmul.mubr.f32.gmra.mrb[0].mxu0 %v7113
    %v7504 = vpop.f32.mrb[0].mxu0
    %v7505 = vadd.f32 %v6784, %v7504
    %v7506 = vpop.f32.mrb[0].mxu0
    %7507 = vmatprep.mubr.f32.mxu0 0.0
    %7508 = vmatmul.mubr.f32.gmra.mrb[0].mxu0 %v7116
    %v7509 = vpop.f32.mrb[0].mxu0
    %v7510 = vadd.f32 %v6789, %v7509
    %v7511 = vpop.f32.mrb[0].mxu0
    %7512 = vmatprep.mubr.f32.mxu0 0.0
    %7513 = vmatmul.mubr.f32.gmra.mrb[0].mxu0 %v7119
    %v7514 = vpop.f32.mrb[0].mxu0
    %v7515 = vadd.f32 %v6794, %v7514
    %v7516 = vpop.f32.mrb[0].mxu0
    %7517 = vmatprep.mubr.f32.mxu0 0.0
    %7518 = vmatmul.mubr.f32.gmra.mrb[0].mxu0 %v7122
    %v7519 = vpop.f32.mrb[0].mxu0
    %v7520 = vadd.f32 %v6799, %v7519
    %v7521 = vpop.f32.mrb[0].mxu0
    %7522 = vmatprep.mubr.f32.mxu0 0.0
    %7523 = vmatmul.mubr.f32.gmra.mrb[0].mxu0 %v7125
    %v7524 = vpop.f32.mrb[0].mxu0
    %v7525 = vadd.f32 %v6804, %v7524
    %v7526 = vpop.f32.mrb[0].mxu0
    %7527 = vmatprep.mubr.f32.mxu0 0.0
    %7528 = vmatmul.mubr.f32.gmra.mrb[0].mxu0 %v7128
    %v7529 = vpop.f32.mrb[0].mxu0
    %v7530 = vadd.f32 %v6809, %v7529
    %v7531 = vpop.f32.mrb[0].mxu0
    %7532 = vmatprep.mubr.f32.mxu0 0.0
    %7533 = vmatmul.mubr.f32.gmra.mrb[0].mxu0 %v7131
    %v7534 = vpop.f32.mrb[0].mxu0
    %v7535 = vadd.f32 %v6814, %v7534
    %v7536 = vpop.f32.mrb[0].mxu0
    %7537 = vmatprep.mubr.f32.mxu0 0.0
    %7538 = vmatmul.mubr.f32.gmra.mrb[0].mxu0 %v7134
    %v7539 = vpop.f32.mrb[0].mxu0
    %v7540 = vadd.f32 %v6819, %v7539
    %v7541 = vpop.f32.mrb[0].mxu0
    %7542 = vmatprep.mubr.f32.mxu0 0.0
    %7543 = vmatmul.mubr.f32.gmra.mrb[0].mxu0 %v7137
    %v7544 = vpop.f32.mrb[0].mxu0
    %v7545 = vadd.f32 %v6824, %v7544
    %v7546 = vpop.f32.mrb[0].mxu0
    %7547 = vmatprep.mubr.f32.mxu0 0.0
    %7548 = vmatmul.mubr.f32.gmra.mrb[0].mxu0 %v7140
    %v7549 = vpop.f32.mrb[0].mxu0
    %v7550 = vadd.f32 %v6829, %v7549
    %v7551 = vpop.f32.mrb[0].mxu0
    %7552 = vmatprep.mubr.f32.mxu0 0.0
    %7553 = vmatmul.mubr.f32.gmra.mrb[0].mxu0 %v7143
    %v7554 = vpop.f32.mrb[0].mxu0
    %v7555 = vadd.f32 %v6834, %v7554
    %v7556 = vpop.f32.mrb[0].mxu0
    %7557 = vmatprep.mubr.f32.mxu0 0.0
    %7558 = vmatmul.mubr.f32.gmra.mrb[0].mxu0 %v7146
    %v7559 = vpop.f32.mrb[0].mxu0
    %v7560 = vadd.f32 %v6839, %v7559
    %v7561 = vpop.f32.mrb[0].mxu0
    %7562 = vmatprep.mubr.f32.mxu0 0.0
    %7563 = vmatmul.mubr.f32.gmra.mrb[0].mxu0 %v7149
    %v7564 = vpop.f32.mrb[0].mxu0
    %v7565 = vadd.f32 %v6844, %v7564
    %v7566 = vpop.f32.mrb[0].mxu0
    %7567 = vmatprep.mubr.f32.mxu0 0.0
    %7568 = vmatmul.mubr.f32.gmra.mrb[0].mxu0 %v7152
    %v7569 = vpop.f32.mrb[0].mxu0
    %v7570 = vadd.f32 %v6849, %v7569
    %v7571 = vpop.f32.mrb[0].mxu0
    %7572 = vmatprep.mubr.f32.mxu0 0.0
    %7573 = vmatmul.mubr.f32.gmra.mrb[0].mxu0 %v7155
    %v7574 = vpop.f32.mrb[0].mxu0
    %v7575 = vadd.f32 %v6854, %v7574
    %v7576 = vpop.f32.mrb[0].mxu0
    %7577 = vmatprep.mubr.f32.mxu0 0.0
    %7578 = vmatmul.mubr.f32.gmra.mrb[0].mxu0 %v7158
    %v7579 = vpop.f32.mrb[0].mxu0
    %v7580 = vadd.f32 %v6859, %v7579
    %v7581 = vpop.f32.mrb[0].mxu0
    %7582 = vmatprep.mubr.f32.mxu0 0.0
    %7583 = vmatmul.mubr.f32.gmra.mrb[0].mxu0 %v7161
    %v7584 = vpop.f32.mrb[0].mxu0
    %v7585 = vadd.f32 %v6864, %v7584
    %v7586 = vpop.f32.mrb[0].mxu0
    %7587 = vmatprep.mubr.f32.mxu0 0.0
    %7588 = vmatmul.mubr.f32.gmra.mrb[0].mxu0 %v7164
    %v7589 = vpop.f32.mrb[0].mxu0
    %v7590 = vadd.f32 %v6869, %v7589
    %v7591 = vpop.f32.mrb[0].mxu0
    %7592 = vmatprep.mubr.f32.mxu0 0.0
    %7593 = vmatmul.mubr.f32.gmra.mrb[0].mxu0 %v7167
    %v7594 = vpop.f32.mrb[0].mxu0
    %v7595 = vadd.f32 %v6874, %v7594
    %v7596 = vpop.f32.mrb[0].mxu0
    %7597 = vmatprep.mubr.f32.mxu0 0.0
    %7598 = vmatmul.mubr.f32.gmra.mrb[0].mxu0 %v7170
    %v7599 = vpop.f32.mrb[0].mxu0
    %v7600 = vadd.f32 %v6879, %v7599
    %v7601 = vpop.f32.mrb[0].mxu0
    %7602 = vmatprep.mubr.f32.mxu0 0.0
    %7603 = vmatmul.mubr.f32.gmra.mrb[0].mxu0 %v7173
    %v7604 = vpop.f32.mrb[0].mxu0
    %v7605 = vadd.f32 %v6884, %v7604
    %v7606 = vpop.f32.mrb[0].mxu0
    %7607 = vmatprep.mubr.f32.mxu0 0.0
    %7608 = vmatmul.mubr.f32.gmra.mrb[0].mxu0 %v7176
    %v7609 = vpop.f32.mrb[0].mxu0
    %v7610 = vadd.f32 %v6889, %v7609
    %v7611 = vpop.f32.mrb[0].mxu0
    %7612 = vmatprep.mubr.f32.mxu0 0.0
    %7613 = vmatmul.mubr.f32.gmra.mrb[0].mxu0 %v7179
    %v7614 = vpop.f32.mrb[0].mxu0
    %v7615 = vadd.f32 %v6894, %v7614
    %v7616 = vpop.f32.mrb[0].mxu0
    %7617 = vmatprep.mubr.f32.mxu0 0.0
    %7618 = vmatmul.mubr.f32.gmra.mrb[0].mxu0 %v7182
    %v7619 = vpop.f32.mrb[0].mxu0
    %v7620 = vadd.f32 %v6899, %v7619
    %v7621 = vpop.f32.mrb[0].mxu0
    %7622 = vmatprep.mubr.f32.mxu0 0.0
    %7623 = vmatmul.mubr.f32.gmra.mrb[0].mxu0 %v7185
    %v7624 = vpop.f32.mrb[0].mxu0
    %v7625 = vadd.f32 %v6904, %v7624
    %v7626 = vpop.f32.mrb[0].mxu0
    %7627 = vmatprep.mubr.f32.mxu0 0.0
    %7628 = vmatmul.mubr.f32.gmra.mrb[0].mxu0 %v7188
    %v7629 = vpop.f32.mrb[0].mxu0
    %v7630 = vadd.f32 %v6909, %v7629
    %v7631 = vpop.f32.mrb[0].mxu0
    %7632 = vmatprep.mubr.f32.mxu0 0.0
    %7633 = vmatmul.mubr.f32.gmra.mrb[0].mxu0 %v7191
    %v7634 = vpop.f32.mrb[0].mxu0
    %v7635 = vadd.f32 %v6914, %v7634
    %v7636 = vpop.f32.mrb[0].mxu0
    %7637 = vmatprep.mubr.f32.mxu0 0.0
    %7638 = vmatmul.mubr.f32.gmra.mrb[0].mxu0 %v7194
    %v7639 = vpop.f32.mrb[0].mxu0
    %v7640 = vadd.f32 %v6919, %v7639
    %v7641 = vpop.f32.mrb[0].mxu0
    %7642 = vmatprep.mubr.f32.mxu0 0.0
    %7643 = vmatmul.mubr.f32.gmra.mrb[0].mxu0 %v7197
    %v7644 = vpop.f32.mrb[0].mxu0
    %v7645 = vadd.f32 %v6924, %v7644
    %v7646 = vpop.f32.mrb[0].mxu0
    %7647 = vmatprep.mubr.f32.mxu0 0.0
    %7648 = vmatmul.mubr.f32.gmra.mrb[0].mxu0 %v7200
    %v7649 = vpop.f32.mrb[0].mxu0
    %v7650 = vadd.f32 %v6929, %v7649
    %v7651 = vpop.f32.mrb[0].mxu0
    %7652 = vmatprep.mubr.f32.mxu0 0.0
    %7653 = vmatmul.mubr.f32.gmra.mrb[0].mxu0 %v7203
    %v7654 = vpop.f32.mrb[0].mxu0
    %v7655 = vadd.f32 %v6934, %v7654
    %v7656 = vpop.f32.mrb[0].mxu0
    %7657 = vmatprep.mubr.f32.mxu0 0.0
    %7658 = vmatmul.mubr.f32.gmra.mrb[0].mxu0 %v7206
    %v7659 = vpop.f32.mrb[0].mxu0
    %v7660 = vadd.f32 %v6939, %v7659
    %v7661 = vpop.f32.mrb[0].mxu0
    %7662 = vmatprep.mubr.f32.mxu0 0.0
    %7663 = vmatmul.mubr.f32.gmra.mrb[0].mxu0 %v7209
    %v7664 = vpop.f32.mrb[0].mxu0
    %v7665 = vadd.f32 %v6944, %v7664
    %v7666 = vpop.f32.mrb[0].mxu0
    %7667 = vmatprep.mubr.f32.mxu0 0.0
    %7668 = vmatmul.mubr.f32.gmra.mrb[0].mxu0 %v7212
    %v7669 = vpop.f32.mrb[0].mxu0
    %v7670 = vadd.f32 %v6949, %v7669
    %v7671 = vpop.f32.mrb[0].mxu0
    %7672 = vmatprep.mubr.f32.mxu0 0.0
    %7673 = vmatmul.mubr.f32.gmra.mrb[0].mxu0 %v7215
    %v7674 = vpop.f32.mrb[0].mxu0
    %v7675 = vadd.f32 %v6954, %v7674
    %v7676 = vpop.f32.mrb[0].mxu0
    %7677 = vmatprep.mubr.f32.mxu0 0.0
    %7678 = vmatmul.mubr.f32.gmra.mrb[0].mxu0 %v7218
    %v7679 = vpop.f32.mrb[0].mxu0
    %v7680 = vadd.f32 %v6959, %v7679
    %v7681 = vpop.f32.mrb[0].mxu0
    %7682 = vmatprep.mubr.f32.mxu0 0.0
    %7683 = vmatmul.mubr.f32.gmra.mrb[0].mxu0 %v7221
    %v7684 = vpop.f32.mrb[0].mxu0
    %v7685 = vadd.f32 %v6964, %v7684
    %v7686 = vpop.f32.mrb[0].mxu0
    %7687 = vmatprep.mubr.f32.mxu0 0.0
    %7688 = vmatmul.mubr.f32.gmra.mrb[0].mxu0 %v7224
    %v7689 = vpop.f32.mrb[0].mxu0
    %v7690 = vadd.f32 %v6969, %v7689
    %v7691 = vpop.f32.mrb[0].mxu0
    %7692 = vmatprep.mubr.f32.mxu0 0.0
    %7693 = vmatmul.mubr.f32.gmra.mrb[0].mxu0 %v7227
    %v7694 = vpop.f32.mrb[0].mxu0
    %v7695 = vadd.f32 %v6974, %v7694
    %v7696 = vpop.f32.mrb[0].mxu0
    %7697 = vmatprep.mubr.f32.mxu0 0.0
    %7698 = vmatmul.mubr.f32.gmra.mrb[0].mxu0 %v7230
    %v7699 = vpop.f32.mrb[0].mxu0
    %v7700 = vadd.f32 %v6979, %v7699
    %v7701 = vpop.f32.mrb[0].mxu0
    %7702 = vmatprep.mubr.f32.mxu0 0.0
    %7703 = vmatmul.mubr.f32.gmra.mrb[0].mxu0 %v7233
    %v7704 = vpop.f32.mrb[0].mxu0
    %v7705 = vadd.f32 %v6984, %v7704
    %v7706 = vpop.f32.mrb[0].mxu0
    %7707 = vmatprep.mubr.f32.mxu0 0.0
    %7708 = vmatmul.mubr.f32.gmra.mrb[0].mxu0 %v7236
    %v7709 = vpop.f32.mrb[0].mxu0
    %v7710 = vadd.f32 %v6989, %v7709
    %v7711 = vpop.f32.mrb[0].mxu0
    %7712 = vdwg.mxu0
    %v7713 = vld [vmem:[#allocation3 + $0x2a] sm:$0xff]
    %v7714 = vld [vmem:[#allocation3 + $0x32] sm:$0xff]
    %v7715 = vld [vmem:[#allocation3 + $0x3a] sm:$0xff]
    %v7716 = vld [vmem:[#allocation3 + $0x42] sm:$0xff]
    %v7717 = vld [vmem:[#allocation3 + $0x4a] sm:$0xff]
    %v7718 = vld [vmem:[#allocation3 + $0x52] sm:$0xff]
    %v7719 = vld [vmem:[#allocation3 + $0x5a] sm:$0xff]
    %v7720 = vld [vmem:[#allocation3 + $0x62] sm:$0xff]
    %v7721 = vld [vmem:[#allocation3 + $0x6a] sm:$0xff]
    %v7722 = vld [vmem:[#allocation3 + $0x72] sm:$0xff]
    %v7723 = vld [vmem:[#allocation3 + $0x7a] sm:$0xff]
    %v7724 = vld [vmem:[#allocation3 + $0x82] sm:$0xff]
    %v7725 = vld [vmem:[#allocation3 + $0x8a] sm:$0xff]
    %v7726 = vld [vmem:[#allocation3 + $0x92] sm:$0xff]
    %v7727 = vld [vmem:[#allocation3 + $0x9a] sm:$0xff]
    %v7728 = vld [vmem:[#allocation3 + $0xa2] sm:$0xff]
    %v7729 = vld [vmem:[#allocation3 + $0xaa] sm:$0xff]
    %v7730 = vld [vmem:[#allocation3 + $0xb2] sm:$0xff]
    %v7731 = vld [vmem:[#allocation3 + $0xba] sm:$0xff]
    %v7732 = vld [vmem:[#allocation3 + $0xc2] sm:$0xff]
    %v7733 = vld [vmem:[#allocation3 + $0xca] sm:$0xff]
    %v7734 = vld [vmem:[#allocation3 + $0xd2] sm:$0xff]
    %v7735 = vld [vmem:[#allocation3 + $0xda] sm:$0xff]
    %v7736 = vld [vmem:[#allocation3 + $0xe2] sm:$0xff]
    %v7737 = vld [vmem:[#allocation3 + $0xea] sm:$0xff]
    %v7738 = vld [vmem:[#allocation3 + $0xf2] sm:$0xff]
    %v7739 = vld [vmem:[#allocation3 + $0xfa] sm:$0xff]
    %v7740 = vld [vmem:[#allocation3 + $0x102] sm:$0xff]
    %v7741 = vld [vmem:[#allocation3 + $0x10a] sm:$0xff]
    %v7742 = vld [vmem:[#allocation3 + $0x112] sm:$0xff]
    %v7743 = vld [vmem:[#allocation3 + $0x11a] sm:$0xff]
    %v7744 = vld [vmem:[#allocation3 + $0x122] sm:$0xff]
    %v7745 = vld [vmem:[#allocation3 + $0x12a] sm:$0xff]
    %v7746 = vld [vmem:[#allocation3 + $0x132] sm:$0xff]
    %v7747 = vld [vmem:[#allocation3 + $0x13a] sm:$0xff]
    %v7748 = vld [vmem:[#allocation3 + $0x142] sm:$0xff]
    %v7749 = vld [vmem:[#allocation3 + $0x14a] sm:$0xff]
    %v7750 = vld [vmem:[#allocation3 + $0x152] sm:$0xff]
    %v7751 = vld [vmem:[#allocation3 + $0x15a] sm:$0xff]
    %v7752 = vld [vmem:[#allocation3 + $0x162] sm:$0xff]
    %v7753 = vld [vmem:[#allocation3 + $0x16a] sm:$0xff]
    %v7754 = vld [vmem:[#allocation3 + $0x172] sm:$0xff]
    %v7755 = vld [vmem:[#allocation3 + $0x17a] sm:$0xff]
    %v7756 = vld [vmem:[#allocation3 + $0x182] sm:$0xff]
    %v7757 = vld [vmem:[#allocation3 + $0x18a] sm:$0xff]
    %v7758 = vld [vmem:[#allocation3 + $0x192] sm:$0xff]
    %v7759 = vld [vmem:[#allocation3 + $0x19a] sm:$0xff]
    %v7760 = vld [vmem:[#allocation3 + $0x1a2] sm:$0xff]
    %v7761 = vld [vmem:[#allocation3 + $0x1aa] sm:$0xff]
    %v7762 = vld [vmem:[#allocation3 + $0x1b2] sm:$0xff]
    %v7763 = vld [vmem:[#allocation3 + $0x1ba] sm:$0xff]
    %v7764 = vld [vmem:[#allocation3 + $0x1c2] sm:$0xff]
    %v7765 = vld [vmem:[#allocation3 + $0x1ca] sm:$0xff]
    %v7766 = vld [vmem:[#allocation3 + $0x1d2] sm:$0xff]
    %v7767 = vld [vmem:[#allocation3 + $0x1da] sm:$0xff]
    %v7768 = vld [vmem:[#allocation3 + $0x1e2] sm:$0xff]
    %v7769 = vld [vmem:[#allocation3 + $0x1ea] sm:$0xff]
    %v7770 = vld [vmem:[#allocation3 + $0x1f2] sm:$0xff]
    %v7771 = vld [vmem:[#allocation3 + $0x1fa] sm:$0xff]
    %v7772 = vld [vmem:[#allocation3 + $0x202] sm:$0xff]
    %v7773 = vld [vmem:[#allocation3 + $0x20a] sm:$0xff]
    %v7774 = vld [vmem:[#allocation3 + $0x212] sm:$0xff]
    %v7775 = vld [vmem:[#allocation3 + $0x21a] sm:$0xff]
    %v7776 = vld [vmem:[#allocation3 + $0x222] sm:$0xff]
    %v7777 = vld [vmem:[#allocation3 + $0x22a] sm:$0xff]
    %v7778 = vld [vmem:[#allocation3 + $0x232] sm:$0xff]
    %v7779 = vld [vmem:[#allocation3 + $0x23a] sm:$0xff]
    %v7780 = vld [vmem:[#allocation3 + $0x242] sm:$0xff]
    %v7781 = vld [vmem:[#allocation3 + $0x24a] sm:$0xff]
    %v7782 = vld [vmem:[#allocation3 + $0x252] sm:$0xff]
    %v7783 = vld [vmem:[#allocation3 + $0x25a] sm:$0xff]
    %v7784 = vld [vmem:[#allocation3 + $0x262] sm:$0xff]
    %v7785 = vld [vmem:[#allocation3 + $0x26a] sm:$0xff]
    %v7786 = vld [vmem:[#allocation3 + $0x272] sm:$0xff]
    %v7787 = vld [vmem:[#allocation3 + $0x27a] sm:$0xff]
    %v7788 = vld [vmem:[#allocation3 + $0x282] sm:$0xff]
    %v7789 = vld [vmem:[#allocation3 + $0x28a] sm:$0xff]
    %v7790 = vld [vmem:[#allocation3 + $0x292] sm:$0xff]
    %v7791 = vld [vmem:[#allocation3 + $0x29a] sm:$0xff]
    %v7792 = vld [vmem:[#allocation3 + $0x2a2] sm:$0xff]
    %v7793 = vld [vmem:[#allocation3 + $0x2aa] sm:$0xff]
    %v7794 = vld [vmem:[#allocation3 + $0x2b2] sm:$0xff]
    %s7795 = scalar_lea.vmem %s3, 48
    %v7796 = vld [vmem:[%s7795] sm:$0xff]
    %v7797 = vld [vmem:[%s7795 + $0x8] sm:$0xff]
    %v7798 = vld [vmem:[%s7795 + $0x10] sm:$0xff]
    %v7800 = vsel %vm6017, %v7713, 0
    %v7803 = vsel %vm6017, %v7714, 0
    %v7806 = vsel %vm6017, %v7715, 0
    %v7809 = vsel %vm6017, %v7716, 0
    %v7812 = vsel %vm6017, %v7717, 0
    %v7815 = vsel %vm6017, %v7718, 0
    %v7818 = vsel %vm6017, %v7719, 0
    %v7821 = vsel %vm6017, %v7720, 0
    %v7824 = vsel %vm6017, %v7721, 0
    %v7827 = vsel %vm6017, %v7722, 0
    %v7830 = vsel %vm6017, %v7723, 0
    %v7833 = vsel %vm6017, %v7724, 0
    %v7836 = vsel %vm6017, %v7725, 0
    %v7839 = vsel %vm6017, %v7726, 0
    %v7842 = vsel %vm6017, %v7727, 0
    %v7845 = vsel %vm6017, %v7728, 0
    %v7848 = vsel %vm6017, %v7729, 0
    %v7851 = vsel %vm6017, %v7730, 0
    %v7854 = vsel %vm6017, %v7731, 0
    %v7857 = vsel %vm6017, %v7732, 0
    %v7860 = vsel %vm6017, %v7733, 0
    %v7863 = vsel %vm6017, %v7734, 0
    %v7866 = vsel %vm6017, %v7735, 0
    %v7869 = vsel %vm6017, %v7736, 0
    %v7872 = vsel %vm6017, %v7737, 0
    %v7875 = vsel %vm6017, %v7738, 0
    %v7878 = vsel %vm6017, %v7739, 0
    %v7881 = vsel %vm6017, %v7740, 0
    %v7884 = vsel %vm6017, %v7741, 0
    %v7887 = vsel %vm6017, %v7742, 0
    %v7890 = vsel %vm6017, %v7743, 0
    %v7893 = vsel %vm6017, %v7744, 0
    %v7896 = vsel %vm6017, %v7745, 0
    %v7899 = vsel %vm6017, %v7746, 0
    %v7902 = vsel %vm6017, %v7747, 0
    %v7905 = vsel %vm6017, %v7748, 0
    %v7908 = vsel %vm6017, %v7749, 0
    %v7911 = vsel %vm6017, %v7750, 0
    %v7914 = vsel %vm6017, %v7751, 0
    %v7917 = vsel %vm6017, %v7752, 0
    %v7920 = vsel %vm6017, %v7753, 0
    %v7923 = vsel %vm6017, %v7754, 0
    %v7926 = vsel %vm6017, %v7755, 0
    %v7929 = vsel %vm6017, %v7756, 0
    %v7932 = vsel %vm6017, %v7757, 0
    %v7935 = vsel %vm6017, %v7758, 0
    %v7938 = vsel %vm6017, %v7759, 0
    %v7941 = vsel %vm6017, %v7760, 0
    %v7944 = vsel %vm6017, %v7761, 0
    %v7947 = vsel %vm6017, %v7762, 0
    %v7950 = vsel %vm6017, %v7763, 0
    %v7953 = vsel %vm6017, %v7764, 0
    %v7956 = vsel %vm6017, %v7765, 0
    %v7959 = vsel %vm6017, %v7766, 0
    %v7962 = vsel %vm6017, %v7767, 0
    %v7965 = vsel %vm6017, %v7768, 0
    %v7968 = vsel %vm6017, %v7769, 0
    %v7971 = vsel %vm6017, %v7770, 0
    %v7974 = vsel %vm6017, %v7771, 0
    %v7977 = vsel %vm6017, %v7772, 0
    %v7980 = vsel %vm6017, %v7773, 0
    %v7983 = vsel %vm6017, %v7774, 0
    %v7986 = vsel %vm6017, %v7775, 0
    %v7989 = vsel %vm6017, %v7776, 0
    %v7992 = vsel %vm6017, %v7777, 0
    %v7995 = vsel %vm6017, %v7778, 0
    %v7998 = vsel %vm6017, %v7779, 0
    %v8001 = vsel %vm6017, %v7780, 0
    %v8004 = vsel %vm6017, %v7781, 0
    %v8007 = vsel %vm6017, %v7782, 0
    %v8010 = vsel %vm6017, %v7783, 0
    %v8013 = vsel %vm6017, %v7784, 0
    %v8016 = vsel %vm6017, %v7785, 0
    %v8019 = vsel %vm6017, %v7786, 0
    %v8022 = vsel %vm6017, %v7787, 0
    %v8025 = vsel %vm6017, %v7788, 0
    %v8028 = vsel %vm6017, %v7789, 0
    %v8031 = vsel %vm6017, %v7790, 0
    %v8034 = vsel %vm6017, %v7791, 0
    %v8037 = vsel %vm6017, %v7792, 0
    %v8040 = vsel %vm6017, %v7793, 0
    %v8043 = vsel %vm6017, %v7794, 0
    %8045 = vmatprep.subr.mxu0 0.0
    %8046 = vmatpush1.msra.mxu0 %v7796
    %8047 = vmatprep.subr.mxu0 0.0
    %8048 = vmatpush1.msra.mxu0 %v7797
    %8049 = vmatprep.subr.mxu0 0.0
    %8050 = vmatpush1.msra.mxu0 %v7798
    %8051 = vmatprep.subr.mxu0 0.0
    %8052 = vmatpush1.msra.mxu0 0.0
    %8053 = vmatprep.subr.mxu0 0.0
    %8054 = vmatpush1.msra.mxu0 0.0
    %8055 = vmatprep.subr.mxu0 0.0
    %8056 = vmatpush1.msra.mxu0 0.0
    %8057 = vmatprep.subr.mxu0 0.0
    %8058 = vmatpush1.msra.mxu0 0.0
    %8059 = vmatprep.subr.mxu0 0.0
    %8060 = vmatpush1.msra.mxu0 0.0
    %8061 = vmatprep.subr.mxu0 0.0
    %8062 = vmatpush1.msra.mxu0 0.0
    %8063 = vmatprep.subr.mxu0 0.0
    %8064 = vmatpush1.msra.mxu0 0.0
    %8065 = vmatprep.subr.mxu0 0.0
    %8066 = vmatpush1.msra.mxu0 0.0
    %8067 = vmatprep.subr.mxu0 0.0
    %8068 = vmatpush1.msra.mxu0 0.0
    %8069 = vmatprep.subr.mxu0 0.0
    %8070 = vmatpush1.msra.mxu0 0.0
    %8071 = vmatprep.subr.mxu0 0.0
    %8072 = vmatpush1.msra.mxu0 0.0
    %8073 = vmatprep.subr.mxu0 0.0
    %8074 = vmatpush1.msra.mxu0 0.0
    %8075 = vmatprep.subr.mxu0 0.0
    %8076 = vmatpush1.msra.mxu0 0.0
    %8077 = vmatprep.subr.mxu0 0.0
    %8078 = vmatpush1.msra.mxu0 0.0
    %8079 = vmatprep.subr.mxu0 0.0
    %8080 = vmatpush1.msra.mxu0 0.0
    %8081 = vmatprep.subr.mxu0 0.0
    %8082 = vmatpush1.msra.mxu0 0.0
    %8083 = vmatprep.subr.mxu0 0.0
    %8084 = vmatpush1.msra.mxu0 0.0
    %8085 = vmatprep.subr.mxu0 0.0
    %8086 = vmatpush1.msra.mxu0 0.0
    %8087 = vmatprep.subr.mxu0 0.0
    %8088 = vmatpush1.msra.mxu0 0.0
    %8089 = vmatprep.subr.mxu0 0.0
    %8090 = vmatpush1.msra.mxu0 0.0
    %8091 = vmatprep.subr.mxu0 0.0
    %8092 = vmatpush1.msra.mxu0 0.0
    %8093 = vmatprep.subr.mxu0 0.0
    %8094 = vmatpush1.msra.mxu0 0.0
    %8095 = vmatprep.subr.mxu0 0.0
    %8096 = vmatpush1.msra.mxu0 0.0
    %8097 = vmatprep.subr.mxu0 0.0
    %8098 = vmatpush1.msra.mxu0 0.0
    %8099 = vmatprep.subr.mxu0 0.0
    %8100 = vmatpush1.msra.mxu0 0.0
    %8101 = vmatprep.subr.mxu0 0.0
    %8102 = vmatpush1.msra.mxu0 0.0
    %8103 = vmatprep.subr.mxu0 0.0
    %8104 = vmatpush1.msra.mxu0 0.0
    %8105 = vmatprep.subr.mxu0 0.0
    %8106 = vmatpush1.msra.mxu0 0.0
    %8107 = vmatprep.subr.mxu0 0.0
    %8108 = vmatpush1.msra.mxu0 0.0
    %8109 = vmatprep.mubr.f32.mxu0 0.0
    %8110 = vmatmul.mubr.f32.gmra.mrb[0].mxu0 %v7800
    %v8111 = vpop.f32.mrb[0].mxu0
    %v8112 = vadd.f32 0.0, %v8111
    %v8113 = vpop.f32.mrb[0].mxu0
    %8114 = vmatprep.mubr.f32.mxu0 0.0
    %8115 = vmatmul.mubr.f32.gmra.mrb[0].mxu0 %v7803
    %v8116 = vpop.f32.mrb[0].mxu0
    %v8117 = vadd.f32 0.0, %v8116
    %v8118 = vpop.f32.mrb[0].mxu0
    %8119 = vmatprep.mubr.f32.mxu0 0.0
    %8120 = vmatmul.mubr.f32.gmra.mrb[0].mxu0 %v7806
    %v8121 = vpop.f32.mrb[0].mxu0
    %v8122 = vadd.f32 0.0, %v8121
    %v8123 = vpop.f32.mrb[0].mxu0
    %8124 = vmatprep.mubr.f32.mxu0 0.0
    %8125 = vmatmul.mubr.f32.gmra.mrb[0].mxu0 %v7809
    %v8126 = vpop.f32.mrb[0].mxu0
    %v8127 = vadd.f32 0.0, %v8126
    %v8128 = vpop.f32.mrb[0].mxu0
    %8129 = vmatprep.mubr.f32.mxu0 0.0
    %8130 = vmatmul.mubr.f32.gmra.mrb[0].mxu0 %v7812
    %v8131 = vpop.f32.mrb[0].mxu0
    %v8132 = vadd.f32 0.0, %v8131
    %v8133 = vpop.f32.mrb[0].mxu0
    %8134 = vmatprep.mubr.f32.mxu0 0.0
    %8135 = vmatmul.mubr.f32.gmra.mrb[0].mxu0 %v7815
    %v8136 = vpop.f32.mrb[0].mxu0
    %v8137 = vadd.f32 0.0, %v8136
    %v8138 = vpop.f32.mrb[0].mxu0
    %8139 = vmatprep.mubr.f32.mxu0 0.0
    %8140 = vmatmul.mubr.f32.gmra.mrb[0].mxu0 %v7818
    %v8141 = vpop.f32.mrb[0].mxu0
    %v8142 = vadd.f32 0.0, %v8141
    %v8143 = vpop.f32.mrb[0].mxu0
    %8144 = vmatprep.mubr.f32.mxu0 0.0
    %8145 = vmatmul.mubr.f32.gmra.mrb[0].mxu0 %v7821
    %v8146 = vpop.f32.mrb[0].mxu0
    %v8147 = vadd.f32 0.0, %v8146
    %v8148 = vpop.f32.mrb[0].mxu0
    %8149 = vmatprep.mubr.f32.mxu0 0.0
    %8150 = vmatmul.mubr.f32.gmra.mrb[0].mxu0 %v7824
    %v8151 = vpop.f32.mrb[0].mxu0
    %v8152 = vadd.f32 0.0, %v8151
    %v8153 = vpop.f32.mrb[0].mxu0
    %8154 = vmatprep.mubr.f32.mxu0 0.0
    %8155 = vmatmul.mubr.f32.gmra.mrb[0].mxu0 %v7827
    %v8156 = vpop.f32.mrb[0].mxu0
    %v8157 = vadd.f32 0.0, %v8156
    %v8158 = vpop.f32.mrb[0].mxu0
    %8159 = vmatprep.mubr.f32.mxu0 0.0
    %8160 = vmatmul.mubr.f32.gmra.mrb[0].mxu0 %v7830
    %v8161 = vpop.f32.mrb[0].mxu0
    %v8162 = vadd.f32 0.0, %v8161
    %v8163 = vpop.f32.mrb[0].mxu0
    %8164 = vmatprep.mubr.f32.mxu0 0.0
    %8165 = vmatmul.mubr.f32.gmra.mrb[0].mxu0 %v7833
    %v8166 = vpop.f32.mrb[0].mxu0
    %v8167 = vadd.f32 0.0, %v8166
    %v8168 = vpop.f32.mrb[0].mxu0
    %8169 = vmatprep.mubr.f32.mxu0 0.0
    %8170 = vmatmul.mubr.f32.gmra.mrb[0].mxu0 %v7836
    %v8171 = vpop.f32.mrb[0].mxu0
    %v8172 = vadd.f32 0.0, %v8171
    %v8173 = vpop.f32.mrb[0].mxu0
    %8174 = vmatprep.mubr.f32.mxu0 0.0
    %8175 = vmatmul.mubr.f32.gmra.mrb[0].mxu0 %v7839
    %v8176 = vpop.f32.mrb[0].mxu0
    %v8177 = vadd.f32 0.0, %v8176
    %v8178 = vpop.f32.mrb[0].mxu0
    %8179 = vmatprep.mubr.f32.mxu0 0.0
    %8180 = vmatmul.mubr.f32.gmra.mrb[0].mxu0 %v7842
    %v8181 = vpop.f32.mrb[0].mxu0
    %v8182 = vadd.f32 0.0, %v8181
    %v8183 = vpop.f32.mrb[0].mxu0
    %8184 = vmatprep.mubr.f32.mxu0 0.0
    %8185 = vmatmul.mubr.f32.gmra.mrb[0].mxu0 %v7845
    %v8186 = vpop.f32.mrb[0].mxu0
    %v8187 = vadd.f32 0.0, %v8186
    %v8188 = vpop.f32.mrb[0].mxu0
    %8189 = vmatprep.mubr.f32.mxu0 0.0
    %8190 = vmatmul.mubr.f32.gmra.mrb[0].mxu0 %v7848
    %v8191 = vpop.f32.mrb[0].mxu0
    %v8192 = vadd.f32 0.0, %v8191
    %v8193 = vpop.f32.mrb[0].mxu0
    %8194 = vmatprep.mubr.f32.mxu0 0.0
    %8195 = vmatmul.mubr.f32.gmra.mrb[0].mxu0 %v7851
    %v8196 = vpop.f32.mrb[0].mxu0
    %v8197 = vadd.f32 0.0, %v8196
    %v8198 = vpop.f32.mrb[0].mxu0
    %8199 = vmatprep.mubr.f32.mxu0 0.0
    %8200 = vmatmul.mubr.f32.gmra.mrb[0].mxu0 %v7854
    %v8201 = vpop.f32.mrb[0].mxu0
    %v8202 = vadd.f32 0.0, %v8201
    %v8203 = vpop.f32.mrb[0].mxu0
    %8204 = vmatprep.mubr.f32.mxu0 0.0
    %8205 = vmatmul.mubr.f32.gmra.mrb[0].mxu0 %v7857
    %v8206 = vpop.f32.mrb[0].mxu0
    %v8207 = vadd.f32 0.0, %v8206
    %v8208 = vpop.f32.mrb[0].mxu0
    %8209 = vmatprep.mubr.f32.mxu0 0.0
    %8210 = vmatmul.mubr.f32.gmra.mrb[0].mxu0 %v7860
    %v8211 = vpop.f32.mrb[0].mxu0
    %v8212 = vadd.f32 0.0, %v8211
    %v8213 = vpop.f32.mrb[0].mxu0
    %8214 = vmatprep.mubr.f32.mxu0 0.0
    %8215 = vmatmul.mubr.f32.gmra.mrb[0].mxu0 %v7863
    %v8216 = vpop.f32.mrb[0].mxu0
    %v8217 = vadd.f32 0.0, %v8216
    %v8218 = vpop.f32.mrb[0].mxu0
    %8219 = vmatprep.mubr.f32.mxu0 0.0
    %8220 = vmatmul.mubr.f32.gmra.mrb[0].mxu0 %v7866
    %v8221 = vpop.f32.mrb[0].mxu0
    %v8222 = vadd.f32 0.0, %v8221
    %v8223 = vpop.f32.mrb[0].mxu0
    %8224 = vmatprep.mubr.f32.mxu0 0.0
    %8225 = vmatmul.mubr.f32.gmra.mrb[0].mxu0 %v7869
    %v8226 = vpop.f32.mrb[0].mxu0
    %v8227 = vadd.f32 0.0, %v8226
    %v8228 = vpop.f32.mrb[0].mxu0
    %8229 = vmatprep.mubr.f32.mxu0 0.0
    %8230 = vmatmul.mubr.f32.gmra.mrb[0].mxu0 %v7872
    %v8231 = vpop.f32.mrb[0].mxu0
    %v8232 = vadd.f32 0.0, %v8231
    %v8233 = vpop.f32.mrb[0].mxu0
    %8234 = vmatprep.mubr.f32.mxu0 0.0
    %8235 = vmatmul.mubr.f32.gmra.mrb[0].mxu0 %v7875
    %v8236 = vpop.f32.mrb[0].mxu0
    %v8237 = vadd.f32 0.0, %v8236
    %v8238 = vpop.f32.mrb[0].mxu0
    %8239 = vmatprep.mubr.f32.mxu0 0.0
    %8240 = vmatmul.mubr.f32.gmra.mrb[0].mxu0 %v7878
    %v8241 = vpop.f32.mrb[0].mxu0
    %v8242 = vadd.f32 0.0, %v8241
    %v8243 = vpop.f32.mrb[0].mxu0
    %8244 = vmatprep.mubr.f32.mxu0 0.0
    %8245 = vmatmul.mubr.f32.gmra.mrb[0].mxu0 %v7881
    %v8246 = vpop.f32.mrb[0].mxu0
    %v8247 = vadd.f32 0.0, %v8246
    %v8248 = vpop.f32.mrb[0].mxu0
    %8249 = vmatprep.mubr.f32.mxu0 0.0
    %8250 = vmatmul.mubr.f32.gmra.mrb[0].mxu0 %v7884
    %v8251 = vpop.f32.mrb[0].mxu0
    %v8252 = vadd.f32 0.0, %v8251
    %v8253 = vpop.f32.mrb[0].mxu0
    %8254 = vmatprep.mubr.f32.mxu0 0.0
    %8255 = vmatmul.mubr.f32.gmra.mrb[0].mxu0 %v7887
    %v8256 = vpop.f32.mrb[0].mxu0
    %v8257 = vadd.f32 0.0, %v8256
    %v8258 = vpop.f32.mrb[0].mxu0
    %8259 = vmatprep.mubr.f32.mxu0 0.0
    %8260 = vmatmul.mubr.f32.gmra.mrb[0].mxu0 %v7890
    %v8261 = vpop.f32.mrb[0].mxu0
    %v8262 = vadd.f32 0.0, %v8261
    %v8263 = vpop.f32.mrb[0].mxu0
    %8264 = vmatprep.mubr.f32.mxu0 0.0
    %8265 = vmatmul.mubr.f32.gmra.mrb[0].mxu0 %v7893
    %v8266 = vpop.f32.mrb[0].mxu0
    %v8267 = vadd.f32 0.0, %v8266
    %v8268 = vpop.f32.mrb[0].mxu0
    %8269 = vmatprep.mubr.f32.mxu0 0.0
    %8270 = vmatmul.mubr.f32.gmra.mrb[0].mxu0 %v7896
    %v8271 = vpop.f32.mrb[0].mxu0
    %v8272 = vadd.f32 0.0, %v8271
    %v8273 = vpop.f32.mrb[0].mxu0
    %8274 = vmatprep.mubr.f32.mxu0 0.0
    %8275 = vmatmul.mubr.f32.gmra.mrb[0].mxu0 %v7899
    %v8276 = vpop.f32.mrb[0].mxu0
    %v8277 = vadd.f32 0.0, %v8276
    %v8278 = vpop.f32.mrb[0].mxu0
    %8279 = vmatprep.mubr.f32.mxu0 0.0
    %8280 = vmatmul.mubr.f32.gmra.mrb[0].mxu0 %v7902
    %v8281 = vpop.f32.mrb[0].mxu0
    %v8282 = vadd.f32 0.0, %v8281
    %v8283 = vpop.f32.mrb[0].mxu0
    %8284 = vmatprep.mubr.f32.mxu0 0.0
    %8285 = vmatmul.mubr.f32.gmra.mrb[0].mxu0 %v7905
    %v8286 = vpop.f32.mrb[0].mxu0
    %v8287 = vadd.f32 0.0, %v8286
    %v8288 = vpop.f32.mrb[0].mxu0
    %8289 = vmatprep.mubr.f32.mxu0 0.0
    %8290 = vmatmul.mubr.f32.gmra.mrb[0].mxu0 %v7908
    %v8291 = vpop.f32.mrb[0].mxu0
    %v8292 = vadd.f32 0.0, %v8291
    %v8293 = vpop.f32.mrb[0].mxu0
    %8294 = vmatprep.mubr.f32.mxu0 0.0
    %8295 = vmatmul.mubr.f32.gmra.mrb[0].mxu0 %v7911
    %v8296 = vpop.f32.mrb[0].mxu0
    %v8297 = vadd.f32 0.0, %v8296
    %v8298 = vpop.f32.mrb[0].mxu0
    %8299 = vmatprep.mubr.f32.mxu0 0.0
    %8300 = vmatmul.mubr.f32.gmra.mrb[0].mxu0 %v7914
    %v8301 = vpop.f32.mrb[0].mxu0
    %v8302 = vadd.f32 0.0, %v8301
    %v8303 = vpop.f32.mrb[0].mxu0
    %8304 = vmatprep.mubr.f32.mxu0 0.0
    %8305 = vmatmul.mubr.f32.gmra.mrb[0].mxu0 %v7917
    %v8306 = vpop.f32.mrb[0].mxu0
    %v8307 = vadd.f32 0.0, %v8306
    %v8308 = vpop.f32.mrb[0].mxu0
    %8309 = vmatprep.mubr.f32.mxu0 0.0
    %8310 = vmatmul.mubr.f32.gmra.mrb[0].mxu0 %v7920
    %v8311 = vpop.f32.mrb[0].mxu0
    %v8312 = vadd.f32 0.0, %v8311
    %v8313 = vpop.f32.mrb[0].mxu0
    %8314 = vmatprep.mubr.f32.mxu0 0.0
    %8315 = vmatmul.mubr.f32.gmra.mrb[0].mxu0 %v7923
    %v8316 = vpop.f32.mrb[0].mxu0
    %v8317 = vadd.f32 0.0, %v8316
    %v8318 = vpop.f32.mrb[0].mxu0
    %8319 = vmatprep.mubr.f32.mxu0 0.0
    %8320 = vmatmul.mubr.f32.gmra.mrb[0].mxu0 %v7926
    %v8321 = vpop.f32.mrb[0].mxu0
    %v8322 = vadd.f32 0.0, %v8321
    %v8323 = vpop.f32.mrb[0].mxu0
    %8324 = vmatprep.mubr.f32.mxu0 0.0
    %8325 = vmatmul.mubr.f32.gmra.mrb[0].mxu0 %v7929
    %v8326 = vpop.f32.mrb[0].mxu0
    %v8327 = vadd.f32 0.0, %v8326
    %v8328 = vpop.f32.mrb[0].mxu0
    %8329 = vmatprep.mubr.f32.mxu0 0.0
    %8330 = vmatmul.mubr.f32.gmra.mrb[0].mxu0 %v7932
    %v8331 = vpop.f32.mrb[0].mxu0
    %v8332 = vadd.f32 0.0, %v8331
    %v8333 = vpop.f32.mrb[0].mxu0
    %8334 = vmatprep.mubr.f32.mxu0 0.0
    %8335 = vmatmul.mubr.f32.gmra.mrb[0].mxu0 %v7935
    %v8336 = vpop.f32.mrb[0].mxu0
    %v8337 = vadd.f32 0.0, %v8336
    %v8338 = vpop.f32.mrb[0].mxu0
    %8339 = vmatprep.mubr.f32.mxu0 0.0
    %8340 = vmatmul.mubr.f32.gmra.mrb[0].mxu0 %v7938
    %v8341 = vpop.f32.mrb[0].mxu0
    %v8342 = vadd.f32 0.0, %v8341
    %v8343 = vpop.f32.mrb[0].mxu0
    %8344 = vmatprep.mubr.f32.mxu0 0.0
    %8345 = vmatmul.mubr.f32.gmra.mrb[0].mxu0 %v7941
    %v8346 = vpop.f32.mrb[0].mxu0
    %v8347 = vadd.f32 0.0, %v8346
    %v8348 = vpop.f32.mrb[0].mxu0
    %8349 = vmatprep.mubr.f32.mxu0 0.0
    %8350 = vmatmul.mubr.f32.gmra.mrb[0].mxu0 %v7944
    %v8351 = vpop.f32.mrb[0].mxu0
    %v8352 = vadd.f32 0.0, %v8351
    %v8353 = vpop.f32.mrb[0].mxu0
    %8354 = vmatprep.mubr.f32.mxu0 0.0
    %8355 = vmatmul.mubr.f32.gmra.mrb[0].mxu0 %v7947
    %v8356 = vpop.f32.mrb[0].mxu0
    %v8357 = vadd.f32 0.0, %v8356
    %v8358 = vpop.f32.mrb[0].mxu0
    %8359 = vmatprep.mubr.f32.mxu0 0.0
    %8360 = vmatmul.mubr.f32.gmra.mrb[0].mxu0 %v7950
    %v8361 = vpop.f32.mrb[0].mxu0
    %v8362 = vadd.f32 0.0, %v8361
    %v8363 = vpop.f32.mrb[0].mxu0
    %8364 = vmatprep.mubr.f32.mxu0 0.0
    %8365 = vmatmul.mubr.f32.gmra.mrb[0].mxu0 %v7953
    %v8366 = vpop.f32.mrb[0].mxu0
    %v8367 = vadd.f32 0.0, %v8366
    %v8368 = vpop.f32.mrb[0].mxu0
    %8369 = vmatprep.mubr.f32.mxu0 0.0
    %8370 = vmatmul.mubr.f32.gmra.mrb[0].mxu0 %v7956
    %v8371 = vpop.f32.mrb[0].mxu0
    %v8372 = vadd.f32 0.0, %v8371
    %v8373 = vpop.f32.mrb[0].mxu0
    %8374 = vmatprep.mubr.f32.mxu0 0.0
    %8375 = vmatmul.mubr.f32.gmra.mrb[0].mxu0 %v7959
    %v8376 = vpop.f32.mrb[0].mxu0
    %v8377 = vadd.f32 0.0, %v8376
    %v8378 = vpop.f32.mrb[0].mxu0
    %8379 = vmatprep.mubr.f32.mxu0 0.0
    %8380 = vmatmul.mubr.f32.gmra.mrb[0].mxu0 %v7962
    %v8381 = vpop.f32.mrb[0].mxu0
    %v8382 = vadd.f32 0.0, %v8381
    %v8383 = vpop.f32.mrb[0].mxu0
    %8384 = vmatprep.mubr.f32.mxu0 0.0
    %8385 = vmatmul.mubr.f32.gmra.mrb[0].mxu0 %v7965
    %v8386 = vpop.f32.mrb[0].mxu0
    %v8387 = vadd.f32 0.0, %v8386
    %v8388 = vpop.f32.mrb[0].mxu0
    %8389 = vmatprep.mubr.f32.mxu0 0.0
    %8390 = vmatmul.mubr.f32.gmra.mrb[0].mxu0 %v7968
    %v8391 = vpop.f32.mrb[0].mxu0
    %v8392 = vadd.f32 0.0, %v8391
    %v8393 = vpop.f32.mrb[0].mxu0
    %8394 = vmatprep.mubr.f32.mxu0 0.0
    %8395 = vmatmul.mubr.f32.gmra.mrb[0].mxu0 %v7971
    %v8396 = vpop.f32.mrb[0].mxu0
    %v8397 = vadd.f32 0.0, %v8396
    %v8398 = vpop.f32.mrb[0].mxu0
    %8399 = vmatprep.mubr.f32.mxu0 0.0
    %8400 = vmatmul.mubr.f32.gmra.mrb[0].mxu0 %v7974
    %v8401 = vpop.f32.mrb[0].mxu0
    %v8402 = vadd.f32 0.0, %v8401
    %v8403 = vpop.f32.mrb[0].mxu0
    %8404 = vmatprep.mubr.f32.mxu0 0.0
    %8405 = vmatmul.mubr.f32.gmra.mrb[0].mxu0 %v7977
    %v8406 = vpop.f32.mrb[0].mxu0
    %v8407 = vadd.f32 0.0, %v8406
    %v8408 = vpop.f32.mrb[0].mxu0
    %8409 = vmatprep.mubr.f32.mxu0 0.0
    %8410 = vmatmul.mubr.f32.gmra.mrb[0].mxu0 %v7980
    %v8411 = vpop.f32.mrb[0].mxu0
    %v8412 = vadd.f32 0.0, %v8411
    %v8413 = vpop.f32.mrb[0].mxu0
    %8414 = vmatprep.mubr.f32.mxu0 0.0
    %8415 = vmatmul.mubr.f32.gmra.mrb[0].mxu0 %v7983
    %v8416 = vpop.f32.mrb[0].mxu0
    %v8417 = vadd.f32 0.0, %v8416
    %v8418 = vpop.f32.mrb[0].mxu0
    %8419 = vmatprep.mubr.f32.mxu0 0.0
    %8420 = vmatmul.mubr.f32.gmra.mrb[0].mxu0 %v7986
    %v8421 = vpop.f32.mrb[0].mxu0
    %v8422 = vadd.f32 0.0, %v8421
    %v8423 = vpop.f32.mrb[0].mxu0
    %8424 = vmatprep.mubr.f32.mxu0 0.0
    %8425 = vmatmul.mubr.f32.gmra.mrb[0].mxu0 %v7989
    %v8426 = vpop.f32.mrb[0].mxu0
    %v8427 = vadd.f32 0.0, %v8426
    %v8428 = vpop.f32.mrb[0].mxu0
    %8429 = vmatprep.mubr.f32.mxu0 0.0
    %8430 = vmatmul.mubr.f32.gmra.mrb[0].mxu0 %v7992
    %v8431 = vpop.f32.mrb[0].mxu0
    %v8432 = vadd.f32 0.0, %v8431
    %v8433 = vpop.f32.mrb[0].mxu0
    %8434 = vmatprep.mubr.f32.mxu0 0.0
    %8435 = vmatmul.mubr.f32.gmra.mrb[0].mxu0 %v7995
    %v8436 = vpop.f32.mrb[0].mxu0
    %v8437 = vadd.f32 0.0, %v8436
    %v8438 = vpop.f32.mrb[0].mxu0
    %8439 = vmatprep.mubr.f32.mxu0 0.0
    %8440 = vmatmul.mubr.f32.gmra.mrb[0].mxu0 %v7998
    %v8441 = vpop.f32.mrb[0].mxu0
    %v8442 = vadd.f32 0.0, %v8441
    %v8443 = vpop.f32.mrb[0].mxu0
    %8444 = vmatprep.mubr.f32.mxu0 0.0
    %8445 = vmatmul.mubr.f32.gmra.mrb[0].mxu0 %v8001
    %v8446 = vpop.f32.mrb[0].mxu0
    %v8447 = vadd.f32 0.0, %v8446
    %v8448 = vpop.f32.mrb[0].mxu0
    %8449 = vmatprep.mubr.f32.mxu0 0.0
    %8450 = vmatmul.mubr.f32.gmra.mrb[0].mxu0 %v8004
    %v8451 = vpop.f32.mrb[0].mxu0
    %v8452 = vadd.f32 0.0, %v8451
    %v8453 = vpop.f32.mrb[0].mxu0
    %8454 = vmatprep.mubr.f32.mxu0 0.0
    %8455 = vmatmul.mubr.f32.gmra.mrb[0].mxu0 %v8007
    %v8456 = vpop.f32.mrb[0].mxu0
    %v8457 = vadd.f32 0.0, %v8456
    %v8458 = vpop.f32.mrb[0].mxu0
    %8459 = vmatprep.mubr.f32.mxu0 0.0
    %8460 = vmatmul.mubr.f32.gmra.mrb[0].mxu0 %v8010
    %v8461 = vpop.f32.mrb[0].mxu0
    %v8462 = vadd.f32 0.0, %v8461
    %v8463 = vpop.f32.mrb[0].mxu0
    %8464 = vmatprep.mubr.f32.mxu0 0.0
    %8465 = vmatmul.mubr.f32.gmra.mrb[0].mxu0 %v8013
    %v8466 = vpop.f32.mrb[0].mxu0
    %v8467 = vadd.f32 0.0, %v8466
    %v8468 = vpop.f32.mrb[0].mxu0
    %8469 = vmatprep.mubr.f32.mxu0 0.0
    %8470 = vmatmul.mubr.f32.gmra.mrb[0].mxu0 %v8016
    %v8471 = vpop.f32.mrb[0].mxu0
    %v8472 = vadd.f32 0.0, %v8471
    %v8473 = vpop.f32.mrb[0].mxu0
    %8474 = vmatprep.mubr.f32.mxu0 0.0
    %8475 = vmatmul.mubr.f32.gmra.mrb[0].mxu0 %v8019
    %v8476 = vpop.f32.mrb[0].mxu0
    %v8477 = vadd.f32 0.0, %v8476
    %v8478 = vpop.f32.mrb[0].mxu0
    %8479 = vmatprep.mubr.f32.mxu0 0.0
    %8480 = vmatmul.mubr.f32.gmra.mrb[0].mxu0 %v8022
    %v8481 = vpop.f32.mrb[0].mxu0
    %v8482 = vadd.f32 0.0, %v8481
    %v8483 = vpop.f32.mrb[0].mxu0
    %8484 = vmatprep.mubr.f32.mxu0 0.0
    %8485 = vmatmul.mubr.f32.gmra.mrb[0].mxu0 %v8025
    %v8486 = vpop.f32.mrb[0].mxu0
    %v8487 = vadd.f32 0.0, %v8486
    %v8488 = vpop.f32.mrb[0].mxu0
    %8489 = vmatprep.mubr.f32.mxu0 0.0
    %8490 = vmatmul.mubr.f32.gmra.mrb[0].mxu0 %v8028
    %v8491 = vpop.f32.mrb[0].mxu0
    %v8492 = vadd.f32 0.0, %v8491
    %v8493 = vpop.f32.mrb[0].mxu0
    %8494 = vmatprep.mubr.f32.mxu0 0.0
    %8495 = vmatmul.mubr.f32.gmra.mrb[0].mxu0 %v8031
    %v8496 = vpop.f32.mrb[0].mxu0
    %v8497 = vadd.f32 0.0, %v8496
    %v8498 = vpop.f32.mrb[0].mxu0
    %8499 = vmatprep.mubr.f32.mxu0 0.0
    %8500 = vmatmul.mubr.f32.gmra.mrb[0].mxu0 %v8034
    %v8501 = vpop.f32.mrb[0].mxu0
    %v8502 = vadd.f32 0.0, %v8501
    %v8503 = vpop.f32.mrb[0].mxu0
    %8504 = vmatprep.mubr.f32.mxu0 0.0
    %8505 = vmatmul.mubr.f32.gmra.mrb[0].mxu0 %v8037
    %v8506 = vpop.f32.mrb[0].mxu0
    %v8507 = vadd.f32 0.0, %v8506
    %v8508 = vpop.f32.mrb[0].mxu0
    %8509 = vmatprep.mubr.f32.mxu0 0.0
    %8510 = vmatmul.mubr.f32.gmra.mrb[0].mxu0 %v8040
    %v8511 = vpop.f32.mrb[0].mxu0
    %v8512 = vadd.f32 0.0, %v8511
    %v8513 = vpop.f32.mrb[0].mxu0
    %8514 = vmatprep.mubr.f32.mxu0 0.0
    %8515 = vmatmul.mubr.f32.gmra.mrb[0].mxu0 %v8043
    %v8516 = vpop.f32.mrb[0].mxu0
    %v8517 = vadd.f32 0.0, %v8516
    %v8518 = vpop.f32.mrb[0].mxu0
    %8519 = vdwg.mxu0
    %v8520 = vadd.f32 %v7305, %v8112
    %v8521 = vadd.f32 %v7310, %v8117
    %v8522 = vadd.f32 %v7315, %v8122
    %v8523 = vadd.f32 %v7320, %v8127
    %v8524 = vadd.f32 %v7325, %v8132
    %v8525 = vadd.f32 %v7330, %v8137
    %v8526 = vadd.f32 %v7335, %v8142
    %v8527 = vadd.f32 %v7340, %v8147
    %v8528 = vadd.f32 %v7345, %v8152
    %v8529 = vadd.f32 %v7350, %v8157
    %v8530 = vadd.f32 %v7355, %v8162
    %v8531 = vadd.f32 %v7360, %v8167
    %v8532 = vadd.f32 %v7365, %v8172
    %v8533 = vadd.f32 %v7370, %v8177
    %v8534 = vadd.f32 %v7375, %v8182
    %v8535 = vadd.f32 %v7380, %v8187
    %v8536 = vadd.f32 %v7385, %v8192
    %v8537 = vadd.f32 %v7390, %v8197
    %v8538 = vadd.f32 %v7395, %v8202
    %v8539 = vadd.f32 %v7400, %v8207
    %v8540 = vadd.f32 %v7405, %v8212
    %v8541 = vadd.f32 %v7410, %v8217
    %v8542 = vadd.f32 %v7415, %v8222
    %v8543 = vadd.f32 %v7420, %v8227
    %v8544 = vadd.f32 %v7425, %v8232
    %v8545 = vadd.f32 %v7430, %v8237
    %v8546 = vadd.f32 %v7435, %v8242
    %v8547 = vadd.f32 %v7440, %v8247
    %v8548 = vadd.f32 %v7445, %v8252
    %v8549 = vadd.f32 %v7450, %v8257
    %v8550 = vadd.f32 %v7455, %v8262
    %v8551 = vadd.f32 %v7460, %v8267
    %v8552 = vadd.f32 %v7465, %v8272
    %v8553 = vadd.f32 %v7470, %v8277
    %v8554 = vadd.f32 %v7475, %v8282
    %v8555 = vadd.f32 %v7480, %v8287
    %v8556 = vadd.f32 %v7485, %v8292
    %v8557 = vadd.f32 %v7490, %v8297
    %v8558 = vadd.f32 %v7495, %v8302
    %v8559 = vadd.f32 %v7500, %v8307
    %v8560 = vadd.f32 %v7505, %v8312
    %v8561 = vadd.f32 %v7510, %v8317
    %v8562 = vadd.f32 %v7515, %v8322
    %v8563 = vadd.f32 %v7520, %v8327
    %v8564 = vadd.f32 %v7525, %v8332
    %v8565 = vadd.f32 %v7530, %v8337
    %v8566 = vadd.f32 %v7535, %v8342
    %v8567 = vadd.f32 %v7540, %v8347
    %v8568 = vadd.f32 %v7545, %v8352
    %v8569 = vadd.f32 %v7550, %v8357
    %v8570 = vadd.f32 %v7555, %v8362
    %v8571 = vadd.f32 %v7560, %v8367
    %v8572 = vadd.f32 %v7565, %v8372
    %v8573 = vadd.f32 %v7570, %v8377
    %v8574 = vadd.f32 %v7575, %v8382
    %v8575 = vadd.f32 %v7580, %v8387
    %v8576 = vadd.f32 %v7585, %v8392
    %v8577 = vadd.f32 %v7590, %v8397
    %v8578 = vadd.f32 %v7595, %v8402
    %v8579 = vadd.f32 %v7600, %v8407
    %v8580 = vadd.f32 %v7605, %v8412
    %v8581 = vadd.f32 %v7610, %v8417
    %v8582 = vadd.f32 %v7615, %v8422
    %v8583 = vadd.f32 %v7620, %v8427
    %v8584 = vadd.f32 %v7625, %v8432
    %v8585 = vadd.f32 %v7630, %v8437
    %v8586 = vadd.f32 %v7635, %v8442
    %v8587 = vadd.f32 %v7640, %v8447
    %v8588 = vadd.f32 %v7645, %v8452
    %v8589 = vadd.f32 %v7650, %v8457
    %v8590 = vadd.f32 %v7655, %v8462
    %v8591 = vadd.f32 %v7660, %v8467
    %v8592 = vadd.f32 %v7665, %v8472
    %v8593 = vadd.f32 %v7670, %v8477
    %v8594 = vadd.f32 %v7675, %v8482
    %v8595 = vadd.f32 %v7680, %v8487
    %v8596 = vadd.f32 %v7685, %v8492
    %v8597 = vadd.f32 %v7690, %v8497
    %v8598 = vadd.f32 %v7695, %v8502
    %v8599 = vadd.f32 %v7700, %v8507
    %v8600 = vadd.f32 %v7705, %v8512
    %v8601 = vadd.f32 %v7710, %v8517
    %v8602 = vld [vmem:[%s4] sm:$0x1]
    %v8604 = vlaneseq
    %v8605 = vshrl.u32 %v8604, 7
    %v8606 = vsub.s32 0, %v8605
    %v8607 = vrot.slane %v8602, %v8606
    %v8609 = vadd.f32 %v8520, %v8607
    %v8610 = vadd.f32 %v8521, %v8607
    %v8611 = vadd.f32 %v8522, %v8607
    %v8612 = vadd.f32 %v8523, %v8607
    %v8613 = vadd.f32 %v8524, %v8607
    %v8614 = vadd.f32 %v8525, %v8607
    %v8615 = vadd.f32 %v8526, %v8607
    %v8616 = vadd.f32 %v8527, %v8607
    %v8617 = vadd.f32 %v8528, %v8607
    %v8618 = vadd.f32 %v8529, %v8607
    %v8619 = vadd.f32 %v8530, %v8607
    %v8620 = vadd.f32 %v8531, %v8607
    %v8621 = vadd.f32 %v8532, %v8607
    %v8622 = vadd.f32 %v8533, %v8607
    %v8623 = vadd.f32 %v8534, %v8607
    %v8624 = vadd.f32 %v8535, %v8607
    %v8625 = vadd.f32 %v8536, %v8607
    %v8626 = vadd.f32 %v8537, %v8607
    %v8627 = vadd.f32 %v8538, %v8607
    %v8628 = vadd.f32 %v8539, %v8607
    %v8629 = vadd.f32 %v8540, %v8607
    %v8630 = vadd.f32 %v8541, %v8607
    %v8631 = vadd.f32 %v8542, %v8607
    %v8632 = vadd.f32 %v8543, %v8607
    %v8633 = vadd.f32 %v8544, %v8607
    %v8634 = vadd.f32 %v8545, %v8607
    %v8635 = vadd.f32 %v8546, %v8607
    %v8636 = vadd.f32 %v8547, %v8607
    %v8637 = vadd.f32 %v8548, %v8607
    %v8638 = vadd.f32 %v8549, %v8607
    %v8639 = vadd.f32 %v8550, %v8607
    %v8640 = vadd.f32 %v8551, %v8607
    %v8641 = vadd.f32 %v8552, %v8607
    %v8642 = vadd.f32 %v8553, %v8607
    %v8643 = vadd.f32 %v8554, %v8607
    %v8644 = vadd.f32 %v8555, %v8607
    %v8645 = vadd.f32 %v8556, %v8607
    %v8646 = vadd.f32 %v8557, %v8607
    %v8647 = vadd.f32 %v8558, %v8607
    %v8648 = vadd.f32 %v8559, %v8607
    %v8649 = vadd.f32 %v8560, %v8607
    %v8650 = vadd.f32 %v8561, %v8607
    %v8651 = vadd.f32 %v8562, %v8607
    %v8652 = vadd.f32 %v8563, %v8607
    %v8653 = vadd.f32 %v8564, %v8607
    %v8654 = vadd.f32 %v8565, %v8607
    %v8655 = vadd.f32 %v8566, %v8607
    %v8656 = vadd.f32 %v8567, %v8607
    %v8657 = vadd.f32 %v8568, %v8607
    %v8658 = vadd.f32 %v8569, %v8607
    %v8659 = vadd.f32 %v8570, %v8607
    %v8660 = vadd.f32 %v8571, %v8607
    %v8661 = vadd.f32 %v8572, %v8607
    %v8662 = vadd.f32 %v8573, %v8607
    %v8663 = vadd.f32 %v8574, %v8607
    %v8664 = vadd.f32 %v8575, %v8607
    %v8665 = vadd.f32 %v8576, %v8607
    %v8666 = vadd.f32 %v8577, %v8607
    %v8667 = vadd.f32 %v8578, %v8607
    %v8668 = vadd.f32 %v8579, %v8607
    %v8669 = vadd.f32 %v8580, %v8607
    %v8670 = vadd.f32 %v8581, %v8607
    %v8671 = vadd.f32 %v8582, %v8607
    %v8672 = vadd.f32 %v8583, %v8607
    %v8673 = vadd.f32 %v8584, %v8607
    %v8674 = vadd.f32 %v8585, %v8607
    %v8675 = vadd.f32 %v8586, %v8607
    %v8676 = vadd.f32 %v8587, %v8607
    %v8677 = vadd.f32 %v8588, %v8607
    %v8678 = vadd.f32 %v8589, %v8607
    %v8679 = vadd.f32 %v8590, %v8607
    %v8680 = vadd.f32 %v8591, %v8607
    %v8681 = vadd.f32 %v8592, %v8607
    %v8682 = vadd.f32 %v8593, %v8607
    %v8683 = vadd.f32 %v8594, %v8607
    %v8684 = vadd.f32 %v8595, %v8607
    %v8685 = vadd.f32 %v8596, %v8607
    %v8686 = vadd.f32 %v8597, %v8607
    %v8687 = vadd.f32 %v8598, %v8607
    %v8688 = vadd.f32 %v8599, %v8607
    %v8689 = vadd.f32 %v8600, %v8607
    %v8690 = vadd.f32 %v8601, %v8607
    %v8691 = vmax.f32 %v8609, 0.0
    %v8692 = vmax.f32 %v8610, 0.0
    %v8693 = vmax.f32 %v8611, 0.0
    %v8694 = vmax.f32 %v8612, 0.0
    %v8695 = vmax.f32 %v8613, 0.0
    %v8696 = vmax.f32 %v8614, 0.0
    %v8697 = vmax.f32 %v8615, 0.0
    %v8698 = vmax.f32 %v8616, 0.0
    %v8699 = vmax.f32 %v8617, 0.0
    %v8700 = vmax.f32 %v8618, 0.0
    %v8701 = vmax.f32 %v8619, 0.0
    %v8702 = vmax.f32 %v8620, 0.0
    %v8703 = vmax.f32 %v8621, 0.0
    %v8704 = vmax.f32 %v8622, 0.0
    %v8705 = vmax.f32 %v8623, 0.0
    %v8706 = vmax.f32 %v8624, 0.0
    %v8707 = vmax.f32 %v8625, 0.0
    %v8708 = vmax.f32 %v8626, 0.0
    %v8709 = vmax.f32 %v8627, 0.0
    %v8710 = vmax.f32 %v8628, 0.0
    %v8711 = vmax.f32 %v8629, 0.0
    %v8712 = vmax.f32 %v8630, 0.0
    %v8713 = vmax.f32 %v8631, 0.0
    %v8714 = vmax.f32 %v8632, 0.0
    %v8715 = vmax.f32 %v8633, 0.0
    %v8716 = vmax.f32 %v8634, 0.0
    %v8717 = vmax.f32 %v8635, 0.0
    %v8718 = vmax.f32 %v8636, 0.0
    %v8719 = vmax.f32 %v8637, 0.0
    %v8720 = vmax.f32 %v8638, 0.0
    %v8721 = vmax.f32 %v8639, 0.0
    %v8722 = vmax.f32 %v8640, 0.0
    %v8723 = vmax.f32 %v8641, 0.0
    %v8724 = vmax.f32 %v8642, 0.0
    %v8725 = vmax.f32 %v8643, 0.0
    %v8726 = vmax.f32 %v8644, 0.0
    %v8727 = vmax.f32 %v8645, 0.0
    %v8728 = vmax.f32 %v8646, 0.0
    %v8729 = vmax.f32 %v8647, 0.0
    %v8730 = vmax.f32 %v8648, 0.0
    %v8731 = vmax.f32 %v8649, 0.0
    %v8732 = vmax.f32 %v8650, 0.0
    %v8733 = vmax.f32 %v8651, 0.0
    %v8734 = vmax.f32 %v8652, 0.0
    %v8735 = vmax.f32 %v8653, 0.0
    %v8736 = vmax.f32 %v8654, 0.0
    %v8737 = vmax.f32 %v8655, 0.0
    %v8738 = vmax.f32 %v8656, 0.0
    %v8739 = vmax.f32 %v8657, 0.0
    %v8740 = vmax.f32 %v8658, 0.0
    %v8741 = vmax.f32 %v8659, 0.0
    %v8742 = vmax.f32 %v8660, 0.0
    %v8743 = vmax.f32 %v8661, 0.0
    %v8744 = vmax.f32 %v8662, 0.0
    %v8745 = vmax.f32 %v8663, 0.0
    %v8746 = vmax.f32 %v8664, 0.0
    %v8747 = vmax.f32 %v8665, 0.0
    %v8748 = vmax.f32 %v8666, 0.0
    %v8749 = vmax.f32 %v8667, 0.0
    %v8750 = vmax.f32 %v8668, 0.0
    %v8751 = vmax.f32 %v8669, 0.0
    %v8752 = vmax.f32 %v8670, 0.0
    %v8753 = vmax.f32 %v8671, 0.0
    %v8754 = vmax.f32 %v8672, 0.0
    %v8755 = vmax.f32 %v8673, 0.0
    %v8756 = vmax.f32 %v8674, 0.0
    %v8757 = vmax.f32 %v8675, 0.0
    %v8758 = vmax.f32 %v8676, 0.0
    %v8759 = vmax.f32 %v8677, 0.0
    %v8760 = vmax.f32 %v8678, 0.0
    %v8761 = vmax.f32 %v8679, 0.0
    %v8762 = vmax.f32 %v8680, 0.0
    %v8763 = vmax.f32 %v8681, 0.0
    %v8764 = vmax.f32 %v8682, 0.0
    %v8765 = vmax.f32 %v8683, 0.0
    %v8766 = vmax.f32 %v8684, 0.0
    %v8767 = vmax.f32 %v8685, 0.0
    %v8768 = vmax.f32 %v8686, 0.0
    %v8769 = vmax.f32 %v8687, 0.0
    %v8770 = vmax.f32 %v8688, 0.0
    %v8771 = vmax.f32 %v8689, 0.0
    %v8772 = vmax.f32 %v8690, 0.0
    %v8773 = vsel %vm4827, %v8691, 0.0
    %v8774 = vsel %vm4828, %v8692, 0.0
    %v8775 = vsel %vm4829, %v8693, 0.0
    %v8776 = vsel %vm4830, %v8694, 0.0
    %v8777 = vsel %vm4831, %v8695, 0.0
    %v8778 = vsel %vm4832, %v8696, 0.0
    %v8779 = vsel %vm4833, %v8697, 0.0
    %v8780 = vsel %vm4834, %v8698, 0.0
    %v8781 = vsel %vm4835, %v8699, 0.0
    %v8782 = vsel %vm4836, %v8700, 0.0
    %v8783 = vsel %vm4837, %v8701, 0.0
    %v8784 = vsel %vm4838, %v8702, 0.0
    %v8785 = vsel %vm4839, %v8703, 0.0
    %v8786 = vsel %vm4840, %v8704, 0.0
    %v8787 = vsel %vm4841, %v8705, 0.0
    %v8788 = vsel %vm4842, %v8706, 0.0
    %v8789 = vsel %vm4843, %v8707, 0.0
    %v8790 = vsel %vm4844, %v8708, 0.0
    %v8791 = vsel %vm4845, %v8709, 0.0
    %v8792 = vsel %vm4846, %v8710, 0.0
    %v8793 = vsel %vm4847, %v8711, 0.0
    %v8794 = vsel %vm4848, %v8712, 0.0
    %v8795 = vsel %vm4849, %v8713, 0.0
    %v8796 = vsel %vm4850, %v8714, 0.0
    %v8797 = vsel %vm4851, %v8715, 0.0
    %v8798 = vsel %vm4852, %v8716, 0.0
    %v8799 = vsel %vm4853, %v8717, 0.0
    %v8800 = vsel %vm4854, %v8718, 0.0
    %v8801 = vsel %vm4855, %v8719, 0.0
    %v8802 = vsel %vm4856, %v8720, 0.0
    %v8803 = vsel %vm4857, %v8721, 0.0
    %v8804 = vsel %vm4858, %v8722, 0.0
    %v8805 = vsel %vm4859, %v8723, 0.0
    %v8806 = vsel %vm4860, %v8724, 0.0
    %v8807 = vsel %vm4861, %v8725, 0.0
    %v8808 = vsel %vm4862, %v8726, 0.0
    %v8809 = vsel %vm4863, %v8727, 0.0
    %v8810 = vsel %vm4864, %v8728, 0.0
    %v8811 = vsel %vm4865, %v8729, 0.0
    %v8812 = vsel %vm4866, %v8730, 0.0
    %v8813 = vsel %vm4867, %v8731, 0.0
    %v8814 = vsel %vm4827, %v8732, 0.0
    %v8815 = vsel %vm4828, %v8733, 0.0
    %v8816 = vsel %vm4829, %v8734, 0.0
    %v8817 = vsel %vm4830, %v8735, 0.0
    %v8818 = vsel %vm4831, %v8736, 0.0
    %v8819 = vsel %vm4832, %v8737, 0.0
    %v8820 = vsel %vm4833, %v8738, 0.0
    %v8821 = vsel %vm4834, %v8739, 0.0
    %v8822 = vsel %vm4835, %v8740, 0.0
    %v8823 = vsel %vm4836, %v8741, 0.0
    %v8824 = vsel %vm4837, %v8742, 0.0
    %v8825 = vsel %vm4838, %v8743, 0.0
    %v8826 = vsel %vm4839, %v8744, 0.0
    %v8827 = vsel %vm4840, %v8745, 0.0
    %v8828 = vsel %vm4841, %v8746, 0.0
    %v8829 = vsel %vm4842, %v8747, 0.0
    %v8830 = vsel %vm4843, %v8748, 0.0
    %v8831 = vsel %vm4844, %v8749, 0.0
    %v8832 = vsel %vm4845, %v8750, 0.0
    %v8833 = vsel %vm4846, %v8751, 0.0
    %v8834 = vsel %vm4847, %v8752, 0.0
    %v8835 = vsel %vm4848, %v8753, 0.0
    %v8836 = vsel %vm4849, %v8754, 0.0
    %v8837 = vsel %vm4850, %v8755, 0.0
    %v8838 = vsel %vm4851, %v8756, 0.0
    %v8839 = vsel %vm4852, %v8757, 0.0
    %v8840 = vsel %vm4853, %v8758, 0.0
    %v8841 = vsel %vm4854, %v8759, 0.0
    %v8842 = vsel %vm4855, %v8760, 0.0
    %v8843 = vsel %vm4856, %v8761, 0.0
    %v8844 = vsel %vm4857, %v8762, 0.0
    %v8845 = vsel %vm4858, %v8763, 0.0
    %v8846 = vsel %vm4859, %v8764, 0.0
    %v8847 = vsel %vm4860, %v8765, 0.0
    %v8848 = vsel %vm4861, %v8766, 0.0
    %v8849 = vsel %vm4862, %v8767, 0.0
    %v8850 = vsel %vm4863, %v8768, 0.0
    %v8851 = vsel %vm4864, %v8769, 0.0
    %v8852 = vsel %vm4865, %v8770, 0.0
    %v8853 = vsel %vm4866, %v8771, 0.0
    %v8854 = vsel %vm4867, %v8772, 0.0
    %8855 = vst.msk [vmem:[#allocation4 + $0x18] sm:$0xff] %vm5934, %v8773
    %8856 = vst.msk [vmem:[#allocation4 + $0x20] sm:$0xff] %vm5934, %v8774
    %8857 = vst.msk [vmem:[#allocation4 + $0x28] sm:$0xff] %vm5934, %v8775
    %8858 = vst.msk [vmem:[#allocation4 + $0x30] sm:$0xff] %vm5934, %v8776
    %8859 = vst.msk [vmem:[#allocation4 + $0x38] sm:$0xff] %vm5934, %v8777
    %8860 = vst.msk [vmem:[#allocation4 + $0x40] sm:$0xff] %vm5934, %v8778
    %8861 = vst.msk [vmem:[#allocation4 + $0x48] sm:$0xff] %vm5934, %v8779
    %8862 = vst.msk [vmem:[#allocation4 + $0x50] sm:$0xff] %vm5934, %v8780
    %8863 = vst.msk [vmem:[#allocation4 + $0x58] sm:$0xff] %vm5934, %v8781
    %8864 = vst.msk [vmem:[#allocation4 + $0x60] sm:$0xff] %vm5934, %v8782
    %8865 = vst.msk [vmem:[#allocation4 + $0x68] sm:$0xff] %vm5934, %v8783
    %8866 = vst.msk [vmem:[#allocation4 + $0x70] sm:$0xff] %vm5934, %v8784
    %8867 = vst.msk [vmem:[#allocation4 + $0x78] sm:$0xff] %vm5934, %v8785
    %8868 = vst.msk [vmem:[#allocation4 + $0x80] sm:$0xff] %vm5934, %v8786
    %8869 = vst.msk [vmem:[#allocation4 + $0x88] sm:$0xff] %vm5934, %v8787
    %8870 = vst.msk [vmem:[#allocation4 + $0x90] sm:$0xff] %vm5934, %v8788
    %8871 = vst.msk [vmem:[#allocation4 + $0x98] sm:$0xff] %vm5934, %v8789
    %8872 = vst.msk [vmem:[#allocation4 + $0xa0] sm:$0xff] %vm5934, %v8790
    %8873 = vst.msk [vmem:[#allocation4 + $0xa8] sm:$0xff] %vm5934, %v8791
    %8874 = vst.msk [vmem:[#allocation4 + $0xb0] sm:$0xff] %vm5934, %v8792
    %8875 = vst.msk [vmem:[#allocation4 + $0xb8] sm:$0xff] %vm5934, %v8793
    %8876 = vst.msk [vmem:[#allocation4 + $0xc0] sm:$0xff] %vm5934, %v8794
    %8877 = vst.msk [vmem:[#allocation4 + $0xc8] sm:$0xff] %vm5934, %v8795
    %8878 = vst.msk [vmem:[#allocation4 + $0xd0] sm:$0xff] %vm5934, %v8796
    %8879 = vst.msk [vmem:[#allocation4 + $0xd8] sm:$0xff] %vm5934, %v8797
    %8880 = vst.msk [vmem:[#allocation4 + $0xe0] sm:$0xff] %vm5934, %v8798
    %8881 = vst.msk [vmem:[#allocation4 + $0xe8] sm:$0xff] %vm5934, %v8799
    %8882 = vst.msk [vmem:[#allocation4 + $0xf0] sm:$0xff] %vm5934, %v8800
    %8883 = vst.msk [vmem:[#allocation4 + $0xf8] sm:$0xff] %vm5934, %v8801
    %8884 = vst.msk [vmem:[#allocation4 + $0x100] sm:$0xff] %vm5934, %v8802
    %8885 = vst.msk [vmem:[#allocation4 + $0x108] sm:$0xff] %vm5934, %v8803
    %8886 = vst.msk [vmem:[#allocation4 + $0x110] sm:$0xff] %vm5934, %v8804
    %8887 = vst.msk [vmem:[#allocation4 + $0x118] sm:$0xff] %vm5934, %v8805
    %8888 = vst.msk [vmem:[#allocation4 + $0x120] sm:$0xff] %vm5934, %v8806
    %8889 = vst.msk [vmem:[#allocation4 + $0x128] sm:$0xff] %vm5934, %v8807
    %8890 = vst.msk [vmem:[#allocation4 + $0x130] sm:$0xff] %vm5934, %v8808
    %8891 = vst.msk [vmem:[#allocation4 + $0x138] sm:$0xff] %vm5934, %v8809
    %8892 = vst.msk [vmem:[#allocation4 + $0x140] sm:$0xff] %vm5934, %v8810
    %8893 = vst.msk [vmem:[#allocation4 + $0x148] sm:$0xff] %vm5934, %v8811
    %8894 = vst.msk [vmem:[#allocation4 + $0x150] sm:$0xff] %vm5934, %v8812
    %8895 = vst.msk [vmem:[#allocation4 + $0x158] sm:$0xff] %vm5934, %v8813
    %8896 = vst.msk [vmem:[#allocation4 + $0x160] sm:$0xff] %vm5934, %v8814
    %8897 = vst.msk [vmem:[#allocation4 + $0x168] sm:$0xff] %vm5934, %v8815
    %8898 = vst.msk [vmem:[#allocation4 + $0x170] sm:$0xff] %vm5934, %v8816
    %8899 = vst.msk [vmem:[#allocation4 + $0x178] sm:$0xff] %vm5934, %v8817
    %8900 = vst.msk [vmem:[#allocation4 + $0x180] sm:$0xff] %vm5934, %v8818
    %8901 = vst.msk [vmem:[#allocation4 + $0x188] sm:$0xff] %vm5934, %v8819
    %8902 = vst.msk [vmem:[#allocation4 + $0x190] sm:$0xff] %vm5934, %v8820
    %8903 = vst.msk [vmem:[#allocation4 + $0x198] sm:$0xff] %vm5934, %v8821
    %8904 = vst.msk [vmem:[#allocation4 + $0x1a0] sm:$0xff] %vm5934, %v8822
    %8905 = vst.msk [vmem:[#allocation4 + $0x1a8] sm:$0xff] %vm5934, %v8823
    %8906 = vst.msk [vmem:[#allocation4 + $0x1b0] sm:$0xff] %vm5934, %v8824
    %8907 = vst.msk [vmem:[#allocation4 + $0x1b8] sm:$0xff] %vm5934, %v8825
    %8908 = vst.msk [vmem:[#allocation4 + $0x1c0] sm:$0xff] %vm5934, %v8826
    %8909 = vst.msk [vmem:[#allocation4 + $0x1c8] sm:$0xff] %vm5934, %v8827
    %8910 = vst.msk [vmem:[#allocation4 + $0x1d0] sm:$0xff] %vm5934, %v8828
    %8911 = vst.msk [vmem:[#allocation4 + $0x1d8] sm:$0xff] %vm5934, %v8829
    %8912 = vst.msk [vmem:[#allocation4 + $0x1e0] sm:$0xff] %vm5934, %v8830
    %8913 = vst.msk [vmem:[#allocation4 + $0x1e8] sm:$0xff] %vm5934, %v8831
    %8914 = vst.msk [vmem:[#allocation4 + $0x1f0] sm:$0xff] %vm5934, %v8832
    %8915 = vst.msk [vmem:[#allocation4 + $0x1f8] sm:$0xff] %vm5934, %v8833
    %8916 = vst.msk [vmem:[#allocation4 + $0x200] sm:$0xff] %vm5934, %v8834
    %8917 = vst.msk [vmem:[#allocation4 + $0x208] sm:$0xff] %vm5934, %v8835
    %8918 = vst.msk [vmem:[#allocation4 + $0x210] sm:$0xff] %vm5934, %v8836
    %8919 = vst.msk [vmem:[#allocation4 + $0x218] sm:$0xff] %vm5934, %v8837
    %8920 = vst.msk [vmem:[#allocation4 + $0x220] sm:$0xff] %vm5934, %v8838
    %8921 = vst.msk [vmem:[#allocation4 + $0x228] sm:$0xff] %vm5934, %v8839
    %8922 = vst.msk [vmem:[#allocation4 + $0x230] sm:$0xff] %vm5934, %v8840
    %8923 = vst.msk [vmem:[#allocation4 + $0x238] sm:$0xff] %vm5934, %v8841
    %8924 = vst.msk [vmem:[#allocation4 + $0x240] sm:$0xff] %vm5934, %v8842
    %8925 = vst.msk [vmem:[#allocation4 + $0x248] sm:$0xff] %vm5934, %v8843
    %8926 = vst.msk [vmem:[#allocation4 + $0x250] sm:$0xff] %vm5934, %v8844
    %8927 = vst.msk [vmem:[#allocation4 + $0x258] sm:$0xff] %vm5934, %v8845
    %8928 = vst.msk [vmem:[#allocation4 + $0x260] sm:$0xff] %vm5934, %v8846
    %8929 = vst.msk [vmem:[#allocation4 + $0x268] sm:$0xff] %vm5934, %v8847
    %8930 = vst.msk [vmem:[#allocation4 + $0x270] sm:$0xff] %vm5934, %v8848
    %8931 = vst.msk [vmem:[#allocation4 + $0x278] sm:$0xff] %vm5934, %v8849
    %8932 = vst.msk [vmem:[#allocation4 + $0x280] sm:$0xff] %vm5934, %v8850
    %8933 = vst.msk [vmem:[#allocation4 + $0x288] sm:$0xff] %vm5934, %v8851
    %8934 = vst.msk [vmem:[#allocation4 + $0x290] sm:$0xff] %vm5934, %v8852
    %8935 = vst.msk [vmem:[#allocation4 + $0x298] sm:$0xff] %vm5934, %v8853
    %8936 = vst.msk [vmem:[#allocation4 + $0x2a0] sm:$0xff] %vm5934, %v8854
    %v8937 = vld [vmem:[#allocation4 + $0x17] sm:$0xff]
    %v8938 = vld [vmem:[#allocation4 + $0x1f] sm:$0xff]
    %v8939 = vld [vmem:[#allocation4 + $0x27] sm:$0xff]
    %v8940 = vld [vmem:[#allocation4 + $0x2f] sm:$0xff]
    %v8941 = vld [vmem:[#allocation4 + $0x37] sm:$0xff]
    %v8942 = vld [vmem:[#allocation4 + $0x3f] sm:$0xff]
    %v8943 = vld [vmem:[#allocation4 + $0x47] sm:$0xff]
    %v8944 = vld [vmem:[#allocation4 + $0x4f] sm:$0xff]
    %v8945 = vld [vmem:[#allocation4 + $0x57] sm:$0xff]
    %v8946 = vld [vmem:[#allocation4 + $0x5f] sm:$0xff]
    %v8947 = vld [vmem:[#allocation4 + $0x67] sm:$0xff]
    %v8948 = vld [vmem:[#allocation4 + $0x6f] sm:$0xff]
    %v8949 = vld [vmem:[#allocation4 + $0x77] sm:$0xff]
    %v8950 = vld [vmem:[#allocation4 + $0x7f] sm:$0xff]
    %v8951 = vld [vmem:[#allocation4 + $0x87] sm:$0xff]
    %v8952 = vld [vmem:[#allocation4 + $0x8f] sm:$0xff]
    %v8953 = vld [vmem:[#allocation4 + $0x97] sm:$0xff]
    %v8954 = vld [vmem:[#allocation4 + $0x9f] sm:$0xff]
    %v8955 = vld [vmem:[#allocation4 + $0xa7] sm:$0xff]
    %v8956 = vld [vmem:[#allocation4 + $0xaf] sm:$0xff]
    %v8957 = vld [vmem:[#allocation4 + $0xb7] sm:$0xff]
    %v8958 = vld [vmem:[#allocation4 + $0xbf] sm:$0xff]
    %v8959 = vld [vmem:[#allocation4 + $0xc7] sm:$0xff]
    %v8960 = vld [vmem:[#allocation4 + $0xcf] sm:$0xff]
    %v8961 = vld [vmem:[#allocation4 + $0xd7] sm:$0xff]
    %v8962 = vld [vmem:[#allocation4 + $0xdf] sm:$0xff]
    %v8963 = vld [vmem:[#allocation4 + $0xe7] sm:$0xff]
    %v8964 = vld [vmem:[#allocation4 + $0xef] sm:$0xff]
    %v8965 = vld [vmem:[#allocation4 + $0xf7] sm:$0xff]
    %v8966 = vld [vmem:[#allocation4 + $0xff] sm:$0xff]
    %v8967 = vld [vmem:[#allocation4 + $0x107] sm:$0xff]
    %v8968 = vld [vmem:[#allocation4 + $0x10f] sm:$0xff]
    %v8969 = vld [vmem:[#allocation4 + $0x117] sm:$0xff]
    %v8970 = vld [vmem:[#allocation4 + $0x11f] sm:$0xff]
    %v8971 = vld [vmem:[#allocation4 + $0x127] sm:$0xff]
    %v8972 = vld [vmem:[#allocation4 + $0x12f] sm:$0xff]
    %v8973 = vld [vmem:[#allocation4 + $0x137] sm:$0xff]
    %v8974 = vld [vmem:[#allocation4 + $0x13f] sm:$0xff]
    %v8975 = vld [vmem:[#allocation4 + $0x147] sm:$0xff]
    %v8976 = vld [vmem:[#allocation4 + $0x14f] sm:$0xff]
    %v8977 = vld [vmem:[#allocation4 + $0x157] sm:$0xff]
    %v8978 = vld [vmem:[#allocation4 + $0x15f] sm:$0xff]
    %v8979 = vld [vmem:[#allocation4 + $0x167] sm:$0xff]
    %v8980 = vld [vmem:[#allocation4 + $0x16f] sm:$0xff]
    %v8981 = vld [vmem:[#allocation4 + $0x177] sm:$0xff]
    %v8982 = vld [vmem:[#allocation4 + $0x17f] sm:$0xff]
    %v8983 = vld [vmem:[#allocation4 + $0x187] sm:$0xff]
    %v8984 = vld [vmem:[#allocation4 + $0x18f] sm:$0xff]
    %v8985 = vld [vmem:[#allocation4 + $0x197] sm:$0xff]
    %v8986 = vld [vmem:[#allocation4 + $0x19f] sm:$0xff]
    %v8987 = vld [vmem:[#allocation4 + $0x1a7] sm:$0xff]
    %v8988 = vld [vmem:[#allocation4 + $0x1af] sm:$0xff]
    %v8989 = vld [vmem:[#allocation4 + $0x1b7] sm:$0xff]
    %v8990 = vld [vmem:[#allocation4 + $0x1bf] sm:$0xff]
    %v8991 = vld [vmem:[#allocation4 + $0x1c7] sm:$0xff]
    %v8992 = vld [vmem:[#allocation4 + $0x1cf] sm:$0xff]
    %v8993 = vld [vmem:[#allocation4 + $0x1d7] sm:$0xff]
    %v8994 = vld [vmem:[#allocation4 + $0x1df] sm:$0xff]
    %v8995 = vld [vmem:[#allocation4 + $0x1e7] sm:$0xff]
    %v8996 = vld [vmem:[#allocation4 + $0x1ef] sm:$0xff]
    %v8997 = vld [vmem:[#allocation4 + $0x1f7] sm:$0xff]
    %v8998 = vld [vmem:[#allocation4 + $0x1ff] sm:$0xff]
    %v8999 = vld [vmem:[#allocation4 + $0x207] sm:$0xff]
    %v9000 = vld [vmem:[#allocation4 + $0x20f] sm:$0xff]
    %v9001 = vld [vmem:[#allocation4 + $0x217] sm:$0xff]
    %v9002 = vld [vmem:[#allocation4 + $0x21f] sm:$0xff]
    %v9003 = vld [vmem:[#allocation4 + $0x227] sm:$0xff]
    %v9004 = vld [vmem:[#allocation4 + $0x22f] sm:$0xff]
    %v9005 = vld [vmem:[#allocation4 + $0x237] sm:$0xff]
    %v9006 = vld [vmem:[#allocation4 + $0x23f] sm:$0xff]
    %v9007 = vld [vmem:[#allocation4 + $0x247] sm:$0xff]
    %v9008 = vld [vmem:[#allocation4 + $0x24f] sm:$0xff]
    %v9009 = vld [vmem:[#allocation4 + $0x257] sm:$0xff]
    %v9010 = vld [vmem:[#allocation4 + $0x25f] sm:$0xff]
    %v9011 = vld [vmem:[#allocation4 + $0x267] sm:$0xff]
    %v9012 = vld [vmem:[#allocation4 + $0x26f] sm:$0xff]
    %v9013 = vld [vmem:[#allocation4 + $0x277] sm:$0xff]
    %v9014 = vld [vmem:[#allocation4 + $0x27f] sm:$0xff]
    %v9015 = vld [vmem:[#allocation4 + $0x287] sm:$0xff]
    %v9016 = vld [vmem:[#allocation4 + $0x28f] sm:$0xff]
    %v9017 = vld [vmem:[#allocation4 + $0x297] sm:$0xff]
    %v9018 = vld [vmem:[#allocation4 + $0x29f] sm:$0xff]
    %v9019 = vld [vmem:[#allocation4 + $0x19] sm:$0xff]
    %v9020 = vld [vmem:[#allocation4 + $0x21] sm:$0xff]
    %v9021 = vld [vmem:[#allocation4 + $0x29] sm:$0xff]
    %v9022 = vld [vmem:[#allocation4 + $0x31] sm:$0xff]
    %v9023 = vld [vmem:[#allocation4 + $0x39] sm:$0xff]
    %v9024 = vld [vmem:[#allocation4 + $0x41] sm:$0xff]
    %v9025 = vld [vmem:[#allocation4 + $0x49] sm:$0xff]
    %v9026 = vld [vmem:[#allocation4 + $0x51] sm:$0xff]
    %v9027 = vld [vmem:[#allocation4 + $0x59] sm:$0xff]
    %v9028 = vld [vmem:[#allocation4 + $0x61] sm:$0xff]
    %v9029 = vld [vmem:[#allocation4 + $0x69] sm:$0xff]
    %v9030 = vld [vmem:[#allocation4 + $0x71] sm:$0xff]
    %v9031 = vld [vmem:[#allocation4 + $0x79] sm:$0xff]
    %v9032 = vld [vmem:[#allocation4 + $0x81] sm:$0xff]
    %v9033 = vld [vmem:[#allocation4 + $0x89] sm:$0xff]
    %v9034 = vld [vmem:[#allocation4 + $0x91] sm:$0xff]
    %v9035 = vld [vmem:[#allocation4 + $0x99] sm:$0xff]
    %v9036 = vld [vmem:[#allocation4 + $0xa1] sm:$0xff]
    %v9037 = vld [vmem:[#allocation4 + $0xa9] sm:$0xff]
    %v9038 = vld [vmem:[#allocation4 + $0xb1] sm:$0xff]
    %v9039 = vld [vmem:[#allocation4 + $0xb9] sm:$0xff]
    %v9040 = vld [vmem:[#allocation4 + $0xc1] sm:$0xff]
    %v9041 = vld [vmem:[#allocation4 + $0xc9] sm:$0xff]
    %v9042 = vld [vmem:[#allocation4 + $0xd1] sm:$0xff]
    %v9043 = vld [vmem:[#allocation4 + $0xd9] sm:$0xff]
    %v9044 = vld [vmem:[#allocation4 + $0xe1] sm:$0xff]
    %v9045 = vld [vmem:[#allocation4 + $0xe9] sm:$0xff]
    %v9046 = vld [vmem:[#allocation4 + $0xf1] sm:$0xff]
    %v9047 = vld [vmem:[#allocation4 + $0xf9] sm:$0xff]
    %v9048 = vld [vmem:[#allocation4 + $0x101] sm:$0xff]
    %v9049 = vld [vmem:[#allocation4 + $0x109] sm:$0xff]
    %v9050 = vld [vmem:[#allocation4 + $0x111] sm:$0xff]
    %v9051 = vld [vmem:[#allocation4 + $0x119] sm:$0xff]
    %v9052 = vld [vmem:[#allocation4 + $0x121] sm:$0xff]
    %v9053 = vld [vmem:[#allocation4 + $0x129] sm:$0xff]
    %v9054 = vld [vmem:[#allocation4 + $0x131] sm:$0xff]
    %v9055 = vld [vmem:[#allocation4 + $0x139] sm:$0xff]
    %v9056 = vld [vmem:[#allocation4 + $0x141] sm:$0xff]
    %v9057 = vld [vmem:[#allocation4 + $0x149] sm:$0xff]
    %v9058 = vld [vmem:[#allocation4 + $0x151] sm:$0xff]
    %v9059 = vld [vmem:[#allocation4 + $0x159] sm:$0xff]
    %v9060 = vld [vmem:[#allocation4 + $0x161] sm:$0xff]
    %v9061 = vld [vmem:[#allocation4 + $0x169] sm:$0xff]
    %v9062 = vld [vmem:[#allocation4 + $0x171] sm:$0xff]
    %v9063 = vld [vmem:[#allocation4 + $0x179] sm:$0xff]
    %v9064 = vld [vmem:[#allocation4 + $0x181] sm:$0xff]
    %v9065 = vld [vmem:[#allocation4 + $0x189] sm:$0xff]
    %v9066 = vld [vmem:[#allocation4 + $0x191] sm:$0xff]
    %v9067 = vld [vmem:[#allocation4 + $0x199] sm:$0xff]
    %v9068 = vld [vmem:[#allocation4 + $0x1a1] sm:$0xff]
    %v9069 = vld [vmem:[#allocation4 + $0x1a9] sm:$0xff]
    %v9070 = vld [vmem:[#allocation4 + $0x1b1] sm:$0xff]
    %v9071 = vld [vmem:[#allocation4 + $0x1b9] sm:$0xff]
    %v9072 = vld [vmem:[#allocation4 + $0x1c1] sm:$0xff]
    %v9073 = vld [vmem:[#allocation4 + $0x1c9] sm:$0xff]
    %v9074 = vld [vmem:[#allocation4 + $0x1d1] sm:$0xff]
    %v9075 = vld [vmem:[#allocation4 + $0x1d9] sm:$0xff]
    %v9076 = vld [vmem:[#allocation4 + $0x1e1] sm:$0xff]
    %v9077 = vld [vmem:[#allocation4 + $0x1e9] sm:$0xff]
    %v9078 = vld [vmem:[#allocation4 + $0x1f1] sm:$0xff]
    %v9079 = vld [vmem:[#allocation4 + $0x1f9] sm:$0xff]
    %v9080 = vld [vmem:[#allocation4 + $0x201] sm:$0xff]
    %v9081 = vld [vmem:[#allocation4 + $0x209] sm:$0xff]
    %v9082 = vld [vmem:[#allocation4 + $0x211] sm:$0xff]
    %v9083 = vld [vmem:[#allocation4 + $0x219] sm:$0xff]
    %v9084 = vld [vmem:[#allocation4 + $0x221] sm:$0xff]
    %v9085 = vld [vmem:[#allocation4 + $0x229] sm:$0xff]
    %v9086 = vld [vmem:[#allocation4 + $0x231] sm:$0xff]
    %v9087 = vld [vmem:[#allocation4 + $0x239] sm:$0xff]
    %v9088 = vld [vmem:[#allocation4 + $0x241] sm:$0xff]
    %v9089 = vld [vmem:[#allocation4 + $0x249] sm:$0xff]
    %v9090 = vld [vmem:[#allocation4 + $0x251] sm:$0xff]
    %v9091 = vld [vmem:[#allocation4 + $0x259] sm:$0xff]
    %v9092 = vld [vmem:[#allocation4 + $0x261] sm:$0xff]
    %v9093 = vld [vmem:[#allocation4 + $0x269] sm:$0xff]
    %v9094 = vld [vmem:[#allocation4 + $0x271] sm:$0xff]
    %v9095 = vld [vmem:[#allocation4 + $0x279] sm:$0xff]
    %v9096 = vld [vmem:[#allocation4 + $0x281] sm:$0xff]
    %v9097 = vld [vmem:[#allocation4 + $0x289] sm:$0xff]
    %v9098 = vld [vmem:[#allocation4 + $0x291] sm:$0xff]
    %v9099 = vld [vmem:[#allocation4 + $0x299] sm:$0xff]
    %v9100 = vld [vmem:[#allocation4 + $0x2a1] sm:$0xff]
    %9183 = vrot.lane.b32.xlu0 %v8937, 16
    %v9184 = vpop.permute.xlu0 %9183
    %9185 = vrot.lane.b32.xlu0 %v8938, 16
    %v9186 = vpop.permute.xlu0 %9185
    %9187 = vrot.lane.b32.xlu0 %v8939, 16
    %v9188 = vpop.permute.xlu0 %9187
    %9189 = vrot.lane.b32.xlu0 %v8940, 16
    %v9190 = vpop.permute.xlu0 %9189
    %9191 = vrot.lane.b32.xlu0 %v8941, 16
    %v9192 = vpop.permute.xlu0 %9191
    %9193 = vrot.lane.b32.xlu0 %v8942, 16
    %v9194 = vpop.permute.xlu0 %9193
    %9195 = vrot.lane.b32.xlu0 %v8943, 16
    %v9196 = vpop.permute.xlu0 %9195
    %9197 = vrot.lane.b32.xlu0 %v8944, 16
    %v9198 = vpop.permute.xlu0 %9197
    %9199 = vrot.lane.b32.xlu0 %v8945, 16
    %v9200 = vpop.permute.xlu0 %9199
    %9201 = vrot.lane.b32.xlu0 %v8946, 16
    %v9202 = vpop.permute.xlu0 %9201
    %9203 = vrot.lane.b32.xlu0 %v8947, 16
    %v9204 = vpop.permute.xlu0 %9203
    %9205 = vrot.lane.b32.xlu0 %v8948, 16
    %v9206 = vpop.permute.xlu0 %9205
    %9207 = vrot.lane.b32.xlu0 %v8949, 16
    %v9208 = vpop.permute.xlu0 %9207
    %9209 = vrot.lane.b32.xlu0 %v8950, 16
    %v9210 = vpop.permute.xlu0 %9209
    %9211 = vrot.lane.b32.xlu0 %v8951, 16
    %v9212 = vpop.permute.xlu0 %9211
    %9213 = vrot.lane.b32.xlu0 %v8952, 16
    %v9214 = vpop.permute.xlu0 %9213
    %9215 = vrot.lane.b32.xlu0 %v8953, 16
    %v9216 = vpop.permute.xlu0 %9215
    %9217 = vrot.lane.b32.xlu0 %v8954, 16
    %v9218 = vpop.permute.xlu0 %9217
    %9219 = vrot.lane.b32.xlu0 %v8955, 16
    %v9220 = vpop.permute.xlu0 %9219
    %9221 = vrot.lane.b32.xlu0 %v8956, 16
    %v9222 = vpop.permute.xlu0 %9221
    %9223 = vrot.lane.b32.xlu0 %v8957, 16
    %v9224 = vpop.permute.xlu0 %9223
    %9225 = vrot.lane.b32.xlu0 %v8958, 16
    %v9226 = vpop.permute.xlu0 %9225
    %9227 = vrot.lane.b32.xlu0 %v8959, 16
    %v9228 = vpop.permute.xlu0 %9227
    %9229 = vrot.lane.b32.xlu0 %v8960, 16
    %v9230 = vpop.permute.xlu0 %9229
    %9231 = vrot.lane.b32.xlu0 %v8961, 16
    %v9232 = vpop.permute.xlu0 %9231
    %9233 = vrot.lane.b32.xlu0 %v8962, 16
    %v9234 = vpop.permute.xlu0 %9233
    %9235 = vrot.lane.b32.xlu0 %v8963, 16
    %v9236 = vpop.permute.xlu0 %9235
    %9237 = vrot.lane.b32.xlu0 %v8964, 16
    %v9238 = vpop.permute.xlu0 %9237
    %9239 = vrot.lane.b32.xlu0 %v8965, 16
    %v9240 = vpop.permute.xlu0 %9239
    %9241 = vrot.lane.b32.xlu0 %v8966, 16
    %v9242 = vpop.permute.xlu0 %9241
    %9243 = vrot.lane.b32.xlu0 %v8967, 16
    %v9244 = vpop.permute.xlu0 %9243
    %9245 = vrot.lane.b32.xlu0 %v8968, 16
    %v9246 = vpop.permute.xlu0 %9245
    %9247 = vrot.lane.b32.xlu0 %v8969, 16
    %v9248 = vpop.permute.xlu0 %9247
    %9249 = vrot.lane.b32.xlu0 %v8970, 16
    %v9250 = vpop.permute.xlu0 %9249
    %9251 = vrot.lane.b32.xlu0 %v8971, 16
    %v9252 = vpop.permute.xlu0 %9251
    %9253 = vrot.lane.b32.xlu0 %v8972, 16
    %v9254 = vpop.permute.xlu0 %9253
    %9255 = vrot.lane.b32.xlu0 %v8973, 16
    %v9256 = vpop.permute.xlu0 %9255
    %9257 = vrot.lane.b32.xlu0 %v8974, 16
    %v9258 = vpop.permute.xlu0 %9257
    %9259 = vrot.lane.b32.xlu0 %v8975, 16
    %v9260 = vpop.permute.xlu0 %9259
    %9261 = vrot.lane.b32.xlu0 %v8976, 16
    %v9262 = vpop.permute.xlu0 %9261
    %9263 = vrot.lane.b32.xlu0 %v8977, 16
    %v9264 = vpop.permute.xlu0 %9263
    %9265 = vrot.lane.b32.xlu0 %v8978, 16
    %v9266 = vpop.permute.xlu0 %9265
    %9267 = vrot.lane.b32.xlu0 %v8979, 16
    %v9268 = vpop.permute.xlu0 %9267
    %9269 = vrot.lane.b32.xlu0 %v8980, 16
    %v9270 = vpop.permute.xlu0 %9269
    %9271 = vrot.lane.b32.xlu0 %v8981, 16
    %v9272 = vpop.permute.xlu0 %9271
    %9273 = vrot.lane.b32.xlu0 %v8982, 16
    %v9274 = vpop.permute.xlu0 %9273
    %9275 = vrot.lane.b32.xlu0 %v8983, 16
    %v9276 = vpop.permute.xlu0 %9275
    %9277 = vrot.lane.b32.xlu0 %v8984, 16
    %v9278 = vpop.permute.xlu0 %9277
    %9279 = vrot.lane.b32.xlu0 %v8985, 16
    %v9280 = vpop.permute.xlu0 %9279
    %9281 = vrot.lane.b32.xlu0 %v8986, 16
    %v9282 = vpop.permute.xlu0 %9281
    %9283 = vrot.lane.b32.xlu0 %v8987, 16
    %v9284 = vpop.permute.xlu0 %9283
    %9285 = vrot.lane.b32.xlu0 %v8988, 16
    %v9286 = vpop.permute.xlu0 %9285
    %9287 = vrot.lane.b32.xlu0 %v8989, 16
    %v9288 = vpop.permute.xlu0 %9287
    %9289 = vrot.lane.b32.xlu0 %v8990, 16
    %v9290 = vpop.permute.xlu0 %9289
    %9291 = vrot.lane.b32.xlu0 %v8991, 16
    %v9292 = vpop.permute.xlu0 %9291
    %9293 = vrot.lane.b32.xlu0 %v8992, 16
    %v9294 = vpop.permute.xlu0 %9293
    %9295 = vrot.lane.b32.xlu0 %v8993, 16
    %v9296 = vpop.permute.xlu0 %9295
    %9297 = vrot.lane.b32.xlu0 %v8994, 16
    %v9298 = vpop.permute.xlu0 %9297
    %9299 = vrot.lane.b32.xlu0 %v8995, 16
    %v9300 = vpop.permute.xlu0 %9299
    %9301 = vrot.lane.b32.xlu0 %v8996, 16
    %v9302 = vpop.permute.xlu0 %9301
    %9303 = vrot.lane.b32.xlu0 %v8997, 16
    %v9304 = vpop.permute.xlu0 %9303
    %9305 = vrot.lane.b32.xlu0 %v8998, 16
    %v9306 = vpop.permute.xlu0 %9305
    %9307 = vrot.lane.b32.xlu0 %v8999, 16
    %v9308 = vpop.permute.xlu0 %9307
    %9309 = vrot.lane.b32.xlu0 %v9000, 16
    %v9310 = vpop.permute.xlu0 %9309
    %9311 = vrot.lane.b32.xlu0 %v9001, 16
    %v9312 = vpop.permute.xlu0 %9311
    %9313 = vrot.lane.b32.xlu0 %v9002, 16
    %v9314 = vpop.permute.xlu0 %9313
    %9315 = vrot.lane.b32.xlu0 %v9003, 16
    %v9316 = vpop.permute.xlu0 %9315
    %9317 = vrot.lane.b32.xlu0 %v9004, 16
    %v9318 = vpop.permute.xlu0 %9317
    %9319 = vrot.lane.b32.xlu0 %v9005, 16
    %v9320 = vpop.permute.xlu0 %9319
    %9321 = vrot.lane.b32.xlu0 %v9006, 16
    %v9322 = vpop.permute.xlu0 %9321
    %9323 = vrot.lane.b32.xlu0 %v9007, 16
    %v9324 = vpop.permute.xlu0 %9323
    %9325 = vrot.lane.b32.xlu0 %v9008, 16
    %v9326 = vpop.permute.xlu0 %9325
    %9327 = vrot.lane.b32.xlu0 %v9009, 16
    %v9328 = vpop.permute.xlu0 %9327
    %9329 = vrot.lane.b32.xlu0 %v9010, 16
    %v9330 = vpop.permute.xlu0 %9329
    %9331 = vrot.lane.b32.xlu0 %v9011, 16
    %v9332 = vpop.permute.xlu0 %9331
    %9333 = vrot.lane.b32.xlu0 %v9012, 16
    %v9334 = vpop.permute.xlu0 %9333
    %9335 = vrot.lane.b32.xlu0 %v9013, 16
    %v9336 = vpop.permute.xlu0 %9335
    %9337 = vrot.lane.b32.xlu0 %v9014, 16
    %v9338 = vpop.permute.xlu0 %9337
    %9339 = vrot.lane.b32.xlu0 %v9015, 16
    %v9340 = vpop.permute.xlu0 %9339
    %9341 = vrot.lane.b32.xlu0 %v9016, 16
    %v9342 = vpop.permute.xlu0 %9341
    %9343 = vrot.lane.b32.xlu0 %v9017, 16
    %v9344 = vpop.permute.xlu0 %9343
    %9345 = vrot.lane.b32.xlu0 %v9018, 16
    %v9346 = vpop.permute.xlu0 %9345
    %9511 = vrot.lane.b32.xlu0 %v9019, 32
    %v9512 = vpop.permute.xlu0 %9511
    %9513 = vrot.lane.b32.xlu0 %v9020, 32
    %v9514 = vpop.permute.xlu0 %9513
    %9515 = vrot.lane.b32.xlu0 %v9021, 32
    %v9516 = vpop.permute.xlu0 %9515
    %9517 = vrot.lane.b32.xlu0 %v9022, 32
    %v9518 = vpop.permute.xlu0 %9517
    %9519 = vrot.lane.b32.xlu0 %v9023, 32
    %v9520 = vpop.permute.xlu0 %9519
    %9521 = vrot.lane.b32.xlu0 %v9024, 32
    %v9522 = vpop.permute.xlu0 %9521
    %9523 = vrot.lane.b32.xlu0 %v9025, 32
    %v9524 = vpop.permute.xlu0 %9523
    %9525 = vrot.lane.b32.xlu0 %v9026, 32
    %v9526 = vpop.permute.xlu0 %9525
    %9527 = vrot.lane.b32.xlu0 %v9027, 32
    %v9528 = vpop.permute.xlu0 %9527
    %9529 = vrot.lane.b32.xlu0 %v9028, 32
    %v9530 = vpop.permute.xlu0 %9529
    %9531 = vrot.lane.b32.xlu0 %v9029, 32
    %v9532 = vpop.permute.xlu0 %9531
    %9533 = vrot.lane.b32.xlu0 %v9030, 32
    %v9534 = vpop.permute.xlu0 %9533
    %9535 = vrot.lane.b32.xlu0 %v9031, 32
    %v9536 = vpop.permute.xlu0 %9535
    %9537 = vrot.lane.b32.xlu0 %v9032, 32
    %v9538 = vpop.permute.xlu0 %9537
    %9539 = vrot.lane.b32.xlu0 %v9033, 32
    %v9540 = vpop.permute.xlu0 %9539
    %9541 = vrot.lane.b32.xlu0 %v9034, 32
    %v9542 = vpop.permute.xlu0 %9541
    %9543 = vrot.lane.b32.xlu0 %v9035, 32
    %v9544 = vpop.permute.xlu0 %9543
    %9545 = vrot.lane.b32.xlu0 %v9036, 32
    %v9546 = vpop.permute.xlu0 %9545
    %9547 = vrot.lane.b32.xlu0 %v9037, 32
    %v9548 = vpop.permute.xlu0 %9547
    %9549 = vrot.lane.b32.xlu0 %v9038, 32
    %v9550 = vpop.permute.xlu0 %9549
    %9551 = vrot.lane.b32.xlu0 %v9039, 32
    %v9552 = vpop.permute.xlu0 %9551
    %9553 = vrot.lane.b32.xlu0 %v9040, 32
    %v9554 = vpop.permute.xlu0 %9553
    %9555 = vrot.lane.b32.xlu0 %v9041, 32
    %v9556 = vpop.permute.xlu0 %9555
    %9557 = vrot.lane.b32.xlu0 %v9042, 32
    %v9558 = vpop.permute.xlu0 %9557
    %9559 = vrot.lane.b32.xlu0 %v9043, 32
    %v9560 = vpop.permute.xlu0 %9559
    %9561 = vrot.lane.b32.xlu0 %v9044, 32
    %v9562 = vpop.permute.xlu0 %9561
    %9563 = vrot.lane.b32.xlu0 %v9045, 32
    %v9564 = vpop.permute.xlu0 %9563
    %9565 = vrot.lane.b32.xlu0 %v9046, 32
    %v9566 = vpop.permute.xlu0 %9565
    %9567 = vrot.lane.b32.xlu0 %v9047, 32
    %v9568 = vpop.permute.xlu0 %9567
    %9569 = vrot.lane.b32.xlu0 %v9048, 32
    %v9570 = vpop.permute.xlu0 %9569
    %9571 = vrot.lane.b32.xlu0 %v9049, 32
    %v9572 = vpop.permute.xlu0 %9571
    %9573 = vrot.lane.b32.xlu0 %v9050, 32
    %v9574 = vpop.permute.xlu0 %9573
    %9575 = vrot.lane.b32.xlu0 %v9051, 32
    %v9576 = vpop.permute.xlu0 %9575
    %9577 = vrot.lane.b32.xlu0 %v9052, 32
    %v9578 = vpop.permute.xlu0 %9577
    %9579 = vrot.lane.b32.xlu0 %v9053, 32
    %v9580 = vpop.permute.xlu0 %9579
    %9581 = vrot.lane.b32.xlu0 %v9054, 32
    %v9582 = vpop.permute.xlu0 %9581
    %9583 = vrot.lane.b32.xlu0 %v9055, 32
    %v9584 = vpop.permute.xlu0 %9583
    %9585 = vrot.lane.b32.xlu0 %v9056, 32
    %v9586 = vpop.permute.xlu0 %9585
    %9587 = vrot.lane.b32.xlu0 %v9057, 32
    %v9588 = vpop.permute.xlu0 %9587
    %9589 = vrot.lane.b32.xlu0 %v9058, 32
    %v9590 = vpop.permute.xlu0 %9589
    %9591 = vrot.lane.b32.xlu0 %v9059, 32
    %v9592 = vpop.permute.xlu0 %9591
    %9593 = vrot.lane.b32.xlu0 %v9060, 32
    %v9594 = vpop.permute.xlu0 %9593
    %9595 = vrot.lane.b32.xlu0 %v9061, 32
    %v9596 = vpop.permute.xlu0 %9595
    %9597 = vrot.lane.b32.xlu0 %v9062, 32
    %v9598 = vpop.permute.xlu0 %9597
    %9599 = vrot.lane.b32.xlu0 %v9063, 32
    %v9600 = vpop.permute.xlu0 %9599
    %9601 = vrot.lane.b32.xlu0 %v9064, 32
    %v9602 = vpop.permute.xlu0 %9601
    %9603 = vrot.lane.b32.xlu0 %v9065, 32
    %v9604 = vpop.permute.xlu0 %9603
    %9605 = vrot.lane.b32.xlu0 %v9066, 32
    %v9606 = vpop.permute.xlu0 %9605
    %9607 = vrot.lane.b32.xlu0 %v9067, 32
    %v9608 = vpop.permute.xlu0 %9607
    %9609 = vrot.lane.b32.xlu0 %v9068, 32
    %v9610 = vpop.permute.xlu0 %9609
    %9611 = vrot.lane.b32.xlu0 %v9069, 32
    %v9612 = vpop.permute.xlu0 %9611
    %9613 = vrot.lane.b32.xlu0 %v9070, 32
    %v9614 = vpop.permute.xlu0 %9613
    %9615 = vrot.lane.b32.xlu0 %v9071, 32
    %v9616 = vpop.permute.xlu0 %9615
    %9617 = vrot.lane.b32.xlu0 %v9072, 32
    %v9618 = vpop.permute.xlu0 %9617
    %9619 = vrot.lane.b32.xlu0 %v9073, 32
    %v9620 = vpop.permute.xlu0 %9619
    %9621 = vrot.lane.b32.xlu0 %v9074, 32
    %v9622 = vpop.permute.xlu0 %9621
    %9623 = vrot.lane.b32.xlu0 %v9075, 32
    %v9624 = vpop.permute.xlu0 %9623
    %9625 = vrot.lane.b32.xlu0 %v9076, 32
    %v9626 = vpop.permute.xlu0 %9625
    %9627 = vrot.lane.b32.xlu0 %v9077, 32
    %v9628 = vpop.permute.xlu0 %9627
    %9629 = vrot.lane.b32.xlu0 %v9078, 32
    %v9630 = vpop.permute.xlu0 %9629
    %9631 = vrot.lane.b32.xlu0 %v9079, 32
    %v9632 = vpop.permute.xlu0 %9631
    %9633 = vrot.lane.b32.xlu0 %v9080, 32
    %v9634 = vpop.permute.xlu0 %9633
    %9635 = vrot.lane.b32.xlu0 %v9081, 32
    %v9636 = vpop.permute.xlu0 %9635
    %9637 = vrot.lane.b32.xlu0 %v9082, 32
    %v9638 = vpop.permute.xlu0 %9637
    %9639 = vrot.lane.b32.xlu0 %v9083, 32
    %v9640 = vpop.permute.xlu0 %9639
    %9641 = vrot.lane.b32.xlu0 %v9084, 32
    %v9642 = vpop.permute.xlu0 %9641
    %9643 = vrot.lane.b32.xlu0 %v9085, 32
    %v9644 = vpop.permute.xlu0 %9643
    %9645 = vrot.lane.b32.xlu0 %v9086, 32
    %v9646 = vpop.permute.xlu0 %9645
    %9647 = vrot.lane.b32.xlu0 %v9087, 32
    %v9648 = vpop.permute.xlu0 %9647
    %9649 = vrot.lane.b32.xlu0 %v9088, 32
    %v9650 = vpop.permute.xlu0 %9649
    %9651 = vrot.lane.b32.xlu0 %v9089, 32
    %v9652 = vpop.permute.xlu0 %9651
    %9653 = vrot.lane.b32.xlu0 %v9090, 32
    %v9654 = vpop.permute.xlu0 %9653
    %9655 = vrot.lane.b32.xlu0 %v9091, 32
    %v9656 = vpop.permute.xlu0 %9655
    %9657 = vrot.lane.b32.xlu0 %v9092, 32
    %v9658 = vpop.permute.xlu0 %9657
    %9659 = vrot.lane.b32.xlu0 %v9093, 32
    %v9660 = vpop.permute.xlu0 %9659
    %9661 = vrot.lane.b32.xlu0 %v9094, 32
    %v9662 = vpop.permute.xlu0 %9661
    %9663 = vrot.lane.b32.xlu0 %v9095, 32
    %v9664 = vpop.permute.xlu0 %9663
    %9665 = vrot.lane.b32.xlu0 %v9096, 32
    %v9666 = vpop.permute.xlu0 %9665
    %9667 = vrot.lane.b32.xlu0 %v9097, 32
    %v9668 = vpop.permute.xlu0 %9667
    %9669 = vrot.lane.b32.xlu0 %v9098, 32
    %v9670 = vpop.permute.xlu0 %9669
    %9671 = vrot.lane.b32.xlu0 %v9099, 32
    %v9672 = vpop.permute.xlu0 %9671
    %9673 = vrot.lane.b32.xlu0 %v9100, 32
    %v9674 = vpop.permute.xlu0 %9673
    %v9757 = vsel %vm5934, %v8773, %v9184
    %v9758 = vsel %vm5934, %v8774, %v9186
    %v9759 = vsel %vm5934, %v8775, %v9188
    %v9760 = vsel %vm5934, %v8776, %v9190
    %v9761 = vsel %vm5934, %v8777, %v9192
    %v9762 = vsel %vm5934, %v8778, %v9194
    %v9763 = vsel %vm5934, %v8779, %v9196
    %v9764 = vsel %vm5934, %v8780, %v9198
    %v9765 = vsel %vm5934, %v8781, %v9200
    %v9766 = vsel %vm5934, %v8782, %v9202
    %v9767 = vsel %vm5934, %v8783, %v9204
    %v9768 = vsel %vm5934, %v8784, %v9206
    %v9769 = vsel %vm5934, %v8785, %v9208
    %v9770 = vsel %vm5934, %v8786, %v9210
    %v9771 = vsel %vm5934, %v8787, %v9212
    %v9772 = vsel %vm5934, %v8788, %v9214
    %v9773 = vsel %vm5934, %v8789, %v9216
    %v9774 = vsel %vm5934, %v8790, %v9218
    %v9775 = vsel %vm5934, %v8791, %v9220
    %v9776 = vsel %vm5934, %v8792, %v9222
    %v9777 = vsel %vm5934, %v8793, %v9224
    %v9778 = vsel %vm5934, %v8794, %v9226
    %v9779 = vsel %vm5934, %v8795, %v9228
    %v9780 = vsel %vm5934, %v8796, %v9230
    %v9781 = vsel %vm5934, %v8797, %v9232
    %v9782 = vsel %vm5934, %v8798, %v9234
    %v9783 = vsel %vm5934, %v8799, %v9236
    %v9784 = vsel %vm5934, %v8800, %v9238
    %v9785 = vsel %vm5934, %v8801, %v9240
    %v9786 = vsel %vm5934, %v8802, %v9242
    %v9787 = vsel %vm5934, %v8803, %v9244
    %v9788 = vsel %vm5934, %v8804, %v9246
    %v9789 = vsel %vm5934, %v8805, %v9248
    %v9790 = vsel %vm5934, %v8806, %v9250
    %v9791 = vsel %vm5934, %v8807, %v9252
    %v9792 = vsel %vm5934, %v8808, %v9254
    %v9793 = vsel %vm5934, %v8809, %v9256
    %v9794 = vsel %vm5934, %v8810, %v9258
    %v9795 = vsel %vm5934, %v8811, %v9260
    %v9796 = vsel %vm5934, %v8812, %v9262
    %v9797 = vsel %vm5934, %v8813, %v9264
    %v9798 = vsel %vm5934, %v8814, %v9266
    %v9799 = vsel %vm5934, %v8815, %v9268
    %v9800 = vsel %vm5934, %v8816, %v9270
    %v9801 = vsel %vm5934, %v8817, %v9272
    %v9802 = vsel %vm5934, %v8818, %v9274
    %v9803 = vsel %vm5934, %v8819, %v9276
    %v9804 = vsel %vm5934, %v8820, %v9278
    %v9805 = vsel %vm5934, %v8821, %v9280
    %v9806 = vsel %vm5934, %v8822, %v9282
    %v9807 = vsel %vm5934, %v8823, %v9284
    %v9808 = vsel %vm5934, %v8824, %v9286
    %v9809 = vsel %vm5934, %v8825, %v9288
    %v9810 = vsel %vm5934, %v8826, %v9290
    %v9811 = vsel %vm5934, %v8827, %v9292
    %v9812 = vsel %vm5934, %v8828, %v9294
    %v9813 = vsel %vm5934, %v8829, %v9296
    %v9814 = vsel %vm5934, %v8830, %v9298
    %v9815 = vsel %vm5934, %v8831, %v9300
    %v9816 = vsel %vm5934, %v8832, %v9302
    %v9817 = vsel %vm5934, %v8833, %v9304
    %v9818 = vsel %vm5934, %v8834, %v9306
    %v9819 = vsel %vm5934, %v8835, %v9308
    %v9820 = vsel %vm5934, %v8836, %v9310
    %v9821 = vsel %vm5934, %v8837, %v9312
    %v9822 = vsel %vm5934, %v8838, %v9314
    %v9823 = vsel %vm5934, %v8839, %v9316
    %v9824 = vsel %vm5934, %v8840, %v9318
    %v9825 = vsel %vm5934, %v8841, %v9320
    %v9826 = vsel %vm5934, %v8842, %v9322
    %v9827 = vsel %vm5934, %v8843, %v9324
    %v9828 = vsel %vm5934, %v8844, %v9326
    %v9829 = vsel %vm5934, %v8845, %v9328
    %v9830 = vsel %vm5934, %v8846, %v9330
    %v9831 = vsel %vm5934, %v8847, %v9332
    %v9832 = vsel %vm5934, %v8848, %v9334
    %v9833 = vsel %vm5934, %v8849, %v9336
    %v9834 = vsel %vm5934, %v8850, %v9338
    %v9835 = vsel %vm5934, %v8851, %v9340
    %v9836 = vsel %vm5934, %v8852, %v9342
    %v9837 = vsel %vm5934, %v8853, %v9344
    %v9838 = vsel %vm5934, %v8854, %v9346
    %vm9839 = vcmask 261120
    %v9840 = vsel %vm9839, %v9757, %v9512
    %v9841 = vsel %vm9839, %v9758, %v9514
    %v9842 = vsel %vm9839, %v9759, %v9516
    %v9843 = vsel %vm9839, %v9760, %v9518
    %v9844 = vsel %vm9839, %v9761, %v9520
    %v9845 = vsel %vm9839, %v9762, %v9522
    %v9846 = vsel %vm9839, %v9763, %v9524
    %v9847 = vsel %vm9839, %v9764, %v9526
    %v9848 = vsel %vm9839, %v9765, %v9528
    %v9849 = vsel %vm9839, %v9766, %v9530
    %v9850 = vsel %vm9839, %v9767, %v9532
    %v9851 = vsel %vm9839, %v9768, %v9534
    %v9852 = vsel %vm9839, %v9769, %v9536
    %v9853 = vsel %vm9839, %v9770, %v9538
    %v9854 = vsel %vm9839, %v9771, %v9540
    %v9855 = vsel %vm9839, %v9772, %v9542
    %v9856 = vsel %vm9839, %v9773, %v9544
    %v9857 = vsel %vm9839, %v9774, %v9546
    %v9858 = vsel %vm9839, %v9775, %v9548
    %v9859 = vsel %vm9839, %v9776, %v9550
    %v9860 = vsel %vm9839, %v9777, %v9552
    %v9861 = vsel %vm9839, %v9778, %v9554
    %v9862 = vsel %vm9839, %v9779, %v9556
    %v9863 = vsel %vm9839, %v9780, %v9558
    %v9864 = vsel %vm9839, %v9781, %v9560
    %v9865 = vsel %vm9839, %v9782, %v9562
    %v9866 = vsel %vm9839, %v9783, %v9564
    %v9867 = vsel %vm9839, %v9784, %v9566
    %v9868 = vsel %vm9839, %v9785, %v9568
    %v9869 = vsel %vm9839, %v9786, %v9570
    %v9870 = vsel %vm9839, %v9787, %v9572
    %v9871 = vsel %vm9839, %v9788, %v9574
    %v9872 = vsel %vm9839, %v9789, %v9576
    %v9873 = vsel %vm9839, %v9790, %v9578
    %v9874 = vsel %vm9839, %v9791, %v9580
    %v9875 = vsel %vm9839, %v9792, %v9582
    %v9876 = vsel %vm9839, %v9793, %v9584
    %v9877 = vsel %vm9839, %v9794, %v9586
    %v9878 = vsel %vm9839, %v9795, %v9588
    %v9879 = vsel %vm9839, %v9796, %v9590
    %v9880 = vsel %vm9839, %v9797, %v9592
    %v9881 = vsel %vm9839, %v9798, %v9594
    %v9882 = vsel %vm9839, %v9799, %v9596
    %v9883 = vsel %vm9839, %v9800, %v9598
    %v9884 = vsel %vm9839, %v9801, %v9600
    %v9885 = vsel %vm9839, %v9802, %v9602
    %v9886 = vsel %vm9839, %v9803, %v9604
    %v9887 = vsel %vm9839, %v9804, %v9606
    %v9888 = vsel %vm9839, %v9805, %v9608
    %v9889 = vsel %vm9839, %v9806, %v9610
    %v9890 = vsel %vm9839, %v9807, %v9612
    %v9891 = vsel %vm9839, %v9808, %v9614
    %v9892 = vsel %vm9839, %v9809, %v9616
    %v9893 = vsel %vm9839, %v9810, %v9618
    %v9894 = vsel %vm9839, %v9811, %v9620
    %v9895 = vsel %vm9839, %v9812, %v9622
    %v9896 = vsel %vm9839, %v9813, %v9624
    %v9897 = vsel %vm9839, %v9814, %v9626
    %v9898 = vsel %vm9839, %v9815, %v9628
    %v9899 = vsel %vm9839, %v9816, %v9630
    %v9900 = vsel %vm9839, %v9817, %v9632
    %v9901 = vsel %vm9839, %v9818, %v9634
    %v9902 = vsel %vm9839, %v9819, %v9636
    %v9903 = vsel %vm9839, %v9820, %v9638
    %v9904 = vsel %vm9839, %v9821, %v9640
    %v9905 = vsel %vm9839, %v9822, %v9642
    %v9906 = vsel %vm9839, %v9823, %v9644
    %v9907 = vsel %vm9839, %v9824, %v9646
    %v9908 = vsel %vm9839, %v9825, %v9648
    %v9909 = vsel %vm9839, %v9826, %v9650
    %v9910 = vsel %vm9839, %v9827, %v9652
    %v9911 = vsel %vm9839, %v9828, %v9654
    %v9912 = vsel %vm9839, %v9829, %v9656
    %v9913 = vsel %vm9839, %v9830, %v9658
    %v9914 = vsel %vm9839, %v9831, %v9660
    %v9915 = vsel %vm9839, %v9832, %v9662
    %v9916 = vsel %vm9839, %v9833, %v9664
    %v9917 = vsel %vm9839, %v9834, %v9666
    %v9918 = vsel %vm9839, %v9835, %v9668
    %v9919 = vsel %vm9839, %v9836, %v9670
    %v9920 = vsel %vm9839, %v9837, %v9672
    %v9921 = vsel %vm9839, %v9838, %v9674
    %vm9922 = vcmask 392192
    %9923 = vst.msk [vmem:[#allocation4 + $0x18] sm:$0xff] %vm9922, %v9840
    %9924 = vst.msk [vmem:[#allocation4 + $0x20] sm:$0xff] %vm9922, %v9841
    %9925 = vst.msk [vmem:[#allocation4 + $0x28] sm:$0xff] %vm9922, %v9842
    %9926 = vst.msk [vmem:[#allocation4 + $0x30] sm:$0xff] %vm9922, %v9843
    %9927 = vst.msk [vmem:[#allocation4 + $0x38] sm:$0xff] %vm9922, %v9844
    %9928 = vst.msk [vmem:[#allocation4 + $0x40] sm:$0xff] %vm9922, %v9845
    %9929 = vst.msk [vmem:[#allocation4 + $0x48] sm:$0xff] %vm9922, %v9846
    %9930 = vst.msk [vmem:[#allocation4 + $0x50] sm:$0xff] %vm9922, %v9847
    %9931 = vst.msk [vmem:[#allocation4 + $0x58] sm:$0xff] %vm9922, %v9848
    %9932 = vst.msk [vmem:[#allocation4 + $0x60] sm:$0xff] %vm9922, %v9849
    %9933 = vst.msk [vmem:[#allocation4 + $0x68] sm:$0xff] %vm9922, %v9850
    %9934 = vst.msk [vmem:[#allocation4 + $0x70] sm:$0xff] %vm9922, %v9851
    %9935 = vst.msk [vmem:[#allocation4 + $0x78] sm:$0xff] %vm9922, %v9852
    %9936 = vst.msk [vmem:[#allocation4 + $0x80] sm:$0xff] %vm9922, %v9853
    %9937 = vst.msk [vmem:[#allocation4 + $0x88] sm:$0xff] %vm9922, %v9854
    %9938 = vst.msk [vmem:[#allocation4 + $0x90] sm:$0xff] %vm9922, %v9855
    %9939 = vst.msk [vmem:[#allocation4 + $0x98] sm:$0xff] %vm9922, %v9856
    %9940 = vst.msk [vmem:[#allocation4 + $0xa0] sm:$0xff] %vm9922, %v9857
    %9941 = vst.msk [vmem:[#allocation4 + $0xa8] sm:$0xff] %vm9922, %v9858
    %9942 = vst.msk [vmem:[#allocation4 + $0xb0] sm:$0xff] %vm9922, %v9859
    %9943 = vst.msk [vmem:[#allocation4 + $0xb8] sm:$0xff] %vm9922, %v9860
    %9944 = vst.msk [vmem:[#allocation4 + $0xc0] sm:$0xff] %vm9922, %v9861
    %9945 = vst.msk [vmem:[#allocation4 + $0xc8] sm:$0xff] %vm9922, %v9862
    %9946 = vst.msk [vmem:[#allocation4 + $0xd0] sm:$0xff] %vm9922, %v9863
    %9947 = vst.msk [vmem:[#allocation4 + $0xd8] sm:$0xff] %vm9922, %v9864
    %9948 = vst.msk [vmem:[#allocation4 + $0xe0] sm:$0xff] %vm9922, %v9865
    %9949 = vst.msk [vmem:[#allocation4 + $0xe8] sm:$0xff] %vm9922, %v9866
    %9950 = vst.msk [vmem:[#allocation4 + $0xf0] sm:$0xff] %vm9922, %v9867
    %9951 = vst.msk [vmem:[#allocation4 + $0xf8] sm:$0xff] %vm9922, %v9868
    %9952 = vst.msk [vmem:[#allocation4 + $0x100] sm:$0xff] %vm9922, %v9869
    %9953 = vst.msk [vmem:[#allocation4 + $0x108] sm:$0xff] %vm9922, %v9870
    %9954 = vst.msk [vmem:[#allocation4 + $0x110] sm:$0xff] %vm9922, %v9871
    %9955 = vst.msk [vmem:[#allocation4 + $0x118] sm:$0xff] %vm9922, %v9872
    %9956 = vst.msk [vmem:[#allocation4 + $0x120] sm:$0xff] %vm9922, %v9873
    %9957 = vst.msk [vmem:[#allocation4 + $0x128] sm:$0xff] %vm9922, %v9874
    %9958 = vst.msk [vmem:[#allocation4 + $0x130] sm:$0xff] %vm9922, %v9875
    %9959 = vst.msk [vmem:[#allocation4 + $0x138] sm:$0xff] %vm9922, %v9876
    %9960 = vst.msk [vmem:[#allocation4 + $0x140] sm:$0xff] %vm9922, %v9877
    %9961 = vst.msk [vmem:[#allocation4 + $0x148] sm:$0xff] %vm9922, %v9878
    %9962 = vst.msk [vmem:[#allocation4 + $0x150] sm:$0xff] %vm9922, %v9879
    %9963 = vst.msk [vmem:[#allocation4 + $0x158] sm:$0xff] %vm9922, %v9880
    %9964 = vst.msk [vmem:[#allocation4 + $0x160] sm:$0xff] %vm9922, %v9881
    %9965 = vst.msk [vmem:[#allocation4 + $0x168] sm:$0xff] %vm9922, %v9882
    %9966 = vst.msk [vmem:[#allocation4 + $0x170] sm:$0xff] %vm9922, %v9883
    %9967 = vst.msk [vmem:[#allocation4 + $0x178] sm:$0xff] %vm9922, %v9884
    %9968 = vst.msk [vmem:[#allocation4 + $0x180] sm:$0xff] %vm9922, %v9885
    %9969 = vst.msk [vmem:[#allocation4 + $0x188] sm:$0xff] %vm9922, %v9886
    %9970 = vst.msk [vmem:[#allocation4 + $0x190] sm:$0xff] %vm9922, %v9887
    %9971 = vst.msk [vmem:[#allocation4 + $0x198] sm:$0xff] %vm9922, %v9888
    %9972 = vst.msk [vmem:[#allocation4 + $0x1a0] sm:$0xff] %vm9922, %v9889
    %9973 = vst.msk [vmem:[#allocation4 + $0x1a8] sm:$0xff] %vm9922, %v9890
    %9974 = vst.msk [vmem:[#allocation4 + $0x1b0] sm:$0xff] %vm9922, %v9891
    %9975 = vst.msk [vmem:[#allocation4 + $0x1b8] sm:$0xff] %vm9922, %v9892
    %9976 = vst.msk [vmem:[#allocation4 + $0x1c0] sm:$0xff] %vm9922, %v9893
    %9977 = vst.msk [vmem:[#allocation4 + $0x1c8] sm:$0xff] %vm9922, %v9894
    %9978 = vst.msk [vmem:[#allocation4 + $0x1d0] sm:$0xff] %vm9922, %v9895
    %9979 = vst.msk [vmem:[#allocation4 + $0x1d8] sm:$0xff] %vm9922, %v9896
    %9980 = vst.msk [vmem:[#allocation4 + $0x1e0] sm:$0xff] %vm9922, %v9897
    %9981 = vst.msk [vmem:[#allocation4 + $0x1e8] sm:$0xff] %vm9922, %v9898
    %9982 = vst.msk [vmem:[#allocation4 + $0x1f0] sm:$0xff] %vm9922, %v9899
    %9983 = vst.msk [vmem:[#allocation4 + $0x1f8] sm:$0xff] %vm9922, %v9900
    %9984 = vst.msk [vmem:[#allocation4 + $0x200] sm:$0xff] %vm9922, %v9901
    %9985 = vst.msk [vmem:[#allocation4 + $0x208] sm:$0xff] %vm9922, %v9902
    %9986 = vst.msk [vmem:[#allocation4 + $0x210] sm:$0xff] %vm9922, %v9903
    %9987 = vst.msk [vmem:[#allocation4 + $0x218] sm:$0xff] %vm9922, %v9904
    %9988 = vst.msk [vmem:[#allocation4 + $0x220] sm:$0xff] %vm9922, %v9905
    %9989 = vst.msk [vmem:[#allocation4 + $0x228] sm:$0xff] %vm9922, %v9906
    %9990 = vst.msk [vmem:[#allocation4 + $0x230] sm:$0xff] %vm9922, %v9907
    %9991 = vst.msk [vmem:[#allocation4 + $0x238] sm:$0xff] %vm9922, %v9908
    %9992 = vst.msk [vmem:[#allocation4 + $0x240] sm:$0xff] %vm9922, %v9909
    %9993 = vst.msk [vmem:[#allocation4 + $0x248] sm:$0xff] %vm9922, %v9910
    %9994 = vst.msk [vmem:[#allocation4 + $0x250] sm:$0xff] %vm9922, %v9911
    %9995 = vst.msk [vmem:[#allocation4 + $0x258] sm:$0xff] %vm9922, %v9912
    %9996 = vst.msk [vmem:[#allocation4 + $0x260] sm:$0xff] %vm9922, %v9913
    %9997 = vst.msk [vmem:[#allocation4 + $0x268] sm:$0xff] %vm9922, %v9914
    %9998 = vst.msk [vmem:[#allocation4 + $0x270] sm:$0xff] %vm9922, %v9915
    %9999 = vst.msk [vmem:[#allocation4 + $0x278] sm:$0xff] %vm9922, %v9916
    %10000 = vst.msk [vmem:[#allocation4 + $0x280] sm:$0xff] %vm9922, %v9917
    %10001 = vst.msk [vmem:[#allocation4 + $0x288] sm:$0xff] %vm9922, %v9918
    %10002 = vst.msk [vmem:[#allocation4 + $0x290] sm:$0xff] %vm9922, %v9919
    %10003 = vst.msk [vmem:[#allocation4 + $0x298] sm:$0xff] %vm9922, %v9920
    %10004 = vst.msk [vmem:[#allocation4 + $0x2a0] sm:$0xff] %vm9922, %v9921
    %v10005 = vld [vmem:[#allocation4 + $0x6] sm:$0xff]
    %v10006 = vld [vmem:[#allocation4 + $0xe] sm:$0xff]
    %v10007 = vld [vmem:[#allocation4 + $0x16] sm:$0xff]
    %v10008 = vld [vmem:[#allocation4 + $0x1e] sm:$0xff]
    %v10009 = vld [vmem:[#allocation4 + $0x26] sm:$0xff]
    %v10010 = vld [vmem:[#allocation4 + $0x2e] sm:$0xff]
    %v10011 = vld [vmem:[#allocation4 + $0x36] sm:$0xff]
    %v10012 = vld [vmem:[#allocation4 + $0x3e] sm:$0xff]
    %v10013 = vld [vmem:[#allocation4 + $0x46] sm:$0xff]
    %v10014 = vld [vmem:[#allocation4 + $0x4e] sm:$0xff]
    %v10015 = vld [vmem:[#allocation4 + $0x56] sm:$0xff]
    %v10016 = vld [vmem:[#allocation4 + $0x5e] sm:$0xff]
    %v10017 = vld [vmem:[#allocation4 + $0x66] sm:$0xff]
    %v10018 = vld [vmem:[#allocation4 + $0x6e] sm:$0xff]
    %v10019 = vld [vmem:[#allocation4 + $0x76] sm:$0xff]
    %v10020 = vld [vmem:[#allocation4 + $0x7e] sm:$0xff]
    %v10021 = vld [vmem:[#allocation4 + $0x86] sm:$0xff]
    %v10022 = vld [vmem:[#allocation4 + $0x8e] sm:$0xff]
    %v10023 = vld [vmem:[#allocation4 + $0x96] sm:$0xff]
    %v10024 = vld [vmem:[#allocation4 + $0x9e] sm:$0xff]
    %v10025 = vld [vmem:[#allocation4 + $0xa6] sm:$0xff]
    %v10026 = vld [vmem:[#allocation4 + $0xae] sm:$0xff]
    %v10027 = vld [vmem:[#allocation4 + $0xb6] sm:$0xff]
    %v10028 = vld [vmem:[#allocation4 + $0xbe] sm:$0xff]
    %v10029 = vld [vmem:[#allocation4 + $0xc6] sm:$0xff]
    %v10030 = vld [vmem:[#allocation4 + $0xce] sm:$0xff]
    %v10031 = vld [vmem:[#allocation4 + $0xd6] sm:$0xff]
    %v10032 = vld [vmem:[#allocation4 + $0xde] sm:$0xff]
    %v10033 = vld [vmem:[#allocation4 + $0xe6] sm:$0xff]
    %v10034 = vld [vmem:[#allocation4 + $0xee] sm:$0xff]
    %v10035 = vld [vmem:[#allocation4 + $0xf6] sm:$0xff]
    %v10036 = vld [vmem:[#allocation4 + $0xfe] sm:$0xff]
    %v10037 = vld [vmem:[#allocation4 + $0x106] sm:$0xff]
    %v10038 = vld [vmem:[#allocation4 + $0x10e] sm:$0xff]
    %v10039 = vld [vmem:[#allocation4 + $0x116] sm:$0xff]
    %v10040 = vld [vmem:[#allocation4 + $0x11e] sm:$0xff]
    %v10041 = vld [vmem:[#allocation4 + $0x126] sm:$0xff]
    %v10042 = vld [vmem:[#allocation4 + $0x12e] sm:$0xff]
    %v10043 = vld [vmem:[#allocation4 + $0x136] sm:$0xff]
    %v10044 = vld [vmem:[#allocation4 + $0x13e] sm:$0xff]
    %v10045 = vld [vmem:[#allocation4 + $0x146] sm:$0xff]
    %v10046 = vld [vmem:[#allocation4 + $0x14e] sm:$0xff]
    %v10047 = vld [vmem:[#allocation4 + $0x156] sm:$0xff]
    %v10048 = vld [vmem:[#allocation4 + $0x15e] sm:$0xff]
    %v10049 = vld [vmem:[#allocation4 + $0x166] sm:$0xff]
    %v10050 = vld [vmem:[#allocation4 + $0x16e] sm:$0xff]
    %v10051 = vld [vmem:[#allocation4 + $0x176] sm:$0xff]
    %v10052 = vld [vmem:[#allocation4 + $0x17e] sm:$0xff]
    %v10053 = vld [vmem:[#allocation4 + $0x186] sm:$0xff]
    %v10054 = vld [vmem:[#allocation4 + $0x18e] sm:$0xff]
    %v10055 = vld [vmem:[#allocation4 + $0x196] sm:$0xff]
    %v10056 = vld [vmem:[#allocation4 + $0x19e] sm:$0xff]
    %v10057 = vld [vmem:[#allocation4 + $0x1a6] sm:$0xff]
    %v10058 = vld [vmem:[#allocation4 + $0x1ae] sm:$0xff]
    %v10059 = vld [vmem:[#allocation4 + $0x1b6] sm:$0xff]
    %v10060 = vld [vmem:[#allocation4 + $0x1be] sm:$0xff]
    %v10061 = vld [vmem:[#allocation4 + $0x1c6] sm:$0xff]
    %v10062 = vld [vmem:[#allocation4 + $0x1ce] sm:$0xff]
    %v10063 = vld [vmem:[#allocation4 + $0x1d6] sm:$0xff]
    %v10064 = vld [vmem:[#allocation4 + $0x1de] sm:$0xff]
    %v10065 = vld [vmem:[#allocation4 + $0x1e6] sm:$0xff]
    %v10066 = vld [vmem:[#allocation4 + $0x1ee] sm:$0xff]
    %v10067 = vld [vmem:[#allocation4 + $0x1f6] sm:$0xff]
    %v10068 = vld [vmem:[#allocation4 + $0x1fe] sm:$0xff]
    %v10069 = vld [vmem:[#allocation4 + $0x206] sm:$0xff]
    %v10070 = vld [vmem:[#allocation4 + $0x20e] sm:$0xff]
    %v10071 = vld [vmem:[#allocation4 + $0x216] sm:$0xff]
    %v10072 = vld [vmem:[#allocation4 + $0x21e] sm:$0xff]
    %v10073 = vld [vmem:[#allocation4 + $0x226] sm:$0xff]
    %v10074 = vld [vmem:[#allocation4 + $0x22e] sm:$0xff]
    %v10075 = vld [vmem:[#allocation4 + $0x236] sm:$0xff]
    %v10076 = vld [vmem:[#allocation4 + $0x23e] sm:$0xff]
    %v10077 = vld [vmem:[#allocation4 + $0x246] sm:$0xff]
    %v10078 = vld [vmem:[#allocation4 + $0x24e] sm:$0xff]
    %v10079 = vld [vmem:[#allocation4 + $0x256] sm:$0xff]
    %v10080 = vld [vmem:[#allocation4 + $0x25e] sm:$0xff]
    %v10081 = vld [vmem:[#allocation4 + $0x266] sm:$0xff]
    %v10082 = vld [vmem:[#allocation4 + $0x26e] sm:$0xff]
    %v10083 = vld [vmem:[#allocation4 + $0x276] sm:$0xff]
    %v10084 = vld [vmem:[#allocation4 + $0x27e] sm:$0xff]
    %v10085 = vld [vmem:[#allocation4 + $0x286] sm:$0xff]
    %v10086 = vld [vmem:[#allocation4 + $0x28e] sm:$0xff]
    %v10087 = vld [vmem:[%s5] sm:$0xff]
    %v10088 = vld [vmem:[%s5 + $0x8] sm:$0xff]
    %v10089 = vld [vmem:[%s5 + $0x10] sm:$0xff]
    %v10090 = vld [vmem:[%s5 + $0x18] sm:$0xff]
    %v10091 = vld [vmem:[%s5 + $0x20] sm:$0xff]
    %v10092 = vld [vmem:[%s5 + $0x28] sm:$0xff]
    %v10093 = vld [vmem:[#allocation4 + $0x18] sm:$0xff]
    %v10094 = vld [vmem:[#allocation4 + $0x20] sm:$0xff]
    %v10095 = vld [vmem:[#allocation4 + $0x28] sm:$0xff]
    %v10096 = vld [vmem:[#allocation4 + $0x30] sm:$0xff]
    %v10097 = vld [vmem:[#allocation4 + $0x38] sm:$0xff]
    %v10098 = vld [vmem:[#allocation4 + $0x40] sm:$0xff]
    %v10099 = vld [vmem:[#allocation4 + $0x48] sm:$0xff]
    %v10100 = vld [vmem:[#allocation4 + $0x50] sm:$0xff]
    %v10101 = vld [vmem:[#allocation4 + $0x58] sm:$0xff]
    %v10102 = vld [vmem:[#allocation4 + $0x60] sm:$0xff]
    %v10103 = vld [vmem:[#allocation4 + $0x68] sm:$0xff]
    %v10104 = vld [vmem:[#allocation4 + $0x70] sm:$0xff]
    %v10105 = vld [vmem:[#allocation4 + $0x78] sm:$0xff]
    %v10106 = vld [vmem:[#allocation4 + $0x80] sm:$0xff]
    %v10107 = vld [vmem:[#allocation4 + $0x88] sm:$0xff]
    %v10108 = vld [vmem:[#allocation4 + $0x90] sm:$0xff]
    %v10109 = vld [vmem:[#allocation4 + $0x98] sm:$0xff]
    %v10110 = vld [vmem:[#allocation4 + $0xa0] sm:$0xff]
    %v10111 = vld [vmem:[#allocation4 + $0xa8] sm:$0xff]
    %v10112 = vld [vmem:[#allocation4 + $0xb0] sm:$0xff]
    %v10113 = vld [vmem:[#allocation4 + $0xb8] sm:$0xff]
    %v10114 = vld [vmem:[#allocation4 + $0xc0] sm:$0xff]
    %v10115 = vld [vmem:[#allocation4 + $0xc8] sm:$0xff]
    %v10116 = vld [vmem:[#allocation4 + $0xd0] sm:$0xff]
    %v10117 = vld [vmem:[#allocation4 + $0xd8] sm:$0xff]
    %v10118 = vld [vmem:[#allocation4 + $0xe0] sm:$0xff]
    %v10119 = vld [vmem:[#allocation4 + $0xe8] sm:$0xff]
    %v10120 = vld [vmem:[#allocation4 + $0xf0] sm:$0xff]
    %v10121 = vld [vmem:[#allocation4 + $0xf8] sm:$0xff]
    %v10122 = vld [vmem:[#allocation4 + $0x100] sm:$0xff]
    %v10123 = vld [vmem:[#allocation4 + $0x108] sm:$0xff]
    %v10124 = vld [vmem:[#allocation4 + $0x110] sm:$0xff]
    %v10125 = vld [vmem:[#allocation4 + $0x118] sm:$0xff]
    %v10126 = vld [vmem:[#allocation4 + $0x120] sm:$0xff]
    %v10127 = vld [vmem:[#allocation4 + $0x128] sm:$0xff]
    %v10128 = vld [vmem:[#allocation4 + $0x130] sm:$0xff]
    %v10129 = vld [vmem:[#allocation4 + $0x138] sm:$0xff]
    %v10130 = vld [vmem:[#allocation4 + $0x140] sm:$0xff]
    %v10131 = vld [vmem:[#allocation4 + $0x148] sm:$0xff]
    %v10132 = vld [vmem:[#allocation4 + $0x150] sm:$0xff]
    %v10133 = vld [vmem:[#allocation4 + $0x158] sm:$0xff]
    %v10134 = vld [vmem:[#allocation4 + $0x160] sm:$0xff]
    %v10135 = vld [vmem:[#allocation4 + $0x168] sm:$0xff]
    %v10136 = vld [vmem:[#allocation4 + $0x170] sm:$0xff]
    %v10137 = vld [vmem:[#allocation4 + $0x178] sm:$0xff]
    %v10138 = vld [vmem:[#allocation4 + $0x180] sm:$0xff]
    %v10139 = vld [vmem:[#allocation4 + $0x188] sm:$0xff]
    %v10140 = vld [vmem:[#allocation4 + $0x190] sm:$0xff]
    %v10141 = vld [vmem:[#allocation4 + $0x198] sm:$0xff]
    %v10142 = vld [vmem:[#allocation4 + $0x1a0] sm:$0xff]
    %v10143 = vld [vmem:[#allocation4 + $0x1a8] sm:$0xff]
    %v10144 = vld [vmem:[#allocation4 + $0x1b0] sm:$0xff]
    %v10145 = vld [vmem:[#allocation4 + $0x1b8] sm:$0xff]
    %v10146 = vld [vmem:[#allocation4 + $0x1c0] sm:$0xff]
    %v10147 = vld [vmem:[#allocation4 + $0x1c8] sm:$0xff]
    %v10148 = vld [vmem:[#allocation4 + $0x1d0] sm:$0xff]
    %v10149 = vld [vmem:[#allocation4 + $0x1d8] sm:$0xff]
    %v10150 = vld [vmem:[#allocation4 + $0x1e0] sm:$0xff]
    %v10151 = vld [vmem:[#allocation4 + $0x1e8] sm:$0xff]
    %v10152 = vld [vmem:[#allocation4 + $0x1f0] sm:$0xff]
    %v10153 = vld [vmem:[#allocation4 + $0x1f8] sm:$0xff]
    %v10154 = vld [vmem:[#allocation4 + $0x200] sm:$0xff]
    %v10155 = vld [vmem:[#allocation4 + $0x208] sm:$0xff]
    %v10156 = vld [vmem:[#allocation4 + $0x210] sm:$0xff]
    %v10157 = vld [vmem:[#allocation4 + $0x218] sm:$0xff]
    %v10158 = vld [vmem:[#allocation4 + $0x220] sm:$0xff]
    %v10159 = vld [vmem:[#allocation4 + $0x228] sm:$0xff]
    %v10160 = vld [vmem:[#allocation4 + $0x230] sm:$0xff]
    %v10161 = vld [vmem:[#allocation4 + $0x238] sm:$0xff]
    %v10162 = vld [vmem:[#allocation4 + $0x240] sm:$0xff]
    %v10163 = vld [vmem:[#allocation4 + $0x248] sm:$0xff]
    %v10164 = vld [vmem:[#allocation4 + $0x250] sm:$0xff]
    %v10165 = vld [vmem:[#allocation4 + $0x258] sm:$0xff]
    %v10166 = vld [vmem:[#allocation4 + $0x260] sm:$0xff]
    %v10167 = vld [vmem:[#allocation4 + $0x268] sm:$0xff]
    %v10168 = vld [vmem:[#allocation4 + $0x270] sm:$0xff]
    %v10169 = vld [vmem:[#allocation4 + $0x278] sm:$0xff]
    %v10170 = vld [vmem:[#allocation4 + $0x280] sm:$0xff]
    %v10171 = vld [vmem:[#allocation4 + $0x288] sm:$0xff]
    %v10172 = vld [vmem:[#allocation4 + $0x290] sm:$0xff]
    %v10173 = vld [vmem:[#allocation4 + $0x298] sm:$0xff]
    %v10174 = vld [vmem:[#allocation4 + $0x2a0] sm:$0xff]
    %s10175 = scalar_lea.vmem %s5, 48
    %v10176 = vld [vmem:[%s10175] sm:$0xff]
    %v10177 = vld [vmem:[%s10175 + $0x8] sm:$0xff]
    %v10178 = vld [vmem:[%s10175 + $0x10] sm:$0xff]
    %v10179 = vld [vmem:[%s10175 + $0x18] sm:$0xff]
    %v10180 = vld [vmem:[%s10175 + $0x20] sm:$0xff]
    %v10181 = vld [vmem:[%s10175 + $0x28] sm:$0xff]
    %v10183 = vsel %vm9922, %v10093, 0
    %v10186 = vsel %vm9922, %v10094, 0
    %v10189 = vsel %vm9922, %v10095, 0
    %v10192 = vsel %vm9922, %v10096, 0
    %v10195 = vsel %vm9922, %v10097, 0
    %v10198 = vsel %vm9922, %v10098, 0
    %v10201 = vsel %vm9922, %v10099, 0
    %v10204 = vsel %vm9922, %v10100, 0
    %v10207 = vsel %vm9922, %v10101, 0
    %v10210 = vsel %vm9922, %v10102, 0
    %v10213 = vsel %vm9922, %v10103, 0
    %v10216 = vsel %vm9922, %v10104, 0
    %v10219 = vsel %vm9922, %v10105, 0
    %v10222 = vsel %vm9922, %v10106, 0
    %v10225 = vsel %vm9922, %v10107, 0
    %v10228 = vsel %vm9922, %v10108, 0
    %v10231 = vsel %vm9922, %v10109, 0
    %v10234 = vsel %vm9922, %v10110, 0
    %v10237 = vsel %vm9922, %v10111, 0
    %v10240 = vsel %vm9922, %v10112, 0
    %v10243 = vsel %vm9922, %v10113, 0
    %v10246 = vsel %vm9922, %v10114, 0
    %v10249 = vsel %vm9922, %v10115, 0
    %v10252 = vsel %vm9922, %v10116, 0
    %v10255 = vsel %vm9922, %v10117, 0
    %v10258 = vsel %vm9922, %v10118, 0
    %v10261 = vsel %vm9922, %v10119, 0
    %v10264 = vsel %vm9922, %v10120, 0
    %v10267 = vsel %vm9922, %v10121, 0
    %v10270 = vsel %vm9922, %v10122, 0
    %v10273 = vsel %vm9922, %v10123, 0
    %v10276 = vsel %vm9922, %v10124, 0
    %v10279 = vsel %vm9922, %v10125, 0
    %v10282 = vsel %vm9922, %v10126, 0
    %v10285 = vsel %vm9922, %v10127, 0
    %v10288 = vsel %vm9922, %v10128, 0
    %v10291 = vsel %vm9922, %v10129, 0
    %v10294 = vsel %vm9922, %v10130, 0
    %v10297 = vsel %vm9922, %v10131, 0
    %v10300 = vsel %vm9922, %v10132, 0
    %v10303 = vsel %vm9922, %v10133, 0
    %v10306 = vsel %vm9922, %v10134, 0
    %v10309 = vsel %vm9922, %v10135, 0
    %v10312 = vsel %vm9922, %v10136, 0
    %v10315 = vsel %vm9922, %v10137, 0
    %v10318 = vsel %vm9922, %v10138, 0
    %v10321 = vsel %vm9922, %v10139, 0
    %v10324 = vsel %vm9922, %v10140, 0
    %v10327 = vsel %vm9922, %v10141, 0
    %v10330 = vsel %vm9922, %v10142, 0
    %v10333 = vsel %vm9922, %v10143, 0
    %v10336 = vsel %vm9922, %v10144, 0
    %v10339 = vsel %vm9922, %v10145, 0
    %v10342 = vsel %vm9922, %v10146, 0
    %v10345 = vsel %vm9922, %v10147, 0
    %v10348 = vsel %vm9922, %v10148, 0
    %v10351 = vsel %vm9922, %v10149, 0
    %v10354 = vsel %vm9922, %v10150, 0
    %v10357 = vsel %vm9922, %v10151, 0
    %v10360 = vsel %vm9922, %v10152, 0
    %v10363 = vsel %vm9922, %v10153, 0
    %v10366 = vsel %vm9922, %v10154, 0
    %v10369 = vsel %vm9922, %v10155, 0
    %v10372 = vsel %vm9922, %v10156, 0
    %v10375 = vsel %vm9922, %v10157, 0
    %v10378 = vsel %vm9922, %v10158, 0
    %v10381 = vsel %vm9922, %v10159, 0
    %v10384 = vsel %vm9922, %v10160, 0
    %v10387 = vsel %vm9922, %v10161, 0
    %v10390 = vsel %vm9922, %v10162, 0
    %v10393 = vsel %vm9922, %v10163, 0
    %v10396 = vsel %vm9922, %v10164, 0
    %v10399 = vsel %vm9922, %v10165, 0
    %v10402 = vsel %vm9922, %v10166, 0
    %v10405 = vsel %vm9922, %v10167, 0
    %v10408 = vsel %vm9922, %v10168, 0
    %v10411 = vsel %vm9922, %v10169, 0
    %v10414 = vsel %vm9922, %v10170, 0
    %v10417 = vsel %vm9922, %v10171, 0
    %v10420 = vsel %vm9922, %v10172, 0
    %v10423 = vsel %vm9922, %v10173, 0
    %v10426 = vsel %vm9922, %v10174, 0
    %10428 = vmatprep.subr.mxu0 0.0
    %10429 = vmatpush1.msra.mxu0 %v10176
    %10430 = vmatprep.subr.mxu0 0.0
    %10431 = vmatpush1.msra.mxu0 %v10177
    %10432 = vmatprep.subr.mxu0 0.0
    %10433 = vmatpush1.msra.mxu0 %v10178
    %10434 = vmatprep.subr.mxu0 0.0
    %10435 = vmatpush1.msra.mxu0 %v10179
    %10436 = vmatprep.subr.mxu0 0.0
    %10437 = vmatpush1.msra.mxu0 %v10180
    %10438 = vmatprep.subr.mxu0 0.0
    %10439 = vmatpush1.msra.mxu0 %v10181
    %10440 = vmatprep.subr.mxu0 0.0
    %10441 = vmatpush1.msra.mxu0 0.0
    %10442 = vmatprep.subr.mxu0 0.0
    %10443 = vmatpush1.msra.mxu0 0.0
    %10444 = vmatprep.subr.mxu0 0.0
    %10445 = vmatpush1.msra.mxu0 0.0
    %10446 = vmatprep.subr.mxu0 0.0
    %10447 = vmatpush1.msra.mxu0 0.0
    %10448 = vmatprep.subr.mxu0 0.0
    %10449 = vmatpush1.msra.mxu0 0.0
    %10450 = vmatprep.subr.mxu0 0.0
    %10451 = vmatpush1.msra.mxu0 0.0
    %10452 = vmatprep.subr.mxu0 0.0
    %10453 = vmatpush1.msra.mxu0 0.0
    %10454 = vmatprep.subr.mxu0 0.0
    %10455 = vmatpush1.msra.mxu0 0.0
    %10456 = vmatprep.subr.mxu0 0.0
    %10457 = vmatpush1.msra.mxu0 0.0
    %10458 = vmatprep.subr.mxu0 0.0
    %10459 = vmatpush1.msra.mxu0 0.0
    %10460 = vmatprep.subr.mxu0 0.0
    %10461 = vmatpush1.msra.mxu0 0.0
    %10462 = vmatprep.subr.mxu0 0.0
    %10463 = vmatpush1.msra.mxu0 0.0
    %10464 = vmatprep.subr.mxu0 0.0
    %10465 = vmatpush1.msra.mxu0 0.0
    %10466 = vmatprep.subr.mxu0 0.0
    %10467 = vmatpush1.msra.mxu0 0.0
    %10468 = vmatprep.subr.mxu0 0.0
    %10469 = vmatpush1.msra.mxu0 0.0
    %10470 = vmatprep.subr.mxu0 0.0
    %10471 = vmatpush1.msra.mxu0 0.0
    %10472 = vmatprep.subr.mxu0 0.0
    %10473 = vmatpush1.msra.mxu0 0.0
    %10474 = vmatprep.subr.mxu0 0.0
    %10475 = vmatpush1.msra.mxu0 0.0
    %10476 = vmatprep.subr.mxu0 0.0
    %10477 = vmatpush1.msra.mxu0 0.0
    %10478 = vmatprep.subr.mxu0 0.0
    %10479 = vmatpush1.msra.mxu0 0.0
    %10480 = vmatprep.subr.mxu0 0.0
    %10481 = vmatpush1.msra.mxu0 0.0
    %10482 = vmatprep.subr.mxu0 0.0
    %10483 = vmatpush1.msra.mxu0 0.0
    %10484 = vmatprep.subr.mxu0 0.0
    %10485 = vmatpush1.msra.mxu0 0.0
    %10486 = vmatprep.subr.mxu0 0.0
    %10487 = vmatpush1.msra.mxu0 0.0
    %10488 = vmatprep.subr.mxu0 0.0
    %10489 = vmatpush1.msra.mxu0 0.0
    %10490 = vmatprep.subr.mxu0 0.0
    %10491 = vmatpush1.msra.mxu0 0.0
    %10492 = vmatprep.mubr.f32.mxu0 0.0
    %10493 = vmatmul.mubr.f32.gmra.mrb[0].mxu0 %v10183
    %v10494 = vpop.f32.mrb[0].mxu0
    %v10495 = vadd.f32 0.0, %v10494
    %v10496 = vpop.f32.mrb[0].mxu0
    %10497 = vmatprep.mubr.f32.mxu0 0.0
    %10498 = vmatmul.mubr.f32.gmra.mrb[0].mxu0 %v10186
    %v10499 = vpop.f32.mrb[0].mxu0
    %v10500 = vadd.f32 0.0, %v10499
    %v10501 = vpop.f32.mrb[0].mxu0
    %10502 = vmatprep.mubr.f32.mxu0 0.0
    %10503 = vmatmul.mubr.f32.gmra.mrb[0].mxu0 %v10189
    %v10504 = vpop.f32.mrb[0].mxu0
    %v10505 = vadd.f32 0.0, %v10504
    %v10506 = vpop.f32.mrb[0].mxu0
    %10507 = vmatprep.mubr.f32.mxu0 0.0
    %10508 = vmatmul.mubr.f32.gmra.mrb[0].mxu0 %v10192
    %v10509 = vpop.f32.mrb[0].mxu0
    %v10510 = vadd.f32 0.0, %v10509
    %v10511 = vpop.f32.mrb[0].mxu0
    %10512 = vmatprep.mubr.f32.mxu0 0.0
    %10513 = vmatmul.mubr.f32.gmra.mrb[0].mxu0 %v10195
    %v10514 = vpop.f32.mrb[0].mxu0
    %v10515 = vadd.f32 0.0, %v10514
    %v10516 = vpop.f32.mrb[0].mxu0
    %10517 = vmatprep.mubr.f32.mxu0 0.0
    %10518 = vmatmul.mubr.f32.gmra.mrb[0].mxu0 %v10198
    %v10519 = vpop.f32.mrb[0].mxu0
    %v10520 = vadd.f32 0.0, %v10519
    %v10521 = vpop.f32.mrb[0].mxu0
    %10522 = vmatprep.mubr.f32.mxu0 0.0
    %10523 = vmatmul.mubr.f32.gmra.mrb[0].mxu0 %v10201
    %v10524 = vpop.f32.mrb[0].mxu0
    %v10525 = vadd.f32 0.0, %v10524
    %v10526 = vpop.f32.mrb[0].mxu0
    %10527 = vmatprep.mubr.f32.mxu0 0.0
    %10528 = vmatmul.mubr.f32.gmra.mrb[0].mxu0 %v10204
    %v10529 = vpop.f32.mrb[0].mxu0
    %v10530 = vadd.f32 0.0, %v10529
    %v10531 = vpop.f32.mrb[0].mxu0
    %10532 = vmatprep.mubr.f32.mxu0 0.0
    %10533 = vmatmul.mubr.f32.gmra.mrb[0].mxu0 %v10207
    %v10534 = vpop.f32.mrb[0].mxu0
    %v10535 = vadd.f32 0.0, %v10534
    %v10536 = vpop.f32.mrb[0].mxu0
    %10537 = vmatprep.mubr.f32.mxu0 0.0
    %10538 = vmatmul.mubr.f32.gmra.mrb[0].mxu0 %v10210
    %v10539 = vpop.f32.mrb[0].mxu0
    %v10540 = vadd.f32 0.0, %v10539
    %v10541 = vpop.f32.mrb[0].mxu0
    %10542 = vmatprep.mubr.f32.mxu0 0.0
    %10543 = vmatmul.mubr.f32.gmra.mrb[0].mxu0 %v10213
    %v10544 = vpop.f32.mrb[0].mxu0
    %v10545 = vadd.f32 0.0, %v10544
    %v10546 = vpop.f32.mrb[0].mxu0
    %10547 = vmatprep.mubr.f32.mxu0 0.0
    %10548 = vmatmul.mubr.f32.gmra.mrb[0].mxu0 %v10216
    %v10549 = vpop.f32.mrb[0].mxu0
    %v10550 = vadd.f32 0.0, %v10549
    %v10551 = vpop.f32.mrb[0].mxu0
    %10552 = vmatprep.mubr.f32.mxu0 0.0
    %10553 = vmatmul.mubr.f32.gmra.mrb[0].mxu0 %v10219
    %v10554 = vpop.f32.mrb[0].mxu0
    %v10555 = vadd.f32 0.0, %v10554
    %v10556 = vpop.f32.mrb[0].mxu0
    %10557 = vmatprep.mubr.f32.mxu0 0.0
    %10558 = vmatmul.mubr.f32.gmra.mrb[0].mxu0 %v10222
    %v10559 = vpop.f32.mrb[0].mxu0
    %v10560 = vadd.f32 0.0, %v10559
    %v10561 = vpop.f32.mrb[0].mxu0
    %10562 = vmatprep.mubr.f32.mxu0 0.0
    %10563 = vmatmul.mubr.f32.gmra.mrb[0].mxu0 %v10225
    %v10564 = vpop.f32.mrb[0].mxu0
    %v10565 = vadd.f32 0.0, %v10564
    %v10566 = vpop.f32.mrb[0].mxu0
    %10567 = vmatprep.mubr.f32.mxu0 0.0
    %10568 = vmatmul.mubr.f32.gmra.mrb[0].mxu0 %v10228
    %v10569 = vpop.f32.mrb[0].mxu0
    %v10570 = vadd.f32 0.0, %v10569
    %v10571 = vpop.f32.mrb[0].mxu0
    %10572 = vmatprep.mubr.f32.mxu0 0.0
    %10573 = vmatmul.mubr.f32.gmra.mrb[0].mxu0 %v10231
    %v10574 = vpop.f32.mrb[0].mxu0
    %v10575 = vadd.f32 0.0, %v10574
    %v10576 = vpop.f32.mrb[0].mxu0
    %10577 = vmatprep.mubr.f32.mxu0 0.0
    %10578 = vmatmul.mubr.f32.gmra.mrb[0].mxu0 %v10234
    %v10579 = vpop.f32.mrb[0].mxu0
    %v10580 = vadd.f32 0.0, %v10579
    %v10581 = vpop.f32.mrb[0].mxu0
    %10582 = vmatprep.mubr.f32.mxu0 0.0
    %10583 = vmatmul.mubr.f32.gmra.mrb[0].mxu0 %v10237
    %v10584 = vpop.f32.mrb[0].mxu0
    %v10585 = vadd.f32 0.0, %v10584
    %v10586 = vpop.f32.mrb[0].mxu0
    %10587 = vmatprep.mubr.f32.mxu0 0.0
    %10588 = vmatmul.mubr.f32.gmra.mrb[0].mxu0 %v10240
    %v10589 = vpop.f32.mrb[0].mxu0
    %v10590 = vadd.f32 0.0, %v10589
    %v10591 = vpop.f32.mrb[0].mxu0
    %10592 = vmatprep.mubr.f32.mxu0 0.0
    %10593 = vmatmul.mubr.f32.gmra.mrb[0].mxu0 %v10243
    %v10594 = vpop.f32.mrb[0].mxu0
    %v10595 = vadd.f32 0.0, %v10594
    %v10596 = vpop.f32.mrb[0].mxu0
    %10597 = vmatprep.mubr.f32.mxu0 0.0
    %10598 = vmatmul.mubr.f32.gmra.mrb[0].mxu0 %v10246
    %v10599 = vpop.f32.mrb[0].mxu0
    %v10600 = vadd.f32 0.0, %v10599
    %v10601 = vpop.f32.mrb[0].mxu0
    %10602 = vmatprep.mubr.f32.mxu0 0.0
    %10603 = vmatmul.mubr.f32.gmra.mrb[0].mxu0 %v10249
    %v10604 = vpop.f32.mrb[0].mxu0
    %v10605 = vadd.f32 0.0, %v10604
    %v10606 = vpop.f32.mrb[0].mxu0
    %10607 = vmatprep.mubr.f32.mxu0 0.0
    %10608 = vmatmul.mubr.f32.gmra.mrb[0].mxu0 %v10252
    %v10609 = vpop.f32.mrb[0].mxu0
    %v10610 = vadd.f32 0.0, %v10609
    %v10611 = vpop.f32.mrb[0].mxu0
    %10612 = vmatprep.mubr.f32.mxu0 0.0
    %10613 = vmatmul.mubr.f32.gmra.mrb[0].mxu0 %v10255
    %v10614 = vpop.f32.mrb[0].mxu0
    %v10615 = vadd.f32 0.0, %v10614
    %v10616 = vpop.f32.mrb[0].mxu0
    %10617 = vmatprep.mubr.f32.mxu0 0.0
    %10618 = vmatmul.mubr.f32.gmra.mrb[0].mxu0 %v10258
    %v10619 = vpop.f32.mrb[0].mxu0
    %v10620 = vadd.f32 0.0, %v10619
    %v10621 = vpop.f32.mrb[0].mxu0
    %10622 = vmatprep.mubr.f32.mxu0 0.0
    %10623 = vmatmul.mubr.f32.gmra.mrb[0].mxu0 %v10261
    %v10624 = vpop.f32.mrb[0].mxu0
    %v10625 = vadd.f32 0.0, %v10624
    %v10626 = vpop.f32.mrb[0].mxu0
    %10627 = vmatprep.mubr.f32.mxu0 0.0
    %10628 = vmatmul.mubr.f32.gmra.mrb[0].mxu0 %v10264
    %v10629 = vpop.f32.mrb[0].mxu0
    %v10630 = vadd.f32 0.0, %v10629
    %v10631 = vpop.f32.mrb[0].mxu0
    %10632 = vmatprep.mubr.f32.mxu0 0.0
    %10633 = vmatmul.mubr.f32.gmra.mrb[0].mxu0 %v10267
    %v10634 = vpop.f32.mrb[0].mxu0
    %v10635 = vadd.f32 0.0, %v10634
    %v10636 = vpop.f32.mrb[0].mxu0
    %10637 = vmatprep.mubr.f32.mxu0 0.0
    %10638 = vmatmul.mubr.f32.gmra.mrb[0].mxu0 %v10270
    %v10639 = vpop.f32.mrb[0].mxu0
    %v10640 = vadd.f32 0.0, %v10639
    %v10641 = vpop.f32.mrb[0].mxu0
    %10642 = vmatprep.mubr.f32.mxu0 0.0
    %10643 = vmatmul.mubr.f32.gmra.mrb[0].mxu0 %v10273
    %v10644 = vpop.f32.mrb[0].mxu0
    %v10645 = vadd.f32 0.0, %v10644
    %v10646 = vpop.f32.mrb[0].mxu0
    %10647 = vmatprep.mubr.f32.mxu0 0.0
    %10648 = vmatmul.mubr.f32.gmra.mrb[0].mxu0 %v10276
    %v10649 = vpop.f32.mrb[0].mxu0
    %v10650 = vadd.f32 0.0, %v10649
    %v10651 = vpop.f32.mrb[0].mxu0
    %10652 = vmatprep.mubr.f32.mxu0 0.0
    %10653 = vmatmul.mubr.f32.gmra.mrb[0].mxu0 %v10279
    %v10654 = vpop.f32.mrb[0].mxu0
    %v10655 = vadd.f32 0.0, %v10654
    %v10656 = vpop.f32.mrb[0].mxu0
    %10657 = vmatprep.mubr.f32.mxu0 0.0
    %10658 = vmatmul.mubr.f32.gmra.mrb[0].mxu0 %v10282
    %v10659 = vpop.f32.mrb[0].mxu0
    %v10660 = vadd.f32 0.0, %v10659
    %v10661 = vpop.f32.mrb[0].mxu0
    %10662 = vmatprep.mubr.f32.mxu0 0.0
    %10663 = vmatmul.mubr.f32.gmra.mrb[0].mxu0 %v10285
    %v10664 = vpop.f32.mrb[0].mxu0
    %v10665 = vadd.f32 0.0, %v10664
    %v10666 = vpop.f32.mrb[0].mxu0
    %10667 = vmatprep.mubr.f32.mxu0 0.0
    %10668 = vmatmul.mubr.f32.gmra.mrb[0].mxu0 %v10288
    %v10669 = vpop.f32.mrb[0].mxu0
    %v10670 = vadd.f32 0.0, %v10669
    %v10671 = vpop.f32.mrb[0].mxu0
    %10672 = vmatprep.mubr.f32.mxu0 0.0
    %10673 = vmatmul.mubr.f32.gmra.mrb[0].mxu0 %v10291
    %v10674 = vpop.f32.mrb[0].mxu0
    %v10675 = vadd.f32 0.0, %v10674
    %v10676 = vpop.f32.mrb[0].mxu0
    %10677 = vmatprep.mubr.f32.mxu0 0.0
    %10678 = vmatmul.mubr.f32.gmra.mrb[0].mxu0 %v10294
    %v10679 = vpop.f32.mrb[0].mxu0
    %v10680 = vadd.f32 0.0, %v10679
    %v10681 = vpop.f32.mrb[0].mxu0
    %10682 = vmatprep.mubr.f32.mxu0 0.0
    %10683 = vmatmul.mubr.f32.gmra.mrb[0].mxu0 %v10297
    %v10684 = vpop.f32.mrb[0].mxu0
    %v10685 = vadd.f32 0.0, %v10684
    %v10686 = vpop.f32.mrb[0].mxu0
    %10687 = vmatprep.mubr.f32.mxu0 0.0
    %10688 = vmatmul.mubr.f32.gmra.mrb[0].mxu0 %v10300
    %v10689 = vpop.f32.mrb[0].mxu0
    %v10690 = vadd.f32 0.0, %v10689
    %v10691 = vpop.f32.mrb[0].mxu0
    %10692 = vmatprep.mubr.f32.mxu0 0.0
    %10693 = vmatmul.mubr.f32.gmra.mrb[0].mxu0 %v10303
    %v10694 = vpop.f32.mrb[0].mxu0
    %v10695 = vadd.f32 0.0, %v10694
    %v10696 = vpop.f32.mrb[0].mxu0
    %10697 = vmatprep.mubr.f32.mxu0 0.0
    %10698 = vmatmul.mubr.f32.gmra.mrb[0].mxu0 %v10306
    %v10699 = vpop.f32.mrb[0].mxu0
    %v10700 = vadd.f32 0.0, %v10699
    %v10701 = vpop.f32.mrb[0].mxu0
    %10702 = vmatprep.mubr.f32.mxu0 0.0
    %10703 = vmatmul.mubr.f32.gmra.mrb[0].mxu0 %v10309
    %v10704 = vpop.f32.mrb[0].mxu0
    %v10705 = vadd.f32 0.0, %v10704
    %v10706 = vpop.f32.mrb[0].mxu0
    %10707 = vmatprep.mubr.f32.mxu0 0.0
    %10708 = vmatmul.mubr.f32.gmra.mrb[0].mxu0 %v10312
    %v10709 = vpop.f32.mrb[0].mxu0
    %v10710 = vadd.f32 0.0, %v10709
    %v10711 = vpop.f32.mrb[0].mxu0
    %10712 = vmatprep.mubr.f32.mxu0 0.0
    %10713 = vmatmul.mubr.f32.gmra.mrb[0].mxu0 %v10315
    %v10714 = vpop.f32.mrb[0].mxu0
    %v10715 = vadd.f32 0.0, %v10714
    %v10716 = vpop.f32.mrb[0].mxu0
    %10717 = vmatprep.mubr.f32.mxu0 0.0
    %10718 = vmatmul.mubr.f32.gmra.mrb[0].mxu0 %v10318
    %v10719 = vpop.f32.mrb[0].mxu0
    %v10720 = vadd.f32 0.0, %v10719
    %v10721 = vpop.f32.mrb[0].mxu0
    %10722 = vmatprep.mubr.f32.mxu0 0.0
    %10723 = vmatmul.mubr.f32.gmra.mrb[0].mxu0 %v10321
    %v10724 = vpop.f32.mrb[0].mxu0
    %v10725 = vadd.f32 0.0, %v10724
    %v10726 = vpop.f32.mrb[0].mxu0
    %10727 = vmatprep.mubr.f32.mxu0 0.0
    %10728 = vmatmul.mubr.f32.gmra.mrb[0].mxu0 %v10324
    %v10729 = vpop.f32.mrb[0].mxu0
    %v10730 = vadd.f32 0.0, %v10729
    %v10731 = vpop.f32.mrb[0].mxu0
    %10732 = vmatprep.mubr.f32.mxu0 0.0
    %10733 = vmatmul.mubr.f32.gmra.mrb[0].mxu0 %v10327
    %v10734 = vpop.f32.mrb[0].mxu0
    %v10735 = vadd.f32 0.0, %v10734
    %v10736 = vpop.f32.mrb[0].mxu0
    %10737 = vmatprep.mubr.f32.mxu0 0.0
    %10738 = vmatmul.mubr.f32.gmra.mrb[0].mxu0 %v10330
    %v10739 = vpop.f32.mrb[0].mxu0
    %v10740 = vadd.f32 0.0, %v10739
    %v10741 = vpop.f32.mrb[0].mxu0
    %10742 = vmatprep.mubr.f32.mxu0 0.0
    %10743 = vmatmul.mubr.f32.gmra.mrb[0].mxu0 %v10333
    %v10744 = vpop.f32.mrb[0].mxu0
    %v10745 = vadd.f32 0.0, %v10744
    %v10746 = vpop.f32.mrb[0].mxu0
    %10747 = vmatprep.mubr.f32.mxu0 0.0
    %10748 = vmatmul.mubr.f32.gmra.mrb[0].mxu0 %v10336
    %v10749 = vpop.f32.mrb[0].mxu0
    %v10750 = vadd.f32 0.0, %v10749
    %v10751 = vpop.f32.mrb[0].mxu0
    %10752 = vmatprep.mubr.f32.mxu0 0.0
    %10753 = vmatmul.mubr.f32.gmra.mrb[0].mxu0 %v10339
    %v10754 = vpop.f32.mrb[0].mxu0
    %v10755 = vadd.f32 0.0, %v10754
    %v10756 = vpop.f32.mrb[0].mxu0
    %10757 = vmatprep.mubr.f32.mxu0 0.0
    %10758 = vmatmul.mubr.f32.gmra.mrb[0].mxu0 %v10342
    %v10759 = vpop.f32.mrb[0].mxu0
    %v10760 = vadd.f32 0.0, %v10759
    %v10761 = vpop.f32.mrb[0].mxu0
    %10762 = vmatprep.mubr.f32.mxu0 0.0
    %10763 = vmatmul.mubr.f32.gmra.mrb[0].mxu0 %v10345
    %v10764 = vpop.f32.mrb[0].mxu0
    %v10765 = vadd.f32 0.0, %v10764
    %v10766 = vpop.f32.mrb[0].mxu0
    %10767 = vmatprep.mubr.f32.mxu0 0.0
    %10768 = vmatmul.mubr.f32.gmra.mrb[0].mxu0 %v10348
    %v10769 = vpop.f32.mrb[0].mxu0
    %v10770 = vadd.f32 0.0, %v10769
    %v10771 = vpop.f32.mrb[0].mxu0
    %10772 = vmatprep.mubr.f32.mxu0 0.0
    %10773 = vmatmul.mubr.f32.gmra.mrb[0].mxu0 %v10351
    %v10774 = vpop.f32.mrb[0].mxu0
    %v10775 = vadd.f32 0.0, %v10774
    %v10776 = vpop.f32.mrb[0].mxu0
    %10777 = vmatprep.mubr.f32.mxu0 0.0
    %10778 = vmatmul.mubr.f32.gmra.mrb[0].mxu0 %v10354
    %v10779 = vpop.f32.mrb[0].mxu0
    %v10780 = vadd.f32 0.0, %v10779
    %v10781 = vpop.f32.mrb[0].mxu0
    %10782 = vmatprep.mubr.f32.mxu0 0.0
    %10783 = vmatmul.mubr.f32.gmra.mrb[0].mxu0 %v10357
    %v10784 = vpop.f32.mrb[0].mxu0
    %v10785 = vadd.f32 0.0, %v10784
    %v10786 = vpop.f32.mrb[0].mxu0
    %10787 = vmatprep.mubr.f32.mxu0 0.0
    %10788 = vmatmul.mubr.f32.gmra.mrb[0].mxu0 %v10360
    %v10789 = vpop.f32.mrb[0].mxu0
    %v10790 = vadd.f32 0.0, %v10789
    %v10791 = vpop.f32.mrb[0].mxu0
    %10792 = vmatprep.mubr.f32.mxu0 0.0
    %10793 = vmatmul.mubr.f32.gmra.mrb[0].mxu0 %v10363
    %v10794 = vpop.f32.mrb[0].mxu0
    %v10795 = vadd.f32 0.0, %v10794
    %v10796 = vpop.f32.mrb[0].mxu0
    %10797 = vmatprep.mubr.f32.mxu0 0.0
    %10798 = vmatmul.mubr.f32.gmra.mrb[0].mxu0 %v10366
    %v10799 = vpop.f32.mrb[0].mxu0
    %v10800 = vadd.f32 0.0, %v10799
    %v10801 = vpop.f32.mrb[0].mxu0
    %10802 = vmatprep.mubr.f32.mxu0 0.0
    %10803 = vmatmul.mubr.f32.gmra.mrb[0].mxu0 %v10369
    %v10804 = vpop.f32.mrb[0].mxu0
    %v10805 = vadd.f32 0.0, %v10804
    %v10806 = vpop.f32.mrb[0].mxu0
    %10807 = vmatprep.mubr.f32.mxu0 0.0
    %10808 = vmatmul.mubr.f32.gmra.mrb[0].mxu0 %v10372
    %v10809 = vpop.f32.mrb[0].mxu0
    %v10810 = vadd.f32 0.0, %v10809
    %v10811 = vpop.f32.mrb[0].mxu0
    %10812 = vmatprep.mubr.f32.mxu0 0.0
    %10813 = vmatmul.mubr.f32.gmra.mrb[0].mxu0 %v10375
    %v10814 = vpop.f32.mrb[0].mxu0
    %v10815 = vadd.f32 0.0, %v10814
    %v10816 = vpop.f32.mrb[0].mxu0
    %10817 = vmatprep.mubr.f32.mxu0 0.0
    %10818 = vmatmul.mubr.f32.gmra.mrb[0].mxu0 %v10378
    %v10819 = vpop.f32.mrb[0].mxu0
    %v10820 = vadd.f32 0.0, %v10819
    %v10821 = vpop.f32.mrb[0].mxu0
    %10822 = vmatprep.mubr.f32.mxu0 0.0
    %10823 = vmatmul.mubr.f32.gmra.mrb[0].mxu0 %v10381
    %v10824 = vpop.f32.mrb[0].mxu0
    %v10825 = vadd.f32 0.0, %v10824
    %v10826 = vpop.f32.mrb[0].mxu0
    %10827 = vmatprep.mubr.f32.mxu0 0.0
    %10828 = vmatmul.mubr.f32.gmra.mrb[0].mxu0 %v10384
    %v10829 = vpop.f32.mrb[0].mxu0
    %v10830 = vadd.f32 0.0, %v10829
    %v10831 = vpop.f32.mrb[0].mxu0
    %10832 = vmatprep.mubr.f32.mxu0 0.0
    %10833 = vmatmul.mubr.f32.gmra.mrb[0].mxu0 %v10387
    %v10834 = vpop.f32.mrb[0].mxu0
    %v10835 = vadd.f32 0.0, %v10834
    %v10836 = vpop.f32.mrb[0].mxu0
    %10837 = vmatprep.mubr.f32.mxu0 0.0
    %10838 = vmatmul.mubr.f32.gmra.mrb[0].mxu0 %v10390
    %v10839 = vpop.f32.mrb[0].mxu0
    %v10840 = vadd.f32 0.0, %v10839
    %v10841 = vpop.f32.mrb[0].mxu0
    %10842 = vmatprep.mubr.f32.mxu0 0.0
    %10843 = vmatmul.mubr.f32.gmra.mrb[0].mxu0 %v10393
    %v10844 = vpop.f32.mrb[0].mxu0
    %v10845 = vadd.f32 0.0, %v10844
    %v10846 = vpop.f32.mrb[0].mxu0
    %10847 = vmatprep.mubr.f32.mxu0 0.0
    %10848 = vmatmul.mubr.f32.gmra.mrb[0].mxu0 %v10396
    %v10849 = vpop.f32.mrb[0].mxu0
    %v10850 = vadd.f32 0.0, %v10849
    %v10851 = vpop.f32.mrb[0].mxu0
    %10852 = vmatprep.mubr.f32.mxu0 0.0
    %10853 = vmatmul.mubr.f32.gmra.mrb[0].mxu0 %v10399
    %v10854 = vpop.f32.mrb[0].mxu0
    %v10855 = vadd.f32 0.0, %v10854
    %v10856 = vpop.f32.mrb[0].mxu0
    %10857 = vmatprep.mubr.f32.mxu0 0.0
    %10858 = vmatmul.mubr.f32.gmra.mrb[0].mxu0 %v10402
    %v10859 = vpop.f32.mrb[0].mxu0
    %v10860 = vadd.f32 0.0, %v10859
    %v10861 = vpop.f32.mrb[0].mxu0
    %10862 = vmatprep.mubr.f32.mxu0 0.0
    %10863 = vmatmul.mubr.f32.gmra.mrb[0].mxu0 %v10405
    %v10864 = vpop.f32.mrb[0].mxu0
    %v10865 = vadd.f32 0.0, %v10864
    %v10866 = vpop.f32.mrb[0].mxu0
    %10867 = vmatprep.mubr.f32.mxu0 0.0
    %10868 = vmatmul.mubr.f32.gmra.mrb[0].mxu0 %v10408
    %v10869 = vpop.f32.mrb[0].mxu0
    %v10870 = vadd.f32 0.0, %v10869
    %v10871 = vpop.f32.mrb[0].mxu0
    %10872 = vmatprep.mubr.f32.mxu0 0.0
    %10873 = vmatmul.mubr.f32.gmra.mrb[0].mxu0 %v10411
    %v10874 = vpop.f32.mrb[0].mxu0
    %v10875 = vadd.f32 0.0, %v10874
    %v10876 = vpop.f32.mrb[0].mxu0
    %10877 = vmatprep.mubr.f32.mxu0 0.0
    %10878 = vmatmul.mubr.f32.gmra.mrb[0].mxu0 %v10414
    %v10879 = vpop.f32.mrb[0].mxu0
    %v10880 = vadd.f32 0.0, %v10879
    %v10881 = vpop.f32.mrb[0].mxu0
    %10882 = vmatprep.mubr.f32.mxu0 0.0
    %10883 = vmatmul.mubr.f32.gmra.mrb[0].mxu0 %v10417
    %v10884 = vpop.f32.mrb[0].mxu0
    %v10885 = vadd.f32 0.0, %v10884
    %v10886 = vpop.f32.mrb[0].mxu0
    %10887 = vmatprep.mubr.f32.mxu0 0.0
    %10888 = vmatmul.mubr.f32.gmra.mrb[0].mxu0 %v10420
    %v10889 = vpop.f32.mrb[0].mxu0
    %v10890 = vadd.f32 0.0, %v10889
    %v10891 = vpop.f32.mrb[0].mxu0
    %10892 = vmatprep.mubr.f32.mxu0 0.0
    %10893 = vmatmul.mubr.f32.gmra.mrb[0].mxu0 %v10423
    %v10894 = vpop.f32.mrb[0].mxu0
    %v10895 = vadd.f32 0.0, %v10894
    %v10896 = vpop.f32.mrb[0].mxu0
    %10897 = vmatprep.mubr.f32.mxu0 0.0
    %10898 = vmatmul.mubr.f32.gmra.mrb[0].mxu0 %v10426
    %v10899 = vpop.f32.mrb[0].mxu0
    %v10900 = vadd.f32 0.0, %v10899
    %v10901 = vpop.f32.mrb[0].mxu0
    %10902 = vdwg.mxu0
    %v10904 = vsel %vm9922, %v10005, 0
    %v10907 = vsel %vm9922, %v10006, 0
    %v10910 = vsel %vm9922, %v10007, 0
    %v10913 = vsel %vm9922, %v10008, 0
    %v10916 = vsel %vm9922, %v10009, 0
    %v10919 = vsel %vm9922, %v10010, 0
    %v10922 = vsel %vm9922, %v10011, 0
    %v10925 = vsel %vm9922, %v10012, 0
    %v10928 = vsel %vm9922, %v10013, 0
    %v10931 = vsel %vm9922, %v10014, 0
    %v10934 = vsel %vm9922, %v10015, 0
    %v10937 = vsel %vm9922, %v10016, 0
    %v10940 = vsel %vm9922, %v10017, 0
    %v10943 = vsel %vm9922, %v10018, 0
    %v10946 = vsel %vm9922, %v10019, 0
    %v10949 = vsel %vm9922, %v10020, 0
    %v10952 = vsel %vm9922, %v10021, 0
    %v10955 = vsel %vm9922, %v10022, 0
    %v10958 = vsel %vm9922, %v10023, 0
    %v10961 = vsel %vm9922, %v10024, 0
    %v10964 = vsel %vm9922, %v10025, 0
    %v10967 = vsel %vm9922, %v10026, 0
    %v10970 = vsel %vm9922, %v10027, 0
    %v10973 = vsel %vm9922, %v10028, 0
    %v10976 = vsel %vm9922, %v10029, 0
    %v10979 = vsel %vm9922, %v10030, 0
    %v10982 = vsel %vm9922, %v10031, 0
    %v10985 = vsel %vm9922, %v10032, 0
    %v10988 = vsel %vm9922, %v10033, 0
    %v10991 = vsel %vm9922, %v10034, 0
    %v10994 = vsel %vm9922, %v10035, 0
    %v10997 = vsel %vm9922, %v10036, 0
    %v11000 = vsel %vm9922, %v10037, 0
    %v11003 = vsel %vm9922, %v10038, 0
    %v11006 = vsel %vm9922, %v10039, 0
    %v11009 = vsel %vm9922, %v10040, 0
    %v11012 = vsel %vm9922, %v10041, 0
    %v11015 = vsel %vm9922, %v10042, 0
    %v11018 = vsel %vm9922, %v10043, 0
    %v11021 = vsel %vm9922, %v10044, 0
    %v11024 = vsel %vm9922, %v10045, 0
    %v11027 = vsel %vm9922, %v10046, 0
    %v11030 = vsel %vm9922, %v10047, 0
    %v11033 = vsel %vm9922, %v10048, 0
    %v11036 = vsel %vm9922, %v10049, 0
    %v11039 = vsel %vm9922, %v10050, 0
    %v11042 = vsel %vm9922, %v10051, 0
    %v11045 = vsel %vm9922, %v10052, 0
    %v11048 = vsel %vm9922, %v10053, 0
    %v11051 = vsel %vm9922, %v10054, 0
    %v11054 = vsel %vm9922, %v10055, 0
    %v11057 = vsel %vm9922, %v10056, 0
    %v11060 = vsel %vm9922, %v10057, 0
    %v11063 = vsel %vm9922, %v10058, 0
    %v11066 = vsel %vm9922, %v10059, 0
    %v11069 = vsel %vm9922, %v10060, 0
    %v11072 = vsel %vm9922, %v10061, 0
    %v11075 = vsel %vm9922, %v10062, 0
    %v11078 = vsel %vm9922, %v10063, 0
    %v11081 = vsel %vm9922, %v10064, 0
    %v11084 = vsel %vm9922, %v10065, 0
    %v11087 = vsel %vm9922, %v10066, 0
    %v11090 = vsel %vm9922, %v10067, 0
    %v11093 = vsel %vm9922, %v10068, 0
    %v11096 = vsel %vm9922, %v10069, 0
    %v11099 = vsel %vm9922, %v10070, 0
    %v11102 = vsel %vm9922, %v10071, 0
    %v11105 = vsel %vm9922, %v10072, 0
    %v11108 = vsel %vm9922, %v10073, 0
    %v11111 = vsel %vm9922, %v10074, 0
    %v11114 = vsel %vm9922, %v10075, 0
    %v11117 = vsel %vm9922, %v10076, 0
    %v11120 = vsel %vm9922, %v10077, 0
    %v11123 = vsel %vm9922, %v10078, 0
    %v11126 = vsel %vm9922, %v10079, 0
    %v11129 = vsel %vm9922, %v10080, 0
    %v11132 = vsel %vm9922, %v10081, 0
    %v11135 = vsel %vm9922, %v10082, 0
    %v11138 = vsel %vm9922, %v10083, 0
    %v11141 = vsel %vm9922, %v10084, 0
    %v11144 = vsel %vm9922, %v10085, 0
    %v11147 = vsel %vm9922, %v10086, 0
    %11149 = vmatprep.subr.mxu0 0.0
    %11150 = vmatpush1.msra.mxu0 %v10087
    %11151 = vmatprep.subr.mxu0 0.0
    %11152 = vmatpush1.msra.mxu0 %v10088
    %11153 = vmatprep.subr.mxu0 0.0
    %11154 = vmatpush1.msra.mxu0 %v10089
    %11155 = vmatprep.subr.mxu0 0.0
    %11156 = vmatpush1.msra.mxu0 %v10090
    %11157 = vmatprep.subr.mxu0 0.0
    %11158 = vmatpush1.msra.mxu0 %v10091
    %11159 = vmatprep.subr.mxu0 0.0
    %11160 = vmatpush1.msra.mxu0 %v10092
    %11161 = vmatprep.subr.mxu0 0.0
    %11162 = vmatpush1.msra.mxu0 0.0
    %11163 = vmatprep.subr.mxu0 0.0
    %11164 = vmatpush1.msra.mxu0 0.0
    %11165 = vmatprep.subr.mxu0 0.0
    %11166 = vmatpush1.msra.mxu0 0.0
    %11167 = vmatprep.subr.mxu0 0.0
    %11168 = vmatpush1.msra.mxu0 0.0
    %11169 = vmatprep.subr.mxu0 0.0
    %11170 = vmatpush1.msra.mxu0 0.0
    %11171 = vmatprep.subr.mxu0 0.0
    %11172 = vmatpush1.msra.mxu0 0.0
    %11173 = vmatprep.subr.mxu0 0.0
    %11174 = vmatpush1.msra.mxu0 0.0
    %11175 = vmatprep.subr.mxu0 0.0
    %11176 = vmatpush1.msra.mxu0 0.0
    %11177 = vmatprep.subr.mxu0 0.0
    %11178 = vmatpush1.msra.mxu0 0.0
    %11179 = vmatprep.subr.mxu0 0.0
    %11180 = vmatpush1.msra.mxu0 0.0
    %11181 = vmatprep.subr.mxu0 0.0
    %11182 = vmatpush1.msra.mxu0 0.0
    %11183 = vmatprep.subr.mxu0 0.0
    %11184 = vmatpush1.msra.mxu0 0.0
    %11185 = vmatprep.subr.mxu0 0.0
    %11186 = vmatpush1.msra.mxu0 0.0
    %11187 = vmatprep.subr.mxu0 0.0
    %11188 = vmatpush1.msra.mxu0 0.0
    %11189 = vmatprep.subr.mxu0 0.0
    %11190 = vmatpush1.msra.mxu0 0.0
    %11191 = vmatprep.subr.mxu0 0.0
    %11192 = vmatpush1.msra.mxu0 0.0
    %11193 = vmatprep.subr.mxu0 0.0
    %11194 = vmatpush1.msra.mxu0 0.0
    %11195 = vmatprep.subr.mxu0 0.0
    %11196 = vmatpush1.msra.mxu0 0.0
    %11197 = vmatprep.subr.mxu0 0.0
    %11198 = vmatpush1.msra.mxu0 0.0
    %11199 = vmatprep.subr.mxu0 0.0
    %11200 = vmatpush1.msra.mxu0 0.0
    %11201 = vmatprep.subr.mxu0 0.0
    %11202 = vmatpush1.msra.mxu0 0.0
    %11203 = vmatprep.subr.mxu0 0.0
    %11204 = vmatpush1.msra.mxu0 0.0
    %11205 = vmatprep.subr.mxu0 0.0
    %11206 = vmatpush1.msra.mxu0 0.0
    %11207 = vmatprep.subr.mxu0 0.0
    %11208 = vmatpush1.msra.mxu0 0.0
    %11209 = vmatprep.subr.mxu0 0.0
    %11210 = vmatpush1.msra.mxu0 0.0
    %11211 = vmatprep.subr.mxu0 0.0
    %11212 = vmatpush1.msra.mxu0 0.0
    %11213 = vmatprep.mubr.f32.mxu0 0.0
    %11214 = vmatmul.mubr.f32.gmra.mrb[0].mxu0 %v10904
    %v11215 = vpop.f32.mrb[0].mxu0
    %v11216 = vadd.f32 %v10495, %v11215
    %v11217 = vpop.f32.mrb[0].mxu0
    %11218 = vmatprep.mubr.f32.mxu0 0.0
    %11219 = vmatmul.mubr.f32.gmra.mrb[0].mxu0 %v10907
    %v11220 = vpop.f32.mrb[0].mxu0
    %v11221 = vadd.f32 %v10500, %v11220
    %v11222 = vpop.f32.mrb[0].mxu0
    %11223 = vmatprep.mubr.f32.mxu0 0.0
    %11224 = vmatmul.mubr.f32.gmra.mrb[0].mxu0 %v10910
    %v11225 = vpop.f32.mrb[0].mxu0
    %v11226 = vadd.f32 %v10505, %v11225
    %v11227 = vpop.f32.mrb[0].mxu0
    %11228 = vmatprep.mubr.f32.mxu0 0.0
    %11229 = vmatmul.mubr.f32.gmra.mrb[0].mxu0 %v10913
    %v11230 = vpop.f32.mrb[0].mxu0
    %v11231 = vadd.f32 %v10510, %v11230
    %v11232 = vpop.f32.mrb[0].mxu0
    %11233 = vmatprep.mubr.f32.mxu0 0.0
    %11234 = vmatmul.mubr.f32.gmra.mrb[0].mxu0 %v10916
    %v11235 = vpop.f32.mrb[0].mxu0
    %v11236 = vadd.f32 %v10515, %v11235
    %v11237 = vpop.f32.mrb[0].mxu0
    %11238 = vmatprep.mubr.f32.mxu0 0.0
    %11239 = vmatmul.mubr.f32.gmra.mrb[0].mxu0 %v10919
    %v11240 = vpop.f32.mrb[0].mxu0
    %v11241 = vadd.f32 %v10520, %v11240
    %v11242 = vpop.f32.mrb[0].mxu0
    %11243 = vmatprep.mubr.f32.mxu0 0.0
    %11244 = vmatmul.mubr.f32.gmra.mrb[0].mxu0 %v10922
    %v11245 = vpop.f32.mrb[0].mxu0
    %v11246 = vadd.f32 %v10525, %v11245
    %v11247 = vpop.f32.mrb[0].mxu0
    %11248 = vmatprep.mubr.f32.mxu0 0.0
    %11249 = vmatmul.mubr.f32.gmra.mrb[0].mxu0 %v10925
    %v11250 = vpop.f32.mrb[0].mxu0
    %v11251 = vadd.f32 %v10530, %v11250
    %v11252 = vpop.f32.mrb[0].mxu0
    %11253 = vmatprep.mubr.f32.mxu0 0.0
    %11254 = vmatmul.mubr.f32.gmra.mrb[0].mxu0 %v10928
    %v11255 = vpop.f32.mrb[0].mxu0
    %v11256 = vadd.f32 %v10535, %v11255
    %v11257 = vpop.f32.mrb[0].mxu0
    %11258 = vmatprep.mubr.f32.mxu0 0.0
    %11259 = vmatmul.mubr.f32.gmra.mrb[0].mxu0 %v10931
    %v11260 = vpop.f32.mrb[0].mxu0
    %v11261 = vadd.f32 %v10540, %v11260
    %v11262 = vpop.f32.mrb[0].mxu0
    %11263 = vmatprep.mubr.f32.mxu0 0.0
    %11264 = vmatmul.mubr.f32.gmra.mrb[0].mxu0 %v10934
    %v11265 = vpop.f32.mrb[0].mxu0
    %v11266 = vadd.f32 %v10545, %v11265
    %v11267 = vpop.f32.mrb[0].mxu0
    %11268 = vmatprep.mubr.f32.mxu0 0.0
    %11269 = vmatmul.mubr.f32.gmra.mrb[0].mxu0 %v10937
    %v11270 = vpop.f32.mrb[0].mxu0
    %v11271 = vadd.f32 %v10550, %v11270
    %v11272 = vpop.f32.mrb[0].mxu0
    %11273 = vmatprep.mubr.f32.mxu0 0.0
    %11274 = vmatmul.mubr.f32.gmra.mrb[0].mxu0 %v10940
    %v11275 = vpop.f32.mrb[0].mxu0
    %v11276 = vadd.f32 %v10555, %v11275
    %v11277 = vpop.f32.mrb[0].mxu0
    %11278 = vmatprep.mubr.f32.mxu0 0.0
    %11279 = vmatmul.mubr.f32.gmra.mrb[0].mxu0 %v10943
    %v11280 = vpop.f32.mrb[0].mxu0
    %v11281 = vadd.f32 %v10560, %v11280
    %v11282 = vpop.f32.mrb[0].mxu0
    %11283 = vmatprep.mubr.f32.mxu0 0.0
    %11284 = vmatmul.mubr.f32.gmra.mrb[0].mxu0 %v10946
    %v11285 = vpop.f32.mrb[0].mxu0
    %v11286 = vadd.f32 %v10565, %v11285
    %v11287 = vpop.f32.mrb[0].mxu0
    %11288 = vmatprep.mubr.f32.mxu0 0.0
    %11289 = vmatmul.mubr.f32.gmra.mrb[0].mxu0 %v10949
    %v11290 = vpop.f32.mrb[0].mxu0
    %v11291 = vadd.f32 %v10570, %v11290
    %v11292 = vpop.f32.mrb[0].mxu0
    %11293 = vmatprep.mubr.f32.mxu0 0.0
    %11294 = vmatmul.mubr.f32.gmra.mrb[0].mxu0 %v10952
    %v11295 = vpop.f32.mrb[0].mxu0
    %v11296 = vadd.f32 %v10575, %v11295
    %v11297 = vpop.f32.mrb[0].mxu0
    %11298 = vmatprep.mubr.f32.mxu0 0.0
    %11299 = vmatmul.mubr.f32.gmra.mrb[0].mxu0 %v10955
    %v11300 = vpop.f32.mrb[0].mxu0
    %v11301 = vadd.f32 %v10580, %v11300
    %v11302 = vpop.f32.mrb[0].mxu0
    %11303 = vmatprep.mubr.f32.mxu0 0.0
    %11304 = vmatmul.mubr.f32.gmra.mrb[0].mxu0 %v10958
    %v11305 = vpop.f32.mrb[0].mxu0
    %v11306 = vadd.f32 %v10585, %v11305
    %v11307 = vpop.f32.mrb[0].mxu0
    %11308 = vmatprep.mubr.f32.mxu0 0.0
    %11309 = vmatmul.mubr.f32.gmra.mrb[0].mxu0 %v10961
    %v11310 = vpop.f32.mrb[0].mxu0
    %v11311 = vadd.f32 %v10590, %v11310
    %v11312 = vpop.f32.mrb[0].mxu0
    %11313 = vmatprep.mubr.f32.mxu0 0.0
    %11314 = vmatmul.mubr.f32.gmra.mrb[0].mxu0 %v10964
    %v11315 = vpop.f32.mrb[0].mxu0
    %v11316 = vadd.f32 %v10595, %v11315
    %v11317 = vpop.f32.mrb[0].mxu0
    %11318 = vmatprep.mubr.f32.mxu0 0.0
    %11319 = vmatmul.mubr.f32.gmra.mrb[0].mxu0 %v10967
    %v11320 = vpop.f32.mrb[0].mxu0
    %v11321 = vadd.f32 %v10600, %v11320
    %v11322 = vpop.f32.mrb[0].mxu0
    %11323 = vmatprep.mubr.f32.mxu0 0.0
    %11324 = vmatmul.mubr.f32.gmra.mrb[0].mxu0 %v10970
    %v11325 = vpop.f32.mrb[0].mxu0
    %v11326 = vadd.f32 %v10605, %v11325
    %v11327 = vpop.f32.mrb[0].mxu0
    %11328 = vmatprep.mubr.f32.mxu0 0.0
    %11329 = vmatmul.mubr.f32.gmra.mrb[0].mxu0 %v10973
    %v11330 = vpop.f32.mrb[0].mxu0
    %v11331 = vadd.f32 %v10610, %v11330
    %v11332 = vpop.f32.mrb[0].mxu0
    %11333 = vmatprep.mubr.f32.mxu0 0.0
    %11334 = vmatmul.mubr.f32.gmra.mrb[0].mxu0 %v10976
    %v11335 = vpop.f32.mrb[0].mxu0
    %v11336 = vadd.f32 %v10615, %v11335
    %v11337 = vpop.f32.mrb[0].mxu0
    %11338 = vmatprep.mubr.f32.mxu0 0.0
    %11339 = vmatmul.mubr.f32.gmra.mrb[0].mxu0 %v10979
    %v11340 = vpop.f32.mrb[0].mxu0
    %v11341 = vadd.f32 %v10620, %v11340
    %v11342 = vpop.f32.mrb[0].mxu0
    %11343 = vmatprep.mubr.f32.mxu0 0.0
    %11344 = vmatmul.mubr.f32.gmra.mrb[0].mxu0 %v10982
    %v11345 = vpop.f32.mrb[0].mxu0
    %v11346 = vadd.f32 %v10625, %v11345
    %v11347 = vpop.f32.mrb[0].mxu0
    %11348 = vmatprep.mubr.f32.mxu0 0.0
    %11349 = vmatmul.mubr.f32.gmra.mrb[0].mxu0 %v10985
    %v11350 = vpop.f32.mrb[0].mxu0
    %v11351 = vadd.f32 %v10630, %v11350
    %v11352 = vpop.f32.mrb[0].mxu0
    %11353 = vmatprep.mubr.f32.mxu0 0.0
    %11354 = vmatmul.mubr.f32.gmra.mrb[0].mxu0 %v10988
    %v11355 = vpop.f32.mrb[0].mxu0
    %v11356 = vadd.f32 %v10635, %v11355
    %v11357 = vpop.f32.mrb[0].mxu0
    %11358 = vmatprep.mubr.f32.mxu0 0.0
    %11359 = vmatmul.mubr.f32.gmra.mrb[0].mxu0 %v10991
    %v11360 = vpop.f32.mrb[0].mxu0
    %v11361 = vadd.f32 %v10640, %v11360
    %v11362 = vpop.f32.mrb[0].mxu0
    %11363 = vmatprep.mubr.f32.mxu0 0.0
    %11364 = vmatmul.mubr.f32.gmra.mrb[0].mxu0 %v10994
    %v11365 = vpop.f32.mrb[0].mxu0
    %v11366 = vadd.f32 %v10645, %v11365
    %v11367 = vpop.f32.mrb[0].mxu0
    %11368 = vmatprep.mubr.f32.mxu0 0.0
    %11369 = vmatmul.mubr.f32.gmra.mrb[0].mxu0 %v10997
    %v11370 = vpop.f32.mrb[0].mxu0
    %v11371 = vadd.f32 %v10650, %v11370
    %v11372 = vpop.f32.mrb[0].mxu0
    %11373 = vmatprep.mubr.f32.mxu0 0.0
    %11374 = vmatmul.mubr.f32.gmra.mrb[0].mxu0 %v11000
    %v11375 = vpop.f32.mrb[0].mxu0
    %v11376 = vadd.f32 %v10655, %v11375
    %v11377 = vpop.f32.mrb[0].mxu0
    %11378 = vmatprep.mubr.f32.mxu0 0.0
    %11379 = vmatmul.mubr.f32.gmra.mrb[0].mxu0 %v11003
    %v11380 = vpop.f32.mrb[0].mxu0
    %v11381 = vadd.f32 %v10660, %v11380
    %v11382 = vpop.f32.mrb[0].mxu0
    %11383 = vmatprep.mubr.f32.mxu0 0.0
    %11384 = vmatmul.mubr.f32.gmra.mrb[0].mxu0 %v11006
    %v11385 = vpop.f32.mrb[0].mxu0
    %v11386 = vadd.f32 %v10665, %v11385
    %v11387 = vpop.f32.mrb[0].mxu0
    %11388 = vmatprep.mubr.f32.mxu0 0.0
    %11389 = vmatmul.mubr.f32.gmra.mrb[0].mxu0 %v11009
    %v11390 = vpop.f32.mrb[0].mxu0
    %v11391 = vadd.f32 %v10670, %v11390
    %v11392 = vpop.f32.mrb[0].mxu0
    %11393 = vmatprep.mubr.f32.mxu0 0.0
    %11394 = vmatmul.mubr.f32.gmra.mrb[0].mxu0 %v11012
    %v11395 = vpop.f32.mrb[0].mxu0
    %v11396 = vadd.f32 %v10675, %v11395
    %v11397 = vpop.f32.mrb[0].mxu0
    %11398 = vmatprep.mubr.f32.mxu0 0.0
    %11399 = vmatmul.mubr.f32.gmra.mrb[0].mxu0 %v11015
    %v11400 = vpop.f32.mrb[0].mxu0
    %v11401 = vadd.f32 %v10680, %v11400
    %v11402 = vpop.f32.mrb[0].mxu0
    %11403 = vmatprep.mubr.f32.mxu0 0.0
    %11404 = vmatmul.mubr.f32.gmra.mrb[0].mxu0 %v11018
    %v11405 = vpop.f32.mrb[0].mxu0
    %v11406 = vadd.f32 %v10685, %v11405
    %v11407 = vpop.f32.mrb[0].mxu0
    %11408 = vmatprep.mubr.f32.mxu0 0.0
    %11409 = vmatmul.mubr.f32.gmra.mrb[0].mxu0 %v11021
    %v11410 = vpop.f32.mrb[0].mxu0
    %v11411 = vadd.f32 %v10690, %v11410
    %v11412 = vpop.f32.mrb[0].mxu0
    %11413 = vmatprep.mubr.f32.mxu0 0.0
    %11414 = vmatmul.mubr.f32.gmra.mrb[0].mxu0 %v11024
    %v11415 = vpop.f32.mrb[0].mxu0
    %v11416 = vadd.f32 %v10695, %v11415
    %v11417 = vpop.f32.mrb[0].mxu0
    %11418 = vmatprep.mubr.f32.mxu0 0.0
    %11419 = vmatmul.mubr.f32.gmra.mrb[0].mxu0 %v11027
    %v11420 = vpop.f32.mrb[0].mxu0
    %v11421 = vadd.f32 %v10700, %v11420
    %v11422 = vpop.f32.mrb[0].mxu0
    %11423 = vmatprep.mubr.f32.mxu0 0.0
    %11424 = vmatmul.mubr.f32.gmra.mrb[0].mxu0 %v11030
    %v11425 = vpop.f32.mrb[0].mxu0
    %v11426 = vadd.f32 %v10705, %v11425
    %v11427 = vpop.f32.mrb[0].mxu0
    %11428 = vmatprep.mubr.f32.mxu0 0.0
    %11429 = vmatmul.mubr.f32.gmra.mrb[0].mxu0 %v11033
    %v11430 = vpop.f32.mrb[0].mxu0
    %v11431 = vadd.f32 %v10710, %v11430
    %v11432 = vpop.f32.mrb[0].mxu0
    %11433 = vmatprep.mubr.f32.mxu0 0.0
    %11434 = vmatmul.mubr.f32.gmra.mrb[0].mxu0 %v11036
    %v11435 = vpop.f32.mrb[0].mxu0
    %v11436 = vadd.f32 %v10715, %v11435
    %v11437 = vpop.f32.mrb[0].mxu0
    %11438 = vmatprep.mubr.f32.mxu0 0.0
    %11439 = vmatmul.mubr.f32.gmra.mrb[0].mxu0 %v11039
    %v11440 = vpop.f32.mrb[0].mxu0
    %v11441 = vadd.f32 %v10720, %v11440
    %v11442 = vpop.f32.mrb[0].mxu0
    %11443 = vmatprep.mubr.f32.mxu0 0.0
    %11444 = vmatmul.mubr.f32.gmra.mrb[0].mxu0 %v11042
    %v11445 = vpop.f32.mrb[0].mxu0
    %v11446 = vadd.f32 %v10725, %v11445
    %v11447 = vpop.f32.mrb[0].mxu0
    %11448 = vmatprep.mubr.f32.mxu0 0.0
    %11449 = vmatmul.mubr.f32.gmra.mrb[0].mxu0 %v11045
    %v11450 = vpop.f32.mrb[0].mxu0
    %v11451 = vadd.f32 %v10730, %v11450
    %v11452 = vpop.f32.mrb[0].mxu0
    %11453 = vmatprep.mubr.f32.mxu0 0.0
    %11454 = vmatmul.mubr.f32.gmra.mrb[0].mxu0 %v11048
    %v11455 = vpop.f32.mrb[0].mxu0
    %v11456 = vadd.f32 %v10735, %v11455
    %v11457 = vpop.f32.mrb[0].mxu0
    %11458 = vmatprep.mubr.f32.mxu0 0.0
    %11459 = vmatmul.mubr.f32.gmra.mrb[0].mxu0 %v11051
    %v11460 = vpop.f32.mrb[0].mxu0
    %v11461 = vadd.f32 %v10740, %v11460
    %v11462 = vpop.f32.mrb[0].mxu0
    %11463 = vmatprep.mubr.f32.mxu0 0.0
    %11464 = vmatmul.mubr.f32.gmra.mrb[0].mxu0 %v11054
    %v11465 = vpop.f32.mrb[0].mxu0
    %v11466 = vadd.f32 %v10745, %v11465
    %v11467 = vpop.f32.mrb[0].mxu0
    %11468 = vmatprep.mubr.f32.mxu0 0.0
    %11469 = vmatmul.mubr.f32.gmra.mrb[0].mxu0 %v11057
    %v11470 = vpop.f32.mrb[0].mxu0
    %v11471 = vadd.f32 %v10750, %v11470
    %v11472 = vpop.f32.mrb[0].mxu0
    %11473 = vmatprep.mubr.f32.mxu0 0.0
    %11474 = vmatmul.mubr.f32.gmra.mrb[0].mxu0 %v11060
    %v11475 = vpop.f32.mrb[0].mxu0
    %v11476 = vadd.f32 %v10755, %v11475
    %v11477 = vpop.f32.mrb[0].mxu0
    %11478 = vmatprep.mubr.f32.mxu0 0.0
    %11479 = vmatmul.mubr.f32.gmra.mrb[0].mxu0 %v11063
    %v11480 = vpop.f32.mrb[0].mxu0
    %v11481 = vadd.f32 %v10760, %v11480
    %v11482 = vpop.f32.mrb[0].mxu0
    %11483 = vmatprep.mubr.f32.mxu0 0.0
    %11484 = vmatmul.mubr.f32.gmra.mrb[0].mxu0 %v11066
    %v11485 = vpop.f32.mrb[0].mxu0
    %v11486 = vadd.f32 %v10765, %v11485
    %v11487 = vpop.f32.mrb[0].mxu0
    %11488 = vmatprep.mubr.f32.mxu0 0.0
    %11489 = vmatmul.mubr.f32.gmra.mrb[0].mxu0 %v11069
    %v11490 = vpop.f32.mrb[0].mxu0
    %v11491 = vadd.f32 %v10770, %v11490
    %v11492 = vpop.f32.mrb[0].mxu0
    %11493 = vmatprep.mubr.f32.mxu0 0.0
    %11494 = vmatmul.mubr.f32.gmra.mrb[0].mxu0 %v11072
    %v11495 = vpop.f32.mrb[0].mxu0
    %v11496 = vadd.f32 %v10775, %v11495
    %v11497 = vpop.f32.mrb[0].mxu0
    %11498 = vmatprep.mubr.f32.mxu0 0.0
    %11499 = vmatmul.mubr.f32.gmra.mrb[0].mxu0 %v11075
    %v11500 = vpop.f32.mrb[0].mxu0
    %v11501 = vadd.f32 %v10780, %v11500
    %v11502 = vpop.f32.mrb[0].mxu0
    %11503 = vmatprep.mubr.f32.mxu0 0.0
    %11504 = vmatmul.mubr.f32.gmra.mrb[0].mxu0 %v11078
    %v11505 = vpop.f32.mrb[0].mxu0
    %v11506 = vadd.f32 %v10785, %v11505
    %v11507 = vpop.f32.mrb[0].mxu0
    %11508 = vmatprep.mubr.f32.mxu0 0.0
    %11509 = vmatmul.mubr.f32.gmra.mrb[0].mxu0 %v11081
    %v11510 = vpop.f32.mrb[0].mxu0
    %v11511 = vadd.f32 %v10790, %v11510
    %v11512 = vpop.f32.mrb[0].mxu0
    %11513 = vmatprep.mubr.f32.mxu0 0.0
    %11514 = vmatmul.mubr.f32.gmra.mrb[0].mxu0 %v11084
    %v11515 = vpop.f32.mrb[0].mxu0
    %v11516 = vadd.f32 %v10795, %v11515
    %v11517 = vpop.f32.mrb[0].mxu0
    %11518 = vmatprep.mubr.f32.mxu0 0.0
    %11519 = vmatmul.mubr.f32.gmra.mrb[0].mxu0 %v11087
    %v11520 = vpop.f32.mrb[0].mxu0
    %v11521 = vadd.f32 %v10800, %v11520
    %v11522 = vpop.f32.mrb[0].mxu0
    %11523 = vmatprep.mubr.f32.mxu0 0.0
    %11524 = vmatmul.mubr.f32.gmra.mrb[0].mxu0 %v11090
    %v11525 = vpop.f32.mrb[0].mxu0
    %v11526 = vadd.f32 %v10805, %v11525
    %v11527 = vpop.f32.mrb[0].mxu0
    %11528 = vmatprep.mubr.f32.mxu0 0.0
    %11529 = vmatmul.mubr.f32.gmra.mrb[0].mxu0 %v11093
    %v11530 = vpop.f32.mrb[0].mxu0
    %v11531 = vadd.f32 %v10810, %v11530
    %v11532 = vpop.f32.mrb[0].mxu0
    %11533 = vmatprep.mubr.f32.mxu0 0.0
    %11534 = vmatmul.mubr.f32.gmra.mrb[0].mxu0 %v11096
    %v11535 = vpop.f32.mrb[0].mxu0
    %v11536 = vadd.f32 %v10815, %v11535
    %v11537 = vpop.f32.mrb[0].mxu0
    %11538 = vmatprep.mubr.f32.mxu0 0.0
    %11539 = vmatmul.mubr.f32.gmra.mrb[0].mxu0 %v11099
    %v11540 = vpop.f32.mrb[0].mxu0
    %v11541 = vadd.f32 %v10820, %v11540
    %v11542 = vpop.f32.mrb[0].mxu0
    %11543 = vmatprep.mubr.f32.mxu0 0.0
    %11544 = vmatmul.mubr.f32.gmra.mrb[0].mxu0 %v11102
    %v11545 = vpop.f32.mrb[0].mxu0
    %v11546 = vadd.f32 %v10825, %v11545
    %v11547 = vpop.f32.mrb[0].mxu0
    %11548 = vmatprep.mubr.f32.mxu0 0.0
    %11549 = vmatmul.mubr.f32.gmra.mrb[0].mxu0 %v11105
    %v11550 = vpop.f32.mrb[0].mxu0
    %v11551 = vadd.f32 %v10830, %v11550
    %v11552 = vpop.f32.mrb[0].mxu0
    %11553 = vmatprep.mubr.f32.mxu0 0.0
    %11554 = vmatmul.mubr.f32.gmra.mrb[0].mxu0 %v11108
    %v11555 = vpop.f32.mrb[0].mxu0
    %v11556 = vadd.f32 %v10835, %v11555
    %v11557 = vpop.f32.mrb[0].mxu0
    %11558 = vmatprep.mubr.f32.mxu0 0.0
    %11559 = vmatmul.mubr.f32.gmra.mrb[0].mxu0 %v11111
    %v11560 = vpop.f32.mrb[0].mxu0
    %v11561 = vadd.f32 %v10840, %v11560
    %v11562 = vpop.f32.mrb[0].mxu0
    %11563 = vmatprep.mubr.f32.mxu0 0.0
    %11564 = vmatmul.mubr.f32.gmra.mrb[0].mxu0 %v11114
    %v11565 = vpop.f32.mrb[0].mxu0
    %v11566 = vadd.f32 %v10845, %v11565
    %v11567 = vpop.f32.mrb[0].mxu0
    %11568 = vmatprep.mubr.f32.mxu0 0.0
    %11569 = vmatmul.mubr.f32.gmra.mrb[0].mxu0 %v11117
    %v11570 = vpop.f32.mrb[0].mxu0
    %v11571 = vadd.f32 %v10850, %v11570
    %v11572 = vpop.f32.mrb[0].mxu0
    %11573 = vmatprep.mubr.f32.mxu0 0.0
    %11574 = vmatmul.mubr.f32.gmra.mrb[0].mxu0 %v11120
    %v11575 = vpop.f32.mrb[0].mxu0
    %v11576 = vadd.f32 %v10855, %v11575
    %v11577 = vpop.f32.mrb[0].mxu0
    %11578 = vmatprep.mubr.f32.mxu0 0.0
    %11579 = vmatmul.mubr.f32.gmra.mrb[0].mxu0 %v11123
    %v11580 = vpop.f32.mrb[0].mxu0
    %v11581 = vadd.f32 %v10860, %v11580
    %v11582 = vpop.f32.mrb[0].mxu0
    %11583 = vmatprep.mubr.f32.mxu0 0.0
    %11584 = vmatmul.mubr.f32.gmra.mrb[0].mxu0 %v11126
    %v11585 = vpop.f32.mrb[0].mxu0
    %v11586 = vadd.f32 %v10865, %v11585
    %v11587 = vpop.f32.mrb[0].mxu0
    %11588 = vmatprep.mubr.f32.mxu0 0.0
    %11589 = vmatmul.mubr.f32.gmra.mrb[0].mxu0 %v11129
    %v11590 = vpop.f32.mrb[0].mxu0
    %v11591 = vadd.f32 %v10870, %v11590
    %v11592 = vpop.f32.mrb[0].mxu0
    %11593 = vmatprep.mubr.f32.mxu0 0.0
    %11594 = vmatmul.mubr.f32.gmra.mrb[0].mxu0 %v11132
    %v11595 = vpop.f32.mrb[0].mxu0
    %v11596 = vadd.f32 %v10875, %v11595
    %v11597 = vpop.f32.mrb[0].mxu0
    %11598 = vmatprep.mubr.f32.mxu0 0.0
    %11599 = vmatmul.mubr.f32.gmra.mrb[0].mxu0 %v11135
    %v11600 = vpop.f32.mrb[0].mxu0
    %v11601 = vadd.f32 %v10880, %v11600
    %v11602 = vpop.f32.mrb[0].mxu0
    %11603 = vmatprep.mubr.f32.mxu0 0.0
    %11604 = vmatmul.mubr.f32.gmra.mrb[0].mxu0 %v11138
    %v11605 = vpop.f32.mrb[0].mxu0
    %v11606 = vadd.f32 %v10885, %v11605
    %v11607 = vpop.f32.mrb[0].mxu0
    %11608 = vmatprep.mubr.f32.mxu0 0.0
    %11609 = vmatmul.mubr.f32.gmra.mrb[0].mxu0 %v11141
    %v11610 = vpop.f32.mrb[0].mxu0
    %v11611 = vadd.f32 %v10890, %v11610
    %v11612 = vpop.f32.mrb[0].mxu0
    %11613 = vmatprep.mubr.f32.mxu0 0.0
    %11614 = vmatmul.mubr.f32.gmra.mrb[0].mxu0 %v11144
    %v11615 = vpop.f32.mrb[0].mxu0
    %v11616 = vadd.f32 %v10895, %v11615
    %v11617 = vpop.f32.mrb[0].mxu0
    %11618 = vmatprep.mubr.f32.mxu0 0.0
    %11619 = vmatmul.mubr.f32.gmra.mrb[0].mxu0 %v11147
    %v11620 = vpop.f32.mrb[0].mxu0
    %v11621 = vadd.f32 %v10900, %v11620
    %v11622 = vpop.f32.mrb[0].mxu0
    %11623 = vdwg.mxu0
    %v11624 = vld [vmem:[#allocation4 + $0x2a] sm:$0xff]
    %v11625 = vld [vmem:[#allocation4 + $0x32] sm:$0xff]
    %v11626 = vld [vmem:[#allocation4 + $0x3a] sm:$0xff]
    %v11627 = vld [vmem:[#allocation4 + $0x42] sm:$0xff]
    %v11628 = vld [vmem:[#allocation4 + $0x4a] sm:$0xff]
    %v11629 = vld [vmem:[#allocation4 + $0x52] sm:$0xff]
    %v11630 = vld [vmem:[#allocation4 + $0x5a] sm:$0xff]
    %v11631 = vld [vmem:[#allocation4 + $0x62] sm:$0xff]
    %v11632 = vld [vmem:[#allocation4 + $0x6a] sm:$0xff]
    %v11633 = vld [vmem:[#allocation4 + $0x72] sm:$0xff]
    %v11634 = vld [vmem:[#allocation4 + $0x7a] sm:$0xff]
    %v11635 = vld [vmem:[#allocation4 + $0x82] sm:$0xff]
    %v11636 = vld [vmem:[#allocation4 + $0x8a] sm:$0xff]
    %v11637 = vld [vmem:[#allocation4 + $0x92] sm:$0xff]
    %v11638 = vld [vmem:[#allocation4 + $0x9a] sm:$0xff]
    %v11639 = vld [vmem:[#allocation4 + $0xa2] sm:$0xff]
    %v11640 = vld [vmem:[#allocation4 + $0xaa] sm:$0xff]
    %v11641 = vld [vmem:[#allocation4 + $0xb2] sm:$0xff]
    %v11642 = vld [vmem:[#allocation4 + $0xba] sm:$0xff]
    %v11643 = vld [vmem:[#allocation4 + $0xc2] sm:$0xff]
    %v11644 = vld [vmem:[#allocation4 + $0xca] sm:$0xff]
    %v11645 = vld [vmem:[#allocation4 + $0xd2] sm:$0xff]
    %v11646 = vld [vmem:[#allocation4 + $0xda] sm:$0xff]
    %v11647 = vld [vmem:[#allocation4 + $0xe2] sm:$0xff]
    %v11648 = vld [vmem:[#allocation4 + $0xea] sm:$0xff]
    %v11649 = vld [vmem:[#allocation4 + $0xf2] sm:$0xff]
    %v11650 = vld [vmem:[#allocation4 + $0xfa] sm:$0xff]
    %v11651 = vld [vmem:[#allocation4 + $0x102] sm:$0xff]
    %v11652 = vld [vmem:[#allocation4 + $0x10a] sm:$0xff]
    %v11653 = vld [vmem:[#allocation4 + $0x112] sm:$0xff]
    %v11654 = vld [vmem:[#allocation4 + $0x11a] sm:$0xff]
    %v11655 = vld [vmem:[#allocation4 + $0x122] sm:$0xff]
    %v11656 = vld [vmem:[#allocation4 + $0x12a] sm:$0xff]
    %v11657 = vld [vmem:[#allocation4 + $0x132] sm:$0xff]
    %v11658 = vld [vmem:[#allocation4 + $0x13a] sm:$0xff]
    %v11659 = vld [vmem:[#allocation4 + $0x142] sm:$0xff]
    %v11660 = vld [vmem:[#allocation4 + $0x14a] sm:$0xff]
    %v11661 = vld [vmem:[#allocation4 + $0x152] sm:$0xff]
    %v11662 = vld [vmem:[#allocation4 + $0x15a] sm:$0xff]
    %v11663 = vld [vmem:[#allocation4 + $0x162] sm:$0xff]
    %v11664 = vld [vmem:[#allocation4 + $0x16a] sm:$0xff]
    %v11665 = vld [vmem:[#allocation4 + $0x172] sm:$0xff]
    %v11666 = vld [vmem:[#allocation4 + $0x17a] sm:$0xff]
    %v11667 = vld [vmem:[#allocation4 + $0x182] sm:$0xff]
    %v11668 = vld [vmem:[#allocation4 + $0x18a] sm:$0xff]
    %v11669 = vld [vmem:[#allocation4 + $0x192] sm:$0xff]
    %v11670 = vld [vmem:[#allocation4 + $0x19a] sm:$0xff]
    %v11671 = vld [vmem:[#allocation4 + $0x1a2] sm:$0xff]
    %v11672 = vld [vmem:[#allocation4 + $0x1aa] sm:$0xff]
    %v11673 = vld [vmem:[#allocation4 + $0x1b2] sm:$0xff]
    %v11674 = vld [vmem:[#allocation4 + $0x1ba] sm:$0xff]
    %v11675 = vld [vmem:[#allocation4 + $0x1c2] sm:$0xff]
    %v11676 = vld [vmem:[#allocation4 + $0x1ca] sm:$0xff]
    %v11677 = vld [vmem:[#allocation4 + $0x1d2] sm:$0xff]
    %v11678 = vld [vmem:[#allocation4 + $0x1da] sm:$0xff]
    %v11679 = vld [vmem:[#allocation4 + $0x1e2] sm:$0xff]
    %v11680 = vld [vmem:[#allocation4 + $0x1ea] sm:$0xff]
    %v11681 = vld [vmem:[#allocation4 + $0x1f2] sm:$0xff]
    %v11682 = vld [vmem:[#allocation4 + $0x1fa] sm:$0xff]
    %v11683 = vld [vmem:[#allocation4 + $0x202] sm:$0xff]
    %v11684 = vld [vmem:[#allocation4 + $0x20a] sm:$0xff]
    %v11685 = vld [vmem:[#allocation4 + $0x212] sm:$0xff]
    %v11686 = vld [vmem:[#allocation4 + $0x21a] sm:$0xff]
    %v11687 = vld [vmem:[#allocation4 + $0x222] sm:$0xff]
    %v11688 = vld [vmem:[#allocation4 + $0x22a] sm:$0xff]
    %v11689 = vld [vmem:[#allocation4 + $0x232] sm:$0xff]
    %v11690 = vld [vmem:[#allocation4 + $0x23a] sm:$0xff]
    %v11691 = vld [vmem:[#allocation4 + $0x242] sm:$0xff]
    %v11692 = vld [vmem:[#allocation4 + $0x24a] sm:$0xff]
    %v11693 = vld [vmem:[#allocation4 + $0x252] sm:$0xff]
    %v11694 = vld [vmem:[#allocation4 + $0x25a] sm:$0xff]
    %v11695 = vld [vmem:[#allocation4 + $0x262] sm:$0xff]
    %v11696 = vld [vmem:[#allocation4 + $0x26a] sm:$0xff]
    %v11697 = vld [vmem:[#allocation4 + $0x272] sm:$0xff]
    %v11698 = vld [vmem:[#allocation4 + $0x27a] sm:$0xff]
    %v11699 = vld [vmem:[#allocation4 + $0x282] sm:$0xff]
    %v11700 = vld [vmem:[#allocation4 + $0x28a] sm:$0xff]
    %v11701 = vld [vmem:[#allocation4 + $0x292] sm:$0xff]
    %v11702 = vld [vmem:[#allocation4 + $0x29a] sm:$0xff]
    %v11703 = vld [vmem:[#allocation4 + $0x2a2] sm:$0xff]
    %v11704 = vld [vmem:[#allocation4 + $0x2aa] sm:$0xff]
    %v11705 = vld [vmem:[#allocation4 + $0x2b2] sm:$0xff]
    %s11706 = scalar_lea.vmem %s5, 96
    %v11707 = vld [vmem:[%s11706] sm:$0xff]
    %v11708 = vld [vmem:[%s11706 + $0x8] sm:$0xff]
    %v11709 = vld [vmem:[%s11706 + $0x10] sm:$0xff]
    %v11710 = vld [vmem:[%s11706 + $0x18] sm:$0xff]
    %v11711 = vld [vmem:[%s11706 + $0x20] sm:$0xff]
    %v11712 = vld [vmem:[%s11706 + $0x28] sm:$0xff]
    %v11714 = vsel %vm9922, %v11624, 0
    %v11717 = vsel %vm9922, %v11625, 0
    %v11720 = vsel %vm9922, %v11626, 0
    %v11723 = vsel %vm9922, %v11627, 0
    %v11726 = vsel %vm9922, %v11628, 0
    %v11729 = vsel %vm9922, %v11629, 0
    %v11732 = vsel %vm9922, %v11630, 0
    %v11735 = vsel %vm9922, %v11631, 0
    %v11738 = vsel %vm9922, %v11632, 0
    %v11741 = vsel %vm9922, %v11633, 0
    %v11744 = vsel %vm9922, %v11634, 0
    %v11747 = vsel %vm9922, %v11635, 0
    %v11750 = vsel %vm9922, %v11636, 0
    %v11753 = vsel %vm9922, %v11637, 0
    %v11756 = vsel %vm9922, %v11638, 0
    %v11759 = vsel %vm9922, %v11639, 0
    %v11762 = vsel %vm9922, %v11640, 0
    %v11765 = vsel %vm9922, %v11641, 0
    %v11768 = vsel %vm9922, %v11642, 0
    %v11771 = vsel %vm9922, %v11643, 0
    %v11774 = vsel %vm9922, %v11644, 0
    %v11777 = vsel %vm9922, %v11645, 0
    %v11780 = vsel %vm9922, %v11646, 0
    %v11783 = vsel %vm9922, %v11647, 0
    %v11786 = vsel %vm9922, %v11648, 0
    %v11789 = vsel %vm9922, %v11649, 0
    %v11792 = vsel %vm9922, %v11650, 0
    %v11795 = vsel %vm9922, %v11651, 0
    %v11798 = vsel %vm9922, %v11652, 0
    %v11801 = vsel %vm9922, %v11653, 0
    %v11804 = vsel %vm9922, %v11654, 0
    %v11807 = vsel %vm9922, %v11655, 0
    %v11810 = vsel %vm9922, %v11656, 0
    %v11813 = vsel %vm9922, %v11657, 0
    %v11816 = vsel %vm9922, %v11658, 0
    %v11819 = vsel %vm9922, %v11659, 0
    %v11822 = vsel %vm9922, %v11660, 0
    %v11825 = vsel %vm9922, %v11661, 0
    %v11828 = vsel %vm9922, %v11662, 0
    %v11831 = vsel %vm9922, %v11663, 0
    %v11834 = vsel %vm9922, %v11664, 0
    %v11837 = vsel %vm9922, %v11665, 0
    %v11840 = vsel %vm9922, %v11666, 0
    %v11843 = vsel %vm9922, %v11667, 0
    %v11846 = vsel %vm9922, %v11668, 0
    %v11849 = vsel %vm9922, %v11669, 0
    %v11852 = vsel %vm9922, %v11670, 0
    %v11855 = vsel %vm9922, %v11671, 0
    %v11858 = vsel %vm9922, %v11672, 0
    %v11861 = vsel %vm9922, %v11673, 0
    %v11864 = vsel %vm9922, %v11674, 0
    %v11867 = vsel %vm9922, %v11675, 0
    %v11870 = vsel %vm9922, %v11676, 0
    %v11873 = vsel %vm9922, %v11677, 0
    %v11876 = vsel %vm9922, %v11678, 0
    %v11879 = vsel %vm9922, %v11679, 0
    %v11882 = vsel %vm9922, %v11680, 0
    %v11885 = vsel %vm9922, %v11681, 0
    %v11888 = vsel %vm9922, %v11682, 0
    %v11891 = vsel %vm9922, %v11683, 0
    %v11894 = vsel %vm9922, %v11684, 0
    %v11897 = vsel %vm9922, %v11685, 0
    %v11900 = vsel %vm9922, %v11686, 0
    %v11903 = vsel %vm9922, %v11687, 0
    %v11906 = vsel %vm9922, %v11688, 0
    %v11909 = vsel %vm9922, %v11689, 0
    %v11912 = vsel %vm9922, %v11690, 0
    %v11915 = vsel %vm9922, %v11691, 0
    %v11918 = vsel %vm9922, %v11692, 0
    %v11921 = vsel %vm9922, %v11693, 0
    %v11924 = vsel %vm9922, %v11694, 0
    %v11927 = vsel %vm9922, %v11695, 0
    %v11930 = vsel %vm9922, %v11696, 0
    %v11933 = vsel %vm9922, %v11697, 0
    %v11936 = vsel %vm9922, %v11698, 0
    %v11939 = vsel %vm9922, %v11699, 0
    %v11942 = vsel %vm9922, %v11700, 0
    %v11945 = vsel %vm9922, %v11701, 0
    %v11948 = vsel %vm9922, %v11702, 0
    %v11951 = vsel %vm9922, %v11703, 0
    %v11954 = vsel %vm9922, %v11704, 0
    %v11957 = vsel %vm9922, %v11705, 0
    %11959 = vmatprep.subr.mxu0 0.0
    %11960 = vmatpush1.msra.mxu0 %v11707
    %11961 = vmatprep.subr.mxu0 0.0
    %11962 = vmatpush1.msra.mxu0 %v11708
    %11963 = vmatprep.subr.mxu0 0.0
    %11964 = vmatpush1.msra.mxu0 %v11709
    %11965 = vmatprep.subr.mxu0 0.0
    %11966 = vmatpush1.msra.mxu0 %v11710
    %11967 = vmatprep.subr.mxu0 0.0
    %11968 = vmatpush1.msra.mxu0 %v11711
    %11969 = vmatprep.subr.mxu0 0.0
    %11970 = vmatpush1.msra.mxu0 %v11712
    %11971 = vmatprep.subr.mxu0 0.0
    %11972 = vmatpush1.msra.mxu0 0.0
    %11973 = vmatprep.subr.mxu0 0.0
    %11974 = vmatpush1.msra.mxu0 0.0
    %11975 = vmatprep.subr.mxu0 0.0
    %11976 = vmatpush1.msra.mxu0 0.0
    %11977 = vmatprep.subr.mxu0 0.0
    %11978 = vmatpush1.msra.mxu0 0.0
    %11979 = vmatprep.subr.mxu0 0.0
    %11980 = vmatpush1.msra.mxu0 0.0
    %11981 = vmatprep.subr.mxu0 0.0
    %11982 = vmatpush1.msra.mxu0 0.0
    %11983 = vmatprep.subr.mxu0 0.0
    %11984 = vmatpush1.msra.mxu0 0.0
    %11985 = vmatprep.subr.mxu0 0.0
    %11986 = vmatpush1.msra.mxu0 0.0
    %11987 = vmatprep.subr.mxu0 0.0
    %11988 = vmatpush1.msra.mxu0 0.0
    %11989 = vmatprep.subr.mxu0 0.0
    %11990 = vmatpush1.msra.mxu0 0.0
    %11991 = vmatprep.subr.mxu0 0.0
    %11992 = vmatpush1.msra.mxu0 0.0
    %11993 = vmatprep.subr.mxu0 0.0
    %11994 = vmatpush1.msra.mxu0 0.0
    %11995 = vmatprep.subr.mxu0 0.0
    %11996 = vmatpush1.msra.mxu0 0.0
    %11997 = vmatprep.subr.mxu0 0.0
    %11998 = vmatpush1.msra.mxu0 0.0
    %11999 = vmatprep.subr.mxu0 0.0
    %12000 = vmatpush1.msra.mxu0 0.0
    %12001 = vmatprep.subr.mxu0 0.0
    %12002 = vmatpush1.msra.mxu0 0.0
    %12003 = vmatprep.subr.mxu0 0.0
    %12004 = vmatpush1.msra.mxu0 0.0
    %12005 = vmatprep.subr.mxu0 0.0
    %12006 = vmatpush1.msra.mxu0 0.0
    %12007 = vmatprep.subr.mxu0 0.0
    %12008 = vmatpush1.msra.mxu0 0.0
    %12009 = vmatprep.subr.mxu0 0.0
    %12010 = vmatpush1.msra.mxu0 0.0
    %12011 = vmatprep.subr.mxu0 0.0
    %12012 = vmatpush1.msra.mxu0 0.0
    %12013 = vmatprep.subr.mxu0 0.0
    %12014 = vmatpush1.msra.mxu0 0.0
    %12015 = vmatprep.subr.mxu0 0.0
    %12016 = vmatpush1.msra.mxu0 0.0
    %12017 = vmatprep.subr.mxu0 0.0
    %12018 = vmatpush1.msra.mxu0 0.0
    %12019 = vmatprep.subr.mxu0 0.0
    %12020 = vmatpush1.msra.mxu0 0.0
    %12021 = vmatprep.subr.mxu0 0.0
    %12022 = vmatpush1.msra.mxu0 0.0
    %12023 = vmatprep.mubr.f32.mxu0 0.0
    %12024 = vmatmul.mubr.f32.gmra.mrb[0].mxu0 %v11714
    %v12025 = vpop.f32.mrb[0].mxu0
    %v12026 = vadd.f32 0.0, %v12025
    %v12027 = vpop.f32.mrb[0].mxu0
    %12028 = vmatprep.mubr.f32.mxu0 0.0
    %12029 = vmatmul.mubr.f32.gmra.mrb[0].mxu0 %v11717
    %v12030 = vpop.f32.mrb[0].mxu0
    %v12031 = vadd.f32 0.0, %v12030
    %v12032 = vpop.f32.mrb[0].mxu0
    %12033 = vmatprep.mubr.f32.mxu0 0.0
    %12034 = vmatmul.mubr.f32.gmra.mrb[0].mxu0 %v11720
    %v12035 = vpop.f32.mrb[0].mxu0
    %v12036 = vadd.f32 0.0, %v12035
    %v12037 = vpop.f32.mrb[0].mxu0
    %12038 = vmatprep.mubr.f32.mxu0 0.0
    %12039 = vmatmul.mubr.f32.gmra.mrb[0].mxu0 %v11723
    %v12040 = vpop.f32.mrb[0].mxu0
    %v12041 = vadd.f32 0.0, %v12040
    %v12042 = vpop.f32.mrb[0].mxu0
    %12043 = vmatprep.mubr.f32.mxu0 0.0
    %12044 = vmatmul.mubr.f32.gmra.mrb[0].mxu0 %v11726
    %v12045 = vpop.f32.mrb[0].mxu0
    %v12046 = vadd.f32 0.0, %v12045
    %v12047 = vpop.f32.mrb[0].mxu0
    %12048 = vmatprep.mubr.f32.mxu0 0.0
    %12049 = vmatmul.mubr.f32.gmra.mrb[0].mxu0 %v11729
    %v12050 = vpop.f32.mrb[0].mxu0
    %v12051 = vadd.f32 0.0, %v12050
    %v12052 = vpop.f32.mrb[0].mxu0
    %12053 = vmatprep.mubr.f32.mxu0 0.0
    %12054 = vmatmul.mubr.f32.gmra.mrb[0].mxu0 %v11732
    %v12055 = vpop.f32.mrb[0].mxu0
    %v12056 = vadd.f32 0.0, %v12055
    %v12057 = vpop.f32.mrb[0].mxu0
    %12058 = vmatprep.mubr.f32.mxu0 0.0
    %12059 = vmatmul.mubr.f32.gmra.mrb[0].mxu0 %v11735
    %v12060 = vpop.f32.mrb[0].mxu0
    %v12061 = vadd.f32 0.0, %v12060
    %v12062 = vpop.f32.mrb[0].mxu0
    %12063 = vmatprep.mubr.f32.mxu0 0.0
    %12064 = vmatmul.mubr.f32.gmra.mrb[0].mxu0 %v11738
    %v12065 = vpop.f32.mrb[0].mxu0
    %v12066 = vadd.f32 0.0, %v12065
    %v12067 = vpop.f32.mrb[0].mxu0
    %12068 = vmatprep.mubr.f32.mxu0 0.0
    %12069 = vmatmul.mubr.f32.gmra.mrb[0].mxu0 %v11741
    %v12070 = vpop.f32.mrb[0].mxu0
    %v12071 = vadd.f32 0.0, %v12070
    %v12072 = vpop.f32.mrb[0].mxu0
    %12073 = vmatprep.mubr.f32.mxu0 0.0
    %12074 = vmatmul.mubr.f32.gmra.mrb[0].mxu0 %v11744
    %v12075 = vpop.f32.mrb[0].mxu0
    %v12076 = vadd.f32 0.0, %v12075
    %v12077 = vpop.f32.mrb[0].mxu0
    %12078 = vmatprep.mubr.f32.mxu0 0.0
    %12079 = vmatmul.mubr.f32.gmra.mrb[0].mxu0 %v11747
    %v12080 = vpop.f32.mrb[0].mxu0
    %v12081 = vadd.f32 0.0, %v12080
    %v12082 = vpop.f32.mrb[0].mxu0
    %12083 = vmatprep.mubr.f32.mxu0 0.0
    %12084 = vmatmul.mubr.f32.gmra.mrb[0].mxu0 %v11750
    %v12085 = vpop.f32.mrb[0].mxu0
    %v12086 = vadd.f32 0.0, %v12085
    %v12087 = vpop.f32.mrb[0].mxu0
    %12088 = vmatprep.mubr.f32.mxu0 0.0
    %12089 = vmatmul.mubr.f32.gmra.mrb[0].mxu0 %v11753
    %v12090 = vpop.f32.mrb[0].mxu0
    %v12091 = vadd.f32 0.0, %v12090
    %v12092 = vpop.f32.mrb[0].mxu0
    %12093 = vmatprep.mubr.f32.mxu0 0.0
    %12094 = vmatmul.mubr.f32.gmra.mrb[0].mxu0 %v11756
    %v12095 = vpop.f32.mrb[0].mxu0
    %v12096 = vadd.f32 0.0, %v12095
    %v12097 = vpop.f32.mrb[0].mxu0
    %12098 = vmatprep.mubr.f32.mxu0 0.0
    %12099 = vmatmul.mubr.f32.gmra.mrb[0].mxu0 %v11759
    %v12100 = vpop.f32.mrb[0].mxu0
    %v12101 = vadd.f32 0.0, %v12100
    %v12102 = vpop.f32.mrb[0].mxu0
    %12103 = vmatprep.mubr.f32.mxu0 0.0
    %12104 = vmatmul.mubr.f32.gmra.mrb[0].mxu0 %v11762
    %v12105 = vpop.f32.mrb[0].mxu0
    %v12106 = vadd.f32 0.0, %v12105
    %v12107 = vpop.f32.mrb[0].mxu0
    %12108 = vmatprep.mubr.f32.mxu0 0.0
    %12109 = vmatmul.mubr.f32.gmra.mrb[0].mxu0 %v11765
    %v12110 = vpop.f32.mrb[0].mxu0
    %v12111 = vadd.f32 0.0, %v12110
    %v12112 = vpop.f32.mrb[0].mxu0
    %12113 = vmatprep.mubr.f32.mxu0 0.0
    %12114 = vmatmul.mubr.f32.gmra.mrb[0].mxu0 %v11768
    %v12115 = vpop.f32.mrb[0].mxu0
    %v12116 = vadd.f32 0.0, %v12115
    %v12117 = vpop.f32.mrb[0].mxu0
    %12118 = vmatprep.mubr.f32.mxu0 0.0
    %12119 = vmatmul.mubr.f32.gmra.mrb[0].mxu0 %v11771
    %v12120 = vpop.f32.mrb[0].mxu0
    %v12121 = vadd.f32 0.0, %v12120
    %v12122 = vpop.f32.mrb[0].mxu0
    %12123 = vmatprep.mubr.f32.mxu0 0.0
    %12124 = vmatmul.mubr.f32.gmra.mrb[0].mxu0 %v11774
    %v12125 = vpop.f32.mrb[0].mxu0
    %v12126 = vadd.f32 0.0, %v12125
    %v12127 = vpop.f32.mrb[0].mxu0
    %12128 = vmatprep.mubr.f32.mxu0 0.0
    %12129 = vmatmul.mubr.f32.gmra.mrb[0].mxu0 %v11777
    %v12130 = vpop.f32.mrb[0].mxu0
    %v12131 = vadd.f32 0.0, %v12130
    %v12132 = vpop.f32.mrb[0].mxu0
    %12133 = vmatprep.mubr.f32.mxu0 0.0
    %12134 = vmatmul.mubr.f32.gmra.mrb[0].mxu0 %v11780
    %v12135 = vpop.f32.mrb[0].mxu0
    %v12136 = vadd.f32 0.0, %v12135
    %v12137 = vpop.f32.mrb[0].mxu0
    %12138 = vmatprep.mubr.f32.mxu0 0.0
    %12139 = vmatmul.mubr.f32.gmra.mrb[0].mxu0 %v11783
    %v12140 = vpop.f32.mrb[0].mxu0
    %v12141 = vadd.f32 0.0, %v12140
    %v12142 = vpop.f32.mrb[0].mxu0
    %12143 = vmatprep.mubr.f32.mxu0 0.0
    %12144 = vmatmul.mubr.f32.gmra.mrb[0].mxu0 %v11786
    %v12145 = vpop.f32.mrb[0].mxu0
    %v12146 = vadd.f32 0.0, %v12145
    %v12147 = vpop.f32.mrb[0].mxu0
    %12148 = vmatprep.mubr.f32.mxu0 0.0
    %12149 = vmatmul.mubr.f32.gmra.mrb[0].mxu0 %v11789
    %v12150 = vpop.f32.mrb[0].mxu0
    %v12151 = vadd.f32 0.0, %v12150
    %v12152 = vpop.f32.mrb[0].mxu0
    %12153 = vmatprep.mubr.f32.mxu0 0.0
    %12154 = vmatmul.mubr.f32.gmra.mrb[0].mxu0 %v11792
    %v12155 = vpop.f32.mrb[0].mxu0
    %v12156 = vadd.f32 0.0, %v12155
    %v12157 = vpop.f32.mrb[0].mxu0
    %12158 = vmatprep.mubr.f32.mxu0 0.0
    %12159 = vmatmul.mubr.f32.gmra.mrb[0].mxu0 %v11795
    %v12160 = vpop.f32.mrb[0].mxu0
    %v12161 = vadd.f32 0.0, %v12160
    %v12162 = vpop.f32.mrb[0].mxu0
    %12163 = vmatprep.mubr.f32.mxu0 0.0
    %12164 = vmatmul.mubr.f32.gmra.mrb[0].mxu0 %v11798
    %v12165 = vpop.f32.mrb[0].mxu0
    %v12166 = vadd.f32 0.0, %v12165
    %v12167 = vpop.f32.mrb[0].mxu0
    %12168 = vmatprep.mubr.f32.mxu0 0.0
    %12169 = vmatmul.mubr.f32.gmra.mrb[0].mxu0 %v11801
    %v12170 = vpop.f32.mrb[0].mxu0
    %v12171 = vadd.f32 0.0, %v12170
    %v12172 = vpop.f32.mrb[0].mxu0
    %12173 = vmatprep.mubr.f32.mxu0 0.0
    %12174 = vmatmul.mubr.f32.gmra.mrb[0].mxu0 %v11804
    %v12175 = vpop.f32.mrb[0].mxu0
    %v12176 = vadd.f32 0.0, %v12175
    %v12177 = vpop.f32.mrb[0].mxu0
    %12178 = vmatprep.mubr.f32.mxu0 0.0
    %12179 = vmatmul.mubr.f32.gmra.mrb[0].mxu0 %v11807
    %v12180 = vpop.f32.mrb[0].mxu0
    %v12181 = vadd.f32 0.0, %v12180
    %v12182 = vpop.f32.mrb[0].mxu0
    %12183 = vmatprep.mubr.f32.mxu0 0.0
    %12184 = vmatmul.mubr.f32.gmra.mrb[0].mxu0 %v11810
    %v12185 = vpop.f32.mrb[0].mxu0
    %v12186 = vadd.f32 0.0, %v12185
    %v12187 = vpop.f32.mrb[0].mxu0
    %12188 = vmatprep.mubr.f32.mxu0 0.0
    %12189 = vmatmul.mubr.f32.gmra.mrb[0].mxu0 %v11813
    %v12190 = vpop.f32.mrb[0].mxu0
    %v12191 = vadd.f32 0.0, %v12190
    %v12192 = vpop.f32.mrb[0].mxu0
    %12193 = vmatprep.mubr.f32.mxu0 0.0
    %12194 = vmatmul.mubr.f32.gmra.mrb[0].mxu0 %v11816
    %v12195 = vpop.f32.mrb[0].mxu0
    %v12196 = vadd.f32 0.0, %v12195
    %v12197 = vpop.f32.mrb[0].mxu0
    %12198 = vmatprep.mubr.f32.mxu0 0.0
    %12199 = vmatmul.mubr.f32.gmra.mrb[0].mxu0 %v11819
    %v12200 = vpop.f32.mrb[0].mxu0
    %v12201 = vadd.f32 0.0, %v12200
    %v12202 = vpop.f32.mrb[0].mxu0
    %12203 = vmatprep.mubr.f32.mxu0 0.0
    %12204 = vmatmul.mubr.f32.gmra.mrb[0].mxu0 %v11822
    %v12205 = vpop.f32.mrb[0].mxu0
    %v12206 = vadd.f32 0.0, %v12205
    %v12207 = vpop.f32.mrb[0].mxu0
    %12208 = vmatprep.mubr.f32.mxu0 0.0
    %12209 = vmatmul.mubr.f32.gmra.mrb[0].mxu0 %v11825
    %v12210 = vpop.f32.mrb[0].mxu0
    %v12211 = vadd.f32 0.0, %v12210
    %v12212 = vpop.f32.mrb[0].mxu0
    %12213 = vmatprep.mubr.f32.mxu0 0.0
    %12214 = vmatmul.mubr.f32.gmra.mrb[0].mxu0 %v11828
    %v12215 = vpop.f32.mrb[0].mxu0
    %v12216 = vadd.f32 0.0, %v12215
    %v12217 = vpop.f32.mrb[0].mxu0
    %12218 = vmatprep.mubr.f32.mxu0 0.0
    %12219 = vmatmul.mubr.f32.gmra.mrb[0].mxu0 %v11831
    %v12220 = vpop.f32.mrb[0].mxu0
    %v12221 = vadd.f32 0.0, %v12220
    %v12222 = vpop.f32.mrb[0].mxu0
    %12223 = vmatprep.mubr.f32.mxu0 0.0
    %12224 = vmatmul.mubr.f32.gmra.mrb[0].mxu0 %v11834
    %v12225 = vpop.f32.mrb[0].mxu0
    %v12226 = vadd.f32 0.0, %v12225
    %v12227 = vpop.f32.mrb[0].mxu0
    %12228 = vmatprep.mubr.f32.mxu0 0.0
    %12229 = vmatmul.mubr.f32.gmra.mrb[0].mxu0 %v11837
    %v12230 = vpop.f32.mrb[0].mxu0
    %v12231 = vadd.f32 0.0, %v12230
    %v12232 = vpop.f32.mrb[0].mxu0
    %12233 = vmatprep.mubr.f32.mxu0 0.0
    %12234 = vmatmul.mubr.f32.gmra.mrb[0].mxu0 %v11840
    %v12235 = vpop.f32.mrb[0].mxu0
    %v12236 = vadd.f32 0.0, %v12235
    %v12237 = vpop.f32.mrb[0].mxu0
    %12238 = vmatprep.mubr.f32.mxu0 0.0
    %12239 = vmatmul.mubr.f32.gmra.mrb[0].mxu0 %v11843
    %v12240 = vpop.f32.mrb[0].mxu0
    %v12241 = vadd.f32 0.0, %v12240
    %v12242 = vpop.f32.mrb[0].mxu0
    %12243 = vmatprep.mubr.f32.mxu0 0.0
    %12244 = vmatmul.mubr.f32.gmra.mrb[0].mxu0 %v11846
    %v12245 = vpop.f32.mrb[0].mxu0
    %v12246 = vadd.f32 0.0, %v12245
    %v12247 = vpop.f32.mrb[0].mxu0
    %12248 = vmatprep.mubr.f32.mxu0 0.0
    %12249 = vmatmul.mubr.f32.gmra.mrb[0].mxu0 %v11849
    %v12250 = vpop.f32.mrb[0].mxu0
    %v12251 = vadd.f32 0.0, %v12250
    %v12252 = vpop.f32.mrb[0].mxu0
    %12253 = vmatprep.mubr.f32.mxu0 0.0
    %12254 = vmatmul.mubr.f32.gmra.mrb[0].mxu0 %v11852
    %v12255 = vpop.f32.mrb[0].mxu0
    %v12256 = vadd.f32 0.0, %v12255
    %v12257 = vpop.f32.mrb[0].mxu0
    %12258 = vmatprep.mubr.f32.mxu0 0.0
    %12259 = vmatmul.mubr.f32.gmra.mrb[0].mxu0 %v11855
    %v12260 = vpop.f32.mrb[0].mxu0
    %v12261 = vadd.f32 0.0, %v12260
    %v12262 = vpop.f32.mrb[0].mxu0
    %12263 = vmatprep.mubr.f32.mxu0 0.0
    %12264 = vmatmul.mubr.f32.gmra.mrb[0].mxu0 %v11858
    %v12265 = vpop.f32.mrb[0].mxu0
    %v12266 = vadd.f32 0.0, %v12265
    %v12267 = vpop.f32.mrb[0].mxu0
    %12268 = vmatprep.mubr.f32.mxu0 0.0
    %12269 = vmatmul.mubr.f32.gmra.mrb[0].mxu0 %v11861
    %v12270 = vpop.f32.mrb[0].mxu0
    %v12271 = vadd.f32 0.0, %v12270
    %v12272 = vpop.f32.mrb[0].mxu0
    %12273 = vmatprep.mubr.f32.mxu0 0.0
    %12274 = vmatmul.mubr.f32.gmra.mrb[0].mxu0 %v11864
    %v12275 = vpop.f32.mrb[0].mxu0
    %v12276 = vadd.f32 0.0, %v12275
    %v12277 = vpop.f32.mrb[0].mxu0
    %12278 = vmatprep.mubr.f32.mxu0 0.0
    %12279 = vmatmul.mubr.f32.gmra.mrb[0].mxu0 %v11867
    %v12280 = vpop.f32.mrb[0].mxu0
    %v12281 = vadd.f32 0.0, %v12280
    %v12282 = vpop.f32.mrb[0].mxu0
    %12283 = vmatprep.mubr.f32.mxu0 0.0
    %12284 = vmatmul.mubr.f32.gmra.mrb[0].mxu0 %v11870
    %v12285 = vpop.f32.mrb[0].mxu0
    %v12286 = vadd.f32 0.0, %v12285
    %v12287 = vpop.f32.mrb[0].mxu0
    %12288 = vmatprep.mubr.f32.mxu0 0.0
    %12289 = vmatmul.mubr.f32.gmra.mrb[0].mxu0 %v11873
    %v12290 = vpop.f32.mrb[0].mxu0
    %v12291 = vadd.f32 0.0, %v12290
    %v12292 = vpop.f32.mrb[0].mxu0
    %12293 = vmatprep.mubr.f32.mxu0 0.0
    %12294 = vmatmul.mubr.f32.gmra.mrb[0].mxu0 %v11876
    %v12295 = vpop.f32.mrb[0].mxu0
    %v12296 = vadd.f32 0.0, %v12295
    %v12297 = vpop.f32.mrb[0].mxu0
    %12298 = vmatprep.mubr.f32.mxu0 0.0
    %12299 = vmatmul.mubr.f32.gmra.mrb[0].mxu0 %v11879
    %v12300 = vpop.f32.mrb[0].mxu0
    %v12301 = vadd.f32 0.0, %v12300
    %v12302 = vpop.f32.mrb[0].mxu0
    %12303 = vmatprep.mubr.f32.mxu0 0.0
    %12304 = vmatmul.mubr.f32.gmra.mrb[0].mxu0 %v11882
    %v12305 = vpop.f32.mrb[0].mxu0
    %v12306 = vadd.f32 0.0, %v12305
    %v12307 = vpop.f32.mrb[0].mxu0
    %12308 = vmatprep.mubr.f32.mxu0 0.0
    %12309 = vmatmul.mubr.f32.gmra.mrb[0].mxu0 %v11885
    %v12310 = vpop.f32.mrb[0].mxu0
    %v12311 = vadd.f32 0.0, %v12310
    %v12312 = vpop.f32.mrb[0].mxu0
    %12313 = vmatprep.mubr.f32.mxu0 0.0
    %12314 = vmatmul.mubr.f32.gmra.mrb[0].mxu0 %v11888
    %v12315 = vpop.f32.mrb[0].mxu0
    %v12316 = vadd.f32 0.0, %v12315
    %v12317 = vpop.f32.mrb[0].mxu0
    %12318 = vmatprep.mubr.f32.mxu0 0.0
    %12319 = vmatmul.mubr.f32.gmra.mrb[0].mxu0 %v11891
    %v12320 = vpop.f32.mrb[0].mxu0
    %v12321 = vadd.f32 0.0, %v12320
    %v12322 = vpop.f32.mrb[0].mxu0
    %12323 = vmatprep.mubr.f32.mxu0 0.0
    %12324 = vmatmul.mubr.f32.gmra.mrb[0].mxu0 %v11894
    %v12325 = vpop.f32.mrb[0].mxu0
    %v12326 = vadd.f32 0.0, %v12325
    %v12327 = vpop.f32.mrb[0].mxu0
    %12328 = vmatprep.mubr.f32.mxu0 0.0
    %12329 = vmatmul.mubr.f32.gmra.mrb[0].mxu0 %v11897
    %v12330 = vpop.f32.mrb[0].mxu0
    %v12331 = vadd.f32 0.0, %v12330
    %v12332 = vpop.f32.mrb[0].mxu0
    %12333 = vmatprep.mubr.f32.mxu0 0.0
    %12334 = vmatmul.mubr.f32.gmra.mrb[0].mxu0 %v11900
    %v12335 = vpop.f32.mrb[0].mxu0
    %v12336 = vadd.f32 0.0, %v12335
    %v12337 = vpop.f32.mrb[0].mxu0
    %12338 = vmatprep.mubr.f32.mxu0 0.0
    %12339 = vmatmul.mubr.f32.gmra.mrb[0].mxu0 %v11903
    %v12340 = vpop.f32.mrb[0].mxu0
    %v12341 = vadd.f32 0.0, %v12340
    %v12342 = vpop.f32.mrb[0].mxu0
    %12343 = vmatprep.mubr.f32.mxu0 0.0
    %12344 = vmatmul.mubr.f32.gmra.mrb[0].mxu0 %v11906
    %v12345 = vpop.f32.mrb[0].mxu0
    %v12346 = vadd.f32 0.0, %v12345
    %v12347 = vpop.f32.mrb[0].mxu0
    %12348 = vmatprep.mubr.f32.mxu0 0.0
    %12349 = vmatmul.mubr.f32.gmra.mrb[0].mxu0 %v11909
    %v12350 = vpop.f32.mrb[0].mxu0
    %v12351 = vadd.f32 0.0, %v12350
    %v12352 = vpop.f32.mrb[0].mxu0
    %12353 = vmatprep.mubr.f32.mxu0 0.0
    %12354 = vmatmul.mubr.f32.gmra.mrb[0].mxu0 %v11912
    %v12355 = vpop.f32.mrb[0].mxu0
    %v12356 = vadd.f32 0.0, %v12355
    %v12357 = vpop.f32.mrb[0].mxu0
    %12358 = vmatprep.mubr.f32.mxu0 0.0
    %12359 = vmatmul.mubr.f32.gmra.mrb[0].mxu0 %v11915
    %v12360 = vpop.f32.mrb[0].mxu0
    %v12361 = vadd.f32 0.0, %v12360
    %v12362 = vpop.f32.mrb[0].mxu0
    %12363 = vmatprep.mubr.f32.mxu0 0.0
    %12364 = vmatmul.mubr.f32.gmra.mrb[0].mxu0 %v11918
    %v12365 = vpop.f32.mrb[0].mxu0
    %v12366 = vadd.f32 0.0, %v12365
    %v12367 = vpop.f32.mrb[0].mxu0
    %12368 = vmatprep.mubr.f32.mxu0 0.0
    %12369 = vmatmul.mubr.f32.gmra.mrb[0].mxu0 %v11921
    %v12370 = vpop.f32.mrb[0].mxu0
    %v12371 = vadd.f32 0.0, %v12370
    %v12372 = vpop.f32.mrb[0].mxu0
    %12373 = vmatprep.mubr.f32.mxu0 0.0
    %12374 = vmatmul.mubr.f32.gmra.mrb[0].mxu0 %v11924
    %v12375 = vpop.f32.mrb[0].mxu0
    %v12376 = vadd.f32 0.0, %v12375
    %v12377 = vpop.f32.mrb[0].mxu0
    %12378 = vmatprep.mubr.f32.mxu0 0.0
    %12379 = vmatmul.mubr.f32.gmra.mrb[0].mxu0 %v11927
    %v12380 = vpop.f32.mrb[0].mxu0
    %v12381 = vadd.f32 0.0, %v12380
    %v12382 = vpop.f32.mrb[0].mxu0
    %12383 = vmatprep.mubr.f32.mxu0 0.0
    %12384 = vmatmul.mubr.f32.gmra.mrb[0].mxu0 %v11930
    %v12385 = vpop.f32.mrb[0].mxu0
    %v12386 = vadd.f32 0.0, %v12385
    %v12387 = vpop.f32.mrb[0].mxu0
    %12388 = vmatprep.mubr.f32.mxu0 0.0
    %12389 = vmatmul.mubr.f32.gmra.mrb[0].mxu0 %v11933
    %v12390 = vpop.f32.mrb[0].mxu0
    %v12391 = vadd.f32 0.0, %v12390
    %v12392 = vpop.f32.mrb[0].mxu0
    %12393 = vmatprep.mubr.f32.mxu0 0.0
    %12394 = vmatmul.mubr.f32.gmra.mrb[0].mxu0 %v11936
    %v12395 = vpop.f32.mrb[0].mxu0
    %v12396 = vadd.f32 0.0, %v12395
    %v12397 = vpop.f32.mrb[0].mxu0
    %12398 = vmatprep.mubr.f32.mxu0 0.0
    %12399 = vmatmul.mubr.f32.gmra.mrb[0].mxu0 %v11939
    %v12400 = vpop.f32.mrb[0].mxu0
    %v12401 = vadd.f32 0.0, %v12400
    %v12402 = vpop.f32.mrb[0].mxu0
    %12403 = vmatprep.mubr.f32.mxu0 0.0
    %12404 = vmatmul.mubr.f32.gmra.mrb[0].mxu0 %v11942
    %v12405 = vpop.f32.mrb[0].mxu0
    %v12406 = vadd.f32 0.0, %v12405
    %v12407 = vpop.f32.mrb[0].mxu0
    %12408 = vmatprep.mubr.f32.mxu0 0.0
    %12409 = vmatmul.mubr.f32.gmra.mrb[0].mxu0 %v11945
    %v12410 = vpop.f32.mrb[0].mxu0
    %v12411 = vadd.f32 0.0, %v12410
    %v12412 = vpop.f32.mrb[0].mxu0
    %12413 = vmatprep.mubr.f32.mxu0 0.0
    %12414 = vmatmul.mubr.f32.gmra.mrb[0].mxu0 %v11948
    %v12415 = vpop.f32.mrb[0].mxu0
    %v12416 = vadd.f32 0.0, %v12415
    %v12417 = vpop.f32.mrb[0].mxu0
    %12418 = vmatprep.mubr.f32.mxu0 0.0
    %12419 = vmatmul.mubr.f32.gmra.mrb[0].mxu0 %v11951
    %v12420 = vpop.f32.mrb[0].mxu0
    %v12421 = vadd.f32 0.0, %v12420
    %v12422 = vpop.f32.mrb[0].mxu0
    %12423 = vmatprep.mubr.f32.mxu0 0.0
    %12424 = vmatmul.mubr.f32.gmra.mrb[0].mxu0 %v11954
    %v12425 = vpop.f32.mrb[0].mxu0
    %v12426 = vadd.f32 0.0, %v12425
    %v12427 = vpop.f32.mrb[0].mxu0
    %12428 = vmatprep.mubr.f32.mxu0 0.0
    %12429 = vmatmul.mubr.f32.gmra.mrb[0].mxu0 %v11957
    %v12430 = vpop.f32.mrb[0].mxu0
    %v12431 = vadd.f32 0.0, %v12430
    %v12432 = vpop.f32.mrb[0].mxu0
    %12433 = vdwg.mxu0
    %v12434 = vadd.f32 %v11216, %v12026
    %v12435 = vadd.f32 %v11221, %v12031
    %v12436 = vadd.f32 %v11226, %v12036
    %v12437 = vadd.f32 %v11231, %v12041
    %v12438 = vadd.f32 %v11236, %v12046
    %v12439 = vadd.f32 %v11241, %v12051
    %v12440 = vadd.f32 %v11246, %v12056
    %v12441 = vadd.f32 %v11251, %v12061
    %v12442 = vadd.f32 %v11256, %v12066
    %v12443 = vadd.f32 %v11261, %v12071
    %v12444 = vadd.f32 %v11266, %v12076
    %v12445 = vadd.f32 %v11271, %v12081
    %v12446 = vadd.f32 %v11276, %v12086
    %v12447 = vadd.f32 %v11281, %v12091
    %v12448 = vadd.f32 %v11286, %v12096
    %v12449 = vadd.f32 %v11291, %v12101
    %v12450 = vadd.f32 %v11296, %v12106
    %v12451 = vadd.f32 %v11301, %v12111
    %v12452 = vadd.f32 %v11306, %v12116
    %v12453 = vadd.f32 %v11311, %v12121
    %v12454 = vadd.f32 %v11316, %v12126
    %v12455 = vadd.f32 %v11321, %v12131
    %v12456 = vadd.f32 %v11326, %v12136
    %v12457 = vadd.f32 %v11331, %v12141
    %v12458 = vadd.f32 %v11336, %v12146
    %v12459 = vadd.f32 %v11341, %v12151
    %v12460 = vadd.f32 %v11346, %v12156
    %v12461 = vadd.f32 %v11351, %v12161
    %v12462 = vadd.f32 %v11356, %v12166
    %v12463 = vadd.f32 %v11361, %v12171
    %v12464 = vadd.f32 %v11366, %v12176
    %v12465 = vadd.f32 %v11371, %v12181
    %v12466 = vadd.f32 %v11376, %v12186
    %v12467 = vadd.f32 %v11381, %v12191
    %v12468 = vadd.f32 %v11386, %v12196
    %v12469 = vadd.f32 %v11391, %v12201
    %v12470 = vadd.f32 %v11396, %v12206
    %v12471 = vadd.f32 %v11401, %v12211
    %v12472 = vadd.f32 %v11406, %v12216
    %v12473 = vadd.f32 %v11411, %v12221
    %v12474 = vadd.f32 %v11416, %v12226
    %v12475 = vadd.f32 %v11421, %v12231
    %v12476 = vadd.f32 %v11426, %v12236
    %v12477 = vadd.f32 %v11431, %v12241
    %v12478 = vadd.f32 %v11436, %v12246
    %v12479 = vadd.f32 %v11441, %v12251
    %v12480 = vadd.f32 %v11446, %v12256
    %v12481 = vadd.f32 %v11451, %v12261
    %v12482 = vadd.f32 %v11456, %v12266
    %v12483 = vadd.f32 %v11461, %v12271
    %v12484 = vadd.f32 %v11466, %v12276
    %v12485 = vadd.f32 %v11471, %v12281
    %v12486 = vadd.f32 %v11476, %v12286
    %v12487 = vadd.f32 %v11481, %v12291
    %v12488 = vadd.f32 %v11486, %v12296
    %v12489 = vadd.f32 %v11491, %v12301
    %v12490 = vadd.f32 %v11496, %v12306
    %v12491 = vadd.f32 %v11501, %v12311
    %v12492 = vadd.f32 %v11506, %v12316
    %v12493 = vadd.f32 %v11511, %v12321
    %v12494 = vadd.f32 %v11516, %v12326
    %v12495 = vadd.f32 %v11521, %v12331
    %v12496 = vadd.f32 %v11526, %v12336
    %v12497 = vadd.f32 %v11531, %v12341
    %v12498 = vadd.f32 %v11536, %v12346
    %v12499 = vadd.f32 %v11541, %v12351
    %v12500 = vadd.f32 %v11546, %v12356
    %v12501 = vadd.f32 %v11551, %v12361
    %v12502 = vadd.f32 %v11556, %v12366
    %v12503 = vadd.f32 %v11561, %v12371
    %v12504 = vadd.f32 %v11566, %v12376
    %v12505 = vadd.f32 %v11571, %v12381
    %v12506 = vadd.f32 %v11576, %v12386
    %v12507 = vadd.f32 %v11581, %v12391
    %v12508 = vadd.f32 %v11586, %v12396
    %v12509 = vadd.f32 %v11591, %v12401
    %v12510 = vadd.f32 %v11596, %v12406
    %v12511 = vadd.f32 %v11601, %v12411
    %v12512 = vadd.f32 %v11606, %v12416
    %v12513 = vadd.f32 %v11611, %v12421
    %v12514 = vadd.f32 %v11616, %v12426
    %v12515 = vadd.f32 %v11621, %v12431
    %v12516 = vld [vmem:[%s6] sm:$0x1]
    %v12518 = vlaneseq
    %v12519 = vshrl.u32 %v12518, 7
    %v12520 = vsub.s32 0, %v12519
    %v12521 = vrot.slane %v12516, %v12520
    %v12523 = vadd.f32 %v12434, %v12521
    %v12524 = vadd.f32 %v12435, %v12521
    %v12525 = vadd.f32 %v12436, %v12521
    %v12526 = vadd.f32 %v12437, %v12521
    %v12527 = vadd.f32 %v12438, %v12521
    %v12528 = vadd.f32 %v12439, %v12521
    %v12529 = vadd.f32 %v12440, %v12521
    %v12530 = vadd.f32 %v12441, %v12521
    %v12531 = vadd.f32 %v12442, %v12521
    %v12532 = vadd.f32 %v12443, %v12521
    %v12533 = vadd.f32 %v12444, %v12521
    %v12534 = vadd.f32 %v12445, %v12521
    %v12535 = vadd.f32 %v12446, %v12521
    %v12536 = vadd.f32 %v12447, %v12521
    %v12537 = vadd.f32 %v12448, %v12521
    %v12538 = vadd.f32 %v12449, %v12521
    %v12539 = vadd.f32 %v12450, %v12521
    %v12540 = vadd.f32 %v12451, %v12521
    %v12541 = vadd.f32 %v12452, %v12521
    %v12542 = vadd.f32 %v12453, %v12521
    %v12543 = vadd.f32 %v12454, %v12521
    %v12544 = vadd.f32 %v12455, %v12521
    %v12545 = vadd.f32 %v12456, %v12521
    %v12546 = vadd.f32 %v12457, %v12521
    %v12547 = vadd.f32 %v12458, %v12521
    %v12548 = vadd.f32 %v12459, %v12521
    %v12549 = vadd.f32 %v12460, %v12521
    %v12550 = vadd.f32 %v12461, %v12521
    %v12551 = vadd.f32 %v12462, %v12521
    %v12552 = vadd.f32 %v12463, %v12521
    %v12553 = vadd.f32 %v12464, %v12521
    %v12554 = vadd.f32 %v12465, %v12521
    %v12555 = vadd.f32 %v12466, %v12521
    %v12556 = vadd.f32 %v12467, %v12521
    %v12557 = vadd.f32 %v12468, %v12521
    %v12558 = vadd.f32 %v12469, %v12521
    %v12559 = vadd.f32 %v12470, %v12521
    %v12560 = vadd.f32 %v12471, %v12521
    %v12561 = vadd.f32 %v12472, %v12521
    %v12562 = vadd.f32 %v12473, %v12521
    %v12563 = vadd.f32 %v12474, %v12521
    %v12564 = vadd.f32 %v12475, %v12521
    %v12565 = vadd.f32 %v12476, %v12521
    %v12566 = vadd.f32 %v12477, %v12521
    %v12567 = vadd.f32 %v12478, %v12521
    %v12568 = vadd.f32 %v12479, %v12521
    %v12569 = vadd.f32 %v12480, %v12521
    %v12570 = vadd.f32 %v12481, %v12521
    %v12571 = vadd.f32 %v12482, %v12521
    %v12572 = vadd.f32 %v12483, %v12521
    %v12573 = vadd.f32 %v12484, %v12521
    %v12574 = vadd.f32 %v12485, %v12521
    %v12575 = vadd.f32 %v12486, %v12521
    %v12576 = vadd.f32 %v12487, %v12521
    %v12577 = vadd.f32 %v12488, %v12521
    %v12578 = vadd.f32 %v12489, %v12521
    %v12579 = vadd.f32 %v12490, %v12521
    %v12580 = vadd.f32 %v12491, %v12521
    %v12581 = vadd.f32 %v12492, %v12521
    %v12582 = vadd.f32 %v12493, %v12521
    %v12583 = vadd.f32 %v12494, %v12521
    %v12584 = vadd.f32 %v12495, %v12521
    %v12585 = vadd.f32 %v12496, %v12521
    %v12586 = vadd.f32 %v12497, %v12521
    %v12587 = vadd.f32 %v12498, %v12521
    %v12588 = vadd.f32 %v12499, %v12521
    %v12589 = vadd.f32 %v12500, %v12521
    %v12590 = vadd.f32 %v12501, %v12521
    %v12591 = vadd.f32 %v12502, %v12521
    %v12592 = vadd.f32 %v12503, %v12521
    %v12593 = vadd.f32 %v12504, %v12521
    %v12594 = vadd.f32 %v12505, %v12521
    %v12595 = vadd.f32 %v12506, %v12521
    %v12596 = vadd.f32 %v12507, %v12521
    %v12597 = vadd.f32 %v12508, %v12521
    %v12598 = vadd.f32 %v12509, %v12521
    %v12599 = vadd.f32 %v12510, %v12521
    %v12600 = vadd.f32 %v12511, %v12521
    %v12601 = vadd.f32 %v12512, %v12521
    %v12602 = vadd.f32 %v12513, %v12521
    %v12603 = vadd.f32 %v12514, %v12521
    %v12604 = vadd.f32 %v12515, %v12521
    %v12605 = vmax.f32 %v12523, 0.0
    %v12606 = vmax.f32 %v12524, 0.0
    %v12607 = vmax.f32 %v12525, 0.0
    %v12608 = vmax.f32 %v12526, 0.0
    %v12609 = vmax.f32 %v12527, 0.0
    %v12610 = vmax.f32 %v12528, 0.0
    %v12611 = vmax.f32 %v12529, 0.0
    %v12612 = vmax.f32 %v12530, 0.0
    %v12613 = vmax.f32 %v12531, 0.0
    %v12614 = vmax.f32 %v12532, 0.0
    %v12615 = vmax.f32 %v12533, 0.0
    %v12616 = vmax.f32 %v12534, 0.0
    %v12617 = vmax.f32 %v12535, 0.0
    %v12618 = vmax.f32 %v12536, 0.0
    %v12619 = vmax.f32 %v12537, 0.0
    %v12620 = vmax.f32 %v12538, 0.0
    %v12621 = vmax.f32 %v12539, 0.0
    %v12622 = vmax.f32 %v12540, 0.0
    %v12623 = vmax.f32 %v12541, 0.0
    %v12624 = vmax.f32 %v12542, 0.0
    %v12625 = vmax.f32 %v12543, 0.0
    %v12626 = vmax.f32 %v12544, 0.0
    %v12627 = vmax.f32 %v12545, 0.0
    %v12628 = vmax.f32 %v12546, 0.0
    %v12629 = vmax.f32 %v12547, 0.0
    %v12630 = vmax.f32 %v12548, 0.0
    %v12631 = vmax.f32 %v12549, 0.0
    %v12632 = vmax.f32 %v12550, 0.0
    %v12633 = vmax.f32 %v12551, 0.0
    %v12634 = vmax.f32 %v12552, 0.0
    %v12635 = vmax.f32 %v12553, 0.0
    %v12636 = vmax.f32 %v12554, 0.0
    %v12637 = vmax.f32 %v12555, 0.0
    %v12638 = vmax.f32 %v12556, 0.0
    %v12639 = vmax.f32 %v12557, 0.0
    %v12640 = vmax.f32 %v12558, 0.0
    %v12641 = vmax.f32 %v12559, 0.0
    %v12642 = vmax.f32 %v12560, 0.0
    %v12643 = vmax.f32 %v12561, 0.0
    %v12644 = vmax.f32 %v12562, 0.0
    %v12645 = vmax.f32 %v12563, 0.0
    %v12646 = vmax.f32 %v12564, 0.0
    %v12647 = vmax.f32 %v12565, 0.0
    %v12648 = vmax.f32 %v12566, 0.0
    %v12649 = vmax.f32 %v12567, 0.0
    %v12650 = vmax.f32 %v12568, 0.0
    %v12651 = vmax.f32 %v12569, 0.0
    %v12652 = vmax.f32 %v12570, 0.0
    %v12653 = vmax.f32 %v12571, 0.0
    %v12654 = vmax.f32 %v12572, 0.0
    %v12655 = vmax.f32 %v12573, 0.0
    %v12656 = vmax.f32 %v12574, 0.0
    %v12657 = vmax.f32 %v12575, 0.0
    %v12658 = vmax.f32 %v12576, 0.0
    %v12659 = vmax.f32 %v12577, 0.0
    %v12660 = vmax.f32 %v12578, 0.0
    %v12661 = vmax.f32 %v12579, 0.0
    %v12662 = vmax.f32 %v12580, 0.0
    %v12663 = vmax.f32 %v12581, 0.0
    %v12664 = vmax.f32 %v12582, 0.0
    %v12665 = vmax.f32 %v12583, 0.0
    %v12666 = vmax.f32 %v12584, 0.0
    %v12667 = vmax.f32 %v12585, 0.0
    %v12668 = vmax.f32 %v12586, 0.0
    %v12669 = vmax.f32 %v12587, 0.0
    %v12670 = vmax.f32 %v12588, 0.0
    %v12671 = vmax.f32 %v12589, 0.0
    %v12672 = vmax.f32 %v12590, 0.0
    %v12673 = vmax.f32 %v12591, 0.0
    %v12674 = vmax.f32 %v12592, 0.0
    %v12675 = vmax.f32 %v12593, 0.0
    %v12676 = vmax.f32 %v12594, 0.0
    %v12677 = vmax.f32 %v12595, 0.0
    %v12678 = vmax.f32 %v12596, 0.0
    %v12679 = vmax.f32 %v12597, 0.0
    %v12680 = vmax.f32 %v12598, 0.0
    %v12681 = vmax.f32 %v12599, 0.0
    %v12682 = vmax.f32 %v12600, 0.0
    %v12683 = vmax.f32 %v12601, 0.0
    %v12684 = vmax.f32 %v12602, 0.0
    %v12685 = vmax.f32 %v12603, 0.0
    %v12686 = vmax.f32 %v12604, 0.0
    %v12687 = vsel %vm4827, %v12605, 0.0
    %v12688 = vsel %vm4828, %v12606, 0.0
    %v12689 = vsel %vm4829, %v12607, 0.0
    %v12690 = vsel %vm4830, %v12608, 0.0
    %v12691 = vsel %vm4831, %v12609, 0.0
    %v12692 = vsel %vm4832, %v12610, 0.0
    %v12693 = vsel %vm4833, %v12611, 0.0
    %v12694 = vsel %vm4834, %v12612, 0.0
    %v12695 = vsel %vm4835, %v12613, 0.0
    %v12696 = vsel %vm4836, %v12614, 0.0
    %v12697 = vsel %vm4837, %v12615, 0.0
    %v12698 = vsel %vm4838, %v12616, 0.0
    %v12699 = vsel %vm4839, %v12617, 0.0
    %v12700 = vsel %vm4840, %v12618, 0.0
    %v12701 = vsel %vm4841, %v12619, 0.0
    %v12702 = vsel %vm4842, %v12620, 0.0
    %v12703 = vsel %vm4843, %v12621, 0.0
    %v12704 = vsel %vm4844, %v12622, 0.0
    %v12705 = vsel %vm4845, %v12623, 0.0
    %v12706 = vsel %vm4846, %v12624, 0.0
    %v12707 = vsel %vm4847, %v12625, 0.0
    %v12708 = vsel %vm4848, %v12626, 0.0
    %v12709 = vsel %vm4849, %v12627, 0.0
    %v12710 = vsel %vm4850, %v12628, 0.0
    %v12711 = vsel %vm4851, %v12629, 0.0
    %v12712 = vsel %vm4852, %v12630, 0.0
    %v12713 = vsel %vm4853, %v12631, 0.0
    %v12714 = vsel %vm4854, %v12632, 0.0
    %v12715 = vsel %vm4855, %v12633, 0.0
    %v12716 = vsel %vm4856, %v12634, 0.0
    %v12717 = vsel %vm4857, %v12635, 0.0
    %v12718 = vsel %vm4858, %v12636, 0.0
    %v12719 = vsel %vm4859, %v12637, 0.0
    %v12720 = vsel %vm4860, %v12638, 0.0
    %v12721 = vsel %vm4861, %v12639, 0.0
    %v12722 = vsel %vm4862, %v12640, 0.0
    %v12723 = vsel %vm4863, %v12641, 0.0
    %v12724 = vsel %vm4864, %v12642, 0.0
    %v12725 = vsel %vm4865, %v12643, 0.0
    %v12726 = vsel %vm4866, %v12644, 0.0
    %v12727 = vsel %vm4867, %v12645, 0.0
    %v12728 = vsel %vm4827, %v12646, 0.0
    %v12729 = vsel %vm4828, %v12647, 0.0
    %v12730 = vsel %vm4829, %v12648, 0.0
    %v12731 = vsel %vm4830, %v12649, 0.0
    %v12732 = vsel %vm4831, %v12650, 0.0
    %v12733 = vsel %vm4832, %v12651, 0.0
    %v12734 = vsel %vm4833, %v12652, 0.0
    %v12735 = vsel %vm4834, %v12653, 0.0
    %v12736 = vsel %vm4835, %v12654, 0.0
    %v12737 = vsel %vm4836, %v12655, 0.0
    %v12738 = vsel %vm4837, %v12656, 0.0
    %v12739 = vsel %vm4838, %v12657, 0.0
    %v12740 = vsel %vm4839, %v12658, 0.0
    %v12741 = vsel %vm4840, %v12659, 0.0
    %v12742 = vsel %vm4841, %v12660, 0.0
    %v12743 = vsel %vm4842, %v12661, 0.0
    %v12744 = vsel %vm4843, %v12662, 0.0
    %v12745 = vsel %vm4844, %v12663, 0.0
    %v12746 = vsel %vm4845, %v12664, 0.0
    %v12747 = vsel %vm4846, %v12665, 0.0
    %v12748 = vsel %vm4847, %v12666, 0.0
    %v12749 = vsel %vm4848, %v12667, 0.0
    %v12750 = vsel %vm4849, %v12668, 0.0
    %v12751 = vsel %vm4850, %v12669, 0.0
    %v12752 = vsel %vm4851, %v12670, 0.0
    %v12753 = vsel %vm4852, %v12671, 0.0
    %v12754 = vsel %vm4853, %v12672, 0.0
    %v12755 = vsel %vm4854, %v12673, 0.0
    %v12756 = vsel %vm4855, %v12674, 0.0
    %v12757 = vsel %vm4856, %v12675, 0.0
    %v12758 = vsel %vm4857, %v12676, 0.0
    %v12759 = vsel %vm4858, %v12677, 0.0
    %v12760 = vsel %vm4859, %v12678, 0.0
    %v12761 = vsel %vm4860, %v12679, 0.0
    %v12762 = vsel %vm4861, %v12680, 0.0
    %v12763 = vsel %vm4862, %v12681, 0.0
    %v12764 = vsel %vm4863, %v12682, 0.0
    %v12765 = vsel %vm4864, %v12683, 0.0
    %v12766 = vsel %vm4865, %v12684, 0.0
    %v12767 = vsel %vm4866, %v12685, 0.0
    %v12768 = vsel %vm4867, %v12686, 0.0
    %v12769 = vsel %vm9839, %v12687, 0.0
    %v12770 = vsel %vm9839, %v12688, 0.0
    %v12771 = vadd.f32 %v12769, %v12770
    %v12772 = vsel %vm9839, %v12689, 0.0
    %v12773 = vadd.f32 %v12771, %v12772
    %v12774 = vsel %vm9839, %v12690, 0.0
    %v12775 = vadd.f32 %v12773, %v12774
    %v12776 = vsel %vm9839, %v12691, 0.0
    %v12777 = vadd.f32 %v12775, %v12776
    %v12778 = vsel %vm9839, %v12692, 0.0
    %v12779 = vadd.f32 %v12777, %v12778
    %v12780 = vsel %vm9839, %v12693, 0.0
    %v12781 = vadd.f32 %v12779, %v12780
    %v12782 = vsel %vm9839, %v12694, 0.0
    %v12783 = vadd.f32 %v12781, %v12782
    %v12784 = vsel %vm9839, %v12695, 0.0
    %v12785 = vadd.f32 %v12783, %v12784
    %v12786 = vsel %vm9839, %v12696, 0.0
    %v12787 = vadd.f32 %v12785, %v12786
    %v12788 = vsel %vm9839, %v12697, 0.0
    %v12789 = vadd.f32 %v12787, %v12788
    %v12790 = vsel %vm9839, %v12698, 0.0
    %v12791 = vadd.f32 %v12789, %v12790
    %v12792 = vsel %vm9839, %v12699, 0.0
    %v12793 = vadd.f32 %v12791, %v12792
    %v12794 = vsel %vm9839, %v12700, 0.0
    %v12795 = vadd.f32 %v12793, %v12794
    %v12796 = vsel %vm9839, %v12701, 0.0
    %v12797 = vadd.f32 %v12795, %v12796
    %v12798 = vsel %vm9839, %v12702, 0.0
    %v12799 = vadd.f32 %v12797, %v12798
    %v12800 = vsel %vm9839, %v12703, 0.0
    %v12801 = vadd.f32 %v12799, %v12800
    %v12802 = vsel %vm9839, %v12704, 0.0
    %v12803 = vadd.f32 %v12801, %v12802
    %v12804 = vsel %vm9839, %v12705, 0.0
    %v12805 = vadd.f32 %v12803, %v12804
    %v12806 = vsel %vm9839, %v12706, 0.0
    %v12807 = vadd.f32 %v12805, %v12806
    %v12808 = vsel %vm9839, %v12707, 0.0
    %v12809 = vadd.f32 %v12807, %v12808
    %v12810 = vsel %vm9839, %v12708, 0.0
    %v12811 = vadd.f32 %v12809, %v12810
    %v12812 = vsel %vm9839, %v12709, 0.0
    %v12813 = vadd.f32 %v12811, %v12812
    %v12814 = vsel %vm9839, %v12710, 0.0
    %v12815 = vadd.f32 %v12813, %v12814
    %v12816 = vsel %vm9839, %v12711, 0.0
    %v12817 = vadd.f32 %v12815, %v12816
    %v12818 = vsel %vm9839, %v12712, 0.0
    %v12819 = vadd.f32 %v12817, %v12818
    %v12820 = vsel %vm9839, %v12713, 0.0
    %v12821 = vadd.f32 %v12819, %v12820
    %v12822 = vsel %vm9839, %v12714, 0.0
    %v12823 = vadd.f32 %v12821, %v12822
    %v12824 = vsel %vm9839, %v12715, 0.0
    %v12825 = vadd.f32 %v12823, %v12824
    %v12826 = vsel %vm9839, %v12716, 0.0
    %v12827 = vadd.f32 %v12825, %v12826
    %v12828 = vsel %vm9839, %v12717, 0.0
    %v12829 = vadd.f32 %v12827, %v12828
    %v12830 = vsel %vm9839, %v12718, 0.0
    %v12831 = vadd.f32 %v12829, %v12830
    %v12832 = vsel %vm9839, %v12719, 0.0
    %v12833 = vadd.f32 %v12831, %v12832
    %v12834 = vsel %vm9839, %v12720, 0.0
    %v12835 = vadd.f32 %v12833, %v12834
    %v12836 = vsel %vm9839, %v12721, 0.0
    %v12837 = vadd.f32 %v12835, %v12836
    %v12838 = vsel %vm9839, %v12722, 0.0
    %v12839 = vadd.f32 %v12837, %v12838
    %v12840 = vsel %vm9839, %v12723, 0.0
    %v12841 = vadd.f32 %v12839, %v12840
    %v12842 = vsel %vm9839, %v12724, 0.0
    %v12843 = vadd.f32 %v12841, %v12842
    %v12844 = vsel %vm9839, %v12725, 0.0
    %v12845 = vadd.f32 %v12843, %v12844
    %v12846 = vsel %vm9839, %v12726, 0.0
    %v12847 = vadd.f32 %v12845, %v12846
    %v12848 = vsel %vm9839, %v12727, 0.0
    %v12849 = vadd.f32 %v12847, %v12848
    %v12850 = vrot.slane %v12849, 4
    %v12851 = vadd.f32 %v12849, %v12850
    %v12852 = vrot.slane %v12851, 2
    %v12853 = vadd.f32 %v12851, %v12852
    %v12854 = vrot.slane %v12853, 1
    %v12855 = vadd.f32 %v12853, %v12854
    %v12856 = vsel %vm9839, %v12728, 0.0
    %v12857 = vsel %vm9839, %v12729, 0.0
    %v12858 = vadd.f32 %v12856, %v12857
    %v12859 = vsel %vm9839, %v12730, 0.0
    %v12860 = vadd.f32 %v12858, %v12859
    %v12861 = vsel %vm9839, %v12731, 0.0
    %v12862 = vadd.f32 %v12860, %v12861
    %v12863 = vsel %vm9839, %v12732, 0.0
    %v12864 = vadd.f32 %v12862, %v12863
    %v12865 = vsel %vm9839, %v12733, 0.0
    %v12866 = vadd.f32 %v12864, %v12865
    %v12867 = vsel %vm9839, %v12734, 0.0
    %v12868 = vadd.f32 %v12866, %v12867
    %v12869 = vsel %vm9839, %v12735, 0.0
    %v12870 = vadd.f32 %v12868, %v12869
    %v12871 = vsel %vm9839, %v12736, 0.0
    %v12872 = vadd.f32 %v12870, %v12871
    %v12873 = vsel %vm9839, %v12737, 0.0
    %v12874 = vadd.f32 %v12872, %v12873
    %v12875 = vsel %vm9839, %v12738, 0.0
    %v12876 = vadd.f32 %v12874, %v12875
    %v12877 = vsel %vm9839, %v12739, 0.0
    %v12878 = vadd.f32 %v12876, %v12877
    %v12879 = vsel %vm9839, %v12740, 0.0
    %v12880 = vadd.f32 %v12878, %v12879
    %v12881 = vsel %vm9839, %v12741, 0.0
    %v12882 = vadd.f32 %v12880, %v12881
    %v12883 = vsel %vm9839, %v12742, 0.0
    %v12884 = vadd.f32 %v12882, %v12883
    %v12885 = vsel %vm9839, %v12743, 0.0
    %v12886 = vadd.f32 %v12884, %v12885
    %v12887 = vsel %vm9839, %v12744, 0.0
    %v12888 = vadd.f32 %v12886, %v12887
    %v12889 = vsel %vm9839, %v12745, 0.0
    %v12890 = vadd.f32 %v12888, %v12889
    %v12891 = vsel %vm9839, %v12746, 0.0
    %v12892 = vadd.f32 %v12890, %v12891
    %v12893 = vsel %vm9839, %v12747, 0.0
    %v12894 = vadd.f32 %v12892, %v12893
    %v12895 = vsel %vm9839, %v12748, 0.0
    %v12896 = vadd.f32 %v12894, %v12895
    %v12897 = vsel %vm9839, %v12749, 0.0
    %v12898 = vadd.f32 %v12896, %v12897
    %v12899 = vsel %vm9839, %v12750, 0.0
    %v12900 = vadd.f32 %v12898, %v12899
    %v12901 = vsel %vm9839, %v12751, 0.0
    %v12902 = vadd.f32 %v12900, %v12901
    %v12903 = vsel %vm9839, %v12752, 0.0
    %v12904 = vadd.f32 %v12902, %v12903
    %v12905 = vsel %vm9839, %v12753, 0.0
    %v12906 = vadd.f32 %v12904, %v12905
    %v12907 = vsel %vm9839, %v12754, 0.0
    %v12908 = vadd.f32 %v12906, %v12907
    %v12909 = vsel %vm9839, %v12755, 0.0
    %v12910 = vadd.f32 %v12908, %v12909
    %v12911 = vsel %vm9839, %v12756, 0.0
    %v12912 = vadd.f32 %v12910, %v12911
    %v12913 = vsel %vm9839, %v12757, 0.0
    %v12914 = vadd.f32 %v12912, %v12913
    %v12915 = vsel %vm9839, %v12758, 0.0
    %v12916 = vadd.f32 %v12914, %v12915
    %v12917 = vsel %vm9839, %v12759, 0.0
    %v12918 = vadd.f32 %v12916, %v12917
    %v12919 = vsel %vm9839, %v12760, 0.0
    %v12920 = vadd.f32 %v12918, %v12919
    %v12921 = vsel %vm9839, %v12761, 0.0
    %v12922 = vadd.f32 %v12920, %v12921
    %v12923 = vsel %vm9839, %v12762, 0.0
    %v12924 = vadd.f32 %v12922, %v12923
    %v12925 = vsel %vm9839, %v12763, 0.0
    %v12926 = vadd.f32 %v12924, %v12925
    %v12927 = vsel %vm9839, %v12764, 0.0
    %v12928 = vadd.f32 %v12926, %v12927
    %v12929 = vsel %vm9839, %v12765, 0.0
    %v12930 = vadd.f32 %v12928, %v12929
    %v12931 = vsel %vm9839, %v12766, 0.0
    %v12932 = vadd.f32 %v12930, %v12931
    %v12933 = vsel %vm9839, %v12767, 0.0
    %v12934 = vadd.f32 %v12932, %v12933
    %v12935 = vsel %vm9839, %v12768, 0.0
    %v12936 = vadd.f32 %v12934, %v12935
    %v12937 = vrot.slane %v12936, 4
    %v12938 = vadd.f32 %v12936, %v12937
    %v12939 = vrot.slane %v12938, 2
    %v12940 = vadd.f32 %v12938, %v12939
    %v12941 = vrot.slane %v12940, 1
    %v12942 = vadd.f32 %v12940, %v12941
    %v12943 = vmul.f32 %v12855, 0.00390625
    %v12944 = vmul.f32 %v12942, 0.00390625
    %vm12947 = vcmask 1041409
    %v12948 = vsel %vm12947, %v12944, %v12943
    %vm12950 = vcmask 254976
    %12951 = vst.msk [vmem:[#allocation5] sm:$0x3] %vm12950, %v12948
    // Predicated region
    $region34: #{tpu_custom_call.1} parent=1 // pred_check
      _
    $region35: #{tpu_custom_call.1} parent=1 // pred_check_branch
      %12953 = sbr.rel (0) target = $region37
    $region36: #{tpu_custom_call.1} parent=1 // pred_region
      %s12955 = ssub.s32 32, 32
      %12956 = vsyncadd [#allocation6], %s12955
      %s12958 = sshll.u32 [#allocation5], 4
      %s12959 = int_to_ptr.vmem [resolvable:$true] %s12958
      %12961 = dma.vmem_to_hbm [thread:$0]  %s12959, 32, %s7, [#allocation6]
    $region37: #{tpu_custom_call.1} parent=1 // pred_fallthru
      _
    // Predicated region
    $region38: #{tpu_custom_call.1} parent=1 // pred_check
      _
    $region39: #{tpu_custom_call.1} parent=1 // pred_check_branch
      %12963 = sbr.rel (0) target = $region41
    $region40: #{tpu_custom_call.1} parent=1 // pred_region
      %12964 = dma.done [#allocation6], 32
    $region41: #{tpu_custom_call.1} parent=1 // pred_fallthru
      _
    %12965 = vsyncpa [#allocation6], 1

</llo_original>
